<compile_context>
chip_gen: v7x
topology: tpu7x:2x2x1
jax: 0.10.0
libtpu: 0.0.40
codegen_flags: <defaults>
</compile_context>

<pallas_src>
import numpy as np
import jax
import jax.numpy as jnp
from jax.experimental import pallas as pl
from jax.experimental.pallas import tpu as pltpu


# --------------------------- fused stem kernel -------------------------------

def _make_stem_kernel(hs, ws, cin, cout):
    """2x2 ceil avg-pool + 3x3 conv (pad 1, bias) + ReLU, one image per step."""

    def kernel(p00_ref, p01_ref, p10_ref, p11_ref, inv_ref, w_ref, b_ref,
               o_ref, pad_ref):
        # 2x2 average pool: four window planes summed, scaled by the static
        # reciprocal in-bounds element count (ceil_mode edge handling).
        pooled = (p00_ref[0] + p01_ref[0] + p10_ref[0] + p11_ref[0]) * inv_ref[...]

        # Zero-padded copy (halo of 1) kept in VMEM for the 3x3 taps.
        pad_ref[...] = jnp.zeros_like(pad_ref)
        pad_ref[1:1 + hs, 1:1 + ws, :] = pooled

        w = w_ref[...]                                     # (9, cin, cout)
        acc = jnp.zeros((hs, ws, cout), jnp.float32) + b_ref[...]
        # cin == 3 is too small for the MXU: do the conv as 9*cin broadcast
        # FMAs on the VPU.  W (sublane) shift hoisted; H slice is free.
        for j in range(3):
            col = pad_ref[:, j:j + ws, :]                  # (hs+2, ws, cin)
            for i in range(3):
                tap = col[i:i + hs]                        # (hs, ws, cin)
                for c in range(cin):
                    acc = acc + tap[:, :, c:c + 1] * w[i * 3 + j, c]
        o_ref[0] = jnp.maximum(acc, 0.0)

    return kernel


def stem_forward(x_nchw, p):
    """inputlayer_0: avg-pool 2x2 (ceil_mode) -> conv3x3(3->32, pad 1) -> ReLU."""
    n, cin, h, w = x_nchw.shape
    cout = p['b'].shape[0]
    hs, ws = -(-h // 2), -(-w // 2)

    # TODO(synk): pool-window extraction / NCHW<->NHWC layout plumbing stays in
    # thin JAX glue; all conv / matmul / ReLU math runs inside Pallas kernels.
    x = jnp.transpose(x_nchw, (0, 2, 3, 1))                # NHWC
    if (h % 2) or (w % 2):
        x = jnp.pad(x, ((0, 0), (0, 2 * hs - h), (0, 2 * ws - w), (0, 0)))
    p00 = x[:, 0::2, 0::2, :]
    p01 = x[:, 0::2, 1::2, :]
    p10 = x[:, 1::2, 0::2, :]
    p11 = x[:, 1::2, 1::2, :]

    # Static ceil-mode divisor (in-bounds element count per pooling window).
    cnt_h = np.minimum(2, h - 2 * np.arange(hs)).astype(np.float32)
    cnt_w = np.minimum(2, w - 2 * np.arange(ws)).astype(np.float32)
    inv_cnt = jnp.asarray((1.0 / (cnt_h[:, None] * cnt_w[None, :]))[..., None])

    plane_spec = pl.BlockSpec((1, hs, ws, cin), lambda b: (b, 0, 0, 0))
    return pl.pallas_call(
        _make_stem_kernel(hs, ws, cin, cout),
        out_shape=jax.ShapeDtypeStruct((n, hs, ws, cout), jnp.float32),
        grid=(n,),
        in_specs=[plane_spec, plane_spec, plane_spec, plane_spec,
                  pl.BlockSpec((hs, ws, 1), lambda b: (0, 0, 0)),
                  pl.BlockSpec((9, cin, cout), lambda b: (0, 0, 0)),
                  pl.BlockSpec((1, cout), lambda b: (0, 0))],
        out_specs=pl.BlockSpec((1, hs, ws, cout), lambda b: (b, 0, 0, 0)),
        scratch_shapes=[pltpu.VMEM((hs + 2, ws + 2, cin), jnp.float32)],
        compiler_params=pltpu.CompilerParams(dimension_semantics=("parallel",)),
    )(p00, p01, p10, p11, inv_cnt, p['w'], p['b'].reshape(1, cout))


# --------------------------- fused CDBlock kernel -----------------------------

def _make_cdblock_kernel(ho, wo, cin, cout, d):
    """Fused CDBlock_1 body for one image:
       1x1 conv (BN1 folded) + ReLU -> depthwise 3x3 dil d (BN2 folded) + ReLU.
       The stride-s subsample of conv1 is applied by the wrapper."""
    # Drop taps whose receptive field lies entirely in the zero halo (static),
    # and clamp the halo to the taps that remain.
    ph = d if d < ho else 0
    pw = d if d < wo else 0
    i_taps = (-1, 0, 1) if ph else (0,)
    j_taps = (-1, 0, 1) if pw else (0,)

    def kernel(x_ref, w1_ref, b1_ref, w2_ref, b2_ref, o_ref, ybuf_ref):
        # ---- 1x1 conv + folded BN1 + ReLU (MXU, bf16 operands, f32 acc) ----
        if ph or pw:
            ybuf_ref[...] = jnp.zeros_like(ybuf_ref)       # zero halo
        x = x_ref[0]                                       # (ho, wo, cin)
        w1 = w1_ref[...]                                   # (cin, cout) bf16
        b1 = b1_ref[...]                                   # (1, cout)
        for h in range(ho):                                # row-wise: no reshapes
            row = jnp.dot(x[h].astype(jnp.bfloat16), w1,
                          preferred_element_type=jnp.float32)
            ybuf_ref[ph + h, pw:pw + wo, :] = jnp.maximum(row + b1, 0.0)

        # ---- depthwise 3x3 (dilation d) + folded BN2 + ReLU (VPU, f32) ----
        w2 = w2_ref[...]                                   # (9, cout), BN2-scaled
        acc = jnp.zeros((ho, wo, cout), jnp.float32) + b2_ref[...]
        for j in j_taps:                                   # hoisted W (sublane) shift
            col = ybuf_ref[:, pw + j * d:pw + j * d + wo, :]
            for i in i_taps:                               # H shift: free slice
                tap = col[ph + i * d:ph + i * d + ho]
                acc = acc + tap * w2[(i + 1) * 3 + (j + 1)]
        o_ref[0] = jnp.maximum(acc, 0.0)

    return kernel, (ho + 2 * ph, wo + 2 * pw, cout)


def cdblock_forward(x, p, dilation, stride):
    """CDBlock_1 on an NHWC activation; eval-mode BN folded into the convs."""
    if stride == 2:
        # 1x1 conv with stride 2 == spatial subsample followed by 1x1 conv.
        x = x[:, ::2, ::2, :]
    n, ho, wo, cin = x.shape
    cout = p['w1'].shape[1]

    # Fold eval-mode BatchNorm (eps = 1e-5, as in nn.BatchNorm2d).
    s1 = p['bn1_g'] / jnp.sqrt(p['bn1_v'] + 1e-5)
    b1 = p['bn1_b'] - p['bn1_m'] * s1
    w1 = (p['w1'] * s1[None, :]).astype(jnp.bfloat16)      # MXU operand
    s2 = p['bn2_g'] / jnp.sqrt(p['bn2_v'] + 1e-5)
    b2 = p['bn2_b'] - p['bn2_m'] * s2
    w2 = p['w2'].reshape(9, cout) * s2[None, :]

    kernel, buf_shape = _make_cdblock_kernel(ho, wo, cin, cout, dilation)
    return pl.pallas_call(
        kernel,
        out_shape=jax.ShapeDtypeStruct((n, ho, wo, cout), jnp.float32),
        grid=(n,),
        in_specs=[pl.BlockSpec((1, ho, wo, cin), lambda b: (b, 0, 0, 0)),
                  pl.BlockSpec((cin, cout), lambda b: (0, 0)),
                  pl.BlockSpec((1, cout), lambda b: (0, 0)),
                  pl.BlockSpec((9, cout), lambda b: (0, 0)),
                  pl.BlockSpec((1, cout), lambda b: (0, 0))],
        out_specs=pl.BlockSpec((1, ho, wo, cout), lambda b: (b, 0, 0, 0)),
        scratch_shapes=[pltpu.VMEM(buf_shape, jnp.float32)],
        compiler_params=pltpu.CompilerParams(dimension_semantics=("parallel",)),
    )(x, w1, b1.reshape(1, cout), w2, b2.reshape(1, cout))


# --------------------------- network glue ------------------------------------

_STAGE_CFG = {
    'stage4':  [(32, 48, 1, 2)],
    'stage8':  [(48, 128, 1, 2), (128, 128, 1, 1)],
    'stage16': [(128, 256, 1, 2), (256, 256, 2, 1), (256, 256, 4, 1)],
    'stage32': [(256, 256, 1, 2), (256, 256, 2, 1), (256, 256, 4, 1), (256, 256, 8, 1)],
}
_STAGE_TAG = [('stage4', '4'), ('stage8', '8'), ('stage16', '16'), ('stage32', '32')]


def lightseg_encoder_forward(x_nchw, params):
    x = stem_forward(x_nchw, params['stem'])               # NHWC from here on
    feats = {}
    for stage, tag in _STAGE_TAG:
        for p, (_, _, dil, stride) in zip(params[stage], _STAGE_CFG[stage]):
            x = cdblock_forward(x, p, dil, stride)
        feats[tag] = jnp.transpose(x, (0, 3, 1, 2))        # NHWC -> NCHW output
    return feats


# --------------------------- parameter init ----------------------------------

def init_params(key):
    keys = iter(jax.random.split(key, 128))

    def nxt():
        return next(keys)

    def w_init(shape, fan_in):
        return jax.random.normal(nxt(), shape, jnp.float32) * (1.0 / jnp.sqrt(fan_in))

    params = {
        'stem': {
            'w': w_init((9, 3, 32), 27.0),                 # (tap, cin, cout)
            'b': 0.1 * jax.random.normal(nxt(), (32,), jnp.float32),
        }
    }

    def bn_init(c, prefix):
        return {
            prefix + '_g': 1.0 + 0.1 * jax.random.normal(nxt(), (c,), jnp.float32),
            prefix + '_b': 0.1 * jax.random.normal(nxt(), (c,), jnp.float32),
            prefix + '_m': 0.1 * jax.random.normal(nxt(), (c,), jnp.float32),
            prefix + '_v': 1.0 + 0.1 * jnp.abs(jax.random.normal(nxt(), (c,), jnp.float32)),
        }

    def cd_params(cin, cout):
        p = {'w1': w_init((cin, cout), float(cin)),        # 1x1 conv, no bias
             'w2': w_init((3, 3, cout), 9.0)}              # depthwise 3x3, no bias
        p.update(bn_init(cout, 'bn1'))
        p.update(bn_init(cout, 'bn2'))
        return p

    for stage in ('stage4', 'stage8', 'stage16', 'stage32'):
        params[stage] = [cd_params(cin, cout) for (cin, cout, _, _) in _STAGE_CFG[stage]]
    return params


# --------------------------- main ---------------------------------------------

if __name__ == "__main__":
    pkey, xkey = jax.random.split(jax.random.PRNGKey(0))
    params = init_params(pkey)
    x = jax.random.normal(xkey, (2, 3, 32, 32), jnp.float32)   # NCHW, like PyTorch

    fwd = jax.jit(lambda inp: lightseg_encoder_forward(inp, params))
    outs = jax.block_until_ready(fwd(x))

    assert outs['4'].shape == (2, 48, 8, 8)
    assert outs['8'].shape == (2, 128, 4, 4)
    assert outs['16'].shape == (2, 256, 2, 2)
    assert outs['32'].shape == (2, 256, 1, 1)
    assert all(bool(jnp.all(jnp.isfinite(v))) for v in outs.values())
    print("KERNEL_OK")
</pallas_src>

<mosaic_0001>
module attributes {stable_mosaic.version = 11 : i64} {
  func.func @kernel(%arg0: i32, %arg1: memref<1x16x16x3xf32, #tpu.memory_space<vmem>>, %arg2: memref<1x16x16x3xf32, #tpu.memory_space<vmem>>, %arg3: memref<1x16x16x3xf32, #tpu.memory_space<vmem>>, %arg4: memref<1x16x16x3xf32, #tpu.memory_space<vmem>>, %arg5: memref<16x16x1xf32, #tpu.memory_space<vmem>>, %arg6: memref<9x3x32xf32, #tpu.memory_space<vmem>>, %arg7: memref<1x32xf32, #tpu.memory_space<vmem>>, %arg8: memref<1x16x16x32xf32, #tpu.memory_space<vmem>>, %arg9: memref<18x18x3xf32, #tpu.memory_space<vmem>>) attributes {dimension_semantics = [#tpu.dimension_semantics<parallel>], iteration_bounds = array<i64: 2>, scalar_prefetch = 0 : i64, scratch_operands = 1 : i64, tpu.core_type = #tpu.core_type<tc>, window_params = [{transform_indices = @transform_0, window_bounds = array<i64: 1, 16, 16, 3>}, {transform_indices = @transform_1, window_bounds = array<i64: 1, 16, 16, 3>}, {transform_indices = @transform_2, window_bounds = array<i64: 1, 16, 16, 3>}, {transform_indices = @transform_3, window_bounds = array<i64: 1, 16, 16, 3>}, {pipeline_mode = #tpu.pipeline_mode<synchronous>, transform_indices = @transform_4, window_bounds = array<i64: 16, 16, 1>}, {pipeline_mode = #tpu.pipeline_mode<synchronous>, transform_indices = @transform_5, window_bounds = array<i64: 9, 3, 32>}, {pipeline_mode = #tpu.pipeline_mode<synchronous>, transform_indices = @transform_6, window_bounds = array<i64: 1, 32>}, {transform_indices = @transform_7, window_bounds = array<i64: 1, 16, 16, 32>}]} {
    %c0 = arith.constant 0 : index
    %c0_0 = arith.constant 0 : index
    %c0_1 = arith.constant 0 : index
    %c0_2 = arith.constant 0 : index
    %0 = vector.load %arg1[%c0, %c0_0, %c0_1, %c0_2] : memref<1x16x16x3xf32, #tpu.memory_space<vmem>>, vector<1x16x16x3xf32>
    %1 = vector.shape_cast %0 : vector<1x16x16x3xf32> to vector<16x16x3xf32>
    %c0_3 = arith.constant 0 : index
    %c0_4 = arith.constant 0 : index
    %c0_5 = arith.constant 0 : index
    %c0_6 = arith.constant 0 : index
    %2 = vector.load %arg2[%c0_3, %c0_4, %c0_5, %c0_6] : memref<1x16x16x3xf32, #tpu.memory_space<vmem>>, vector<1x16x16x3xf32>
    %3 = vector.shape_cast %2 : vector<1x16x16x3xf32> to vector<16x16x3xf32>
    %4 = arith.addf %1, %3 : vector<16x16x3xf32>
    %c0_7 = arith.constant 0 : index
    %c0_8 = arith.constant 0 : index
    %c0_9 = arith.constant 0 : index
    %c0_10 = arith.constant 0 : index
    %5 = vector.load %arg3[%c0_7, %c0_8, %c0_9, %c0_10] : memref<1x16x16x3xf32, #tpu.memory_space<vmem>>, vector<1x16x16x3xf32>
    %6 = vector.shape_cast %5 : vector<1x16x16x3xf32> to vector<16x16x3xf32>
    %7 = arith.addf %4, %6 : vector<16x16x3xf32>
    %c0_11 = arith.constant 0 : index
    %c0_12 = arith.constant 0 : index
    %c0_13 = arith.constant 0 : index
    %c0_14 = arith.constant 0 : index
    %8 = vector.load %arg4[%c0_11, %c0_12, %c0_13, %c0_14] : memref<1x16x16x3xf32, #tpu.memory_space<vmem>>, vector<1x16x16x3xf32>
    %9 = vector.shape_cast %8 : vector<1x16x16x3xf32> to vector<16x16x3xf32>
    %10 = arith.addf %7, %9 : vector<16x16x3xf32>
    %c0_15 = arith.constant 0 : index
    %c0_16 = arith.constant 0 : index
    %c0_17 = arith.constant 0 : index
    %11 = vector.load %arg5[%c0_15, %c0_16, %c0_17] : memref<16x16x1xf32, #tpu.memory_space<vmem>>, vector<16x16x1xf32>
    %12 = vector.broadcast %11 : vector<16x16x1xf32> to vector<16x16x3xf32>
    %13 = arith.mulf %10, %12 : vector<16x16x3xf32>
    %cst = arith.constant 0.000000e+00 : f32
    %14 = vector.broadcast %cst : f32 to vector<18x18x3xf32>
    %c0_18 = arith.constant 0 : index
    %c0_19 = arith.constant 0 : index
    %c0_20 = arith.constant 0 : index
    %15 = vector.load %arg9[%c0_18, %c0_19, %c0_20] : memref<18x18x3xf32, #tpu.memory_space<vmem>>, vector<18x18x3xf32>
    tpu.vector_store %arg9[%c0_18, %c0_19, %c0_20], %14 {strides = array<i32>} : memref<18x18x3xf32, #tpu.memory_space<vmem>>, vector<18x18x3xf32>,
    %c1 = arith.constant 1 : index
    %c1_21 = arith.constant 1 : index
    %c0_22 = arith.constant 0 : index
    %16 = vector.load %arg9[%c1, %c1_21, %c0_22] : memref<18x18x3xf32, #tpu.memory_space<vmem>>, vector<16x16x3xf32>
    tpu.vector_store %arg9[%c1, %c1_21, %c0_22], %13 {strides = array<i32>} : memref<18x18x3xf32, #tpu.memory_space<vmem>>, vector<16x16x3xf32>,
    %c0_23 = arith.constant 0 : index
    %c0_24 = arith.constant 0 : index
    %c0_25 = arith.constant 0 : index
    %17 = vector.load %arg6[%c0_23, %c0_24, %c0_25] : memref<9x3x32xf32, #tpu.memory_space<vmem>>, vector<9x3x32xf32>
    %cst_26 = arith.constant 0.000000e+00 : f32
    %18 = vector.broadcast %cst_26 : f32 to vector<16x16x32xf32>
    %c0_27 = arith.constant 0 : index
    %c0_28 = arith.constant 0 : index
    %19 = vector.load %arg7[%c0_27, %c0_28] : memref<1x32xf32, #tpu.memory_space<vmem>>, vector<1x32xf32>
    %20 = vector.shape_cast %19 : vector<1x32xf32> to vector<1x1x32xf32>
    %21 = vector.broadcast %20 : vector<1x1x32xf32> to vector<16x16x32xf32>
    %22 = arith.addf %18, %21 : vector<16x16x32xf32>
    %c0_29 = arith.constant 0 : index
    %c0_30 = arith.constant 0 : index
    %c0_31 = arith.constant 0 : index
    %23 = vector.load %arg9[%c0_29, %c0_30, %c0_31] : memref<18x18x3xf32, #tpu.memory_space<vmem>>, vector<18x16x3xf32>
    %24 = vector.extract_strided_slice %23 {offsets = [0, 0, 0], sizes = [16, 16, 3], strides = [1, 1, 1]} : vector<18x16x3xf32> to vector<16x16x3xf32>
    %25 = vector.extract_strided_slice %24 {offsets = [0, 0, 0], sizes = [16, 16, 1], strides = [1, 1, 1]} : vector<16x16x3xf32> to vector<16x16x1xf32>
    %26 = vector.extract_strided_slice %17 {offsets = [0, 0, 0], sizes = [1, 1, 32], strides = [1, 1, 1]} : vector<9x3x32xf32> to vector<1x1x32xf32>
    %27 = vector.shape_cast %26 : vector<1x1x32xf32> to vector<32xf32>
    %28 = vector.shape_cast %27 : vector<32xf32> to vector<1x1x32xf32>
    %29 = vector.broadcast %25 : vector<16x16x1xf32> to vector<16x16x32xf32>
    %30 = vector.broadcast %28 : vector<1x1x32xf32> to vector<16x16x32xf32>
    %31 = arith.mulf %29, %30 : vector<16x16x32xf32>
    %32 = arith.addf %22, %31 : vector<16x16x32xf32>
    %33 = vector.extract_strided_slice %24 {offsets = [0, 0, 1], sizes = [16, 16, 1], strides = [1, 1, 1]} : vector<16x16x3xf32> to vector<16x16x1xf32>
    %34 = vector.extract_strided_slice %17 {offsets = [0, 1, 0], sizes = [1, 1, 32], strides = [1, 1, 1]} : vector<9x3x32xf32> to vector<1x1x32xf32>
    %35 = vector.shape_cast %34 : vector<1x1x32xf32> to vector<32xf32>
    %36 = vector.shape_cast %35 : vector<32xf32> to vector<1x1x32xf32>
    %37 = vector.broadcast %33 : vector<16x16x1xf32> to vector<16x16x32xf32>
    %38 = vector.broadcast %36 : vector<1x1x32xf32> to vector<16x16x32xf32>
    %39 = arith.mulf %37, %38 : vector<16x16x32xf32>
    %40 = arith.addf %32, %39 : vector<16x16x32xf32>
    %41 = vector.extract_strided_slice %24 {offsets = [0, 0, 2], sizes = [16, 16, 1], strides = [1, 1, 1]} : vector<16x16x3xf32> to vector<16x16x1xf32>
    %42 = vector.extract_strided_slice %17 {offsets = [0, 2, 0], sizes = [1, 1, 32], strides = [1, 1, 1]} : vector<9x3x32xf32> to vector<1x1x32xf32>
    %43 = vector.shape_cast %42 : vector<1x1x32xf32> to vector<32xf32>
    %44 = vector.shape_cast %43 : vector<32xf32> to vector<1x1x32xf32>
    %45 = vector.broadcast %41 : vector<16x16x1xf32> to vector<16x16x32xf32>
    %46 = vector.broadcast %44 : vector<1x1x32xf32> to vector<16x16x32xf32>
    %47 = arith.mulf %45, %46 : vector<16x16x32xf32>
    %48 = arith.addf %40, %47 : vector<16x16x32xf32>
    %49 = vector.extract_strided_slice %23 {offsets = [1, 0, 0], sizes = [16, 16, 3], strides = [1, 1, 1]} : vector<18x16x3xf32> to vector<16x16x3xf32>
    %50 = vector.extract_strided_slice %49 {offsets = [0, 0, 0], sizes = [16, 16, 1], strides = [1, 1, 1]} : vector<16x16x3xf32> to vector<16x16x1xf32>
    %51 = vector.extract_strided_slice %17 {offsets = [3, 0, 0], sizes = [1, 1, 32], strides = [1, 1, 1]} : vector<9x3x32xf32> to vector<1x1x32xf32>
    %52 = vector.shape_cast %51 : vector<1x1x32xf32> to vector<32xf32>
    %53 = vector.shape_cast %52 : vector<32xf32> to vector<1x1x32xf32>
    %54 = vector.broadcast %50 : vector<16x16x1xf32> to vector<16x16x32xf32>
    %55 = vector.broadcast %53 : vector<1x1x32xf32> to vector<16x16x32xf32>
    %56 = arith.mulf %54, %55 : vector<16x16x32xf32>
    %57 = arith.addf %48, %56 : vector<16x16x32xf32>
    %58 = vector.extract_strided_slice %49 {offsets = [0, 0, 1], sizes = [16, 16, 1], strides = [1, 1, 1]} : vector<16x16x3xf32> to vector<16x16x1xf32>
    %59 = vector.extract_strided_slice %17 {offsets = [3, 1, 0], sizes = [1, 1, 32], strides = [1, 1, 1]} : vector<9x3x32xf32> to vector<1x1x32xf32>
    %60 = vector.shape_cast %59 : vector<1x1x32xf32> to vector<32xf32>
    %61 = vector.shape_cast %60 : vector<32xf32> to vector<1x1x32xf32>
    %62 = vector.broadcast %58 : vector<16x16x1xf32> to vector<16x16x32xf32>
    %63 = vector.broadcast %61 : vector<1x1x32xf32> to vector<16x16x32xf32>
    %64 = arith.mulf %62, %63 : vector<16x16x32xf32>
    %65 = arith.addf %57, %64 : vector<16x16x32xf32>
    %66 = vector.extract_strided_slice %49 {offsets = [0, 0, 2], sizes = [16, 16, 1], strides = [1, 1, 1]} : vector<16x16x3xf32> to vector<16x16x1xf32>
    %67 = vector.extract_strided_slice %17 {offsets = [3, 2, 0], sizes = [1, 1, 32], strides = [1, 1, 1]} : vector<9x3x32xf32> to vector<1x1x32xf32>
    %68 = vector.shape_cast %67 : vector<1x1x32xf32> to vector<32xf32>
    %69 = vector.shape_cast %68 : vector<32xf32> to vector<1x1x32xf32>
    %70 = vector.broadcast %66 : vector<16x16x1xf32> to vector<16x16x32xf32>
    %71 = vector.broadcast %69 : vector<1x1x32xf32> to vector<16x16x32xf32>
    %72 = arith.mulf %70, %71 : vector<16x16x32xf32>
    %73 = arith.addf %65, %72 : vector<16x16x32xf32>
    %74 = vector.extract_strided_slice %23 {offsets = [2, 0, 0], sizes = [16, 16, 3], strides = [1, 1, 1]} : vector<18x16x3xf32> to vector<16x16x3xf32>
    %75 = vector.extract_strided_slice %74 {offsets = [0, 0, 0], sizes = [16, 16, 1], strides = [1, 1, 1]} : vector<16x16x3xf32> to vector<16x16x1xf32>
    %76 = vector.extract_strided_slice %17 {offsets = [6, 0, 0], sizes = [1, 1, 32], strides = [1, 1, 1]} : vector<9x3x32xf32> to vector<1x1x32xf32>
    %77 = vector.shape_cast %76 : vector<1x1x32xf32> to vector<32xf32>
    %78 = vector.shape_cast %77 : vector<32xf32> to vector<1x1x32xf32>
    %79 = vector.broadcast %75 : vector<16x16x1xf32> to vector<16x16x32xf32>
    %80 = vector.broadcast %78 : vector<1x1x32xf32> to vector<16x16x32xf32>
    %81 = arith.mulf %79, %80 : vector<16x16x32xf32>
    %82 = arith.addf %73, %81 : vector<16x16x32xf32>
    %83 = vector.extract_strided_slice %74 {offsets = [0, 0, 1], sizes = [16, 16, 1], strides = [1, 1, 1]} : vector<16x16x3xf32> to vector<16x16x1xf32>
    %84 = vector.extract_strided_slice %17 {offsets = [6, 1, 0], sizes = [1, 1, 32], strides = [1, 1, 1]} : vector<9x3x32xf32> to vector<1x1x32xf32>
    %85 = vector.shape_cast %84 : vector<1x1x32xf32> to vector<32xf32>
    %86 = vector.shape_cast %85 : vector<32xf32> to vector<1x1x32xf32>
    %87 = vector.broadcast %83 : vector<16x16x1xf32> to vector<16x16x32xf32>
    %88 = vector.broadcast %86 : vector<1x1x32xf32> to vector<16x16x32xf32>
    %89 = arith.mulf %87, %88 : vector<16x16x32xf32>
    %90 = arith.addf %82, %89 : vector<16x16x32xf32>
    %91 = vector.extract_strided_slice %74 {offsets = [0, 0, 2], sizes = [16, 16, 1], strides = [1, 1, 1]} : vector<16x16x3xf32> to vector<16x16x1xf32>
    %92 = vector.extract_strided_slice %17 {offsets = [6, 2, 0], sizes = [1, 1, 32], strides = [1, 1, 1]} : vector<9x3x32xf32> to vector<1x1x32xf32>
    %93 = vector.shape_cast %92 : vector<1x1x32xf32> to vector<32xf32>
    %94 = vector.shape_cast %93 : vector<32xf32> to vector<1x1x32xf32>
    %95 = vector.broadcast %91 : vector<16x16x1xf32> to vector<16x16x32xf32>
    %96 = vector.broadcast %94 : vector<1x1x32xf32> to vector<16x16x32xf32>
    %97 = arith.mulf %95, %96 : vector<16x16x32xf32>
    %98 = arith.addf %90, %97 : vector<16x16x32xf32>
    %c0_32 = arith.constant 0 : index
    %c1_33 = arith.constant 1 : index
    %c0_34 = arith.constant 0 : index
    %99 = vector.load %arg9[%c0_32, %c1_33, %c0_34] : memref<18x18x3xf32, #tpu.memory_space<vmem>>, vector<18x16x3xf32>
    %100 = vector.extract_strided_slice %99 {offsets = [0, 0, 0], sizes = [16, 16, 3], strides = [1, 1, 1]} : vector<18x16x3xf32> to vector<16x16x3xf32>
    %101 = vector.extract_strided_slice %100 {offsets = [0, 0, 0], sizes = [16, 16, 1], strides = [1, 1, 1]} : vector<16x16x3xf32> to vector<16x16x1xf32>
    %102 = vector.extract_strided_slice %17 {offsets = [1, 0, 0], sizes = [1, 1, 32], strides = [1, 1, 1]} : vector<9x3x32xf32> to vector<1x1x32xf32>
    %103 = vector.shape_cast %102 : vector<1x1x32xf32> to vector<32xf32>
    %104 = vector.shape_cast %103 : vector<32xf32> to vector<1x1x32xf32>
    %105 = vector.broadcast %101 : vector<16x16x1xf32> to vector<16x16x32xf32>
    %106 = vector.broadcast %104 : vector<1x1x32xf32> to vector<16x16x32xf32>
    %107 = arith.mulf %105, %106 : vector<16x16x32xf32>
    %108 = arith.addf %98, %107 : vector<16x16x32xf32>
    %109 = vector.extract_strided_slice %100 {offsets = [0, 0, 1], sizes = [16, 16, 1], strides = [1, 1, 1]} : vector<16x16x3xf32> to vector<16x16x1xf32>
    %110 = vector.extract_strided_slice %17 {offsets = [1, 1, 0], sizes = [1, 1, 32], strides = [1, 1, 1]} : vector<9x3x32xf32> to vector<1x1x32xf32>
    %111 = vector.shape_cast %110 : vector<1x1x32xf32> to vector<32xf32>
    %112 = vector.shape_cast %111 : vector<32xf32> to vector<1x1x32xf32>
    %113 = vector.broadcast %109 : vector<16x16x1xf32> to vector<16x16x32xf32>
    %114 = vector.broadcast %112 : vector<1x1x32xf32> to vector<16x16x32xf32>
    %115 = arith.mulf %113, %114 : vector<16x16x32xf32>
    %116 = arith.addf %108, %115 : vector<16x16x32xf32>
    %117 = vector.extract_strided_slice %100 {offsets = [0, 0, 2], sizes = [16, 16, 1], strides = [1, 1, 1]} : vector<16x16x3xf32> to vector<16x16x1xf32>
    %118 = vector.extract_strided_slice %17 {offsets = [1, 2, 0], sizes = [1, 1, 32], strides = [1, 1, 1]} : vector<9x3x32xf32> to vector<1x1x32xf32>
    %119 = vector.shape_cast %118 : vector<1x1x32xf32> to vector<32xf32>
    %120 = vector.shape_cast %119 : vector<32xf32> to vector<1x1x32xf32>
    %121 = vector.broadcast %117 : vector<16x16x1xf32> to vector<16x16x32xf32>
    %122 = vector.broadcast %120 : vector<1x1x32xf32> to vector<16x16x32xf32>
    %123 = arith.mulf %121, %122 : vector<16x16x32xf32>
    %124 = arith.addf %116, %123 : vector<16x16x32xf32>
    %125 = vector.extract_strided_slice %99 {offsets = [1, 0, 0], sizes = [16, 16, 3], strides = [1, 1, 1]} : vector<18x16x3xf32> to vector<16x16x3xf32>
    %126 = vector.extract_strided_slice %125 {offsets = [0, 0, 0], sizes = [16, 16, 1], strides = [1, 1, 1]} : vector<16x16x3xf32> to vector<16x16x1xf32>
    %127 = vector.extract_strided_slice %17 {offsets = [4, 0, 0], sizes = [1, 1, 32], strides = [1, 1, 1]} : vector<9x3x32xf32> to vector<1x1x32xf32>
    %128 = vector.shape_cast %127 : vector<1x1x32xf32> to vector<32xf32>
    %129 = vector.shape_cast %128 : vector<32xf32> to vector<1x1x32xf32>
    %130 = vector.broadcast %126 : vector<16x16x1xf32> to vector<16x16x32xf32>
    %131 = vector.broadcast %129 : vector<1x1x32xf32> to vector<16x16x32xf32>
    %132 = arith.mulf %130, %131 : vector<16x16x32xf32>
    %133 = arith.addf %124, %132 : vector<16x16x32xf32>
    %134 = vector.extract_strided_slice %125 {offsets = [0, 0, 1], sizes = [16, 16, 1], strides = [1, 1, 1]} : vector<16x16x3xf32> to vector<16x16x1xf32>
    %135 = vector.extract_strided_slice %17 {offsets = [4, 1, 0], sizes = [1, 1, 32], strides = [1, 1, 1]} : vector<9x3x32xf32> to vector<1x1x32xf32>
    %136 = vector.shape_cast %135 : vector<1x1x32xf32> to vector<32xf32>
    %137 = vector.shape_cast %136 : vector<32xf32> to vector<1x1x32xf32>
    %138 = vector.broadcast %134 : vector<16x16x1xf32> to vector<16x16x32xf32>
    %139 = vector.broadcast %137 : vector<1x1x32xf32> to vector<16x16x32xf32>
    %140 = arith.mulf %138, %139 : vector<16x16x32xf32>
    %141 = arith.addf %133, %140 : vector<16x16x32xf32>
    %142 = vector.extract_strided_slice %125 {offsets = [0, 0, 2], sizes = [16, 16, 1], strides = [1, 1, 1]} : vector<16x16x3xf32> to vector<16x16x1xf32>
    %143 = vector.extract_strided_slice %17 {offsets = [4, 2, 0], sizes = [1, 1, 32], strides = [1, 1, 1]} : vector<9x3x32xf32> to vector<1x1x32xf32>
    %144 = vector.shape_cast %143 : vector<1x1x32xf32> to vector<32xf32>
    %145 = vector.shape_cast %144 : vector<32xf32> to vector<1x1x32xf32>
    %146 = vector.broadcast %142 : vector<16x16x1xf32> to vector<16x16x32xf32>
    %147 = vector.broadcast %145 : vector<1x1x32xf32> to vector<16x16x32xf32>
    %148 = arith.mulf %146, %147 : vector<16x16x32xf32>
    %149 = arith.addf %141, %148 : vector<16x16x32xf32>
    %150 = vector.extract_strided_slice %99 {offsets = [2, 0, 0], sizes = [16, 16, 3], strides = [1, 1, 1]} : vector<18x16x3xf32> to vector<16x16x3xf32>
    %151 = vector.extract_strided_slice %150 {offsets = [0, 0, 0], sizes = [16, 16, 1], strides = [1, 1, 1]} : vector<16x16x3xf32> to vector<16x16x1xf32>
    %152 = vector.extract_strided_slice %17 {offsets = [7, 0, 0], sizes = [1, 1, 32], strides = [1, 1, 1]} : vector<9x3x32xf32> to vector<1x1x32xf32>
    %153 = vector.shape_cast %152 : vector<1x1x32xf32> to vector<32xf32>
    %154 = vector.shape_cast %153 : vector<32xf32> to vector<1x1x32xf32>
    %155 = vector.broadcast %151 : vector<16x16x1xf32> to vector<16x16x32xf32>
    %156 = vector.broadcast %154 : vector<1x1x32xf32> to vector<16x16x32xf32>
    %157 = arith.mulf %155, %156 : vector<16x16x32xf32>
    %158 = arith.addf %149, %157 : vector<16x16x32xf32>
    %159 = vector.extract_strided_slice %150 {offsets = [0, 0, 1], sizes = [16, 16, 1], strides = [1, 1, 1]} : vector<16x16x3xf32> to vector<16x16x1xf32>
    %160 = vector.extract_strided_slice %17 {offsets = [7, 1, 0], sizes = [1, 1, 32], strides = [1, 1, 1]} : vector<9x3x32xf32> to vector<1x1x32xf32>
    %161 = vector.shape_cast %160 : vector<1x1x32xf32> to vector<32xf32>
    %162 = vector.shape_cast %161 : vector<32xf32> to vector<1x1x32xf32>
    %163 = vector.broadcast %159 : vector<16x16x1xf32> to vector<16x16x32xf32>
    %164 = vector.broadcast %162 : vector<1x1x32xf32> to vector<16x16x32xf32>
    %165 = arith.mulf %163, %164 : vector<16x16x32xf32>
    %166 = arith.addf %158, %165 : vector<16x16x32xf32>
    %167 = vector.extract_strided_slice %150 {offsets = [0, 0, 2], sizes = [16, 16, 1], strides = [1, 1, 1]} : vector<16x16x3xf32> to vector<16x16x1xf32>
    %168 = vector.extract_strided_slice %17 {offsets = [7, 2, 0], sizes = [1, 1, 32], strides = [1, 1, 1]} : vector<9x3x32xf32> to vector<1x1x32xf32>
    %169 = vector.shape_cast %168 : vector<1x1x32xf32> to vector<32xf32>
    %170 = vector.shape_cast %169 : vector<32xf32> to vector<1x1x32xf32>
    %171 = vector.broadcast %167 : vector<16x16x1xf32> to vector<16x16x32xf32>
    %172 = vector.broadcast %170 : vector<1x1x32xf32> to vector<16x16x32xf32>
    %173 = arith.mulf %171, %172 : vector<16x16x32xf32>
    %174 = arith.addf %166, %173 : vector<16x16x32xf32>
    %c0_35 = arith.constant 0 : index
    %c2 = arith.constant 2 : index
    %c0_36 = arith.constant 0 : index
    %175 = vector.load %arg9[%c0_35, %c2, %c0_36] : memref<18x18x3xf32, #tpu.memory_space<vmem>>, vector<18x16x3xf32>
    %176 = vector.extract_strided_slice %175 {offsets = [0, 0, 0], sizes = [16, 16, 3], strides = [1, 1, 1]} : vector<18x16x3xf32> to vector<16x16x3xf32>
    %177 = vector.extract_strided_slice %176 {offsets = [0, 0, 0], sizes = [16, 16, 1], strides = [1, 1, 1]} : vector<16x16x3xf32> to vector<16x16x1xf32>
    %178 = vector.extract_strided_slice %17 {offsets = [2, 0, 0], sizes = [1, 1, 32], strides = [1, 1, 1]} : vector<9x3x32xf32> to vector<1x1x32xf32>
    %179 = vector.shape_cast %178 : vector<1x1x32xf32> to vector<32xf32>
    %180 = vector.shape_cast %179 : vector<32xf32> to vector<1x1x32xf32>
    %181 = vector.broadcast %177 : vector<16x16x1xf32> to vector<16x16x32xf32>
    %182 = vector.broadcast %180 : vector<1x1x32xf32> to vector<16x16x32xf32>
    %183 = arith.mulf %181, %182 : vector<16x16x32xf32>
    %184 = arith.addf %174, %183 : vector<16x16x32xf32>
    %185 = vector.extract_strided_slice %176 {offsets = [0, 0, 1], sizes = [16, 16, 1], strides = [1, 1, 1]} : vector<16x16x3xf32> to vector<16x16x1xf32>
    %186 = vector.extract_strided_slice %17 {offsets = [2, 1, 0], sizes = [1, 1, 32], strides = [1, 1, 1]} : vector<9x3x32xf32> to vector<1x1x32xf32>
    %187 = vector.shape_cast %186 : vector<1x1x32xf32> to vector<32xf32>
    %188 = vector.shape_cast %187 : vector<32xf32> to vector<1x1x32xf32>
    %189 = vector.broadcast %185 : vector<16x16x1xf32> to vector<16x16x32xf32>
    %190 = vector.broadcast %188 : vector<1x1x32xf32> to vector<16x16x32xf32>
    %191 = arith.mulf %189, %190 : vector<16x16x32xf32>
    %192 = arith.addf %184, %191 : vector<16x16x32xf32>
    %193 = vector.extract_strided_slice %176 {offsets = [0, 0, 2], sizes = [16, 16, 1], strides = [1, 1, 1]} : vector<16x16x3xf32> to vector<16x16x1xf32>
    %194 = vector.extract_strided_slice %17 {offsets = [2, 2, 0], sizes = [1, 1, 32], strides = [1, 1, 1]} : vector<9x3x32xf32> to vector<1x1x32xf32>
    %195 = vector.shape_cast %194 : vector<1x1x32xf32> to vector<32xf32>
    %196 = vector.shape_cast %195 : vector<32xf32> to vector<1x1x32xf32>
    %197 = vector.broadcast %193 : vector<16x16x1xf32> to vector<16x16x32xf32>
    %198 = vector.broadcast %196 : vector<1x1x32xf32> to vector<16x16x32xf32>
    %199 = arith.mulf %197, %198 : vector<16x16x32xf32>
    %200 = arith.addf %192, %199 : vector<16x16x32xf32>
    %201 = vector.extract_strided_slice %175 {offsets = [1, 0, 0], sizes = [16, 16, 3], strides = [1, 1, 1]} : vector<18x16x3xf32> to vector<16x16x3xf32>
    %202 = vector.extract_strided_slice %201 {offsets = [0, 0, 0], sizes = [16, 16, 1], strides = [1, 1, 1]} : vector<16x16x3xf32> to vector<16x16x1xf32>
    %203 = vector.extract_strided_slice %17 {offsets = [5, 0, 0], sizes = [1, 1, 32], strides = [1, 1, 1]} : vector<9x3x32xf32> to vector<1x1x32xf32>
    %204 = vector.shape_cast %203 : vector<1x1x32xf32> to vector<32xf32>
    %205 = vector.shape_cast %204 : vector<32xf32> to vector<1x1x32xf32>
    %206 = vector.broadcast %202 : vector<16x16x1xf32> to vector<16x16x32xf32>
    %207 = vector.broadcast %205 : vector<1x1x32xf32> to vector<16x16x32xf32>
    %208 = arith.mulf %206, %207 : vector<16x16x32xf32>
    %209 = arith.addf %200, %208 : vector<16x16x32xf32>
    %210 = vector.extract_strided_slice %201 {offsets = [0, 0, 1], sizes = [16, 16, 1], strides = [1, 1, 1]} : vector<16x16x3xf32> to vector<16x16x1xf32>
    %211 = vector.extract_strided_slice %17 {offsets = [5, 1, 0], sizes = [1, 1, 32], strides = [1, 1, 1]} : vector<9x3x32xf32> to vector<1x1x32xf32>
    %212 = vector.shape_cast %211 : vector<1x1x32xf32> to vector<32xf32>
    %213 = vector.shape_cast %212 : vector<32xf32> to vector<1x1x32xf32>
    %214 = vector.broadcast %210 : vector<16x16x1xf32> to vector<16x16x32xf32>
    %215 = vector.broadcast %213 : vector<1x1x32xf32> to vector<16x16x32xf32>
    %216 = arith.mulf %214, %215 : vector<16x16x32xf32>
    %217 = arith.addf %209, %216 : vector<16x16x32xf32>
    %218 = vector.extract_strided_slice %201 {offsets = [0, 0, 2], sizes = [16, 16, 1], strides = [1, 1, 1]} : vector<16x16x3xf32> to vector<16x16x1xf32>
    %219 = vector.extract_strided_slice %17 {offsets = [5, 2, 0], sizes = [1, 1, 32], strides = [1, 1, 1]} : vector<9x3x32xf32> to vector<1x1x32xf32>
    %220 = vector.shape_cast %219 : vector<1x1x32xf32> to vector<32xf32>
    %221 = vector.shape_cast %220 : vector<32xf32> to vector<1x1x32xf32>
    %222 = vector.broadcast %218 : vector<16x16x1xf32> to vector<16x16x32xf32>
    %223 = vector.broadcast %221 : vector<1x1x32xf32> to vector<16x16x32xf32>
    %224 = arith.mulf %222, %223 : vector<16x16x32xf32>
    %225 = arith.addf %217, %224 : vector<16x16x32xf32>
    %226 = vector.extract_strided_slice %175 {offsets = [2, 0, 0], sizes = [16, 16, 3], strides = [1, 1, 1]} : vector<18x16x3xf32> to vector<16x16x3xf32>
    %227 = vector.extract_strided_slice %226 {offsets = [0, 0, 0], sizes = [16, 16, 1], strides = [1, 1, 1]} : vector<16x16x3xf32> to vector<16x16x1xf32>
    %228 = vector.extract_strided_slice %17 {offsets = [8, 0, 0], sizes = [1, 1, 32], strides = [1, 1, 1]} : vector<9x3x32xf32> to vector<1x1x32xf32>
    %229 = vector.shape_cast %228 : vector<1x1x32xf32> to vector<32xf32>
    %230 = vector.shape_cast %229 : vector<32xf32> to vector<1x1x32xf32>
    %231 = vector.broadcast %227 : vector<16x16x1xf32> to vector<16x16x32xf32>
    %232 = vector.broadcast %230 : vector<1x1x32xf32> to vector<16x16x32xf32>
    %233 = arith.mulf %231, %232 : vector<16x16x32xf32>
    %234 = arith.addf %225, %233 : vector<16x16x32xf32>
    %235 = vector.extract_strided_slice %226 {offsets = [0, 0, 1], sizes = [16, 16, 1], strides = [1, 1, 1]} : vector<16x16x3xf32> to vector<16x16x1xf32>
    %236 = vector.extract_strided_slice %17 {offsets = [8, 1, 0], sizes = [1, 1, 32], strides = [1, 1, 1]} : vector<9x3x32xf32> to vector<1x1x32xf32>
    %237 = vector.shape_cast %236 : vector<1x1x32xf32> to vector<32xf32>
    %238 = vector.shape_cast %237 : vector<32xf32> to vector<1x1x32xf32>
    %239 = vector.broadcast %235 : vector<16x16x1xf32> to vector<16x16x32xf32>
    %240 = vector.broadcast %238 : vector<1x1x32xf32> to vector<16x16x32xf32>
    %241 = arith.mulf %239, %240 : vector<16x16x32xf32>
    %242 = arith.addf %234, %241 : vector<16x16x32xf32>
    %243 = vector.extract_strided_slice %226 {offsets = [0, 0, 2], sizes = [16, 16, 1], strides = [1, 1, 1]} : vector<16x16x3xf32> to vector<16x16x1xf32>
    %244 = vector.extract_strided_slice %17 {offsets = [8, 2, 0], sizes = [1, 1, 32], strides = [1, 1, 1]} : vector<9x3x32xf32> to vector<1x1x32xf32>
    %245 = vector.shape_cast %244 : vector<1x1x32xf32> to vector<32xf32>
    %246 = vector.shape_cast %245 : vector<32xf32> to vector<1x1x32xf32>
    %247 = vector.broadcast %243 : vector<16x16x1xf32> to vector<16x16x32xf32>
    %248 = vector.broadcast %246 : vector<1x1x32xf32> to vector<16x16x32xf32>
    %249 = arith.mulf %247, %248 : vector<16x16x32xf32>
    %250 = arith.addf %242, %249 : vector<16x16x32xf32>
    %cst_37 = arith.constant 0.000000e+00 : f32
    %251 = vector.broadcast %cst_37 : f32 to vector<16x16x32xf32>
    %252 = arith.maximumf %250, %251 : vector<16x16x32xf32>
    %c0_38 = arith.constant 0 : index
    %c0_39 = arith.constant 0 : index
    %c0_40 = arith.constant 0 : index
    %c0_41 = arith.constant 0 : index
    %253 = vector.load %arg8[%c0_38, %c0_39, %c0_40, %c0_41] : memref<1x16x16x32xf32, #tpu.memory_space<vmem>>, vector<1x16x16x32xf32>
    %254 = vector.shape_cast %253 : vector<1x16x16x32xf32> to vector<16x16x32xf32>
    %255 = vector.shape_cast %252 : vector<16x16x32xf32> to vector<1x16x16x32xf32>
    tpu.vector_store %arg8[%c0_38, %c0_39, %c0_40, %c0_41], %255 {strides = array<i32>} : memref<1x16x16x32xf32, #tpu.memory_space<vmem>>, vector<1x16x16x32xf32>,
    return
  }
  func.func @transform_0(%arg0: i32) -> (i32, i32, i32, i32) {
    %c0_i32 = arith.constant 0 : i32
    %c0_i32_0 = arith.constant 0 : i32
    %c0_i32_1 = arith.constant 0 : i32
    %c0_i32_2 = arith.constant 0 : i32
    return %arg0, %c0_i32, %c0_i32_0, %c0_i32_1 : i32, i32, i32, i32
  }
  func.func @transform_1(%arg0: i32) -> (i32, i32, i32, i32) {
    %c0_i32 = arith.constant 0 : i32
    %c0_i32_0 = arith.constant 0 : i32
    %c0_i32_1 = arith.constant 0 : i32
    %c0_i32_2 = arith.constant 0 : i32
    return %arg0, %c0_i32, %c0_i32_0, %c0_i32_1 : i32, i32, i32, i32
  }
  func.func @transform_2(%arg0: i32) -> (i32, i32, i32, i32) {
    %c0_i32 = arith.constant 0 : i32
    %c0_i32_0 = arith.constant 0 : i32
    %c0_i32_1 = arith.constant 0 : i32
    %c0_i32_2 = arith.constant 0 : i32
    return %arg0, %c0_i32, %c0_i32_0, %c0_i32_1 : i32, i32, i32, i32
  }
  func.func @transform_3(%arg0: i32) -> (i32, i32, i32, i32) {
    %c0_i32 = arith.constant 0 : i32
    %c0_i32_0 = arith.constant 0 : i32
    %c0_i32_1 = arith.constant 0 : i32
    %c0_i32_2 = arith.constant 0 : i32
    return %arg0, %c0_i32, %c0_i32_0, %c0_i32_1 : i32, i32, i32, i32
  }
  func.func @transform_4(%arg0: i32) -> (i32, i32, i32) {
    %c0_i32 = arith.constant 0 : i32
    %c0_i32_0 = arith.constant 0 : i32
    %c0_i32_1 = arith.constant 0 : i32
    %c0_i32_2 = arith.constant 0 : i32
    return %c0_i32, %c0_i32_0, %c0_i32_1 : i32, i32, i32
  }
  func.func @transform_5(%arg0: i32) -> (i32, i32, i32) {
    %c0_i32 = arith.constant 0 : i32
    %c0_i32_0 = arith.constant 0 : i32
    %c0_i32_1 = arith.constant 0 : i32
    %c0_i32_2 = arith.constant 0 : i32
    return %c0_i32, %c0_i32_0, %c0_i32_1 : i32, i32, i32
  }
  func.func @transform_6(%arg0: i32) -> (i32, i32) {
    %c0_i32 = arith.constant 0 : i32
    %c0_i32_0 = arith.constant 0 : i32
    %c0_i32_1 = arith.constant 0 : i32
    return %c0_i32, %c0_i32_0 : i32, i32
  }
  func.func @transform_7(%arg0: i32) -> (i32, i32, i32, i32) {
    %c0_i32 = arith.constant 0 : i32
    %c0_i32_0 = arith.constant 0 : i32
    %c0_i32_1 = arith.constant 0 : i32
    %c0_i32_2 = arith.constant 0 : i32
    return %arg0, %c0_i32, %c0_i32_0, %c0_i32_1 : i32, i32, i32, i32
  }
}

module attributes {stable_mosaic.version = 11 : i64} {
  func.func @kernel(%arg0: i32, %arg1: memref<1x8x8x32xf32, #tpu.memory_space<vmem>>, %arg2: memref<32x48xbf16, #tpu.memory_space<vmem>>, %arg3: memref<1x48xf32, #tpu.memory_space<vmem>>, %arg4: memref<9x48xf32, #tpu.memory_space<vmem>>, %arg5: memref<1x48xf32, #tpu.memory_space<vmem>>, %arg6: memref<1x8x8x48xf32, #tpu.memory_space<vmem>>, %arg7: memref<10x10x48xf32, #tpu.memory_space<vmem>>) attributes {dimension_semantics = [#tpu.dimension_semantics<parallel>], iteration_bounds = array<i64: 2>, scalar_prefetch = 0 : i64, scratch_operands = 1 : i64, tpu.core_type = #tpu.core_type<tc>, window_params = [{transform_indices = @transform_0, window_bounds = array<i64: 1, 8, 8, 32>}, {pipeline_mode = #tpu.pipeline_mode<synchronous>, transform_indices = @transform_1, window_bounds = array<i64: 32, 48>}, {pipeline_mode = #tpu.pipeline_mode<synchronous>, transform_indices = @transform_2, window_bounds = array<i64: 1, 48>}, {pipeline_mode = #tpu.pipeline_mode<synchronous>, transform_indices = @transform_3, window_bounds = array<i64: 9, 48>}, {pipeline_mode = #tpu.pipeline_mode<synchronous>, transform_indices = @transform_4, window_bounds = array<i64: 1, 48>}, {transform_indices = @transform_5, window_bounds = array<i64: 1, 8, 8, 48>}]} {
    %cst = arith.constant 0.000000e+00 : f32
    %0 = vector.broadcast %cst : f32 to vector<10x10x48xf32>
    %c0 = arith.constant 0 : index
    %c0_0 = arith.constant 0 : index
    %c0_1 = arith.constant 0 : index
    %1 = vector.load %arg7[%c0, %c0_0, %c0_1] : memref<10x10x48xf32, #tpu.memory_space<vmem>>, vector<10x10x48xf32>
    tpu.vector_store %arg7[%c0, %c0_0, %c0_1], %0 {strides = array<i32>} : memref<10x10x48xf32, #tpu.memory_space<vmem>>, vector<10x10x48xf32>,
    %c0_2 = arith.constant 0 : index
    %c0_3 = arith.constant 0 : index
    %c0_4 = arith.constant 0 : index
    %c0_5 = arith.constant 0 : index
    %2 = vector.load %arg1[%c0_2, %c0_3, %c0_4, %c0_5] : memref<1x8x8x32xf32, #tpu.memory_space<vmem>>, vector<1x8x8x32xf32>
    %3 = vector.shape_cast %2 : vector<1x8x8x32xf32> to vector<8x8x32xf32>
    %c0_6 = arith.constant 0 : index
    %c0_7 = arith.constant 0 : index
    %4 = vector.load %arg2[%c0_6, %c0_7] : memref<32x48xbf16, #tpu.memory_space<vmem>>, vector<32x48xbf16>
    %c0_8 = arith.constant 0 : index
    %c0_9 = arith.constant 0 : index
    %5 = vector.load %arg3[%c0_8, %c0_9] : memref<1x48xf32, #tpu.memory_space<vmem>>, vector<1x48xf32>
    %6 = vector.extract_strided_slice %3 {offsets = [0, 0, 0], sizes = [1, 8, 32], strides = [1, 1, 1]} : vector<8x8x32xf32> to vector<1x8x32xf32>
    %7 = vector.shape_cast %6 : vector<1x8x32xf32> to vector<8x32xf32>
    %8 = arith.truncf %7 : vector<8x32xf32> to vector<8x32xbf16>
    %cst_10 = arith.constant dense<0.000000e+00> : vector<8x48xf32>
    %9 = tpu.matmul %8, %4, %cst_10 {dimension_numbers = #tpu.dot_dimension_numbers<[1], [0], [0], [1], [0, 0, 1, 1], [], []>} : vector<8x32xbf16>, vector<32x48xbf16>, vector<8x48xf32> -> vector<8x48xf32>
    %10 = vector.broadcast %5 : vector<1x48xf32> to vector<8x48xf32>
    %11 = arith.addf %9, %10 : vector<8x48xf32>
    %cst_11 = arith.constant 0.000000e+00 : f32
    %12 = vector.broadcast %cst_11 : f32 to vector<8x48xf32>
    %13 = arith.maximumf %11, %12 : vector<8x48xf32>
    %c1 = arith.constant 1 : index
    %c1_12 = arith.constant 1 : index
    %c0_13 = arith.constant 0 : index
    %14 = vector.load %arg7[%c1, %c1_12, %c0_13] : memref<10x10x48xf32, #tpu.memory_space<vmem>>, vector<1x8x48xf32>
    %15 = vector.shape_cast %14 : vector<1x8x48xf32> to vector<8x48xf32>
    %16 = vector.shape_cast %13 : vector<8x48xf32> to vector<1x8x48xf32>
    tpu.vector_store %arg7[%c1, %c1_12, %c0_13], %16 {strides = array<i32>} : memref<10x10x48xf32, #tpu.memory_space<vmem>>, vector<1x8x48xf32>,
    %17 = vector.extract_strided_slice %3 {offsets = [1, 0, 0], sizes = [1, 8, 32], strides = [1, 1, 1]} : vector<8x8x32xf32> to vector<1x8x32xf32>
    %18 = vector.shape_cast %17 : vector<1x8x32xf32> to vector<8x32xf32>
    %19 = arith.truncf %18 : vector<8x32xf32> to vector<8x32xbf16>
    %cst_14 = arith.constant dense<0.000000e+00> : vector<8x48xf32>
    %20 = tpu.matmul %19, %4, %cst_14 {dimension_numbers = #tpu.dot_dimension_numbers<[1], [0], [0], [1], [0, 0, 1, 1], [], []>} : vector<8x32xbf16>, vector<32x48xbf16>, vector<8x48xf32> -> vector<8x48xf32>
    %21 = vector.broadcast %5 : vector<1x48xf32> to vector<8x48xf32>
    %22 = arith.addf %20, %21 : vector<8x48xf32>
    %cst_15 = arith.constant 0.000000e+00 : f32
    %23 = vector.broadcast %cst_15 : f32 to vector<8x48xf32>
    %24 = arith.maximumf %22, %23 : vector<8x48xf32>
    %c2 = arith.constant 2 : index
    %c1_16 = arith.constant 1 : index
    %c0_17 = arith.constant 0 : index
    %25 = vector.load %arg7[%c2, %c1_16, %c0_17] : memref<10x10x48xf32, #tpu.memory_space<vmem>>, vector<1x8x48xf32>
    %26 = vector.shape_cast %25 : vector<1x8x48xf32> to vector<8x48xf32>
    %27 = vector.shape_cast %24 : vector<8x48xf32> to vector<1x8x48xf32>
    tpu.vector_store %arg7[%c2, %c1_16, %c0_17], %27 {strides = array<i32>} : memref<10x10x48xf32, #tpu.memory_space<vmem>>, vector<1x8x48xf32>,
    %28 = vector.extract_strided_slice %3 {offsets = [2, 0, 0], sizes = [1, 8, 32], strides = [1, 1, 1]} : vector<8x8x32xf32> to vector<1x8x32xf32>
    %29 = vector.shape_cast %28 : vector<1x8x32xf32> to vector<8x32xf32>
    %30 = arith.truncf %29 : vector<8x32xf32> to vector<8x32xbf16>
    %cst_18 = arith.constant dense<0.000000e+00> : vector<8x48xf32>
    %31 = tpu.matmul %30, %4, %cst_18 {dimension_numbers = #tpu.dot_dimension_numbers<[1], [0], [0], [1], [0, 0, 1, 1], [], []>} : vector<8x32xbf16>, vector<32x48xbf16>, vector<8x48xf32> -> vector<8x48xf32>
    %32 = vector.broadcast %5 : vector<1x48xf32> to vector<8x48xf32>
    %33 = arith.addf %31, %32 : vector<8x48xf32>
    %cst_19 = arith.constant 0.000000e+00 : f32
    %34 = vector.broadcast %cst_19 : f32 to vector<8x48xf32>
    %35 = arith.maximumf %33, %34 : vector<8x48xf32>
    %c3 = arith.constant 3 : index
    %c1_20 = arith.constant 1 : index
    %c0_21 = arith.constant 0 : index
    %36 = vector.load %arg7[%c3, %c1_20, %c0_21] : memref<10x10x48xf32, #tpu.memory_space<vmem>>, vector<1x8x48xf32>
    %37 = vector.shape_cast %36 : vector<1x8x48xf32> to vector<8x48xf32>
    %38 = vector.shape_cast %35 : vector<8x48xf32> to vector<1x8x48xf32>
    tpu.vector_store %arg7[%c3, %c1_20, %c0_21], %38 {strides = array<i32>} : memref<10x10x48xf32, #tpu.memory_space<vmem>>, vector<1x8x48xf32>,
    %39 = vector.extract_strided_slice %3 {offsets = [3, 0, 0], sizes = [1, 8, 32], strides = [1, 1, 1]} : vector<8x8x32xf32> to vector<1x8x32xf32>
    %40 = vector.shape_cast %39 : vector<1x8x32xf32> to vector<8x32xf32>
    %41 = arith.truncf %40 : vector<8x32xf32> to vector<8x32xbf16>
    %cst_22 = arith.constant dense<0.000000e+00> : vector<8x48xf32>
    %42 = tpu.matmul %41, %4, %cst_22 {dimension_numbers = #tpu.dot_dimension_numbers<[1], [0], [0], [1], [0, 0, 1, 1], [], []>} : vector<8x32xbf16>, vector<32x48xbf16>, vector<8x48xf32> -> vector<8x48xf32>
    %43 = vector.broadcast %5 : vector<1x48xf32> to vector<8x48xf32>
    %44 = arith.addf %42, %43 : vector<8x48xf32>
    %cst_23 = arith.constant 0.000000e+00 : f32
    %45 = vector.broadcast %cst_23 : f32 to vector<8x48xf32>
    %46 = arith.maximumf %44, %45 : vector<8x48xf32>
    %c4 = arith.constant 4 : index
    %c1_24 = arith.constant 1 : index
    %c0_25 = arith.constant 0 : index
    %47 = vector.load %arg7[%c4, %c1_24, %c0_25] : memref<10x10x48xf32, #tpu.memory_space<vmem>>, vector<1x8x48xf32>
    %48 = vector.shape_cast %47 : vector<1x8x48xf32> to vector<8x48xf32>
    %49 = vector.shape_cast %46 : vector<8x48xf32> to vector<1x8x48xf32>
    tpu.vector_store %arg7[%c4, %c1_24, %c0_25], %49 {strides = array<i32>} : memref<10x10x48xf32, #tpu.memory_space<vmem>>, vector<1x8x48xf32>,
    %50 = vector.extract_strided_slice %3 {offsets = [4, 0, 0], sizes = [1, 8, 32], strides = [1, 1, 1]} : vector<8x8x32xf32> to vector<1x8x32xf32>
    %51 = vector.shape_cast %50 : vector<1x8x32xf32> to vector<8x32xf32>
    %52 = arith.truncf %51 : vector<8x32xf32> to vector<8x32xbf16>
    %cst_26 = arith.constant dense<0.000000e+00> : vector<8x48xf32>
    %53 = tpu.matmul %52, %4, %cst_26 {dimension_numbers = #tpu.dot_dimension_numbers<[1], [0], [0], [1], [0, 0, 1, 1], [], []>} : vector<8x32xbf16>, vector<32x48xbf16>, vector<8x48xf32> -> vector<8x48xf32>
    %54 = vector.broadcast %5 : vector<1x48xf32> to vector<8x48xf32>
    %55 = arith.addf %53, %54 : vector<8x48xf32>
    %cst_27 = arith.constant 0.000000e+00 : f32
    %56 = vector.broadcast %cst_27 : f32 to vector<8x48xf32>
    %57 = arith.maximumf %55, %56 : vector<8x48xf32>
    %c5 = arith.constant 5 : index
    %c1_28 = arith.constant 1 : index
    %c0_29 = arith.constant 0 : index
    %58 = vector.load %arg7[%c5, %c1_28, %c0_29] : memref<10x10x48xf32, #tpu.memory_space<vmem>>, vector<1x8x48xf32>
    %59 = vector.shape_cast %58 : vector<1x8x48xf32> to vector<8x48xf32>
    %60 = vector.shape_cast %57 : vector<8x48xf32> to vector<1x8x48xf32>
    tpu.vector_store %arg7[%c5, %c1_28, %c0_29], %60 {strides = array<i32>} : memref<10x10x48xf32, #tpu.memory_space<vmem>>, vector<1x8x48xf32>,
    %61 = vector.extract_strided_slice %3 {offsets = [5, 0, 0], sizes = [1, 8, 32], strides = [1, 1, 1]} : vector<8x8x32xf32> to vector<1x8x32xf32>
    %62 = vector.shape_cast %61 : vector<1x8x32xf32> to vector<8x32xf32>
    %63 = arith.truncf %62 : vector<8x32xf32> to vector<8x32xbf16>
    %cst_30 = arith.constant dense<0.000000e+00> : vector<8x48xf32>
    %64 = tpu.matmul %63, %4, %cst_30 {dimension_numbers = #tpu.dot_dimension_numbers<[1], [0], [0], [1], [0, 0, 1, 1], [], []>} : vector<8x32xbf16>, vector<32x48xbf16>, vector<8x48xf32> -> vector<8x48xf32>
    %65 = vector.broadcast %5 : vector<1x48xf32> to vector<8x48xf32>
    %66 = arith.addf %64, %65 : vector<8x48xf32>
    %cst_31 = arith.constant 0.000000e+00 : f32
    %67 = vector.broadcast %cst_31 : f32 to vector<8x48xf32>
    %68 = arith.maximumf %66, %67 : vector<8x48xf32>
    %c6 = arith.constant 6 : index
    %c1_32 = arith.constant 1 : index
    %c0_33 = arith.constant 0 : index
    %69 = vector.load %arg7[%c6, %c1_32, %c0_33] : memref<10x10x48xf32, #tpu.memory_space<vmem>>, vector<1x8x48xf32>
    %70 = vector.shape_cast %69 : vector<1x8x48xf32> to vector<8x48xf32>
    %71 = vector.shape_cast %68 : vector<8x48xf32> to vector<1x8x48xf32>
    tpu.vector_store %arg7[%c6, %c1_32, %c0_33], %71 {strides = array<i32>} : memref<10x10x48xf32, #tpu.memory_space<vmem>>, vector<1x8x48xf32>,
    %72 = vector.extract_strided_slice %3 {offsets = [6, 0, 0], sizes = [1, 8, 32], strides = [1, 1, 1]} : vector<8x8x32xf32> to vector<1x8x32xf32>
    %73 = vector.shape_cast %72 : vector<1x8x32xf32> to vector<8x32xf32>
    %74 = arith.truncf %73 : vector<8x32xf32> to vector<8x32xbf16>
    %cst_34 = arith.constant dense<0.000000e+00> : vector<8x48xf32>
    %75 = tpu.matmul %74, %4, %cst_34 {dimension_numbers = #tpu.dot_dimension_numbers<[1], [0], [0], [1], [0, 0, 1, 1], [], []>} : vector<8x32xbf16>, vector<32x48xbf16>, vector<8x48xf32> -> vector<8x48xf32>
    %76 = vector.broadcast %5 : vector<1x48xf32> to vector<8x48xf32>
    %77 = arith.addf %75, %76 : vector<8x48xf32>
    %cst_35 = arith.constant 0.000000e+00 : f32
    %78 = vector.broadcast %cst_35 : f32 to vector<8x48xf32>
    %79 = arith.maximumf %77, %78 : vector<8x48xf32>
    %c7 = arith.constant 7 : index
    %c1_36 = arith.constant 1 : index
    %c0_37 = arith.constant 0 : index
    %80 = vector.load %arg7[%c7, %c1_36, %c0_37] : memref<10x10x48xf32, #tpu.memory_space<vmem>>, vector<1x8x48xf32>
    %81 = vector.shape_cast %80 : vector<1x8x48xf32> to vector<8x48xf32>
    %82 = vector.shape_cast %79 : vector<8x48xf32> to vector<1x8x48xf32>
    tpu.vector_store %arg7[%c7, %c1_36, %c0_37], %82 {strides = array<i32>} : memref<10x10x48xf32, #tpu.memory_space<vmem>>, vector<1x8x48xf32>,
    %83 = vector.extract_strided_slice %3 {offsets = [7, 0, 0], sizes = [1, 8, 32], strides = [1, 1, 1]} : vector<8x8x32xf32> to vector<1x8x32xf32>
    %84 = vector.shape_cast %83 : vector<1x8x32xf32> to vector<8x32xf32>
    %85 = arith.truncf %84 : vector<8x32xf32> to vector<8x32xbf16>
    %cst_38 = arith.constant dense<0.000000e+00> : vector<8x48xf32>
    %86 = tpu.matmul %85, %4, %cst_38 {dimension_numbers = #tpu.dot_dimension_numbers<[1], [0], [0], [1], [0, 0, 1, 1], [], []>} : vector<8x32xbf16>, vector<32x48xbf16>, vector<8x48xf32> -> vector<8x48xf32>
    %87 = vector.broadcast %5 : vector<1x48xf32> to vector<8x48xf32>
    %88 = arith.addf %86, %87 : vector<8x48xf32>
    %cst_39 = arith.constant 0.000000e+00 : f32
    %89 = vector.broadcast %cst_39 : f32 to vector<8x48xf32>
    %90 = arith.maximumf %88, %89 : vector<8x48xf32>
    %c8 = arith.constant 8 : index
    %c1_40 = arith.constant 1 : index
    %c0_41 = arith.constant 0 : index
    %91 = vector.load %arg7[%c8, %c1_40, %c0_41] : memref<10x10x48xf32, #tpu.memory_space<vmem>>, vector<1x8x48xf32>
    %92 = vector.shape_cast %91 : vector<1x8x48xf32> to vector<8x48xf32>
    %93 = vector.shape_cast %90 : vector<8x48xf32> to vector<1x8x48xf32>
    tpu.vector_store %arg7[%c8, %c1_40, %c0_41], %93 {strides = array<i32>} : memref<10x10x48xf32, #tpu.memory_space<vmem>>, vector<1x8x48xf32>,
    %c0_42 = arith.constant 0 : index
    %c0_43 = arith.constant 0 : index
    %94 = vector.load %arg4[%c0_42, %c0_43] : memref<9x48xf32, #tpu.memory_space<vmem>>, vector<9x48xf32>
    %cst_44 = arith.constant 0.000000e+00 : f32
    %95 = vector.broadcast %cst_44 : f32 to vector<8x8x48xf32>
    %c0_45 = arith.constant 0 : index
    %c0_46 = arith.constant 0 : index
    %96 = vector.load %arg5[%c0_45, %c0_46] : memref<1x48xf32, #tpu.memory_space<vmem>>, vector<1x48xf32>
    %97 = vector.shape_cast %96 : vector<1x48xf32> to vector<1x1x48xf32>
    %98 = vector.broadcast %97 : vector<1x1x48xf32> to vector<8x8x48xf32>
    %99 = arith.addf %95, %98 : vector<8x8x48xf32>
    %c0_47 = arith.constant 0 : index
    %c0_48 = arith.constant 0 : index
    %c0_49 = arith.constant 0 : index
    %100 = vector.load %arg7[%c0_47, %c0_48, %c0_49] : memref<10x10x48xf32, #tpu.memory_space<vmem>>, vector<10x8x48xf32>
    %101 = vector.extract_strided_slice %100 {offsets = [0, 0, 0], sizes = [8, 8, 48], strides = [1, 1, 1]} : vector<10x8x48xf32> to vector<8x8x48xf32>
    %102 = vector.extract_strided_slice %94 {offsets = [0, 0], sizes = [1, 48], strides = [1, 1]} : vector<9x48xf32> to vector<1x48xf32>
    %103 = vector.shape_cast %102 : vector<1x48xf32> to vector<48xf32>
    %104 = vector.shape_cast %103 : vector<48xf32> to vector<1x1x48xf32>
    %105 = vector.broadcast %104 : vector<1x1x48xf32> to vector<8x8x48xf32>
    %106 = arith.mulf %101, %105 : vector<8x8x48xf32>
    %107 = arith.addf %99, %106 : vector<8x8x48xf32>
    %108 = vector.extract_strided_slice %100 {offsets = [1, 0, 0], sizes = [8, 8, 48], strides = [1, 1, 1]} : vector<10x8x48xf32> to vector<8x8x48xf32>
    %109 = vector.extract_strided_slice %94 {offsets = [3, 0], sizes = [1, 48], strides = [1, 1]} : vector<9x48xf32> to vector<1x48xf32>
    %110 = vector.shape_cast %109 : vector<1x48xf32> to vector<48xf32>
    %111 = vector.shape_cast %110 : vector<48xf32> to vector<1x1x48xf32>
    %112 = vector.broadcast %111 : vector<1x1x48xf32> to vector<8x8x48xf32>
    %113 = arith.mulf %108, %112 : vector<8x8x48xf32>
    %114 = arith.addf %107, %113 : vector<8x8x48xf32>
    %115 = vector.extract_strided_slice %100 {offsets = [2, 0, 0], sizes = [8, 8, 48], strides = [1, 1, 1]} : vector<10x8x48xf32> to vector<8x8x48xf32>
    %116 = vector.extract_strided_slice %94 {offsets = [6, 0], sizes = [1, 48], strides = [1, 1]} : vector<9x48xf32> to vector<1x48xf32>
    %117 = vector.shape_cast %116 : vector<1x48xf32> to vector<48xf32>
    %118 = vector.shape_cast %117 : vector<48xf32> to vector<1x1x48xf32>
    %119 = vector.broadcast %118 : vector<1x1x48xf32> to vector<8x8x48xf32>
    %120 = arith.mulf %115, %119 : vector<8x8x48xf32>
    %121 = arith.addf %114, %120 : vector<8x8x48xf32>
    %c0_50 = arith.constant 0 : index
    %c1_51 = arith.constant 1 : index
    %c0_52 = arith.constant 0 : index
    %122 = vector.load %arg7[%c0_50, %c1_51, %c0_52] : memref<10x10x48xf32, #tpu.memory_space<vmem>>, vector<10x8x48xf32>
    %123 = vector.extract_strided_slice %122 {offsets = [0, 0, 0], sizes = [8, 8, 48], strides = [1, 1, 1]} : vector<10x8x48xf32> to vector<8x8x48xf32>
    %124 = vector.extract_strided_slice %94 {offsets = [1, 0], sizes = [1, 48], strides = [1, 1]} : vector<9x48xf32> to vector<1x48xf32>
    %125 = vector.shape_cast %124 : vector<1x48xf32> to vector<48xf32>
    %126 = vector.shape_cast %125 : vector<48xf32> to vector<1x1x48xf32>
    %127 = vector.broadcast %126 : vector<1x1x48xf32> to vector<8x8x48xf32>
    %128 = arith.mulf %123, %127 : vector<8x8x48xf32>
    %129 = arith.addf %121, %128 : vector<8x8x48xf32>
    %130 = vector.extract_strided_slice %122 {offsets = [1, 0, 0], sizes = [8, 8, 48], strides = [1, 1, 1]} : vector<10x8x48xf32> to vector<8x8x48xf32>
    %131 = vector.extract_strided_slice %94 {offsets = [4, 0], sizes = [1, 48], strides = [1, 1]} : vector<9x48xf32> to vector<1x48xf32>
    %132 = vector.shape_cast %131 : vector<1x48xf32> to vector<48xf32>
    %133 = vector.shape_cast %132 : vector<48xf32> to vector<1x1x48xf32>
    %134 = vector.broadcast %133 : vector<1x1x48xf32> to vector<8x8x48xf32>
    %135 = arith.mulf %130, %134 : vector<8x8x48xf32>
    %136 = arith.addf %129, %135 : vector<8x8x48xf32>
    %137 = vector.extract_strided_slice %122 {offsets = [2, 0, 0], sizes = [8, 8, 48], strides = [1, 1, 1]} : vector<10x8x48xf32> to vector<8x8x48xf32>
    %138 = vector.extract_strided_slice %94 {offsets = [7, 0], sizes = [1, 48], strides = [1, 1]} : vector<9x48xf32> to vector<1x48xf32>
    %139 = vector.shape_cast %138 : vector<1x48xf32> to vector<48xf32>
    %140 = vector.shape_cast %139 : vector<48xf32> to vector<1x1x48xf32>
    %141 = vector.broadcast %140 : vector<1x1x48xf32> to vector<8x8x48xf32>
    %142 = arith.mulf %137, %141 : vector<8x8x48xf32>
    %143 = arith.addf %136, %142 : vector<8x8x48xf32>
    %c0_53 = arith.constant 0 : index
    %c2_54 = arith.constant 2 : index
    %c0_55 = arith.constant 0 : index
    %144 = vector.load %arg7[%c0_53, %c2_54, %c0_55] : memref<10x10x48xf32, #tpu.memory_space<vmem>>, vector<10x8x48xf32>
    %145 = vector.extract_strided_slice %144 {offsets = [0, 0, 0], sizes = [8, 8, 48], strides = [1, 1, 1]} : vector<10x8x48xf32> to vector<8x8x48xf32>
    %146 = vector.extract_strided_slice %94 {offsets = [2, 0], sizes = [1, 48], strides = [1, 1]} : vector<9x48xf32> to vector<1x48xf32>
    %147 = vector.shape_cast %146 : vector<1x48xf32> to vector<48xf32>
    %148 = vector.shape_cast %147 : vector<48xf32> to vector<1x1x48xf32>
    %149 = vector.broadcast %148 : vector<1x1x48xf32> to vector<8x8x48xf32>
    %150 = arith.mulf %145, %149 : vector<8x8x48xf32>
    %151 = arith.addf %143, %150 : vector<8x8x48xf32>
    %152 = vector.extract_strided_slice %144 {offsets = [1, 0, 0], sizes = [8, 8, 48], strides = [1, 1, 1]} : vector<10x8x48xf32> to vector<8x8x48xf32>
    %153 = vector.extract_strided_slice %94 {offsets = [5, 0], sizes = [1, 48], strides = [1, 1]} : vector<9x48xf32> to vector<1x48xf32>
    %154 = vector.shape_cast %153 : vector<1x48xf32> to vector<48xf32>
    %155 = vector.shape_cast %154 : vector<48xf32> to vector<1x1x48xf32>
    %156 = vector.broadcast %155 : vector<1x1x48xf32> to vector<8x8x48xf32>
    %157 = arith.mulf %152, %156 : vector<8x8x48xf32>
    %158 = arith.addf %151, %157 : vector<8x8x48xf32>
    %159 = vector.extract_strided_slice %144 {offsets = [2, 0, 0], sizes = [8, 8, 48], strides = [1, 1, 1]} : vector<10x8x48xf32> to vector<8x8x48xf32>
    %160 = vector.extract_strided_slice %94 {offsets = [8, 0], sizes = [1, 48], strides = [1, 1]} : vector<9x48xf32> to vector<1x48xf32>
    %161 = vector.shape_cast %160 : vector<1x48xf32> to vector<48xf32>
    %162 = vector.shape_cast %161 : vector<48xf32> to vector<1x1x48xf32>
    %163 = vector.broadcast %162 : vector<1x1x48xf32> to vector<8x8x48xf32>
    %164 = arith.mulf %159, %163 : vector<8x8x48xf32>
    %165 = arith.addf %158, %164 : vector<8x8x48xf32>
    %cst_56 = arith.constant 0.000000e+00 : f32
    %166 = vector.broadcast %cst_56 : f32 to vector<8x8x48xf32>
    %167 = arith.maximumf %165, %166 : vector<8x8x48xf32>
    %c0_57 = arith.constant 0 : index
    %c0_58 = arith.constant 0 : index
    %c0_59 = arith.constant 0 : index
    %c0_60 = arith.constant 0 : index
    %168 = vector.load %arg6[%c0_57, %c0_58, %c0_59, %c0_60] : memref<1x8x8x48xf32, #tpu.memory_space<vmem>>, vector<1x8x8x48xf32>
    %169 = vector.shape_cast %168 : vector<1x8x8x48xf32> to vector<8x8x48xf32>
    %170 = vector.shape_cast %167 : vector<8x8x48xf32> to vector<1x8x8x48xf32>
    tpu.vector_store %arg6[%c0_57, %c0_58, %c0_59, %c0_60], %170 {strides = array<i32>} : memref<1x8x8x48xf32, #tpu.memory_space<vmem>>, vector<1x8x8x48xf32>,
    return
  }
  func.func @transform_0(%arg0: i32) -> (i32, i32, i32, i32) {
    %c0_i32 = arith.constant 0 : i32
    %c0_i32_0 = arith.constant 0 : i32
    %c0_i32_1 = arith.constant 0 : i32
    %c0_i32_2 = arith.constant 0 : i32
    return %arg0, %c0_i32, %c0_i32_0, %c0_i32_1 : i32, i32, i32, i32
  }
  func.func @transform_1(%arg0: i32) -> (i32, i32) {
    %c0_i32 = arith.constant 0 : i32
    %c0_i32_0 = arith.constant 0 : i32
    %c0_i32_1 = arith.constant 0 : i32
    return %c0_i32, %c0_i32_0 : i32, i32
  }
  func.func @transform_2(%arg0: i32) -> (i32, i32) {
    %c0_i32 = arith.constant 0 : i32
    %c0_i32_0 = arith.constant 0 : i32
    %c0_i32_1 = arith.constant 0 : i32
    return %c0_i32, %c0_i32_0 : i32, i32
  }
  func.func @transform_3(%arg0: i32) -> (i32, i32) {
    %c0_i32 = arith.constant 0 : i32
    %c0_i32_0 = arith.constant 0 : i32
    %c0_i32_1 = arith.constant 0 : i32
    return %c0_i32, %c0_i32_0 : i32, i32
  }
  func.func @transform_4(%arg0: i32) -> (i32, i32) {
    %c0_i32 = arith.constant 0 : i32
    %c0_i32_0 = arith.constant 0 : i32
    %c0_i32_1 = arith.constant 0 : i32
    return %c0_i32, %c0_i32_0 : i32, i32
  }
  func.func @transform_5(%arg0: i32) -> (i32, i32, i32, i32) {
    %c0_i32 = arith.constant 0 : i32
    %c0_i32_0 = arith.constant 0 : i32
    %c0_i32_1 = arith.constant 0 : i32
    %c0_i32_2 = arith.constant 0 : i32
    return %arg0, %c0_i32, %c0_i32_0, %c0_i32_1 : i32, i32, i32, i32
  }
}

module attributes {stable_mosaic.version = 11 : i64} {
  func.func @kernel(%arg0: i32, %arg1: memref<1x4x4x48xf32, #tpu.memory_space<vmem>>, %arg2: memref<48x128xbf16, #tpu.memory_space<vmem>>, %arg3: memref<1x128xf32, #tpu.memory_space<vmem>>, %arg4: memref<9x128xf32, #tpu.memory_space<vmem>>, %arg5: memref<1x128xf32, #tpu.memory_space<vmem>>, %arg6: memref<1x4x4x128xf32, #tpu.memory_space<vmem>>, %arg7: memref<6x6x128xf32, #tpu.memory_space<vmem>>) attributes {dimension_semantics = [#tpu.dimension_semantics<parallel>], iteration_bounds = array<i64: 2>, scalar_prefetch = 0 : i64, scratch_operands = 1 : i64, tpu.core_type = #tpu.core_type<tc>, window_params = [{transform_indices = @transform_0, window_bounds = array<i64: 1, 4, 4, 48>}, {pipeline_mode = #tpu.pipeline_mode<synchronous>, transform_indices = @transform_1, window_bounds = array<i64: 48, 128>}, {pipeline_mode = #tpu.pipeline_mode<synchronous>, transform_indices = @transform_2, window_bounds = array<i64: 1, 128>}, {pipeline_mode = #tpu.pipeline_mode<synchronous>, transform_indices = @transform_3, window_bounds = array<i64: 9, 128>}, {pipeline_mode = #tpu.pipeline_mode<synchronous>, transform_indices = @transform_4, window_bounds = array<i64: 1, 128>}, {transform_indices = @transform_5, window_bounds = array<i64: 1, 4, 4, 128>}]} {
    %cst = arith.constant 0.000000e+00 : f32
    %0 = vector.broadcast %cst : f32 to vector<6x6x128xf32>
    %c0 = arith.constant 0 : index
    %c0_0 = arith.constant 0 : index
    %c0_1 = arith.constant 0 : index
    %1 = vector.load %arg7[%c0, %c0_0, %c0_1] : memref<6x6x128xf32, #tpu.memory_space<vmem>>, vector<6x6x128xf32>
    tpu.vector_store %arg7[%c0, %c0_0, %c0_1], %0 {strides = array<i32>} : memref<6x6x128xf32, #tpu.memory_space<vmem>>, vector<6x6x128xf32>,
    %c0_2 = arith.constant 0 : index
    %c0_3 = arith.constant 0 : index
    %c0_4 = arith.constant 0 : index
    %c0_5 = arith.constant 0 : index
    %2 = vector.load %arg1[%c0_2, %c0_3, %c0_4, %c0_5] : memref<1x4x4x48xf32, #tpu.memory_space<vmem>>, vector<1x4x4x48xf32>
    %3 = vector.shape_cast %2 : vector<1x4x4x48xf32> to vector<4x4x48xf32>
    %c0_6 = arith.constant 0 : index
    %c0_7 = arith.constant 0 : index
    %4 = vector.load %arg2[%c0_6, %c0_7] : memref<48x128xbf16, #tpu.memory_space<vmem>>, vector<48x128xbf16>
    %c0_8 = arith.constant 0 : index
    %c0_9 = arith.constant 0 : index
    %5 = vector.load %arg3[%c0_8, %c0_9] : memref<1x128xf32, #tpu.memory_space<vmem>>, vector<1x128xf32>
    %6 = vector.extract_strided_slice %3 {offsets = [0, 0, 0], sizes = [1, 4, 48], strides = [1, 1, 1]} : vector<4x4x48xf32> to vector<1x4x48xf32>
    %7 = vector.shape_cast %6 : vector<1x4x48xf32> to vector<4x48xf32>
    %8 = arith.truncf %7 : vector<4x48xf32> to vector<4x48xbf16>
    %cst_10 = arith.constant dense<0.000000e+00> : vector<4x128xf32>
    %9 = tpu.matmul %8, %4, %cst_10 {dimension_numbers = #tpu.dot_dimension_numbers<[1], [0], [0], [1], [0, 0, 1, 1], [], []>} : vector<4x48xbf16>, vector<48x128xbf16>, vector<4x128xf32> -> vector<4x128xf32>
    %10 = vector.broadcast %5 : vector<1x128xf32> to vector<4x128xf32>
    %11 = arith.addf %9, %10 : vector<4x128xf32>
    %cst_11 = arith.constant 0.000000e+00 : f32
    %12 = vector.broadcast %cst_11 : f32 to vector<4x128xf32>
    %13 = arith.maximumf %11, %12 : vector<4x128xf32>
    %c1 = arith.constant 1 : index
    %c1_12 = arith.constant 1 : index
    %c0_13 = arith.constant 0 : index
    %14 = vector.load %arg7[%c1, %c1_12, %c0_13] : memref<6x6x128xf32, #tpu.memory_space<vmem>>, vector<1x4x128xf32>
    %15 = vector.shape_cast %14 : vector<1x4x128xf32> to vector<4x128xf32>
    %16 = vector.shape_cast %13 : vector<4x128xf32> to vector<1x4x128xf32>
    tpu.vector_store %arg7[%c1, %c1_12, %c0_13], %16 {strides = array<i32>} : memref<6x6x128xf32, #tpu.memory_space<vmem>>, vector<1x4x128xf32>,
    %17 = vector.extract_strided_slice %3 {offsets = [1, 0, 0], sizes = [1, 4, 48], strides = [1, 1, 1]} : vector<4x4x48xf32> to vector<1x4x48xf32>
    %18 = vector.shape_cast %17 : vector<1x4x48xf32> to vector<4x48xf32>
    %19 = arith.truncf %18 : vector<4x48xf32> to vector<4x48xbf16>
    %cst_14 = arith.constant dense<0.000000e+00> : vector<4x128xf32>
    %20 = tpu.matmul %19, %4, %cst_14 {dimension_numbers = #tpu.dot_dimension_numbers<[1], [0], [0], [1], [0, 0, 1, 1], [], []>} : vector<4x48xbf16>, vector<48x128xbf16>, vector<4x128xf32> -> vector<4x128xf32>
    %21 = vector.broadcast %5 : vector<1x128xf32> to vector<4x128xf32>
    %22 = arith.addf %20, %21 : vector<4x128xf32>
    %cst_15 = arith.constant 0.000000e+00 : f32
    %23 = vector.broadcast %cst_15 : f32 to vector<4x128xf32>
    %24 = arith.maximumf %22, %23 : vector<4x128xf32>
    %c2 = arith.constant 2 : index
    %c1_16 = arith.constant 1 : index
    %c0_17 = arith.constant 0 : index
    %25 = vector.load %arg7[%c2, %c1_16, %c0_17] : memref<6x6x128xf32, #tpu.memory_space<vmem>>, vector<1x4x128xf32>
    %26 = vector.shape_cast %25 : vector<1x4x128xf32> to vector<4x128xf32>
    %27 = vector.shape_cast %24 : vector<4x128xf32> to vector<1x4x128xf32>
    tpu.vector_store %arg7[%c2, %c1_16, %c0_17], %27 {strides = array<i32>} : memref<6x6x128xf32, #tpu.memory_space<vmem>>, vector<1x4x128xf32>,
    %28 = vector.extract_strided_slice %3 {offsets = [2, 0, 0], sizes = [1, 4, 48], strides = [1, 1, 1]} : vector<4x4x48xf32> to vector<1x4x48xf32>
    %29 = vector.shape_cast %28 : vector<1x4x48xf32> to vector<4x48xf32>
    %30 = arith.truncf %29 : vector<4x48xf32> to vector<4x48xbf16>
    %cst_18 = arith.constant dense<0.000000e+00> : vector<4x128xf32>
    %31 = tpu.matmul %30, %4, %cst_18 {dimension_numbers = #tpu.dot_dimension_numbers<[1], [0], [0], [1], [0, 0, 1, 1], [], []>} : vector<4x48xbf16>, vector<48x128xbf16>, vector<4x128xf32> -> vector<4x128xf32>
    %32 = vector.broadcast %5 : vector<1x128xf32> to vector<4x128xf32>
    %33 = arith.addf %31, %32 : vector<4x128xf32>
    %cst_19 = arith.constant 0.000000e+00 : f32
    %34 = vector.broadcast %cst_19 : f32 to vector<4x128xf32>
    %35 = arith.maximumf %33, %34 : vector<4x128xf32>
    %c3 = arith.constant 3 : index
    %c1_20 = arith.constant 1 : index
    %c0_21 = arith.constant 0 : index
    %36 = vector.load %arg7[%c3, %c1_20, %c0_21] : memref<6x6x128xf32, #tpu.memory_space<vmem>>, vector<1x4x128xf32>
    %37 = vector.shape_cast %36 : vector<1x4x128xf32> to vector<4x128xf32>
    %38 = vector.shape_cast %35 : vector<4x128xf32> to vector<1x4x128xf32>
    tpu.vector_store %arg7[%c3, %c1_20, %c0_21], %38 {strides = array<i32>} : memref<6x6x128xf32, #tpu.memory_space<vmem>>, vector<1x4x128xf32>,
    %39 = vector.extract_strided_slice %3 {offsets = [3, 0, 0], sizes = [1, 4, 48], strides = [1, 1, 1]} : vector<4x4x48xf32> to vector<1x4x48xf32>
    %40 = vector.shape_cast %39 : vector<1x4x48xf32> to vector<4x48xf32>
    %41 = arith.truncf %40 : vector<4x48xf32> to vector<4x48xbf16>
    %cst_22 = arith.constant dense<0.000000e+00> : vector<4x128xf32>
    %42 = tpu.matmul %41, %4, %cst_22 {dimension_numbers = #tpu.dot_dimension_numbers<[1], [0], [0], [1], [0, 0, 1, 1], [], []>} : vector<4x48xbf16>, vector<48x128xbf16>, vector<4x128xf32> -> vector<4x128xf32>
    %43 = vector.broadcast %5 : vector<1x128xf32> to vector<4x128xf32>
    %44 = arith.addf %42, %43 : vector<4x128xf32>
    %cst_23 = arith.constant 0.000000e+00 : f32
    %45 = vector.broadcast %cst_23 : f32 to vector<4x128xf32>
    %46 = arith.maximumf %44, %45 : vector<4x128xf32>
    %c4 = arith.constant 4 : index
    %c1_24 = arith.constant 1 : index
    %c0_25 = arith.constant 0 : index
    %47 = vector.load %arg7[%c4, %c1_24, %c0_25] : memref<6x6x128xf32, #tpu.memory_space<vmem>>, vector<1x4x128xf32>
    %48 = vector.shape_cast %47 : vector<1x4x128xf32> to vector<4x128xf32>
    %49 = vector.shape_cast %46 : vector<4x128xf32> to vector<1x4x128xf32>
    tpu.vector_store %arg7[%c4, %c1_24, %c0_25], %49 {strides = array<i32>} : memref<6x6x128xf32, #tpu.memory_space<vmem>>, vector<1x4x128xf32>,
    %c0_26 = arith.constant 0 : index
    %c0_27 = arith.constant 0 : index
    %50 = vector.load %arg4[%c0_26, %c0_27] : memref<9x128xf32, #tpu.memory_space<vmem>>, vector<9x128xf32>
    %cst_28 = arith.constant 0.000000e+00 : f32
    %51 = vector.broadcast %cst_28 : f32 to vector<4x4x128xf32>
    %c0_29 = arith.constant 0 : index
    %c0_30 = arith.constant 0 : index
    %52 = vector.load %arg5[%c0_29, %c0_30] : memref<1x128xf32, #tpu.memory_space<vmem>>, vector<1x128xf32>
    %53 = vector.shape_cast %52 : vector<1x128xf32> to vector<1x1x128xf32>
    %54 = vector.broadcast %53 : vector<1x1x128xf32> to vector<4x4x128xf32>
    %55 = arith.addf %51, %54 : vector<4x4x128xf32>
    %c0_31 = arith.constant 0 : index
    %c0_32 = arith.constant 0 : index
    %c0_33 = arith.constant 0 : index
    %56 = vector.load %arg7[%c0_31, %c0_32, %c0_33] : memref<6x6x128xf32, #tpu.memory_space<vmem>>, vector<6x4x128xf32>
    %57 = vector.extract_strided_slice %56 {offsets = [0, 0, 0], sizes = [4, 4, 128], strides = [1, 1, 1]} : vector<6x4x128xf32> to vector<4x4x128xf32>
    %58 = vector.extract_strided_slice %50 {offsets = [0, 0], sizes = [1, 128], strides = [1, 1]} : vector<9x128xf32> to vector<1x128xf32>
    %59 = vector.shape_cast %58 : vector<1x128xf32> to vector<128xf32>
    %60 = vector.shape_cast %59 : vector<128xf32> to vector<1x1x128xf32>
    %61 = vector.broadcast %60 : vector<1x1x128xf32> to vector<4x4x128xf32>
    %62 = arith.mulf %57, %61 : vector<4x4x128xf32>
    %63 = arith.addf %55, %62 : vector<4x4x128xf32>
    %64 = vector.extract_strided_slice %56 {offsets = [1, 0, 0], sizes = [4, 4, 128], strides = [1, 1, 1]} : vector<6x4x128xf32> to vector<4x4x128xf32>
    %65 = vector.extract_strided_slice %50 {offsets = [3, 0], sizes = [1, 128], strides = [1, 1]} : vector<9x128xf32> to vector<1x128xf32>
    %66 = vector.shape_cast %65 : vector<1x128xf32> to vector<128xf32>
    %67 = vector.shape_cast %66 : vector<128xf32> to vector<1x1x128xf32>
    %68 = vector.broadcast %67 : vector<1x1x128xf32> to vector<4x4x128xf32>
    %69 = arith.mulf %64, %68 : vector<4x4x128xf32>
    %70 = arith.addf %63, %69 : vector<4x4x128xf32>
    %71 = vector.extract_strided_slice %56 {offsets = [2, 0, 0], sizes = [4, 4, 128], strides = [1, 1, 1]} : vector<6x4x128xf32> to vector<4x4x128xf32>
    %72 = vector.extract_strided_slice %50 {offsets = [6, 0], sizes = [1, 128], strides = [1, 1]} : vector<9x128xf32> to vector<1x128xf32>
    %73 = vector.shape_cast %72 : vector<1x128xf32> to vector<128xf32>
    %74 = vector.shape_cast %73 : vector<128xf32> to vector<1x1x128xf32>
    %75 = vector.broadcast %74 : vector<1x1x128xf32> to vector<4x4x128xf32>
    %76 = arith.mulf %71, %75 : vector<4x4x128xf32>
    %77 = arith.addf %70, %76 : vector<4x4x128xf32>
    %c0_34 = arith.constant 0 : index
    %c1_35 = arith.constant 1 : index
    %c0_36 = arith.constant 0 : index
    %78 = vector.load %arg7[%c0_34, %c1_35, %c0_36] : memref<6x6x128xf32, #tpu.memory_space<vmem>>, vector<6x4x128xf32>
    %79 = vector.extract_strided_slice %78 {offsets = [0, 0, 0], sizes = [4, 4, 128], strides = [1, 1, 1]} : vector<6x4x128xf32> to vector<4x4x128xf32>
    %80 = vector.extract_strided_slice %50 {offsets = [1, 0], sizes = [1, 128], strides = [1, 1]} : vector<9x128xf32> to vector<1x128xf32>
    %81 = vector.shape_cast %80 : vector<1x128xf32> to vector<128xf32>
    %82 = vector.shape_cast %81 : vector<128xf32> to vector<1x1x128xf32>
    %83 = vector.broadcast %82 : vector<1x1x128xf32> to vector<4x4x128xf32>
    %84 = arith.mulf %79, %83 : vector<4x4x128xf32>
    %85 = arith.addf %77, %84 : vector<4x4x128xf32>
    %86 = vector.extract_strided_slice %78 {offsets = [1, 0, 0], sizes = [4, 4, 128], strides = [1, 1, 1]} : vector<6x4x128xf32> to vector<4x4x128xf32>
    %87 = vector.extract_strided_slice %50 {offsets = [4, 0], sizes = [1, 128], strides = [1, 1]} : vector<9x128xf32> to vector<1x128xf32>
    %88 = vector.shape_cast %87 : vector<1x128xf32> to vector<128xf32>
    %89 = vector.shape_cast %88 : vector<128xf32> to vector<1x1x128xf32>
    %90 = vector.broadcast %89 : vector<1x1x128xf32> to vector<4x4x128xf32>
    %91 = arith.mulf %86, %90 : vector<4x4x128xf32>
    %92 = arith.addf %85, %91 : vector<4x4x128xf32>
    %93 = vector.extract_strided_slice %78 {offsets = [2, 0, 0], sizes = [4, 4, 128], strides = [1, 1, 1]} : vector<6x4x128xf32> to vector<4x4x128xf32>
    %94 = vector.extract_strided_slice %50 {offsets = [7, 0], sizes = [1, 128], strides = [1, 1]} : vector<9x128xf32> to vector<1x128xf32>
    %95 = vector.shape_cast %94 : vector<1x128xf32> to vector<128xf32>
    %96 = vector.shape_cast %95 : vector<128xf32> to vector<1x1x128xf32>
    %97 = vector.broadcast %96 : vector<1x1x128xf32> to vector<4x4x128xf32>
    %98 = arith.mulf %93, %97 : vector<4x4x128xf32>
    %99 = arith.addf %92, %98 : vector<4x4x128xf32>
    %c0_37 = arith.constant 0 : index
    %c2_38 = arith.constant 2 : index
    %c0_39 = arith.constant 0 : index
    %100 = vector.load %arg7[%c0_37, %c2_38, %c0_39] : memref<6x6x128xf32, #tpu.memory_space<vmem>>, vector<6x4x128xf32>
    %101 = vector.extract_strided_slice %100 {offsets = [0, 0, 0], sizes = [4, 4, 128], strides = [1, 1, 1]} : vector<6x4x128xf32> to vector<4x4x128xf32>
    %102 = vector.extract_strided_slice %50 {offsets = [2, 0], sizes = [1, 128], strides = [1, 1]} : vector<9x128xf32> to vector<1x128xf32>
    %103 = vector.shape_cast %102 : vector<1x128xf32> to vector<128xf32>
    %104 = vector.shape_cast %103 : vector<128xf32> to vector<1x1x128xf32>
    %105 = vector.broadcast %104 : vector<1x1x128xf32> to vector<4x4x128xf32>
    %106 = arith.mulf %101, %105 : vector<4x4x128xf32>
    %107 = arith.addf %99, %106 : vector<4x4x128xf32>
    %108 = vector.extract_strided_slice %100 {offsets = [1, 0, 0], sizes = [4, 4, 128], strides = [1, 1, 1]} : vector<6x4x128xf32> to vector<4x4x128xf32>
    %109 = vector.extract_strided_slice %50 {offsets = [5, 0], sizes = [1, 128], strides = [1, 1]} : vector<9x128xf32> to vector<1x128xf32>
    %110 = vector.shape_cast %109 : vector<1x128xf32> to vector<128xf32>
    %111 = vector.shape_cast %110 : vector<128xf32> to vector<1x1x128xf32>
    %112 = vector.broadcast %111 : vector<1x1x128xf32> to vector<4x4x128xf32>
    %113 = arith.mulf %108, %112 : vector<4x4x128xf32>
    %114 = arith.addf %107, %113 : vector<4x4x128xf32>
    %115 = vector.extract_strided_slice %100 {offsets = [2, 0, 0], sizes = [4, 4, 128], strides = [1, 1, 1]} : vector<6x4x128xf32> to vector<4x4x128xf32>
    %116 = vector.extract_strided_slice %50 {offsets = [8, 0], sizes = [1, 128], strides = [1, 1]} : vector<9x128xf32> to vector<1x128xf32>
    %117 = vector.shape_cast %116 : vector<1x128xf32> to vector<128xf32>
    %118 = vector.shape_cast %117 : vector<128xf32> to vector<1x1x128xf32>
    %119 = vector.broadcast %118 : vector<1x1x128xf32> to vector<4x4x128xf32>
    %120 = arith.mulf %115, %119 : vector<4x4x128xf32>
    %121 = arith.addf %114, %120 : vector<4x4x128xf32>
    %cst_40 = arith.constant 0.000000e+00 : f32
    %122 = vector.broadcast %cst_40 : f32 to vector<4x4x128xf32>
    %123 = arith.maximumf %121, %122 : vector<4x4x128xf32>
    %c0_41 = arith.constant 0 : index
    %c0_42 = arith.constant 0 : index
    %c0_43 = arith.constant 0 : index
    %c0_44 = arith.constant 0 : index
    %124 = vector.load %arg6[%c0_41, %c0_42, %c0_43, %c0_44] : memref<1x4x4x128xf32, #tpu.memory_space<vmem>>, vector<1x4x4x128xf32>
    %125 = vector.shape_cast %124 : vector<1x4x4x128xf32> to vector<4x4x128xf32>
    %126 = vector.shape_cast %123 : vector<4x4x128xf32> to vector<1x4x4x128xf32>
    tpu.vector_store %arg6[%c0_41, %c0_42, %c0_43, %c0_44], %126 {strides = array<i32>} : memref<1x4x4x128xf32, #tpu.memory_space<vmem>>, vector<1x4x4x128xf32>,
    return
  }
  func.func @transform_0(%arg0: i32) -> (i32, i32, i32, i32) {
    %c0_i32 = arith.constant 0 : i32
    %c0_i32_0 = arith.constant 0 : i32
    %c0_i32_1 = arith.constant 0 : i32
    %c0_i32_2 = arith.constant 0 : i32
    return %arg0, %c0_i32, %c0_i32_0, %c0_i32_1 : i32, i32, i32, i32
  }
  func.func @transform_1(%arg0: i32) -> (i32, i32) {
    %c0_i32 = arith.constant 0 : i32
    %c0_i32_0 = arith.constant 0 : i32
    %c0_i32_1 = arith.constant 0 : i32
    return %c0_i32, %c0_i32_0 : i32, i32
  }
  func.func @transform_2(%arg0: i32) -> (i32, i32) {
    %c0_i32 = arith.constant 0 : i32
    %c0_i32_0 = arith.constant 0 : i32
    %c0_i32_1 = arith.constant 0 : i32
    return %c0_i32, %c0_i32_0 : i32, i32
  }
  func.func @transform_3(%arg0: i32) -> (i32, i32) {
    %c0_i32 = arith.constant 0 : i32
    %c0_i32_0 = arith.constant 0 : i32
    %c0_i32_1 = arith.constant 0 : i32
    return %c0_i32, %c0_i32_0 : i32, i32
  }
  func.func @transform_4(%arg0: i32) -> (i32, i32) {
    %c0_i32 = arith.constant 0 : i32
    %c0_i32_0 = arith.constant 0 : i32
    %c0_i32_1 = arith.constant 0 : i32
    return %c0_i32, %c0_i32_0 : i32, i32
  }
  func.func @transform_5(%arg0: i32) -> (i32, i32, i32, i32) {
    %c0_i32 = arith.constant 0 : i32
    %c0_i32_0 = arith.constant 0 : i32
    %c0_i32_1 = arith.constant 0 : i32
    %c0_i32_2 = arith.constant 0 : i32
    return %arg0, %c0_i32, %c0_i32_0, %c0_i32_1 : i32, i32, i32, i32
  }
}

module attributes {stable_mosaic.version = 11 : i64} {
  func.func @kernel(%arg0: i32, %arg1: memref<1x4x4x128xf32, #tpu.memory_space<vmem>>, %arg2: memref<128x128xbf16, #tpu.memory_space<vmem>>, %arg3: memref<1x128xf32, #tpu.memory_space<vmem>>, %arg4: memref<9x128xf32, #tpu.memory_space<vmem>>, %arg5: memref<1x128xf32, #tpu.memory_space<vmem>>, %arg6: memref<1x4x4x128xf32, #tpu.memory_space<vmem>>, %arg7: memref<6x6x128xf32, #tpu.memory_space<vmem>>) attributes {dimension_semantics = [#tpu.dimension_semantics<parallel>], iteration_bounds = array<i64: 2>, scalar_prefetch = 0 : i64, scratch_operands = 1 : i64, tpu.core_type = #tpu.core_type<tc>, window_params = [{transform_indices = @transform_0, window_bounds = array<i64: 1, 4, 4, 128>}, {pipeline_mode = #tpu.pipeline_mode<synchronous>, transform_indices = @transform_1, window_bounds = array<i64: 128, 128>}, {pipeline_mode = #tpu.pipeline_mode<synchronous>, transform_indices = @transform_2, window_bounds = array<i64: 1, 128>}, {pipeline_mode = #tpu.pipeline_mode<synchronous>, transform_indices = @transform_3, window_bounds = array<i64: 9, 128>}, {pipeline_mode = #tpu.pipeline_mode<synchronous>, transform_indices = @transform_4, window_bounds = array<i64: 1, 128>}, {transform_indices = @transform_5, window_bounds = array<i64: 1, 4, 4, 128>}]} {
    %cst = arith.constant 0.000000e+00 : f32
    %0 = vector.broadcast %cst : f32 to vector<6x6x128xf32>
    %c0 = arith.constant 0 : index
    %c0_0 = arith.constant 0 : index
    %c0_1 = arith.constant 0 : index
    %1 = vector.load %arg7[%c0, %c0_0, %c0_1] : memref<6x6x128xf32, #tpu.memory_space<vmem>>, vector<6x6x128xf32>
    tpu.vector_store %arg7[%c0, %c0_0, %c0_1], %0 {strides = array<i32>} : memref<6x6x128xf32, #tpu.memory_space<vmem>>, vector<6x6x128xf32>,
    %c0_2 = arith.constant 0 : index
    %c0_3 = arith.constant 0 : index
    %c0_4 = arith.constant 0 : index
    %c0_5 = arith.constant 0 : index
    %2 = vector.load %arg1[%c0_2, %c0_3, %c0_4, %c0_5] : memref<1x4x4x128xf32, #tpu.memory_space<vmem>>, vector<1x4x4x128xf32>
    %3 = vector.shape_cast %2 : vector<1x4x4x128xf32> to vector<4x4x128xf32>
    %c0_6 = arith.constant 0 : index
    %c0_7 = arith.constant 0 : index
    %4 = vector.load %arg2[%c0_6, %c0_7] : memref<128x128xbf16, #tpu.memory_space<vmem>>, vector<128x128xbf16>
    %c0_8 = arith.constant 0 : index
    %c0_9 = arith.constant 0 : index
    %5 = vector.load %arg3[%c0_8, %c0_9] : memref<1x128xf32, #tpu.memory_space<vmem>>, vector<1x128xf32>
    %6 = vector.extract_strided_slice %3 {offsets = [0, 0, 0], sizes = [1, 4, 128], strides = [1, 1, 1]} : vector<4x4x128xf32> to vector<1x4x128xf32>
    %7 = vector.shape_cast %6 : vector<1x4x128xf32> to vector<4x128xf32>
    %8 = arith.truncf %7 : vector<4x128xf32> to vector<4x128xbf16>
    %cst_10 = arith.constant dense<0.000000e+00> : vector<4x128xf32>
    %9 = tpu.matmul %8, %4, %cst_10 {dimension_numbers = #tpu.dot_dimension_numbers<[1], [0], [0], [1], [0, 0, 1, 1], [], []>} : vector<4x128xbf16>, vector<128x128xbf16>, vector<4x128xf32> -> vector<4x128xf32>
    %10 = vector.broadcast %5 : vector<1x128xf32> to vector<4x128xf32>
    %11 = arith.addf %9, %10 : vector<4x128xf32>
    %cst_11 = arith.constant 0.000000e+00 : f32
    %12 = vector.broadcast %cst_11 : f32 to vector<4x128xf32>
    %13 = arith.maximumf %11, %12 : vector<4x128xf32>
    %c1 = arith.constant 1 : index
    %c1_12 = arith.constant 1 : index
    %c0_13 = arith.constant 0 : index
    %14 = vector.load %arg7[%c1, %c1_12, %c0_13] : memref<6x6x128xf32, #tpu.memory_space<vmem>>, vector<1x4x128xf32>
    %15 = vector.shape_cast %14 : vector<1x4x128xf32> to vector<4x128xf32>
    %16 = vector.shape_cast %13 : vector<4x128xf32> to vector<1x4x128xf32>
    tpu.vector_store %arg7[%c1, %c1_12, %c0_13], %16 {strides = array<i32>} : memref<6x6x128xf32, #tpu.memory_space<vmem>>, vector<1x4x128xf32>,
    %17 = vector.extract_strided_slice %3 {offsets = [1, 0, 0], sizes = [1, 4, 128], strides = [1, 1, 1]} : vector<4x4x128xf32> to vector<1x4x128xf32>
    %18 = vector.shape_cast %17 : vector<1x4x128xf32> to vector<4x128xf32>
    %19 = arith.truncf %18 : vector<4x128xf32> to vector<4x128xbf16>
    %cst_14 = arith.constant dense<0.000000e+00> : vector<4x128xf32>
    %20 = tpu.matmul %19, %4, %cst_14 {dimension_numbers = #tpu.dot_dimension_numbers<[1], [0], [0], [1], [0, 0, 1, 1], [], []>} : vector<4x128xbf16>, vector<128x128xbf16>, vector<4x128xf32> -> vector<4x128xf32>
    %21 = vector.broadcast %5 : vector<1x128xf32> to vector<4x128xf32>
    %22 = arith.addf %20, %21 : vector<4x128xf32>
    %cst_15 = arith.constant 0.000000e+00 : f32
    %23 = vector.broadcast %cst_15 : f32 to vector<4x128xf32>
    %24 = arith.maximumf %22, %23 : vector<4x128xf32>
    %c2 = arith.constant 2 : index
    %c1_16 = arith.constant 1 : index
    %c0_17 = arith.constant 0 : index
    %25 = vector.load %arg7[%c2, %c1_16, %c0_17] : memref<6x6x128xf32, #tpu.memory_space<vmem>>, vector<1x4x128xf32>
    %26 = vector.shape_cast %25 : vector<1x4x128xf32> to vector<4x128xf32>
    %27 = vector.shape_cast %24 : vector<4x128xf32> to vector<1x4x128xf32>
    tpu.vector_store %arg7[%c2, %c1_16, %c0_17], %27 {strides = array<i32>} : memref<6x6x128xf32, #tpu.memory_space<vmem>>, vector<1x4x128xf32>,
    %28 = vector.extract_strided_slice %3 {offsets = [2, 0, 0], sizes = [1, 4, 128], strides = [1, 1, 1]} : vector<4x4x128xf32> to vector<1x4x128xf32>
    %29 = vector.shape_cast %28 : vector<1x4x128xf32> to vector<4x128xf32>
    %30 = arith.truncf %29 : vector<4x128xf32> to vector<4x128xbf16>
    %cst_18 = arith.constant dense<0.000000e+00> : vector<4x128xf32>
    %31 = tpu.matmul %30, %4, %cst_18 {dimension_numbers = #tpu.dot_dimension_numbers<[1], [0], [0], [1], [0, 0, 1, 1], [], []>} : vector<4x128xbf16>, vector<128x128xbf16>, vector<4x128xf32> -> vector<4x128xf32>
    %32 = vector.broadcast %5 : vector<1x128xf32> to vector<4x128xf32>
    %33 = arith.addf %31, %32 : vector<4x128xf32>
    %cst_19 = arith.constant 0.000000e+00 : f32
    %34 = vector.broadcast %cst_19 : f32 to vector<4x128xf32>
    %35 = arith.maximumf %33, %34 : vector<4x128xf32>
    %c3 = arith.constant 3 : index
    %c1_20 = arith.constant 1 : index
    %c0_21 = arith.constant 0 : index
    %36 = vector.load %arg7[%c3, %c1_20, %c0_21] : memref<6x6x128xf32, #tpu.memory_space<vmem>>, vector<1x4x128xf32>
    %37 = vector.shape_cast %36 : vector<1x4x128xf32> to vector<4x128xf32>
    %38 = vector.shape_cast %35 : vector<4x128xf32> to vector<1x4x128xf32>
    tpu.vector_store %arg7[%c3, %c1_20, %c0_21], %38 {strides = array<i32>} : memref<6x6x128xf32, #tpu.memory_space<vmem>>, vector<1x4x128xf32>,
    %39 = vector.extract_strided_slice %3 {offsets = [3, 0, 0], sizes = [1, 4, 128], strides = [1, 1, 1]} : vector<4x4x128xf32> to vector<1x4x128xf32>
    %40 = vector.shape_cast %39 : vector<1x4x128xf32> to vector<4x128xf32>
    %41 = arith.truncf %40 : vector<4x128xf32> to vector<4x128xbf16>
    %cst_22 = arith.constant dense<0.000000e+00> : vector<4x128xf32>
    %42 = tpu.matmul %41, %4, %cst_22 {dimension_numbers = #tpu.dot_dimension_numbers<[1], [0], [0], [1], [0, 0, 1, 1], [], []>} : vector<4x128xbf16>, vector<128x128xbf16>, vector<4x128xf32> -> vector<4x128xf32>
    %43 = vector.broadcast %5 : vector<1x128xf32> to vector<4x128xf32>
    %44 = arith.addf %42, %43 : vector<4x128xf32>
    %cst_23 = arith.constant 0.000000e+00 : f32
    %45 = vector.broadcast %cst_23 : f32 to vector<4x128xf32>
    %46 = arith.maximumf %44, %45 : vector<4x128xf32>
    %c4 = arith.constant 4 : index
    %c1_24 = arith.constant 1 : index
    %c0_25 = arith.constant 0 : index
    %47 = vector.load %arg7[%c4, %c1_24, %c0_25] : memref<6x6x128xf32, #tpu.memory_space<vmem>>, vector<1x4x128xf32>
    %48 = vector.shape_cast %47 : vector<1x4x128xf32> to vector<4x128xf32>
    %49 = vector.shape_cast %46 : vector<4x128xf32> to vector<1x4x128xf32>
    tpu.vector_store %arg7[%c4, %c1_24, %c0_25], %49 {strides = array<i32>} : memref<6x6x128xf32, #tpu.memory_space<vmem>>, vector<1x4x128xf32>,
    %c0_26 = arith.constant 0 : index
    %c0_27 = arith.constant 0 : index
    %50 = vector.load %arg4[%c0_26, %c0_27] : memref<9x128xf32, #tpu.memory_space<vmem>>, vector<9x128xf32>
    %cst_28 = arith.constant 0.000000e+00 : f32
    %51 = vector.broadcast %cst_28 : f32 to vector<4x4x128xf32>
    %c0_29 = arith.constant 0 : index
    %c0_30 = arith.constant 0 : index
    %52 = vector.load %arg5[%c0_29, %c0_30] : memref<1x128xf32, #tpu.memory_space<vmem>>, vector<1x128xf32>
    %53 = vector.shape_cast %52 : vector<1x128xf32> to vector<1x1x128xf32>
    %54 = vector.broadcast %53 : vector<1x1x128xf32> to vector<4x4x128xf32>
    %55 = arith.addf %51, %54 : vector<4x4x128xf32>
    %c0_31 = arith.constant 0 : index
    %c0_32 = arith.constant 0 : index
    %c0_33 = arith.constant 0 : index
    %56 = vector.load %arg7[%c0_31, %c0_32, %c0_33] : memref<6x6x128xf32, #tpu.memory_space<vmem>>, vector<6x4x128xf32>
    %57 = vector.extract_strided_slice %56 {offsets = [0, 0, 0], sizes = [4, 4, 128], strides = [1, 1, 1]} : vector<6x4x128xf32> to vector<4x4x128xf32>
    %58 = vector.extract_strided_slice %50 {offsets = [0, 0], sizes = [1, 128], strides = [1, 1]} : vector<9x128xf32> to vector<1x128xf32>
    %59 = vector.shape_cast %58 : vector<1x128xf32> to vector<128xf32>
    %60 = vector.shape_cast %59 : vector<128xf32> to vector<1x1x128xf32>
    %61 = vector.broadcast %60 : vector<1x1x128xf32> to vector<4x4x128xf32>
    %62 = arith.mulf %57, %61 : vector<4x4x128xf32>
    %63 = arith.addf %55, %62 : vector<4x4x128xf32>
    %64 = vector.extract_strided_slice %56 {offsets = [1, 0, 0], sizes = [4, 4, 128], strides = [1, 1, 1]} : vector<6x4x128xf32> to vector<4x4x128xf32>
    %65 = vector.extract_strided_slice %50 {offsets = [3, 0], sizes = [1, 128], strides = [1, 1]} : vector<9x128xf32> to vector<1x128xf32>
    %66 = vector.shape_cast %65 : vector<1x128xf32> to vector<128xf32>
    %67 = vector.shape_cast %66 : vector<128xf32> to vector<1x1x128xf32>
    %68 = vector.broadcast %67 : vector<1x1x128xf32> to vector<4x4x128xf32>
    %69 = arith.mulf %64, %68 : vector<4x4x128xf32>
    %70 = arith.addf %63, %69 : vector<4x4x128xf32>
    %71 = vector.extract_strided_slice %56 {offsets = [2, 0, 0], sizes = [4, 4, 128], strides = [1, 1, 1]} : vector<6x4x128xf32> to vector<4x4x128xf32>
    %72 = vector.extract_strided_slice %50 {offsets = [6, 0], sizes = [1, 128], strides = [1, 1]} : vector<9x128xf32> to vector<1x128xf32>
    %73 = vector.shape_cast %72 : vector<1x128xf32> to vector<128xf32>
    %74 = vector.shape_cast %73 : vector<128xf32> to vector<1x1x128xf32>
    %75 = vector.broadcast %74 : vector<1x1x128xf32> to vector<4x4x128xf32>
    %76 = arith.mulf %71, %75 : vector<4x4x128xf32>
    %77 = arith.addf %70, %76 : vector<4x4x128xf32>
    %c0_34 = arith.constant 0 : index
    %c1_35 = arith.constant 1 : index
    %c0_36 = arith.constant 0 : index
    %78 = vector.load %arg7[%c0_34, %c1_35, %c0_36] : memref<6x6x128xf32, #tpu.memory_space<vmem>>, vector<6x4x128xf32>
    %79 = vector.extract_strided_slice %78 {offsets = [0, 0, 0], sizes = [4, 4, 128], strides = [1, 1, 1]} : vector<6x4x128xf32> to vector<4x4x128xf32>
    %80 = vector.extract_strided_slice %50 {offsets = [1, 0], sizes = [1, 128], strides = [1, 1]} : vector<9x128xf32> to vector<1x128xf32>
    %81 = vector.shape_cast %80 : vector<1x128xf32> to vector<128xf32>
    %82 = vector.shape_cast %81 : vector<128xf32> to vector<1x1x128xf32>
    %83 = vector.broadcast %82 : vector<1x1x128xf32> to vector<4x4x128xf32>
    %84 = arith.mulf %79, %83 : vector<4x4x128xf32>
    %85 = arith.addf %77, %84 : vector<4x4x128xf32>
    %86 = vector.extract_strided_slice %78 {offsets = [1, 0, 0], sizes = [4, 4, 128], strides = [1, 1, 1]} : vector<6x4x128xf32> to vector<4x4x128xf32>
    %87 = vector.extract_strided_slice %50 {offsets = [4, 0], sizes = [1, 128], strides = [1, 1]} : vector<9x128xf32> to vector<1x128xf32>
    %88 = vector.shape_cast %87 : vector<1x128xf32> to vector<128xf32>
    %89 = vector.shape_cast %88 : vector<128xf32> to vector<1x1x128xf32>
    %90 = vector.broadcast %89 : vector<1x1x128xf32> to vector<4x4x128xf32>
    %91 = arith.mulf %86, %90 : vector<4x4x128xf32>
    %92 = arith.addf %85, %91 : vector<4x4x128xf32>
    %93 = vector.extract_strided_slice %78 {offsets = [2, 0, 0], sizes = [4, 4, 128], strides = [1, 1, 1]} : vector<6x4x128xf32> to vector<4x4x128xf32>
    %94 = vector.extract_strided_slice %50 {offsets = [7, 0], sizes = [1, 128], strides = [1, 1]} : vector<9x128xf32> to vector<1x128xf32>
    %95 = vector.shape_cast %94 : vector<1x128xf32> to vector<128xf32>
    %96 = vector.shape_cast %95 : vector<128xf32> to vector<1x1x128xf32>
    %97 = vector.broadcast %96 : vector<1x1x128xf32> to vector<4x4x128xf32>
    %98 = arith.mulf %93, %97 : vector<4x4x128xf32>
    %99 = arith.addf %92, %98 : vector<4x4x128xf32>
    %c0_37 = arith.constant 0 : index
    %c2_38 = arith.constant 2 : index
    %c0_39 = arith.constant 0 : index
    %100 = vector.load %arg7[%c0_37, %c2_38, %c0_39] : memref<6x6x128xf32, #tpu.memory_space<vmem>>, vector<6x4x128xf32>
    %101 = vector.extract_strided_slice %100 {offsets = [0, 0, 0], sizes = [4, 4, 128], strides = [1, 1, 1]} : vector<6x4x128xf32> to vector<4x4x128xf32>
    %102 = vector.extract_strided_slice %50 {offsets = [2, 0], sizes = [1, 128], strides = [1, 1]} : vector<9x128xf32> to vector<1x128xf32>
    %103 = vector.shape_cast %102 : vector<1x128xf32> to vector<128xf32>
    %104 = vector.shape_cast %103 : vector<128xf32> to vector<1x1x128xf32>
    %105 = vector.broadcast %104 : vector<1x1x128xf32> to vector<4x4x128xf32>
    %106 = arith.mulf %101, %105 : vector<4x4x128xf32>
    %107 = arith.addf %99, %106 : vector<4x4x128xf32>
    %108 = vector.extract_strided_slice %100 {offsets = [1, 0, 0], sizes = [4, 4, 128], strides = [1, 1, 1]} : vector<6x4x128xf32> to vector<4x4x128xf32>
    %109 = vector.extract_strided_slice %50 {offsets = [5, 0], sizes = [1, 128], strides = [1, 1]} : vector<9x128xf32> to vector<1x128xf32>
    %110 = vector.shape_cast %109 : vector<1x128xf32> to vector<128xf32>
    %111 = vector.shape_cast %110 : vector<128xf32> to vector<1x1x128xf32>
    %112 = vector.broadcast %111 : vector<1x1x128xf32> to vector<4x4x128xf32>
    %113 = arith.mulf %108, %112 : vector<4x4x128xf32>
    %114 = arith.addf %107, %113 : vector<4x4x128xf32>
    %115 = vector.extract_strided_slice %100 {offsets = [2, 0, 0], sizes = [4, 4, 128], strides = [1, 1, 1]} : vector<6x4x128xf32> to vector<4x4x128xf32>
    %116 = vector.extract_strided_slice %50 {offsets = [8, 0], sizes = [1, 128], strides = [1, 1]} : vector<9x128xf32> to vector<1x128xf32>
    %117 = vector.shape_cast %116 : vector<1x128xf32> to vector<128xf32>
    %118 = vector.shape_cast %117 : vector<128xf32> to vector<1x1x128xf32>
    %119 = vector.broadcast %118 : vector<1x1x128xf32> to vector<4x4x128xf32>
    %120 = arith.mulf %115, %119 : vector<4x4x128xf32>
    %121 = arith.addf %114, %120 : vector<4x4x128xf32>
    %cst_40 = arith.constant 0.000000e+00 : f32
    %122 = vector.broadcast %cst_40 : f32 to vector<4x4x128xf32>
    %123 = arith.maximumf %121, %122 : vector<4x4x128xf32>
    %c0_41 = arith.constant 0 : index
    %c0_42 = arith.constant 0 : index
    %c0_43 = arith.constant 0 : index
    %c0_44 = arith.constant 0 : index
    %124 = vector.load %arg6[%c0_41, %c0_42, %c0_43, %c0_44] : memref<1x4x4x128xf32, #tpu.memory_space<vmem>>, vector<1x4x4x128xf32>
    %125 = vector.shape_cast %124 : vector<1x4x4x128xf32> to vector<4x4x128xf32>
    %126 = vector.shape_cast %123 : vector<4x4x128xf32> to vector<1x4x4x128xf32>
    tpu.vector_store %arg6[%c0_41, %c0_42, %c0_43, %c0_44], %126 {strides = array<i32>} : memref<1x4x4x128xf32, #tpu.memory_space<vmem>>, vector<1x4x4x128xf32>,
    return
  }
  func.func @transform_0(%arg0: i32) -> (i32, i32, i32, i32) {
    %c0_i32 = arith.constant 0 : i32
    %c0_i32_0 = arith.constant 0 : i32
    %c0_i32_1 = arith.constant 0 : i32
    %c0_i32_2 = arith.constant 0 : i32
    return %arg0, %c0_i32, %c0_i32_0, %c0_i32_1 : i32, i32, i32, i32
  }
  func.func @transform_1(%arg0: i32) -> (i32, i32) {
    %c0_i32 = arith.constant 0 : i32
    %c0_i32_0 = arith.constant 0 : i32
    %c0_i32_1 = arith.constant 0 : i32
    return %c0_i32, %c0_i32_0 : i32, i32
  }
  func.func @transform_2(%arg0: i32) -> (i32, i32) {
    %c0_i32 = arith.constant 0 : i32
    %c0_i32_0 = arith.constant 0 : i32
    %c0_i32_1 = arith.constant 0 : i32
    return %c0_i32, %c0_i32_0 : i32, i32
  }
  func.func @transform_3(%arg0: i32) -> (i32, i32) {
    %c0_i32 = arith.constant 0 : i32
    %c0_i32_0 = arith.constant 0 : i32
    %c0_i32_1 = arith.constant 0 : i32
    return %c0_i32, %c0_i32_0 : i32, i32
  }
  func.func @transform_4(%arg0: i32) -> (i32, i32) {
    %c0_i32 = arith.constant 0 : i32
    %c0_i32_0 = arith.constant 0 : i32
    %c0_i32_1 = arith.constant 0 : i32
    return %c0_i32, %c0_i32_0 : i32, i32
  }
  func.func @transform_5(%arg0: i32) -> (i32, i32, i32, i32) {
    %c0_i32 = arith.constant 0 : i32
    %c0_i32_0 = arith.constant 0 : i32
    %c0_i32_1 = arith.constant 0 : i32
    %c0_i32_2 = arith.constant 0 : i32
    return %arg0, %c0_i32, %c0_i32_0, %c0_i32_1 : i32, i32, i32, i32
  }
}

module attributes {stable_mosaic.version = 11 : i64} {
  func.func @kernel(%arg0: i32, %arg1: memref<1x2x2x128xf32, #tpu.memory_space<vmem>>, %arg2: memref<128x256xbf16, #tpu.memory_space<vmem>>, %arg3: memref<1x256xf32, #tpu.memory_space<vmem>>, %arg4: memref<9x256xf32, #tpu.memory_space<vmem>>, %arg5: memref<1x256xf32, #tpu.memory_space<vmem>>, %arg6: memref<1x2x2x256xf32, #tpu.memory_space<vmem>>, %arg7: memref<4x4x256xf32, #tpu.memory_space<vmem>>) attributes {dimension_semantics = [#tpu.dimension_semantics<parallel>], iteration_bounds = array<i64: 2>, scalar_prefetch = 0 : i64, scratch_operands = 1 : i64, tpu.core_type = #tpu.core_type<tc>, window_params = [{transform_indices = @transform_0, window_bounds = array<i64: 1, 2, 2, 128>}, {pipeline_mode = #tpu.pipeline_mode<synchronous>, transform_indices = @transform_1, window_bounds = array<i64: 128, 256>}, {pipeline_mode = #tpu.pipeline_mode<synchronous>, transform_indices = @transform_2, window_bounds = array<i64: 1, 256>}, {pipeline_mode = #tpu.pipeline_mode<synchronous>, transform_indices = @transform_3, window_bounds = array<i64: 9, 256>}, {pipeline_mode = #tpu.pipeline_mode<synchronous>, transform_indices = @transform_4, window_bounds = array<i64: 1, 256>}, {transform_indices = @transform_5, window_bounds = array<i64: 1, 2, 2, 256>}]} {
    %cst = arith.constant 0.000000e+00 : f32
    %0 = vector.broadcast %cst : f32 to vector<4x4x256xf32>
    %c0 = arith.constant 0 : index
    %c0_0 = arith.constant 0 : index
    %c0_1 = arith.constant 0 : index
    %1 = vector.load %arg7[%c0, %c0_0, %c0_1] : memref<4x4x256xf32, #tpu.memory_space<vmem>>, vector<4x4x256xf32>
    tpu.vector_store %arg7[%c0, %c0_0, %c0_1], %0 {strides = array<i32>} : memref<4x4x256xf32, #tpu.memory_space<vmem>>, vector<4x4x256xf32>,
    %c0_2 = arith.constant 0 : index
    %c0_3 = arith.constant 0 : index
    %c0_4 = arith.constant 0 : index
    %c0_5 = arith.constant 0 : index
    %2 = vector.load %arg1[%c0_2, %c0_3, %c0_4, %c0_5] : memref<1x2x2x128xf32, #tpu.memory_space<vmem>>, vector<1x2x2x128xf32>
    %3 = vector.shape_cast %2 : vector<1x2x2x128xf32> to vector<2x2x128xf32>
    %c0_6 = arith.constant 0 : index
    %c0_7 = arith.constant 0 : index
    %4 = vector.load %arg2[%c0_6, %c0_7] : memref<128x256xbf16, #tpu.memory_space<vmem>>, vector<128x256xbf16>
    %c0_8 = arith.constant 0 : index
    %c0_9 = arith.constant 0 : index
    %5 = vector.load %arg3[%c0_8, %c0_9] : memref<1x256xf32, #tpu.memory_space<vmem>>, vector<1x256xf32>
    %6 = vector.extract_strided_slice %3 {offsets = [0, 0, 0], sizes = [1, 2, 128], strides = [1, 1, 1]} : vector<2x2x128xf32> to vector<1x2x128xf32>
    %7 = vector.shape_cast %6 : vector<1x2x128xf32> to vector<2x128xf32>
    %8 = arith.truncf %7 : vector<2x128xf32> to vector<2x128xbf16>
    %cst_10 = arith.constant dense<0.000000e+00> : vector<2x256xf32>
    %9 = tpu.matmul %8, %4, %cst_10 {dimension_numbers = #tpu.dot_dimension_numbers<[1], [0], [0], [1], [0, 0, 1, 1], [], []>} : vector<2x128xbf16>, vector<128x256xbf16>, vector<2x256xf32> -> vector<2x256xf32>
    %10 = vector.broadcast %5 : vector<1x256xf32> to vector<2x256xf32>
    %11 = arith.addf %9, %10 : vector<2x256xf32>
    %cst_11 = arith.constant 0.000000e+00 : f32
    %12 = vector.broadcast %cst_11 : f32 to vector<2x256xf32>
    %13 = arith.maximumf %11, %12 : vector<2x256xf32>
    %c1 = arith.constant 1 : index
    %c1_12 = arith.constant 1 : index
    %c0_13 = arith.constant 0 : index
    %14 = vector.load %arg7[%c1, %c1_12, %c0_13] : memref<4x4x256xf32, #tpu.memory_space<vmem>>, vector<1x2x256xf32>
    %15 = vector.shape_cast %14 : vector<1x2x256xf32> to vector<2x256xf32>
    %16 = vector.shape_cast %13 : vector<2x256xf32> to vector<1x2x256xf32>
    tpu.vector_store %arg7[%c1, %c1_12, %c0_13], %16 {strides = array<i32>} : memref<4x4x256xf32, #tpu.memory_space<vmem>>, vector<1x2x256xf32>,
    %17 = vector.extract_strided_slice %3 {offsets = [1, 0, 0], sizes = [1, 2, 128], strides = [1, 1, 1]} : vector<2x2x128xf32> to vector<1x2x128xf32>
    %18 = vector.shape_cast %17 : vector<1x2x128xf32> to vector<2x128xf32>
    %19 = arith.truncf %18 : vector<2x128xf32> to vector<2x128xbf16>
    %cst_14 = arith.constant dense<0.000000e+00> : vector<2x256xf32>
    %20 = tpu.matmul %19, %4, %cst_14 {dimension_numbers = #tpu.dot_dimension_numbers<[1], [0], [0], [1], [0, 0, 1, 1], [], []>} : vector<2x128xbf16>, vector<128x256xbf16>, vector<2x256xf32> -> vector<2x256xf32>
    %21 = vector.broadcast %5 : vector<1x256xf32> to vector<2x256xf32>
    %22 = arith.addf %20, %21 : vector<2x256xf32>
    %cst_15 = arith.constant 0.000000e+00 : f32
    %23 = vector.broadcast %cst_15 : f32 to vector<2x256xf32>
    %24 = arith.maximumf %22, %23 : vector<2x256xf32>
    %c2 = arith.constant 2 : index
    %c1_16 = arith.constant 1 : index
    %c0_17 = arith.constant 0 : index
    %25 = vector.load %arg7[%c2, %c1_16, %c0_17] : memref<4x4x256xf32, #tpu.memory_space<vmem>>, vector<1x2x256xf32>
    %26 = vector.shape_cast %25 : vector<1x2x256xf32> to vector<2x256xf32>
    %27 = vector.shape_cast %24 : vector<2x256xf32> to vector<1x2x256xf32>
    tpu.vector_store %arg7[%c2, %c1_16, %c0_17], %27 {strides = array<i32>} : memref<4x4x256xf32, #tpu.memory_space<vmem>>, vector<1x2x256xf32>,
    %c0_18 = arith.constant 0 : index
    %c0_19 = arith.constant 0 : index
    %28 = vector.load %arg4[%c0_18, %c0_19] : memref<9x256xf32, #tpu.memory_space<vmem>>, vector<9x256xf32>
    %cst_20 = arith.constant 0.000000e+00 : f32
    %29 = vector.broadcast %cst_20 : f32 to vector<2x2x256xf32>
    %c0_21 = arith.constant 0 : index
    %c0_22 = arith.constant 0 : index
    %30 = vector.load %arg5[%c0_21, %c0_22] : memref<1x256xf32, #tpu.memory_space<vmem>>, vector<1x256xf32>
    %31 = vector.shape_cast %30 : vector<1x256xf32> to vector<1x1x256xf32>
    %32 = vector.broadcast %31 : vector<1x1x256xf32> to vector<2x2x256xf32>
    %33 = arith.addf %29, %32 : vector<2x2x256xf32>
    %c0_23 = arith.constant 0 : index
    %c0_24 = arith.constant 0 : index
    %c0_25 = arith.constant 0 : index
    %34 = vector.load %arg7[%c0_23, %c0_24, %c0_25] : memref<4x4x256xf32, #tpu.memory_space<vmem>>, vector<4x2x256xf32>
    %35 = vector.extract_strided_slice %34 {offsets = [0, 0, 0], sizes = [2, 2, 256], strides = [1, 1, 1]} : vector<4x2x256xf32> to vector<2x2x256xf32>
    %36 = vector.extract_strided_slice %28 {offsets = [0, 0], sizes = [1, 256], strides = [1, 1]} : vector<9x256xf32> to vector<1x256xf32>
    %37 = vector.shape_cast %36 : vector<1x256xf32> to vector<256xf32>
    %38 = vector.shape_cast %37 : vector<256xf32> to vector<1x1x256xf32>
    %39 = vector.broadcast %38 : vector<1x1x256xf32> to vector<2x2x256xf32>
    %40 = arith.mulf %35, %39 : vector<2x2x256xf32>
    %41 = arith.addf %33, %40 : vector<2x2x256xf32>
    %42 = vector.extract_strided_slice %34 {offsets = [1, 0, 0], sizes = [2, 2, 256], strides = [1, 1, 1]} : vector<4x2x256xf32> to vector<2x2x256xf32>
    %43 = vector.extract_strided_slice %28 {offsets = [3, 0], sizes = [1, 256], strides = [1, 1]} : vector<9x256xf32> to vector<1x256xf32>
    %44 = vector.shape_cast %43 : vector<1x256xf32> to vector<256xf32>
    %45 = vector.shape_cast %44 : vector<256xf32> to vector<1x1x256xf32>
    %46 = vector.broadcast %45 : vector<1x1x256xf32> to vector<2x2x256xf32>
    %47 = arith.mulf %42, %46 : vector<2x2x256xf32>
    %48 = arith.addf %41, %47 : vector<2x2x256xf32>
    %49 = vector.extract_strided_slice %34 {offsets = [2, 0, 0], sizes = [2, 2, 256], strides = [1, 1, 1]} : vector<4x2x256xf32> to vector<2x2x256xf32>
    %50 = vector.extract_strided_slice %28 {offsets = [6, 0], sizes = [1, 256], strides = [1, 1]} : vector<9x256xf32> to vector<1x256xf32>
    %51 = vector.shape_cast %50 : vector<1x256xf32> to vector<256xf32>
    %52 = vector.shape_cast %51 : vector<256xf32> to vector<1x1x256xf32>
    %53 = vector.broadcast %52 : vector<1x1x256xf32> to vector<2x2x256xf32>
    %54 = arith.mulf %49, %53 : vector<2x2x256xf32>
    %55 = arith.addf %48, %54 : vector<2x2x256xf32>
    %c0_26 = arith.constant 0 : index
    %c1_27 = arith.constant 1 : index
    %c0_28 = arith.constant 0 : index
    %56 = vector.load %arg7[%c0_26, %c1_27, %c0_28] : memref<4x4x256xf32, #tpu.memory_space<vmem>>, vector<4x2x256xf32>
    %57 = vector.extract_strided_slice %56 {offsets = [0, 0, 0], sizes = [2, 2, 256], strides = [1, 1, 1]} : vector<4x2x256xf32> to vector<2x2x256xf32>
    %58 = vector.extract_strided_slice %28 {offsets = [1, 0], sizes = [1, 256], strides = [1, 1]} : vector<9x256xf32> to vector<1x256xf32>
    %59 = vector.shape_cast %58 : vector<1x256xf32> to vector<256xf32>
    %60 = vector.shape_cast %59 : vector<256xf32> to vector<1x1x256xf32>
    %61 = vector.broadcast %60 : vector<1x1x256xf32> to vector<2x2x256xf32>
    %62 = arith.mulf %57, %61 : vector<2x2x256xf32>
    %63 = arith.addf %55, %62 : vector<2x2x256xf32>
    %64 = vector.extract_strided_slice %56 {offsets = [1, 0, 0], sizes = [2, 2, 256], strides = [1, 1, 1]} : vector<4x2x256xf32> to vector<2x2x256xf32>
    %65 = vector.extract_strided_slice %28 {offsets = [4, 0], sizes = [1, 256], strides = [1, 1]} : vector<9x256xf32> to vector<1x256xf32>
    %66 = vector.shape_cast %65 : vector<1x256xf32> to vector<256xf32>
    %67 = vector.shape_cast %66 : vector<256xf32> to vector<1x1x256xf32>
    %68 = vector.broadcast %67 : vector<1x1x256xf32> to vector<2x2x256xf32>
    %69 = arith.mulf %64, %68 : vector<2x2x256xf32>
    %70 = arith.addf %63, %69 : vector<2x2x256xf32>
    %71 = vector.extract_strided_slice %56 {offsets = [2, 0, 0], sizes = [2, 2, 256], strides = [1, 1, 1]} : vector<4x2x256xf32> to vector<2x2x256xf32>
    %72 = vector.extract_strided_slice %28 {offsets = [7, 0], sizes = [1, 256], strides = [1, 1]} : vector<9x256xf32> to vector<1x256xf32>
    %73 = vector.shape_cast %72 : vector<1x256xf32> to vector<256xf32>
    %74 = vector.shape_cast %73 : vector<256xf32> to vector<1x1x256xf32>
    %75 = vector.broadcast %74 : vector<1x1x256xf32> to vector<2x2x256xf32>
    %76 = arith.mulf %71, %75 : vector<2x2x256xf32>
    %77 = arith.addf %70, %76 : vector<2x2x256xf32>
    %c0_29 = arith.constant 0 : index
    %c2_30 = arith.constant 2 : index
    %c0_31 = arith.constant 0 : index
    %78 = vector.load %arg7[%c0_29, %c2_30, %c0_31] : memref<4x4x256xf32, #tpu.memory_space<vmem>>, vector<4x2x256xf32>
    %79 = vector.extract_strided_slice %78 {offsets = [0, 0, 0], sizes = [2, 2, 256], strides = [1, 1, 1]} : vector<4x2x256xf32> to vector<2x2x256xf32>
    %80 = vector.extract_strided_slice %28 {offsets = [2, 0], sizes = [1, 256], strides = [1, 1]} : vector<9x256xf32> to vector<1x256xf32>
    %81 = vector.shape_cast %80 : vector<1x256xf32> to vector<256xf32>
    %82 = vector.shape_cast %81 : vector<256xf32> to vector<1x1x256xf32>
    %83 = vector.broadcast %82 : vector<1x1x256xf32> to vector<2x2x256xf32>
    %84 = arith.mulf %79, %83 : vector<2x2x256xf32>
    %85 = arith.addf %77, %84 : vector<2x2x256xf32>
    %86 = vector.extract_strided_slice %78 {offsets = [1, 0, 0], sizes = [2, 2, 256], strides = [1, 1, 1]} : vector<4x2x256xf32> to vector<2x2x256xf32>
    %87 = vector.extract_strided_slice %28 {offsets = [5, 0], sizes = [1, 256], strides = [1, 1]} : vector<9x256xf32> to vector<1x256xf32>
    %88 = vector.shape_cast %87 : vector<1x256xf32> to vector<256xf32>
    %89 = vector.shape_cast %88 : vector<256xf32> to vector<1x1x256xf32>
    %90 = vector.broadcast %89 : vector<1x1x256xf32> to vector<2x2x256xf32>
    %91 = arith.mulf %86, %90 : vector<2x2x256xf32>
    %92 = arith.addf %85, %91 : vector<2x2x256xf32>
    %93 = vector.extract_strided_slice %78 {offsets = [2, 0, 0], sizes = [2, 2, 256], strides = [1, 1, 1]} : vector<4x2x256xf32> to vector<2x2x256xf32>
    %94 = vector.extract_strided_slice %28 {offsets = [8, 0], sizes = [1, 256], strides = [1, 1]} : vector<9x256xf32> to vector<1x256xf32>
    %95 = vector.shape_cast %94 : vector<1x256xf32> to vector<256xf32>
    %96 = vector.shape_cast %95 : vector<256xf32> to vector<1x1x256xf32>
    %97 = vector.broadcast %96 : vector<1x1x256xf32> to vector<2x2x256xf32>
    %98 = arith.mulf %93, %97 : vector<2x2x256xf32>
    %99 = arith.addf %92, %98 : vector<2x2x256xf32>
    %cst_32 = arith.constant 0.000000e+00 : f32
    %100 = vector.broadcast %cst_32 : f32 to vector<2x2x256xf32>
    %101 = arith.maximumf %99, %100 : vector<2x2x256xf32>
    %c0_33 = arith.constant 0 : index
    %c0_34 = arith.constant 0 : index
    %c0_35 = arith.constant 0 : index
    %c0_36 = arith.constant 0 : index
    %102 = vector.load %arg6[%c0_33, %c0_34, %c0_35, %c0_36] : memref<1x2x2x256xf32, #tpu.memory_space<vmem>>, vector<1x2x2x256xf32>
    %103 = vector.shape_cast %102 : vector<1x2x2x256xf32> to vector<2x2x256xf32>
    %104 = vector.shape_cast %101 : vector<2x2x256xf32> to vector<1x2x2x256xf32>
    tpu.vector_store %arg6[%c0_33, %c0_34, %c0_35, %c0_36], %104 {strides = array<i32>} : memref<1x2x2x256xf32, #tpu.memory_space<vmem>>, vector<1x2x2x256xf32>,
    return
  }
  func.func @transform_0(%arg0: i32) -> (i32, i32, i32, i32) {
    %c0_i32 = arith.constant 0 : i32
    %c0_i32_0 = arith.constant 0 : i32
    %c0_i32_1 = arith.constant 0 : i32
    %c0_i32_2 = arith.constant 0 : i32
    return %arg0, %c0_i32, %c0_i32_0, %c0_i32_1 : i32, i32, i32, i32
  }
  func.func @transform_1(%arg0: i32) -> (i32, i32) {
    %c0_i32 = arith.constant 0 : i32
    %c0_i32_0 = arith.constant 0 : i32
    %c0_i32_1 = arith.constant 0 : i32
    return %c0_i32, %c0_i32_0 : i32, i32
  }
  func.func @transform_2(%arg0: i32) -> (i32, i32) {
    %c0_i32 = arith.constant 0 : i32
    %c0_i32_0 = arith.constant 0 : i32
    %c0_i32_1 = arith.constant 0 : i32
    return %c0_i32, %c0_i32_0 : i32, i32
  }
  func.func @transform_3(%arg0: i32) -> (i32, i32) {
    %c0_i32 = arith.constant 0 : i32
    %c0_i32_0 = arith.constant 0 : i32
    %c0_i32_1 = arith.constant 0 : i32
    return %c0_i32, %c0_i32_0 : i32, i32
  }
  func.func @transform_4(%arg0: i32) -> (i32, i32) {
    %c0_i32 = arith.constant 0 : i32
    %c0_i32_0 = arith.constant 0 : i32
    %c0_i32_1 = arith.constant 0 : i32
    return %c0_i32, %c0_i32_0 : i32, i32
  }
  func.func @transform_5(%arg0: i32) -> (i32, i32, i32, i32) {
    %c0_i32 = arith.constant 0 : i32
    %c0_i32_0 = arith.constant 0 : i32
    %c0_i32_1 = arith.constant 0 : i32
    %c0_i32_2 = arith.constant 0 : i32
    return %arg0, %c0_i32, %c0_i32_0, %c0_i32_1 : i32, i32, i32, i32
  }
}

module attributes {stable_mosaic.version = 11 : i64} {
  func.func @kernel(%arg0: i32, %arg1: memref<1x2x2x256xf32, #tpu.memory_space<vmem>>, %arg2: memref<256x256xbf16, #tpu.memory_space<vmem>>, %arg3: memref<1x256xf32, #tpu.memory_space<vmem>>, %arg4: memref<9x256xf32, #tpu.memory_space<vmem>>, %arg5: memref<1x256xf32, #tpu.memory_space<vmem>>, %arg6: memref<1x2x2x256xf32, #tpu.memory_space<vmem>>, %arg7: memref<2x2x256xf32, #tpu.memory_space<vmem>>) attributes {dimension_semantics = [#tpu.dimension_semantics<parallel>], iteration_bounds = array<i64: 2>, scalar_prefetch = 0 : i64, scratch_operands = 1 : i64, tpu.core_type = #tpu.core_type<tc>, window_params = [{transform_indices = @transform_0, window_bounds = array<i64: 1, 2, 2, 256>}, {pipeline_mode = #tpu.pipeline_mode<synchronous>, transform_indices = @transform_1, window_bounds = array<i64: 256, 256>}, {pipeline_mode = #tpu.pipeline_mode<synchronous>, transform_indices = @transform_2, window_bounds = array<i64: 1, 256>}, {pipeline_mode = #tpu.pipeline_mode<synchronous>, transform_indices = @transform_3, window_bounds = array<i64: 9, 256>}, {pipeline_mode = #tpu.pipeline_mode<synchronous>, transform_indices = @transform_4, window_bounds = array<i64: 1, 256>}, {transform_indices = @transform_5, window_bounds = array<i64: 1, 2, 2, 256>}]} {
    %c0 = arith.constant 0 : index
    %c0_0 = arith.constant 0 : index
    %c0_1 = arith.constant 0 : index
    %c0_2 = arith.constant 0 : index
    %0 = vector.load %arg1[%c0, %c0_0, %c0_1, %c0_2] : memref<1x2x2x256xf32, #tpu.memory_space<vmem>>, vector<1x2x2x256xf32>
    %1 = vector.shape_cast %0 : vector<1x2x2x256xf32> to vector<2x2x256xf32>
    %c0_3 = arith.constant 0 : index
    %c0_4 = arith.constant 0 : index
    %2 = vector.load %arg2[%c0_3, %c0_4] : memref<256x256xbf16, #tpu.memory_space<vmem>>, vector<256x256xbf16>
    %c0_5 = arith.constant 0 : index
    %c0_6 = arith.constant 0 : index
    %3 = vector.load %arg3[%c0_5, %c0_6] : memref<1x256xf32, #tpu.memory_space<vmem>>, vector<1x256xf32>
    %4 = vector.extract_strided_slice %1 {offsets = [0, 0, 0], sizes = [1, 2, 256], strides = [1, 1, 1]} : vector<2x2x256xf32> to vector<1x2x256xf32>
    %5 = vector.shape_cast %4 : vector<1x2x256xf32> to vector<2x256xf32>
    %6 = arith.truncf %5 : vector<2x256xf32> to vector<2x256xbf16>
    %cst = arith.constant dense<0.000000e+00> : vector<2x256xf32>
    %7 = tpu.matmul %6, %2, %cst {dimension_numbers = #tpu.dot_dimension_numbers<[1], [0], [0], [1], [0, 0, 1, 1], [], []>} : vector<2x256xbf16>, vector<256x256xbf16>, vector<2x256xf32> -> vector<2x256xf32>
    %8 = vector.broadcast %3 : vector<1x256xf32> to vector<2x256xf32>
    %9 = arith.addf %7, %8 : vector<2x256xf32>
    %cst_7 = arith.constant 0.000000e+00 : f32
    %10 = vector.broadcast %cst_7 : f32 to vector<2x256xf32>
    %11 = arith.maximumf %9, %10 : vector<2x256xf32>
    %c0_8 = arith.constant 0 : index
    %c0_9 = arith.constant 0 : index
    %c0_10 = arith.constant 0 : index
    %12 = vector.load %arg7[%c0_8, %c0_9, %c0_10] : memref<2x2x256xf32, #tpu.memory_space<vmem>>, vector<1x2x256xf32>
    %13 = vector.shape_cast %12 : vector<1x2x256xf32> to vector<2x256xf32>
    %14 = vector.shape_cast %11 : vector<2x256xf32> to vector<1x2x256xf32>
    tpu.vector_store %arg7[%c0_8, %c0_9, %c0_10], %14 {strides = array<i32>} : memref<2x2x256xf32, #tpu.memory_space<vmem>>, vector<1x2x256xf32>,
    %15 = vector.extract_strided_slice %1 {offsets = [1, 0, 0], sizes = [1, 2, 256], strides = [1, 1, 1]} : vector<2x2x256xf32> to vector<1x2x256xf32>
    %16 = vector.shape_cast %15 : vector<1x2x256xf32> to vector<2x256xf32>
    %17 = arith.truncf %16 : vector<2x256xf32> to vector<2x256xbf16>
    %cst_11 = arith.constant dense<0.000000e+00> : vector<2x256xf32>
    %18 = tpu.matmul %17, %2, %cst_11 {dimension_numbers = #tpu.dot_dimension_numbers<[1], [0], [0], [1], [0, 0, 1, 1], [], []>} : vector<2x256xbf16>, vector<256x256xbf16>, vector<2x256xf32> -> vector<2x256xf32>
    %19 = vector.broadcast %3 : vector<1x256xf32> to vector<2x256xf32>
    %20 = arith.addf %18, %19 : vector<2x256xf32>
    %cst_12 = arith.constant 0.000000e+00 : f32
    %21 = vector.broadcast %cst_12 : f32 to vector<2x256xf32>
    %22 = arith.maximumf %20, %21 : vector<2x256xf32>
    %c1 = arith.constant 1 : index
    %c0_13 = arith.constant 0 : index
    %c0_14 = arith.constant 0 : index
    %23 = vector.load %arg7[%c1, %c0_13, %c0_14] : memref<2x2x256xf32, #tpu.memory_space<vmem>>, vector<1x2x256xf32>
    %24 = vector.shape_cast %23 : vector<1x2x256xf32> to vector<2x256xf32>
    %25 = vector.shape_cast %22 : vector<2x256xf32> to vector<1x2x256xf32>
    tpu.vector_store %arg7[%c1, %c0_13, %c0_14], %25 {strides = array<i32>} : memref<2x2x256xf32, #tpu.memory_space<vmem>>, vector<1x2x256xf32>,
    %c0_15 = arith.constant 0 : index
    %c0_16 = arith.constant 0 : index
    %26 = vector.load %arg4[%c0_15, %c0_16] : memref<9x256xf32, #tpu.memory_space<vmem>>, vector<9x256xf32>
    %cst_17 = arith.constant 0.000000e+00 : f32
    %27 = vector.broadcast %cst_17 : f32 to vector<2x2x256xf32>
    %c0_18 = arith.constant 0 : index
    %c0_19 = arith.constant 0 : index
    %28 = vector.load %arg5[%c0_18, %c0_19] : memref<1x256xf32, #tpu.memory_space<vmem>>, vector<1x256xf32>
    %29 = vector.shape_cast %28 : vector<1x256xf32> to vector<1x1x256xf32>
    %30 = vector.broadcast %29 : vector<1x1x256xf32> to vector<2x2x256xf32>
    %31 = arith.addf %27, %30 : vector<2x2x256xf32>
    %c0_20 = arith.constant 0 : index
    %c0_21 = arith.constant 0 : index
    %c0_22 = arith.constant 0 : index
    %32 = vector.load %arg7[%c0_20, %c0_21, %c0_22] : memref<2x2x256xf32, #tpu.memory_space<vmem>>, vector<2x2x256xf32>
    %33 = vector.extract_strided_slice %26 {offsets = [4, 0], sizes = [1, 256], strides = [1, 1]} : vector<9x256xf32> to vector<1x256xf32>
    %34 = vector.shape_cast %33 : vector<1x256xf32> to vector<256xf32>
    %35 = vector.shape_cast %34 : vector<256xf32> to vector<1x1x256xf32>
    %36 = vector.broadcast %35 : vector<1x1x256xf32> to vector<2x2x256xf32>
    %37 = arith.mulf %32, %36 : vector<2x2x256xf32>
    %38 = arith.addf %31, %37 : vector<2x2x256xf32>
    %cst_23 = arith.constant 0.000000e+00 : f32
    %39 = vector.broadcast %cst_23 : f32 to vector<2x2x256xf32>
    %40 = arith.maximumf %38, %39 : vector<2x2x256xf32>
    %c0_24 = arith.constant 0 : index
    %c0_25 = arith.constant 0 : index
    %c0_26 = arith.constant 0 : index
    %c0_27 = arith.constant 0 : index
    %41 = vector.load %arg6[%c0_24, %c0_25, %c0_26, %c0_27] : memref<1x2x2x256xf32, #tpu.memory_space<vmem>>, vector<1x2x2x256xf32>
    %42 = vector.shape_cast %41 : vector<1x2x2x256xf32> to vector<2x2x256xf32>
    %43 = vector.shape_cast %40 : vector<2x2x256xf32> to vector<1x2x2x256xf32>
    tpu.vector_store %arg6[%c0_24, %c0_25, %c0_26, %c0_27], %43 {strides = array<i32>} : memref<1x2x2x256xf32, #tpu.memory_space<vmem>>, vector<1x2x2x256xf32>,
    return
  }
  func.func @transform_0(%arg0: i32) -> (i32, i32, i32, i32) {
    %c0_i32 = arith.constant 0 : i32
    %c0_i32_0 = arith.constant 0 : i32
    %c0_i32_1 = arith.constant 0 : i32
    %c0_i32_2 = arith.constant 0 : i32
    return %arg0, %c0_i32, %c0_i32_0, %c0_i32_1 : i32, i32, i32, i32
  }
  func.func @transform_1(%arg0: i32) -> (i32, i32) {
    %c0_i32 = arith.constant 0 : i32
    %c0_i32_0 = arith.constant 0 : i32
    %c0_i32_1 = arith.constant 0 : i32
    return %c0_i32, %c0_i32_0 : i32, i32
  }
  func.func @transform_2(%arg0: i32) -> (i32, i32) {
    %c0_i32 = arith.constant 0 : i32
    %c0_i32_0 = arith.constant 0 : i32
    %c0_i32_1 = arith.constant 0 : i32
    return %c0_i32, %c0_i32_0 : i32, i32
  }
  func.func @transform_3(%arg0: i32) -> (i32, i32) {
    %c0_i32 = arith.constant 0 : i32
    %c0_i32_0 = arith.constant 0 : i32
    %c0_i32_1 = arith.constant 0 : i32
    return %c0_i32, %c0_i32_0 : i32, i32
  }
  func.func @transform_4(%arg0: i32) -> (i32, i32) {
    %c0_i32 = arith.constant 0 : i32
    %c0_i32_0 = arith.constant 0 : i32
    %c0_i32_1 = arith.constant 0 : i32
    return %c0_i32, %c0_i32_0 : i32, i32
  }
  func.func @transform_5(%arg0: i32) -> (i32, i32, i32, i32) {
    %c0_i32 = arith.constant 0 : i32
    %c0_i32_0 = arith.constant 0 : i32
    %c0_i32_1 = arith.constant 0 : i32
    %c0_i32_2 = arith.constant 0 : i32
    return %arg0, %c0_i32, %c0_i32_0, %c0_i32_1 : i32, i32, i32, i32
  }
}

module attributes {stable_mosaic.version = 11 : i64} {
  func.func @kernel(%arg0: i32, %arg1: memref<1x1x1x256xf32, #tpu.memory_space<vmem>>, %arg2: memref<256x256xbf16, #tpu.memory_space<vmem>>, %arg3: memref<1x256xf32, #tpu.memory_space<vmem>>, %arg4: memref<9x256xf32, #tpu.memory_space<vmem>>, %arg5: memref<1x256xf32, #tpu.memory_space<vmem>>, %arg6: memref<1x1x1x256xf32, #tpu.memory_space<vmem>>, %arg7: memref<1x1x256xf32, #tpu.memory_space<vmem>>) attributes {dimension_semantics = [#tpu.dimension_semantics<parallel>], iteration_bounds = array<i64: 2>, scalar_prefetch = 0 : i64, scratch_operands = 1 : i64, tpu.core_type = #tpu.core_type<tc>, window_params = [{transform_indices = @transform_0, window_bounds = array<i64: 1, 1, 1, 256>}, {pipeline_mode = #tpu.pipeline_mode<synchronous>, transform_indices = @transform_1, window_bounds = array<i64: 256, 256>}, {pipeline_mode = #tpu.pipeline_mode<synchronous>, transform_indices = @transform_2, window_bounds = array<i64: 1, 256>}, {pipeline_mode = #tpu.pipeline_mode<synchronous>, transform_indices = @transform_3, window_bounds = array<i64: 9, 256>}, {pipeline_mode = #tpu.pipeline_mode<synchronous>, transform_indices = @transform_4, window_bounds = array<i64: 1, 256>}, {transform_indices = @transform_5, window_bounds = array<i64: 1, 1, 1, 256>}]} {
    %c0 = arith.constant 0 : index
    %c0_0 = arith.constant 0 : index
    %c0_1 = arith.constant 0 : index
    %c0_2 = arith.constant 0 : index
    %0 = vector.load %arg1[%c0, %c0_0, %c0_1, %c0_2] : memref<1x1x1x256xf32, #tpu.memory_space<vmem>>, vector<1x1x1x256xf32>
    %1 = vector.shape_cast %0 : vector<1x1x1x256xf32> to vector<1x1x256xf32>
    %c0_3 = arith.constant 0 : index
    %c0_4 = arith.constant 0 : index
    %2 = vector.load %arg2[%c0_3, %c0_4] : memref<256x256xbf16, #tpu.memory_space<vmem>>, vector<256x256xbf16>
    %c0_5 = arith.constant 0 : index
    %c0_6 = arith.constant 0 : index
    %3 = vector.load %arg3[%c0_5, %c0_6] : memref<1x256xf32, #tpu.memory_space<vmem>>, vector<1x256xf32>
    %4 = vector.shape_cast %1 : vector<1x1x256xf32> to vector<1x256xf32>
    %5 = arith.truncf %4 : vector<1x256xf32> to vector<1x256xbf16>
    %cst = arith.constant dense<0.000000e+00> : vector<1x256xf32>
    %6 = tpu.matmul %5, %2, %cst {dimension_numbers = #tpu.dot_dimension_numbers<[1], [0], [0], [1], [0, 0, 1, 1], [], []>} : vector<1x256xbf16>, vector<256x256xbf16>, vector<1x256xf32> -> vector<1x256xf32>
    %7 = arith.addf %6, %3 : vector<1x256xf32>
    %cst_7 = arith.constant 0.000000e+00 : f32
    %8 = vector.broadcast %cst_7 : f32 to vector<1x256xf32>
    %9 = arith.maximumf %7, %8 : vector<1x256xf32>
    %c0_8 = arith.constant 0 : index
    %c0_9 = arith.constant 0 : index
    %c0_10 = arith.constant 0 : index
    %10 = vector.load %arg7[%c0_8, %c0_9, %c0_10] : memref<1x1x256xf32, #tpu.memory_space<vmem>>, vector<1x1x256xf32>
    %11 = vector.shape_cast %10 : vector<1x1x256xf32> to vector<1x256xf32>
    %12 = vector.shape_cast %9 : vector<1x256xf32> to vector<1x1x256xf32>
    tpu.vector_store %arg7[%c0_8, %c0_9, %c0_10], %12 {strides = array<i32>} : memref<1x1x256xf32, #tpu.memory_space<vmem>>, vector<1x1x256xf32>,
    %c0_11 = arith.constant 0 : index
    %c0_12 = arith.constant 0 : index
    %13 = vector.load %arg4[%c0_11, %c0_12] : memref<9x256xf32, #tpu.memory_space<vmem>>, vector<9x256xf32>
    %cst_13 = arith.constant 0.000000e+00 : f32
    %14 = vector.broadcast %cst_13 : f32 to vector<1x1x256xf32>
    %c0_14 = arith.constant 0 : index
    %c0_15 = arith.constant 0 : index
    %15 = vector.load %arg5[%c0_14, %c0_15] : memref<1x256xf32, #tpu.memory_space<vmem>>, vector<1x256xf32>
    %16 = vector.shape_cast %15 : vector<1x256xf32> to vector<1x1x256xf32>
    %17 = arith.addf %14, %16 : vector<1x1x256xf32>
    %c0_16 = arith.constant 0 : index
    %c0_17 = arith.constant 0 : index
    %c0_18 = arith.constant 0 : index
    %18 = vector.load %arg7[%c0_16, %c0_17, %c0_18] : memref<1x1x256xf32, #tpu.memory_space<vmem>>, vector<1x1x256xf32>
    %19 = vector.extract_strided_slice %13 {offsets = [4, 0], sizes = [1, 256], strides = [1, 1]} : vector<9x256xf32> to vector<1x256xf32>
    %20 = vector.shape_cast %19 : vector<1x256xf32> to vector<256xf32>
    %21 = vector.shape_cast %20 : vector<256xf32> to vector<1x1x256xf32>
    %22 = arith.mulf %18, %21 : vector<1x1x256xf32>
    %23 = arith.addf %17, %22 : vector<1x1x256xf32>
    %cst_19 = arith.constant 0.000000e+00 : f32
    %24 = vector.broadcast %cst_19 : f32 to vector<1x1x256xf32>
    %25 = arith.maximumf %23, %24 : vector<1x1x256xf32>
    %c0_20 = arith.constant 0 : index
    %c0_21 = arith.constant 0 : index
    %c0_22 = arith.constant 0 : index
    %c0_23 = arith.constant 0 : index
    %26 = vector.load %arg6[%c0_20, %c0_21, %c0_22, %c0_23] : memref<1x1x1x256xf32, #tpu.memory_space<vmem>>, vector<1x1x1x256xf32>
    %27 = vector.shape_cast %26 : vector<1x1x1x256xf32> to vector<1x1x256xf32>
    %28 = vector.shape_cast %25 : vector<1x1x256xf32> to vector<1x1x1x256xf32>
    tpu.vector_store %arg6[%c0_20, %c0_21, %c0_22, %c0_23], %28 {strides = array<i32>} : memref<1x1x1x256xf32, #tpu.memory_space<vmem>>, vector<1x1x1x256xf32>,
    return
  }
  func.func @transform_0(%arg0: i32) -> (i32, i32, i32, i32) {
    %c0_i32 = arith.constant 0 : i32
    %c0_i32_0 = arith.constant 0 : i32
    %c0_i32_1 = arith.constant 0 : i32
    %c0_i32_2 = arith.constant 0 : i32
    return %arg0, %c0_i32, %c0_i32_0, %c0_i32_1 : i32, i32, i32, i32
  }
  func.func @transform_1(%arg0: i32) -> (i32, i32) {
    %c0_i32 = arith.constant 0 : i32
    %c0_i32_0 = arith.constant 0 : i32
    %c0_i32_1 = arith.constant 0 : i32
    return %c0_i32, %c0_i32_0 : i32, i32
  }
  func.func @transform_2(%arg0: i32) -> (i32, i32) {
    %c0_i32 = arith.constant 0 : i32
    %c0_i32_0 = arith.constant 0 : i32
    %c0_i32_1 = arith.constant 0 : i32
    return %c0_i32, %c0_i32_0 : i32, i32
  }
  func.func @transform_3(%arg0: i32) -> (i32, i32) {
    %c0_i32 = arith.constant 0 : i32
    %c0_i32_0 = arith.constant 0 : i32
    %c0_i32_1 = arith.constant 0 : i32
    return %c0_i32, %c0_i32_0 : i32, i32
  }
  func.func @transform_4(%arg0: i32) -> (i32, i32) {
    %c0_i32 = arith.constant 0 : i32
    %c0_i32_0 = arith.constant 0 : i32
    %c0_i32_1 = arith.constant 0 : i32
    return %c0_i32, %c0_i32_0 : i32, i32
  }
  func.func @transform_5(%arg0: i32) -> (i32, i32, i32, i32) {
    %c0_i32 = arith.constant 0 : i32
    %c0_i32_0 = arith.constant 0 : i32
    %c0_i32_1 = arith.constant 0 : i32
    %c0_i32_2 = arith.constant 0 : i32
    return %arg0, %c0_i32, %c0_i32_0, %c0_i32_1 : i32, i32, i32, i32
  }
}

module attributes {stable_mosaic.version = 11 : i64} {
  func.func @kernel(%arg0: i32, %arg1: memref<1x1x1x256xf32, #tpu.memory_space<vmem>>, %arg2: memref<256x256xbf16, #tpu.memory_space<vmem>>, %arg3: memref<1x256xf32, #tpu.memory_space<vmem>>, %arg4: memref<9x256xf32, #tpu.memory_space<vmem>>, %arg5: memref<1x256xf32, #tpu.memory_space<vmem>>, %arg6: memref<1x1x1x256xf32, #tpu.memory_space<vmem>>, %arg7: memref<1x1x256xf32, #tpu.memory_space<vmem>>) attributes {dimension_semantics = [#tpu.dimension_semantics<parallel>], iteration_bounds = array<i64: 2>, scalar_prefetch = 0 : i64, scratch_operands = 1 : i64, tpu.core_type = #tpu.core_type<tc>, window_params = [{transform_indices = @transform_0, window_bounds = array<i64: 1, 1, 1, 256>}, {pipeline_mode = #tpu.pipeline_mode<synchronous>, transform_indices = @transform_1, window_bounds = array<i64: 256, 256>}, {pipeline_mode = #tpu.pipeline_mode<synchronous>, transform_indices = @transform_2, window_bounds = array<i64: 1, 256>}, {pipeline_mode = #tpu.pipeline_mode<synchronous>, transform_indices = @transform_3, window_bounds = array<i64: 9, 256>}, {pipeline_mode = #tpu.pipeline_mode<synchronous>, transform_indices = @transform_4, window_bounds = array<i64: 1, 256>}, {transform_indices = @transform_5, window_bounds = array<i64: 1, 1, 1, 256>}]} {
    %c0 = arith.constant 0 : index
    %c0_0 = arith.constant 0 : index
    %c0_1 = arith.constant 0 : index
    %c0_2 = arith.constant 0 : index
    %0 = vector.load %arg1[%c0, %c0_0, %c0_1, %c0_2] : memref<1x1x1x256xf32, #tpu.memory_space<vmem>>, vector<1x1x1x256xf32>
    %1 = vector.shape_cast %0 : vector<1x1x1x256xf32> to vector<1x1x256xf32>
    %c0_3 = arith.constant 0 : index
    %c0_4 = arith.constant 0 : index
    %2 = vector.load %arg2[%c0_3, %c0_4] : memref<256x256xbf16, #tpu.memory_space<vmem>>, vector<256x256xbf16>
    %c0_5 = arith.constant 0 : index
    %c0_6 = arith.constant 0 : index
    %3 = vector.load %arg3[%c0_5, %c0_6] : memref<1x256xf32, #tpu.memory_space<vmem>>, vector<1x256xf32>
    %4 = vector.shape_cast %1 : vector<1x1x256xf32> to vector<1x256xf32>
    %5 = arith.truncf %4 : vector<1x256xf32> to vector<1x256xbf16>
    %cst = arith.constant dense<0.000000e+00> : vector<1x256xf32>
    %6 = tpu.matmul %5, %2, %cst {dimension_numbers = #tpu.dot_dimension_numbers<[1], [0], [0], [1], [0, 0, 1, 1], [], []>} : vector<1x256xbf16>, vector<256x256xbf16>, vector<1x256xf32> -> vector<1x256xf32>
    %7 = arith.addf %6, %3 : vector<1x256xf32>
    %cst_7 = arith.constant 0.000000e+00 : f32
    %8 = vector.broadcast %cst_7 : f32 to vector<1x256xf32>
    %9 = arith.maximumf %7, %8 : vector<1x256xf32>
    %c0_8 = arith.constant 0 : index
    %c0_9 = arith.constant 0 : index
    %c0_10 = arith.constant 0 : index
    %10 = vector.load %arg7[%c0_8, %c0_9, %c0_10] : memref<1x1x256xf32, #tpu.memory_space<vmem>>, vector<1x1x256xf32>
    %11 = vector.shape_cast %10 : vector<1x1x256xf32> to vector<1x256xf32>
    %12 = vector.shape_cast %9 : vector<1x256xf32> to vector<1x1x256xf32>
    tpu.vector_store %arg7[%c0_8, %c0_9, %c0_10], %12 {strides = array<i32>} : memref<1x1x256xf32, #tpu.memory_space<vmem>>, vector<1x1x256xf32>,
    %c0_11 = arith.constant 0 : index
    %c0_12 = arith.constant 0 : index
    %13 = vector.load %arg4[%c0_11, %c0_12] : memref<9x256xf32, #tpu.memory_space<vmem>>, vector<9x256xf32>
    %cst_13 = arith.constant 0.000000e+00 : f32
    %14 = vector.broadcast %cst_13 : f32 to vector<1x1x256xf32>
    %c0_14 = arith.constant 0 : index
    %c0_15 = arith.constant 0 : index
    %15 = vector.load %arg5[%c0_14, %c0_15] : memref<1x256xf32, #tpu.memory_space<vmem>>, vector<1x256xf32>
    %16 = vector.shape_cast %15 : vector<1x256xf32> to vector<1x1x256xf32>
    %17 = arith.addf %14, %16 : vector<1x1x256xf32>
    %c0_16 = arith.constant 0 : index
    %c0_17 = arith.constant 0 : index
    %c0_18 = arith.constant 0 : index
    %18 = vector.load %arg7[%c0_16, %c0_17, %c0_18] : memref<1x1x256xf32, #tpu.memory_space<vmem>>, vector<1x1x256xf32>
    %19 = vector.extract_strided_slice %13 {offsets = [4, 0], sizes = [1, 256], strides = [1, 1]} : vector<9x256xf32> to vector<1x256xf32>
    %20 = vector.shape_cast %19 : vector<1x256xf32> to vector<256xf32>
    %21 = vector.shape_cast %20 : vector<256xf32> to vector<1x1x256xf32>
    %22 = arith.mulf %18, %21 : vector<1x1x256xf32>
    %23 = arith.addf %17, %22 : vector<1x1x256xf32>
    %cst_19 = arith.constant 0.000000e+00 : f32
    %24 = vector.broadcast %cst_19 : f32 to vector<1x1x256xf32>
    %25 = arith.maximumf %23, %24 : vector<1x1x256xf32>
    %c0_20 = arith.constant 0 : index
    %c0_21 = arith.constant 0 : index
    %c0_22 = arith.constant 0 : index
    %c0_23 = arith.constant 0 : index
    %26 = vector.load %arg6[%c0_20, %c0_21, %c0_22, %c0_23] : memref<1x1x1x256xf32, #tpu.memory_space<vmem>>, vector<1x1x1x256xf32>
    %27 = vector.shape_cast %26 : vector<1x1x1x256xf32> to vector<1x1x256xf32>
    %28 = vector.shape_cast %25 : vector<1x1x256xf32> to vector<1x1x1x256xf32>
    tpu.vector_store %arg6[%c0_20, %c0_21, %c0_22, %c0_23], %28 {strides = array<i32>} : memref<1x1x1x256xf32, #tpu.memory_space<vmem>>, vector<1x1x1x256xf32>,
    return
  }
  func.func @transform_0(%arg0: i32) -> (i32, i32, i32, i32) {
    %c0_i32 = arith.constant 0 : i32
    %c0_i32_0 = arith.constant 0 : i32
    %c0_i32_1 = arith.constant 0 : i32
    %c0_i32_2 = arith.constant 0 : i32
    return %arg0, %c0_i32, %c0_i32_0, %c0_i32_1 : i32, i32, i32, i32
  }
  func.func @transform_1(%arg0: i32) -> (i32, i32) {
    %c0_i32 = arith.constant 0 : i32
    %c0_i32_0 = arith.constant 0 : i32
    %c0_i32_1 = arith.constant 0 : i32
    return %c0_i32, %c0_i32_0 : i32, i32
  }
  func.func @transform_2(%arg0: i32) -> (i32, i32) {
    %c0_i32 = arith.constant 0 : i32
    %c0_i32_0 = arith.constant 0 : i32
    %c0_i32_1 = arith.constant 0 : i32
    return %c0_i32, %c0_i32_0 : i32, i32
  }
  func.func @transform_3(%arg0: i32) -> (i32, i32) {
    %c0_i32 = arith.constant 0 : i32
    %c0_i32_0 = arith.constant 0 : i32
    %c0_i32_1 = arith.constant 0 : i32
    return %c0_i32, %c0_i32_0 : i32, i32
  }
  func.func @transform_4(%arg0: i32) -> (i32, i32) {
    %c0_i32 = arith.constant 0 : i32
    %c0_i32_0 = arith.constant 0 : i32
    %c0_i32_1 = arith.constant 0 : i32
    return %c0_i32, %c0_i32_0 : i32, i32
  }
  func.func @transform_5(%arg0: i32) -> (i32, i32, i32, i32) {
    %c0_i32 = arith.constant 0 : i32
    %c0_i32_0 = arith.constant 0 : i32
    %c0_i32_1 = arith.constant 0 : i32
    %c0_i32_2 = arith.constant 0 : i32
    return %arg0, %c0_i32, %c0_i32_0, %c0_i32_1 : i32, i32, i32, i32
  }
}

</mosaic_0001>

<llo_original>
// kernel: _lambda_.13
$region0: #{_lambda_.13}
  #allocation0 [shape = 'u32[]', space=smem, size = 0x4, offset = 0x4, fixed_abs, tag = 'smem constant byte address 0x4 - core index']
  #allocation1 [shape = 'u32[144,128]{1,0:T(1,128)}', space=vmem, size = 0x12000, scoped, tag = 'internal scratch']
  #allocation2 [shape = 'f32[6,6,128]{2,1,0:T(8,128)}', space=vmem, size = 0x6000, scoped, tag = 'scratch operand']
  %s0 = inlined_call_operand.vmem [shape: f32[2,4,4,48], index: 0, kind: input, shape index: {}]
  %s1 = inlined_call_operand.vmem [shape: bf16[48,128], index: 1, kind: input, shape index: {}]
  %s2 = inlined_call_operand.vmem [shape: f32[1,128], index: 2, kind: input, shape index: {}]
  %s3 = inlined_call_operand.vmem [shape: f32[9,128], index: 3, kind: input, shape index: {}]
  %s4 = inlined_call_operand.vmem [shape: f32[1,128], index: 4, kind: input, shape index: {}]
  %s5 = inlined_call_operand.vmem [shape: f32[2,4,4,128], index: 5, kind: output, shape index: {}]
  %s6 = sld [smem:[#allocation0]]
  $region53: #{_lambda_.13} parent=0
    _
  %s8 = ssub.s32 1, %s6
  %s9 = scalar_select 0, %s8, %s6
  loop: start=0, step=1, limit=4
  $region2: #{_lambda_.13} parent=0 // loop_pre_header
    _
  $region3: #{_lambda_.13} parent=0 // loop_header
    %s11 = sphi 0, %s15
    %p12 = scmp.ge.s32.totalorder %s11, 4
    %s21 = sphi 0, %s23
    %s24 = sphi 0, %s21
    %s25 = sphi 0, %s24
    %s41 = sphi 0, %s25
    %s45 = sphi 0, %s45
    %s47 = sphi 0, %s45
    %s48 = sphi 0, %s47
    %s62 = sphi 0, %s48
    %s66 = sphi 0, %s66
    %s68 = sphi 0, %s66
    %s69 = sphi 0, %s68
    %s83 = sphi 0, %s69
    %s87 = sphi 0, %s87
    %s89 = sphi 0, %s87
    %s90 = sphi 0, %s89
    %s104 = sphi 0, %s90
    %s108 = sphi 0, %s108
    %s110 = sphi 0, %s108
    %s111 = sphi 0, %s110
    %s125 = sphi 0, %s111
    %s131 = sphi 0, %s133
    %s134 = sphi 0, %s131
    %s135 = sphi 0, %s134
    %s151 = sphi 0, %s135
  $region4: #{_lambda_.13} parent=0 // loop_header_branch
    %14 = sbr.rel (%p12) target = $region8
  $region5: #{_lambda_.13} parent=0 // loop_body
    %s16 = ssub.s32 %s11, 1
    %s17 = ssub.s32 %s11, 2
    %s18 = sadd.s32 %s11, 1
    %s19 = ssub.s32 %s11, %s18
    %p20 = scmp.eq.s32.totalorder %s19, 0
    %s22 = sadd.s32 %s21, 1
    %s23 = scalar_select %p20, %s21, %s22
    %p26 = pneg %p20
    %p27 = scmp.eq.s32.totalorder %s11, 1
    %p28 = por %p26, %p27
    %p29 = scmp.ne.s32.totalorder %s21, %s24
    %p30 = scmp.eq.s32.totalorder %s11, 0
    %p31 = por %p29, %p30
    %p32 = scmp.ne.s32.totalorder %s21, %s24
    %p33 = scmp.eq.s32.totalorder %s16, 1
    %p34 = por %p32, %p33
    %p35 = scmp.ne.s32.totalorder %s24, %s25
    %p36 = scmp.eq.s32.totalorder %s16, 0
    %p37 = por %p35, %p36
    %p38 = scmp.ne.s32.totalorder %s24, %s25
    %p39 = scmp.eq.s32.totalorder %s17, 1
    %p40 = por %p38, %p39
    %p42 = scmp.ne.s32.totalorder %s25, %s41
    %p43 = scmp.eq.s32.totalorder %s17, 0
    %p44 = por %p42, %p43
    %s46 = sadd.s32 %s45, 1
    %p49 = scmp.eq.s32.totalorder %s11, 1
    %p50 = scmp.ne.s32.totalorder %s45, %s47
    %p51 = scmp.eq.s32.totalorder %s11, 0
    %p52 = por %p50, %p51
    %p53 = scmp.ne.s32.totalorder %s45, %s47
    %p54 = scmp.eq.s32.totalorder %s16, 1
    %p55 = por %p53, %p54
    %p56 = scmp.ne.s32.totalorder %s47, %s48
    %p57 = scmp.eq.s32.totalorder %s16, 0
    %p58 = por %p56, %p57
    %p59 = scmp.ne.s32.totalorder %s47, %s48
    %p60 = scmp.eq.s32.totalorder %s17, 1
    %p61 = por %p59, %p60
    %p63 = scmp.ne.s32.totalorder %s48, %s62
    %p64 = scmp.eq.s32.totalorder %s17, 0
    %p65 = por %p63, %p64
    %s67 = sadd.s32 %s66, 1
    %p70 = scmp.eq.s32.totalorder %s11, 1
    %p71 = scmp.ne.s32.totalorder %s66, %s68
    %p72 = scmp.eq.s32.totalorder %s11, 0
    %p73 = por %p71, %p72
    %p74 = scmp.ne.s32.totalorder %s66, %s68
    %p75 = scmp.eq.s32.totalorder %s16, 1
    %p76 = por %p74, %p75
    %p77 = scmp.ne.s32.totalorder %s68, %s69
    %p78 = scmp.eq.s32.totalorder %s16, 0
    %p79 = por %p77, %p78
    %p80 = scmp.ne.s32.totalorder %s68, %s69
    %p81 = scmp.eq.s32.totalorder %s17, 1
    %p82 = por %p80, %p81
    %p84 = scmp.ne.s32.totalorder %s69, %s83
    %p85 = scmp.eq.s32.totalorder %s17, 0
    %p86 = por %p84, %p85
    %s88 = sadd.s32 %s87, 1
    %p91 = scmp.eq.s32.totalorder %s11, 1
    %p92 = scmp.ne.s32.totalorder %s87, %s89
    %p93 = scmp.eq.s32.totalorder %s11, 0
    %p94 = por %p92, %p93
    %p95 = scmp.ne.s32.totalorder %s87, %s89
    %p96 = scmp.eq.s32.totalorder %s16, 1
    %p97 = por %p95, %p96
    %p98 = scmp.ne.s32.totalorder %s89, %s90
    %p99 = scmp.eq.s32.totalorder %s16, 0
    %p100 = por %p98, %p99
    %p101 = scmp.ne.s32.totalorder %s89, %s90
    %p102 = scmp.eq.s32.totalorder %s17, 1
    %p103 = por %p101, %p102
    %p105 = scmp.ne.s32.totalorder %s90, %s104
    %p106 = scmp.eq.s32.totalorder %s17, 0
    %p107 = por %p105, %p106
    %s109 = sadd.s32 %s108, 1
    %p112 = scmp.eq.s32.totalorder %s11, 1
    %p113 = scmp.ne.s32.totalorder %s108, %s110
    %p114 = scmp.eq.s32.totalorder %s11, 0
    %p115 = por %p113, %p114
    %p116 = scmp.ne.s32.totalorder %s108, %s110
    %p117 = scmp.eq.s32.totalorder %s16, 1
    %p118 = por %p116, %p117
    %p119 = scmp.ne.s32.totalorder %s110, %s111
    %p120 = scmp.eq.s32.totalorder %s16, 0
    %p121 = por %p119, %p120
    %p122 = scmp.ne.s32.totalorder %s110, %s111
    %p123 = scmp.eq.s32.totalorder %s17, 1
    %p124 = por %p122, %p123
    %p126 = scmp.ne.s32.totalorder %s111, %s125
    %p127 = scmp.eq.s32.totalorder %s17, 0
    %p128 = por %p126, %p127
    %s129 = ssub.s32 %s11, %s18
    %p130 = scmp.eq.s32.totalorder %s129, 0
    %s132 = sadd.s32 %s131, 1
    %s133 = scalar_select %p130, %s131, %s132
    %p136 = pneg %p130
    %p137 = scmp.eq.s32.totalorder %s11, 1
    %p138 = por %p136, %p137
    %p139 = scmp.ne.s32.totalorder %s131, %s134
    %p140 = scmp.eq.s32.totalorder %s11, 0
    %p141 = por %p139, %p140
    %p142 = scmp.ne.s32.totalorder %s131, %s134
    %p143 = scmp.eq.s32.totalorder %s16, 1
    %p144 = por %p142, %p143
    %p145 = scmp.ne.s32.totalorder %s134, %s135
    %p146 = scmp.eq.s32.totalorder %s16, 0
    %p147 = por %p145, %p146
    %p148 = scmp.ne.s32.totalorder %s134, %s135
    %p149 = scmp.eq.s32.totalorder %s17, 1
    %p150 = por %p148, %p149
    %p152 = scmp.ne.s32.totalorder %s135, %s151
    %p153 = scmp.eq.s32.totalorder %s17, 0
    %p154 = por %p152, %p153
    %p155 = scmp.le.s32.totalorder 1, %s11
    %p156 = scmp.lt.s32.totalorder %s11, 3
    %p157 = pnand %p155, %p156
    %p158 = pneg %p157
    // Predicated region
    $region9: #{_lambda_.13} parent=5 // pred_check
      _
    $region10: #{_lambda_.13} parent=5 // pred_check_branch
      %160 = sbr.rel (%p157) target = $region12
    $region11: #{_lambda_.13} parent=5 // pred_region
      %s161 = ssub.s32 %s11, 1
      // Predicated region
      $region13: #{_lambda_.13} parent=11 // pred_check
        %p162 = pneg %p58
      $region14: #{_lambda_.13} parent=11 // pred_check_branch
        %164 = sbr.rel (%p162) target = $region16
      $region15: #{_lambda_.13} parent=11 // pred_region
        _
      $region16: #{_lambda_.13} parent=11 // pred_fallthru
        _
      // Predicated region
      $region17: #{_lambda_.13} parent=11 // pred_check
        %p165 = pneg %p79
      $region18: #{_lambda_.13} parent=11 // pred_check_branch
        %167 = sbr.rel (%p165) target = $region20
      $region19: #{_lambda_.13} parent=11 // pred_region
        _
      $region20: #{_lambda_.13} parent=11 // pred_fallthru
        _
      // Predicated region
      $region21: #{_lambda_.13} parent=11 // pred_check
        %p168 = pneg %p100
      $region22: #{_lambda_.13} parent=11 // pred_check_branch
        %170 = sbr.rel (%p168) target = $region24
      $region23: #{_lambda_.13} parent=11 // pred_region
        _
      $region24: #{_lambda_.13} parent=11 // pred_fallthru
        _
      // Predicated region
      $region25: #{_lambda_.13} parent=11 // pred_check
        %p171 = pneg %p121
      $region26: #{_lambda_.13} parent=11 // pred_check_branch
        %173 = sbr.rel (%p171) target = $region28
      $region27: #{_lambda_.13} parent=11 // pred_region
        _
      $region28: #{_lambda_.13} parent=11 // pred_fallthru
        _
    $region12: #{_lambda_.13} parent=5 // pred_fallthru
      _
    %p174 = scmp.lt.s32.totalorder %s11, 2
    // Predicated region
    $region29: #{_lambda_.13} parent=5 // pred_check
      %p175 = pneg %p174
    $region30: #{_lambda_.13} parent=5 // pred_check_branch
      %177 = sbr.rel (%p175) target = $region32
    $region31: #{_lambda_.13} parent=5 // pred_region
      // Predicated region
      $region33: #{_lambda_.13} parent=31 // pred_check
        %p178 = pneg %p31
      $region34: #{_lambda_.13} parent=31 // pred_check_branch
        %180 = sbr.rel (%p178) target = $region36
      $region35: #{_lambda_.13} parent=31 // pred_region
        %p181 = scmp.lt.s32.totalorder %s11, 1
        %s182 = scalar_select %p181, %s11, 1
        %s183 = smul.addr %s182, 4
        %s184 = smul.addr %s183, 4
        %s185 = scalar_lea.vmem %s0, %s184
      $region36: #{_lambda_.13} parent=31 // pred_fallthru
        _
    $region32: #{_lambda_.13} parent=5 // pred_fallthru
      _
    %p186 = scmp.le.s32.totalorder 1, %s11
    %p187 = scmp.lt.s32.totalorder %s11, 3
    %p188 = pnand %p186, %p187
    %p189 = pneg %p188
    // Predicated region
    $region37: #{_lambda_.13} parent=5 // pred_check
      _
    $region38: #{_lambda_.13} parent=5 // pred_check_branch
      %191 = sbr.rel (%p188) target = $region40
    $region39: #{_lambda_.13} parent=5 // pred_region
      %s192 = ssub.s32 %s11, 1
      %p193 = scmp.lt.s32.totalorder %s16, 1
      %s194 = scalar_select %p193, %s16, 1
      %s195 = smul.addr %s194, 4
      %s196 = smul.addr %s195, 4
      %s197 = scalar_lea.vmem %s0, %s196
      %p198 = pneg %p37
      %p199 = pneg %p34
      %p200 = pneg %p58
      %p201 = pneg %p55
      %p202 = pneg %p79
      %p203 = pneg %p76
      %p204 = pneg %p100
      %p205 = pneg %p97
      %p206 = pneg %p121
      %p207 = pneg %p118
      %p208 = pneg %p147
      %p209 = pneg %p144
      %p210 = scmp.lt.s32.totalorder %s16, 1
      %s211 = scalar_select %p210, %s16, 1
      %s212 = smul.addr %s211, 4
      %s213 = smul.addr %s212, 4
      %s214 = scalar_lea.vmem %s5, %s213
      %p215 = scmp.lt.s32.totalorder %s16, 1
      %s216 = scalar_select %p215, %s16, 1
      %s217 = smul.addr %s216, 4
      %s218 = smul.addr %s217, 4
      %s219 = scalar_lea.vmem %s0, %s218
      %p220 = scmp.lt.s32.totalorder %s16, 1
      %s221 = scalar_select %p220, %s16, 1
      %s222 = smul.addr %s221, 4
      %s223 = smul.addr %s222, 4
      %s224 = scalar_lea.vmem %s5, %s223
      %226 = vst [vmem:[#allocation2] sm:$0x3f] 0.0
      %227 = vst [vmem:[#allocation2 + $0x8] sm:$0x3f] 0.0
      %228 = vst [vmem:[#allocation2 + $0x10] sm:$0x3f] 0.0
      %229 = vst [vmem:[#allocation2 + $0x18] sm:$0x3f] 0.0
      %230 = vst [vmem:[#allocation2 + $0x20] sm:$0x3f] 0.0
      %231 = vst [vmem:[#allocation2 + $0x28] sm:$0x3f] 0.0
      %v232 = vld [vmem:[%s219] sm:$0xf]
      %v233 = vld [vmem:[%s219 + $0x4] sm:$0xf]
      %v234 = vld [vmem:[%s219 + $0x8] sm:$0xf]
      %v235 = vld [vmem:[%s219 + $0xc] sm:$0xf]
      %v236 = vld [vmem:[%s1] sm:$0xf]
      %v237 = vld [vmem:[%s1 + $0x4] sm:$0xf]
      %v238 = vld [vmem:[%s1 + $0x8] sm:$0xf]
      %v239 = vld [vmem:[%s1 + $0xc] sm:$0xf]
      %v240 = vld [vmem:[%s1 + $0x10] sm:$0xf]
      %v241 = vld [vmem:[%s1 + $0x14] sm:$0xf]
      %v242 = vld [vmem:[%s2] sm:$0x1]
      %v243 = vpack.c.bf16 %v232, %v232
      %v245 = vlaneseq
      %v246 = vshrl.u32 %v245, 7
      %v247 = vsub.s32 0, %v246
      %v248 = vrot.slane %v242, %v247
      %v256 = vunpack.c.l.b16 %v236
      %v257 = vunpack.c.l.b16 %v237
      %v258 = vunpack.c.l.b16 %v238
      %v259 = vunpack.c.l.b16 %v239
      %v260 = vunpack.c.l.b16 %v240
      %v261 = vunpack.c.l.b16 %v241
      %v262 = vpack.c.b16 %v257, %v256
      %v263 = vpack.c.b16 %v259, %v258
      %v264 = vpack.c.b16 %v261, %v260
      %vm268 = vcmask 392192
      %v270 = vsel %vm268, %v243, 0
      %272 = vmatprep.subr.bf16.mxu0 0
      %273 = vmatpush1.bf16.msra.mxu0 %v262
      %274 = vmatprep.subr.bf16.mxu0 0
      %275 = vmatpush1.bf16.msra.mxu0 %v263
      %276 = vmatprep.subr.bf16.mxu0 0
      %277 = vmatpush1.bf16.msra.mxu0 %v264
      %278 = vmatprep.subr.bf16.mxu0 0
      %279 = vmatpush1.bf16.msra.mxu0 0
      %280 = vmatprep.subr.bf16.mxu0 0
      %281 = vmatpush1.bf16.msra.mxu0 0
      %282 = vmatprep.subr.bf16.mxu0 0
      %283 = vmatpush1.bf16.msra.mxu0 0
      %284 = vmatprep.subr.bf16.mxu0 0
      %285 = vmatpush1.bf16.msra.mxu0 0
      %286 = vmatprep.subr.bf16.mxu0 0
      %287 = vmatpush1.bf16.msra.mxu0 0
      %288 = vmatprep.subr.bf16.mxu0 0
      %289 = vmatpush1.bf16.msra.mxu0 0
      %290 = vmatprep.subr.bf16.mxu0 0
      %291 = vmatpush1.bf16.msra.mxu0 0
      %292 = vmatprep.subr.bf16.mxu0 0
      %293 = vmatpush1.bf16.msra.mxu0 0
      %294 = vmatprep.subr.bf16.mxu0 0
      %295 = vmatpush1.bf16.msra.mxu0 0
      %296 = vmatprep.subr.bf16.mxu0 0
      %297 = vmatpush1.bf16.msra.mxu0 0
      %298 = vmatprep.subr.bf16.mxu0 0
      %299 = vmatpush1.bf16.msra.mxu0 0
      %300 = vmatprep.subr.bf16.mxu0 0
      %301 = vmatpush1.bf16.msra.mxu0 0
      %302 = vmatprep.subr.bf16.mxu0 0
      %303 = vmatpush1.bf16.msra.mxu0 0
      %304 = vmatprep.mubr.bf16.mxu0 0
      %305 = vmatmul.mubr.bf16.gmra.mrb[0].mxu0 %v270
      %v306 = vpop.f32.mrb[0].mxu0
      %v307 = vadd.f32 %v248, %v306
      %v308 = vpop.f32.mrb[0].mxu0
      %v309 = vpop.f32.mrb[0].mxu0
      %v310 = vpop.f32.mrb[0].mxu0
      %311 = vdwg.mxu0
      %v312 = vmax.f32 %v307, 0.0
      %s313 = scalar_lea.vmem [#allocation2], 8
      %314 = vst [vmem:[%s313 + $0x1] sm:$0xf] %v312
      %v315 = vpack.c.bf16 %v233, %v233
      %v317 = vsel %vm268, %v315, 0
      %319 = vmatprep.subr.bf16.mxu0 0
      %320 = vmatpush1.bf16.msra.mxu0 %v262
      %321 = vmatprep.subr.bf16.mxu0 0
      %322 = vmatpush1.bf16.msra.mxu0 %v263
      %323 = vmatprep.subr.bf16.mxu0 0
      %324 = vmatpush1.bf16.msra.mxu0 %v264
      %325 = vmatprep.subr.bf16.mxu0 0
      %326 = vmatpush1.bf16.msra.mxu0 0
      %327 = vmatprep.subr.bf16.mxu0 0
      %328 = vmatpush1.bf16.msra.mxu0 0
      %329 = vmatprep.subr.bf16.mxu0 0
      %330 = vmatpush1.bf16.msra.mxu0 0
      %331 = vmatprep.subr.bf16.mxu0 0
      %332 = vmatpush1.bf16.msra.mxu0 0
      %333 = vmatprep.subr.bf16.mxu0 0
      %334 = vmatpush1.bf16.msra.mxu0 0
      %335 = vmatprep.subr.bf16.mxu0 0
      %336 = vmatpush1.bf16.msra.mxu0 0
      %337 = vmatprep.subr.bf16.mxu0 0
      %338 = vmatpush1.bf16.msra.mxu0 0
      %339 = vmatprep.subr.bf16.mxu0 0
      %340 = vmatpush1.bf16.msra.mxu0 0
      %341 = vmatprep.subr.bf16.mxu0 0
      %342 = vmatpush1.bf16.msra.mxu0 0
      %343 = vmatprep.subr.bf16.mxu0 0
      %344 = vmatpush1.bf16.msra.mxu0 0
      %345 = vmatprep.subr.bf16.mxu0 0
      %346 = vmatpush1.bf16.msra.mxu0 0
      %347 = vmatprep.subr.bf16.mxu0 0
      %348 = vmatpush1.bf16.msra.mxu0 0
      %349 = vmatprep.subr.bf16.mxu0 0
      %350 = vmatpush1.bf16.msra.mxu0 0
      %351 = vmatprep.mubr.bf16.mxu0 0
      %352 = vmatmul.mubr.bf16.gmra.mrb[0].mxu0 %v317
      %v353 = vpop.f32.mrb[0].mxu0
      %v354 = vadd.f32 %v248, %v353
      %v355 = vpop.f32.mrb[0].mxu0
      %v356 = vpop.f32.mrb[0].mxu0
      %v357 = vpop.f32.mrb[0].mxu0
      %358 = vdwg.mxu0
      %v359 = vmax.f32 %v354, 0.0
      %s360 = scalar_lea.vmem [#allocation2], 16
      %361 = vst [vmem:[%s360 + $0x1] sm:$0xf] %v359
      %v362 = vpack.c.bf16 %v234, %v234
      %v364 = vsel %vm268, %v362, 0
      %366 = vmatprep.subr.bf16.mxu0 0
      %367 = vmatpush1.bf16.msra.mxu0 %v262
      %368 = vmatprep.subr.bf16.mxu0 0
      %369 = vmatpush1.bf16.msra.mxu0 %v263
      %370 = vmatprep.subr.bf16.mxu0 0
      %371 = vmatpush1.bf16.msra.mxu0 %v264
      %372 = vmatprep.subr.bf16.mxu0 0
      %373 = vmatpush1.bf16.msra.mxu0 0
      %374 = vmatprep.subr.bf16.mxu0 0
      %375 = vmatpush1.bf16.msra.mxu0 0
      %376 = vmatprep.subr.bf16.mxu0 0
      %377 = vmatpush1.bf16.msra.mxu0 0
      %378 = vmatprep.subr.bf16.mxu0 0
      %379 = vmatpush1.bf16.msra.mxu0 0
      %380 = vmatprep.subr.bf16.mxu0 0
      %381 = vmatpush1.bf16.msra.mxu0 0
      %382 = vmatprep.subr.bf16.mxu0 0
      %383 = vmatpush1.bf16.msra.mxu0 0
      %384 = vmatprep.subr.bf16.mxu0 0
      %385 = vmatpush1.bf16.msra.mxu0 0
      %386 = vmatprep.subr.bf16.mxu0 0
      %387 = vmatpush1.bf16.msra.mxu0 0
      %388 = vmatprep.subr.bf16.mxu0 0
      %389 = vmatpush1.bf16.msra.mxu0 0
      %390 = vmatprep.subr.bf16.mxu0 0
      %391 = vmatpush1.bf16.msra.mxu0 0
      %392 = vmatprep.subr.bf16.mxu0 0
      %393 = vmatpush1.bf16.msra.mxu0 0
      %394 = vmatprep.subr.bf16.mxu0 0
      %395 = vmatpush1.bf16.msra.mxu0 0
      %396 = vmatprep.subr.bf16.mxu0 0
      %397 = vmatpush1.bf16.msra.mxu0 0
      %398 = vmatprep.mubr.bf16.mxu0 0
      %399 = vmatmul.mubr.bf16.gmra.mrb[0].mxu0 %v364
      %v400 = vpop.f32.mrb[0].mxu0
      %v401 = vadd.f32 %v248, %v400
      %v402 = vpop.f32.mrb[0].mxu0
      %v403 = vpop.f32.mrb[0].mxu0
      %v404 = vpop.f32.mrb[0].mxu0
      %405 = vdwg.mxu0
      %v406 = vmax.f32 %v401, 0.0
      %s407 = scalar_lea.vmem [#allocation2], 24
      %408 = vst [vmem:[%s407 + $0x1] sm:$0xf] %v406
      %v409 = vpack.c.bf16 %v235, %v235
      %v411 = vsel %vm268, %v409, 0
      %413 = vmatprep.subr.bf16.mxu0 0
      %414 = vmatpush1.bf16.msra.mxu0 %v262
      %415 = vmatprep.subr.bf16.mxu0 0
      %416 = vmatpush1.bf16.msra.mxu0 %v263
      %417 = vmatprep.subr.bf16.mxu0 0
      %418 = vmatpush1.bf16.msra.mxu0 %v264
      %419 = vmatprep.subr.bf16.mxu0 0
      %420 = vmatpush1.bf16.msra.mxu0 0
      %421 = vmatprep.subr.bf16.mxu0 0
      %422 = vmatpush1.bf16.msra.mxu0 0
      %423 = vmatprep.subr.bf16.mxu0 0
      %424 = vmatpush1.bf16.msra.mxu0 0
      %425 = vmatprep.subr.bf16.mxu0 0
      %426 = vmatpush1.bf16.msra.mxu0 0
      %427 = vmatprep.subr.bf16.mxu0 0
      %428 = vmatpush1.bf16.msra.mxu0 0
      %429 = vmatprep.subr.bf16.mxu0 0
      %430 = vmatpush1.bf16.msra.mxu0 0
      %431 = vmatprep.subr.bf16.mxu0 0
      %432 = vmatpush1.bf16.msra.mxu0 0
      %433 = vmatprep.subr.bf16.mxu0 0
      %434 = vmatpush1.bf16.msra.mxu0 0
      %435 = vmatprep.subr.bf16.mxu0 0
      %436 = vmatpush1.bf16.msra.mxu0 0
      %437 = vmatprep.subr.bf16.mxu0 0
      %438 = vmatpush1.bf16.msra.mxu0 0
      %439 = vmatprep.subr.bf16.mxu0 0
      %440 = vmatpush1.bf16.msra.mxu0 0
      %441 = vmatprep.subr.bf16.mxu0 0
      %442 = vmatpush1.bf16.msra.mxu0 0
      %443 = vmatprep.subr.bf16.mxu0 0
      %444 = vmatpush1.bf16.msra.mxu0 0
      %445 = vmatprep.mubr.bf16.mxu0 0
      %446 = vmatmul.mubr.bf16.gmra.mrb[0].mxu0 %v411
      %v447 = vpop.f32.mrb[0].mxu0
      %v448 = vadd.f32 %v248, %v447
      %v449 = vpop.f32.mrb[0].mxu0
      %v450 = vpop.f32.mrb[0].mxu0
      %v451 = vpop.f32.mrb[0].mxu0
      %452 = vdwg.mxu0
      %v453 = vmax.f32 %v448, 0.0
      %s454 = scalar_lea.vmem [#allocation2], 32
      %455 = vst [vmem:[%s454 + $0x1] sm:$0xf] %v453
      %v456 = vld [vmem:[%s3] sm:$0xff]
      %v457 = vld [vmem:[%s3 + $0x8] sm:$0x1]
      %v458 = vld [vmem:[%s4] sm:$0x1]
      %v460 = vlaneseq
      %v461 = vshrl.u32 %v460, 7
      %v462 = vsub.s32 0, %v461
      %v463 = vrot.slane %v458, %v462
      %v465 = vadd.f32 %v463, 0.0
      %v466 = vld [vmem:[#allocation2] sm:$0xf]
      %v467 = vld [vmem:[#allocation2 + $0x8] sm:$0xf]
      %v468 = vld [vmem:[#allocation2 + $0x10] sm:$0xf]
      %v469 = vld [vmem:[#allocation2 + $0x18] sm:$0xf]
      %v470 = vld [vmem:[#allocation2 + $0x20] sm:$0xf]
      %v471 = vld [vmem:[#allocation2 + $0x28] sm:$0xf]
      %v472 = vlaneseq
      %v473 = vshrl.u32 %v472, 7
      %v474 = vsub.s32 0, %v473
      %v475 = vrot.slane %v456, %v474
      %v476 = vmul.f32 %v466, %v475
      %v477 = vmul.f32 %v467, %v475
      %v478 = vmul.f32 %v468, %v475
      %v479 = vmul.f32 %v469, %v475
      %v480 = vadd.f32 %v465, %v476
      %v481 = vadd.f32 %v465, %v477
      %v482 = vadd.f32 %v465, %v478
      %v483 = vadd.f32 %v465, %v479
      %v484 = vlaneseq
      %v485 = vshrl.u32 %v484, 7
      %v486 = vsub.s32 3, %v485
      %v487 = vrot.slane %v456, %v486
      %v488 = vmul.f32 %v467, %v487
      %v489 = vmul.f32 %v468, %v487
      %v490 = vmul.f32 %v469, %v487
      %v491 = vmul.f32 %v470, %v487
      %v492 = vadd.f32 %v480, %v488
      %v493 = vadd.f32 %v481, %v489
      %v494 = vadd.f32 %v482, %v490
      %v495 = vadd.f32 %v483, %v491
      %v496 = vlaneseq
      %v497 = vshrl.u32 %v496, 7
      %v498 = vsub.s32 6, %v497
      %v499 = vrot.slane %v456, %v498
      %v500 = vmul.f32 %v468, %v499
      %v501 = vmul.f32 %v469, %v499
      %v502 = vmul.f32 %v470, %v499
      %v503 = vmul.f32 %v471, %v499
      %v504 = vadd.f32 %v492, %v500
      %v505 = vadd.f32 %v493, %v501
      %v506 = vadd.f32 %v494, %v502
      %v507 = vadd.f32 %v495, %v503
      %v508 = vld [vmem:[#allocation2 + $0x1] sm:$0xf]
      %v509 = vld [vmem:[#allocation2 + $0x9] sm:$0xf]
      %v510 = vld [vmem:[#allocation2 + $0x11] sm:$0xf]
      %v511 = vld [vmem:[#allocation2 + $0x19] sm:$0xf]
      %v512 = vld [vmem:[#allocation2 + $0x21] sm:$0xf]
      %v513 = vld [vmem:[#allocation2 + $0x29] sm:$0xf]
      %v514 = vlaneseq
      %v515 = vshrl.u32 %v514, 7
      %v516 = vsub.s32 1, %v515
      %v517 = vrot.slane %v456, %v516
      %v518 = vmul.f32 %v508, %v517
      %v519 = vmul.f32 %v509, %v517
      %v520 = vmul.f32 %v510, %v517
      %v521 = vmul.f32 %v511, %v517
      %v522 = vadd.f32 %v504, %v518
      %v523 = vadd.f32 %v505, %v519
      %v524 = vadd.f32 %v506, %v520
      %v525 = vadd.f32 %v507, %v521
      %v526 = vlaneseq
      %v527 = vshrl.u32 %v526, 7
      %v528 = vsub.s32 4, %v527
      %v529 = vrot.slane %v456, %v528
      %v530 = vmul.f32 %v509, %v529
      %v531 = vmul.f32 %v510, %v529
      %v532 = vmul.f32 %v511, %v529
      %v533 = vmul.f32 %v512, %v529
      %v534 = vadd.f32 %v522, %v530
      %v535 = vadd.f32 %v523, %v531
      %v536 = vadd.f32 %v524, %v532
      %v537 = vadd.f32 %v525, %v533
      %v538 = vlaneseq
      %v539 = vshrl.u32 %v538, 7
      %v540 = vsub.s32 7, %v539
      %v541 = vrot.slane %v456, %v540
      %v542 = vmul.f32 %v510, %v541
      %v543 = vmul.f32 %v511, %v541
      %v544 = vmul.f32 %v512, %v541
      %v545 = vmul.f32 %v513, %v541
      %v546 = vadd.f32 %v534, %v542
      %v547 = vadd.f32 %v535, %v543
      %v548 = vadd.f32 %v536, %v544
      %v549 = vadd.f32 %v537, %v545
      %v550 = vld [vmem:[#allocation2 + $0x2] sm:$0xf]
      %v551 = vld [vmem:[#allocation2 + $0xa] sm:$0xf]
      %v552 = vld [vmem:[#allocation2 + $0x12] sm:$0xf]
      %v553 = vld [vmem:[#allocation2 + $0x1a] sm:$0xf]
      %v554 = vld [vmem:[#allocation2 + $0x22] sm:$0xf]
      %v555 = vld [vmem:[#allocation2 + $0x2a] sm:$0xf]
      %v556 = vlaneseq
      %v557 = vshrl.u32 %v556, 7
      %v558 = vsub.s32 2, %v557
      %v559 = vrot.slane %v456, %v558
      %v560 = vmul.f32 %v550, %v559
      %v561 = vmul.f32 %v551, %v559
      %v562 = vmul.f32 %v552, %v559
      %v563 = vmul.f32 %v553, %v559
      %v564 = vadd.f32 %v546, %v560
      %v565 = vadd.f32 %v547, %v561
      %v566 = vadd.f32 %v548, %v562
      %v567 = vadd.f32 %v549, %v563
      %v568 = vlaneseq
      %v569 = vshrl.u32 %v568, 7
      %v570 = vsub.s32 5, %v569
      %v571 = vrot.slane %v456, %v570
      %v572 = vmul.f32 %v551, %v571
      %v573 = vmul.f32 %v552, %v571
      %v574 = vmul.f32 %v553, %v571
      %v575 = vmul.f32 %v554, %v571
      %v576 = vadd.f32 %v564, %v572
      %v577 = vadd.f32 %v565, %v573
      %v578 = vadd.f32 %v566, %v574
      %v579 = vadd.f32 %v567, %v575
      %v580 = vlaneseq
      %v581 = vshrl.u32 %v580, 7
      %v582 = vsub.s32 0, %v581
      %v583 = vrot.slane %v457, %v582
      %v584 = vmul.f32 %v552, %v583
      %v585 = vmul.f32 %v553, %v583
      %v586 = vmul.f32 %v554, %v583
      %v587 = vmul.f32 %v555, %v583
      %v588 = vadd.f32 %v576, %v584
      %v589 = vadd.f32 %v577, %v585
      %v590 = vadd.f32 %v578, %v586
      %v591 = vadd.f32 %v579, %v587
      %v592 = vmax.f32 %v588, 0.0
      %v593 = vmax.f32 %v589, 0.0
      %v594 = vmax.f32 %v590, 0.0
      %v595 = vmax.f32 %v591, 0.0
      %596 = vst [vmem:[%s224] sm:$0xf] %v592
      %597 = vst [vmem:[%s224 + $0x4] sm:$0xf] %v593
      %598 = vst [vmem:[%s224 + $0x8] sm:$0xf] %v594
      %599 = vst [vmem:[%s224 + $0xc] sm:$0xf] %v595
      %p600 = scmp.lt.s32.totalorder %s16, 1
      %s601 = scalar_select %p600, %s16, 1
      %s602 = smul.addr %s601, 4
      %s603 = smul.addr %s602, 4
      %s604 = scalar_lea.vmem %s5, %s603
      // Predicated region
      $region41: #{_lambda_.13} parent=39 // pred_check
        %p605 = pneg %p144
      $region42: #{_lambda_.13} parent=39 // pred_check_branch
        %607 = sbr.rel (%p605) target = $region44
      $region43: #{_lambda_.13} parent=39 // pred_region
        _
      $region44: #{_lambda_.13} parent=39 // pred_fallthru
        _
    $region40: #{_lambda_.13} parent=5 // pred_fallthru
      _
    %p608 = scmp.le.s32.totalorder 2, %s11
    // Predicated region
    $region45: #{_lambda_.13} parent=5 // pred_check
      %p609 = pneg %p608
    $region46: #{_lambda_.13} parent=5 // pred_check_branch
      %611 = sbr.rel (%p609) target = $region48
    $region47: #{_lambda_.13} parent=5 // pred_region
      %s612 = ssub.s32 %s11, 2
      // Predicated region
      $region49: #{_lambda_.13} parent=47 // pred_check
        %p613 = pneg %p150
      $region50: #{_lambda_.13} parent=47 // pred_check_branch
        %615 = sbr.rel (%p613) target = $region52
      $region51: #{_lambda_.13} parent=47 // pred_region
        %p616 = scmp.lt.s32.totalorder %s17, 1
        %s617 = scalar_select %p616, %s17, 1
        %s618 = smul.addr %s617, 4
        %s619 = smul.addr %s618, 4
        %s620 = scalar_lea.vmem %s5, %s619
      $region52: #{_lambda_.13} parent=47 // pred_fallthru
        _
    $region48: #{_lambda_.13} parent=5 // pred_fallthru
      _
  $region6: #{_lambda_.13} parent=0 // loop_footer
    %s15 = sadd.s32 1, %s11
  $region7: #{_lambda_.13} parent=0 // loop_footer_branch
    %10 = sbr.rel target = $region3
  $region8: #{_lambda_.13} parent=0 // loop_exit
    _

// kernel: _lambda_.12
$region0: #{_lambda_.12}
  #allocation0 [shape = 'u32[]', space=smem, size = 0x4, offset = 0x4, fixed_abs, tag = 'smem constant byte address 0x4 - core index']
  #allocation1 [shape = 'u32[144,128]{1,0:T(1,128)}', space=vmem, size = 0x12000, scoped, tag = 'internal scratch']
  #allocation2 [shape = 'f32[10,10,48]{2,1,0:T(8,128)}', space=vmem, size = 0x14000, scoped, tag = 'scratch operand']
  %s0 = inlined_call_operand.vmem [shape: f32[2,8,8,32], index: 0, kind: input, shape index: {}]
  %s1 = inlined_call_operand.vmem [shape: bf16[32,48], index: 1, kind: input, shape index: {}]
  %s2 = inlined_call_operand.vmem [shape: f32[1,48], index: 2, kind: input, shape index: {}]
  %s3 = inlined_call_operand.vmem [shape: f32[9,48], index: 3, kind: input, shape index: {}]
  %s4 = inlined_call_operand.vmem [shape: f32[1,48], index: 4, kind: input, shape index: {}]
  %s5 = inlined_call_operand.vmem [shape: f32[2,8,8,48], index: 5, kind: output, shape index: {}]
  %s6 = sld [smem:[#allocation0]]
  $region53: #{_lambda_.12} parent=0
    _
  %s8 = ssub.s32 1, %s6
  %s9 = scalar_select 0, %s8, %s6
  loop: start=0, step=1, limit=4
  $region2: #{_lambda_.12} parent=0 // loop_pre_header
    _
  $region3: #{_lambda_.12} parent=0 // loop_header
    %s11 = sphi 0, %s15
    %p12 = scmp.ge.s32.totalorder %s11, 4
    %s21 = sphi 0, %s23
    %s24 = sphi 0, %s21
    %s25 = sphi 0, %s24
    %s41 = sphi 0, %s25
    %s45 = sphi 0, %s45
    %s47 = sphi 0, %s45
    %s48 = sphi 0, %s47
    %s62 = sphi 0, %s48
    %s66 = sphi 0, %s66
    %s68 = sphi 0, %s66
    %s69 = sphi 0, %s68
    %s83 = sphi 0, %s69
    %s87 = sphi 0, %s87
    %s89 = sphi 0, %s87
    %s90 = sphi 0, %s89
    %s104 = sphi 0, %s90
    %s108 = sphi 0, %s108
    %s110 = sphi 0, %s108
    %s111 = sphi 0, %s110
    %s125 = sphi 0, %s111
    %s131 = sphi 0, %s133
    %s134 = sphi 0, %s131
    %s135 = sphi 0, %s134
    %s151 = sphi 0, %s135
  $region4: #{_lambda_.12} parent=0 // loop_header_branch
    %14 = sbr.rel (%p12) target = $region8
  $region5: #{_lambda_.12} parent=0 // loop_body
    %s16 = ssub.s32 %s11, 1
    %s17 = ssub.s32 %s11, 2
    %s18 = sadd.s32 %s11, 1
    %s19 = ssub.s32 %s11, %s18
    %p20 = scmp.eq.s32.totalorder %s19, 0
    %s22 = sadd.s32 %s21, 1
    %s23 = scalar_select %p20, %s21, %s22
    %p26 = pneg %p20
    %p27 = scmp.eq.s32.totalorder %s11, 1
    %p28 = por %p26, %p27
    %p29 = scmp.ne.s32.totalorder %s21, %s24
    %p30 = scmp.eq.s32.totalorder %s11, 0
    %p31 = por %p29, %p30
    %p32 = scmp.ne.s32.totalorder %s21, %s24
    %p33 = scmp.eq.s32.totalorder %s16, 1
    %p34 = por %p32, %p33
    %p35 = scmp.ne.s32.totalorder %s24, %s25
    %p36 = scmp.eq.s32.totalorder %s16, 0
    %p37 = por %p35, %p36
    %p38 = scmp.ne.s32.totalorder %s24, %s25
    %p39 = scmp.eq.s32.totalorder %s17, 1
    %p40 = por %p38, %p39
    %p42 = scmp.ne.s32.totalorder %s25, %s41
    %p43 = scmp.eq.s32.totalorder %s17, 0
    %p44 = por %p42, %p43
    %s46 = sadd.s32 %s45, 1
    %p49 = scmp.eq.s32.totalorder %s11, 1
    %p50 = scmp.ne.s32.totalorder %s45, %s47
    %p51 = scmp.eq.s32.totalorder %s11, 0
    %p52 = por %p50, %p51
    %p53 = scmp.ne.s32.totalorder %s45, %s47
    %p54 = scmp.eq.s32.totalorder %s16, 1
    %p55 = por %p53, %p54
    %p56 = scmp.ne.s32.totalorder %s47, %s48
    %p57 = scmp.eq.s32.totalorder %s16, 0
    %p58 = por %p56, %p57
    %p59 = scmp.ne.s32.totalorder %s47, %s48
    %p60 = scmp.eq.s32.totalorder %s17, 1
    %p61 = por %p59, %p60
    %p63 = scmp.ne.s32.totalorder %s48, %s62
    %p64 = scmp.eq.s32.totalorder %s17, 0
    %p65 = por %p63, %p64
    %s67 = sadd.s32 %s66, 1
    %p70 = scmp.eq.s32.totalorder %s11, 1
    %p71 = scmp.ne.s32.totalorder %s66, %s68
    %p72 = scmp.eq.s32.totalorder %s11, 0
    %p73 = por %p71, %p72
    %p74 = scmp.ne.s32.totalorder %s66, %s68
    %p75 = scmp.eq.s32.totalorder %s16, 1
    %p76 = por %p74, %p75
    %p77 = scmp.ne.s32.totalorder %s68, %s69
    %p78 = scmp.eq.s32.totalorder %s16, 0
    %p79 = por %p77, %p78
    %p80 = scmp.ne.s32.totalorder %s68, %s69
    %p81 = scmp.eq.s32.totalorder %s17, 1
    %p82 = por %p80, %p81
    %p84 = scmp.ne.s32.totalorder %s69, %s83
    %p85 = scmp.eq.s32.totalorder %s17, 0
    %p86 = por %p84, %p85
    %s88 = sadd.s32 %s87, 1
    %p91 = scmp.eq.s32.totalorder %s11, 1
    %p92 = scmp.ne.s32.totalorder %s87, %s89
    %p93 = scmp.eq.s32.totalorder %s11, 0
    %p94 = por %p92, %p93
    %p95 = scmp.ne.s32.totalorder %s87, %s89
    %p96 = scmp.eq.s32.totalorder %s16, 1
    %p97 = por %p95, %p96
    %p98 = scmp.ne.s32.totalorder %s89, %s90
    %p99 = scmp.eq.s32.totalorder %s16, 0
    %p100 = por %p98, %p99
    %p101 = scmp.ne.s32.totalorder %s89, %s90
    %p102 = scmp.eq.s32.totalorder %s17, 1
    %p103 = por %p101, %p102
    %p105 = scmp.ne.s32.totalorder %s90, %s104
    %p106 = scmp.eq.s32.totalorder %s17, 0
    %p107 = por %p105, %p106
    %s109 = sadd.s32 %s108, 1
    %p112 = scmp.eq.s32.totalorder %s11, 1
    %p113 = scmp.ne.s32.totalorder %s108, %s110
    %p114 = scmp.eq.s32.totalorder %s11, 0
    %p115 = por %p113, %p114
    %p116 = scmp.ne.s32.totalorder %s108, %s110
    %p117 = scmp.eq.s32.totalorder %s16, 1
    %p118 = por %p116, %p117
    %p119 = scmp.ne.s32.totalorder %s110, %s111
    %p120 = scmp.eq.s32.totalorder %s16, 0
    %p121 = por %p119, %p120
    %p122 = scmp.ne.s32.totalorder %s110, %s111
    %p123 = scmp.eq.s32.totalorder %s17, 1
    %p124 = por %p122, %p123
    %p126 = scmp.ne.s32.totalorder %s111, %s125
    %p127 = scmp.eq.s32.totalorder %s17, 0
    %p128 = por %p126, %p127
    %s129 = ssub.s32 %s11, %s18
    %p130 = scmp.eq.s32.totalorder %s129, 0
    %s132 = sadd.s32 %s131, 1
    %s133 = scalar_select %p130, %s131, %s132
    %p136 = pneg %p130
    %p137 = scmp.eq.s32.totalorder %s11, 1
    %p138 = por %p136, %p137
    %p139 = scmp.ne.s32.totalorder %s131, %s134
    %p140 = scmp.eq.s32.totalorder %s11, 0
    %p141 = por %p139, %p140
    %p142 = scmp.ne.s32.totalorder %s131, %s134
    %p143 = scmp.eq.s32.totalorder %s16, 1
    %p144 = por %p142, %p143
    %p145 = scmp.ne.s32.totalorder %s134, %s135
    %p146 = scmp.eq.s32.totalorder %s16, 0
    %p147 = por %p145, %p146
    %p148 = scmp.ne.s32.totalorder %s134, %s135
    %p149 = scmp.eq.s32.totalorder %s17, 1
    %p150 = por %p148, %p149
    %p152 = scmp.ne.s32.totalorder %s135, %s151
    %p153 = scmp.eq.s32.totalorder %s17, 0
    %p154 = por %p152, %p153
    %p155 = scmp.le.s32.totalorder 1, %s11
    %p156 = scmp.lt.s32.totalorder %s11, 3
    %p157 = pnand %p155, %p156
    %p158 = pneg %p157
    // Predicated region
    $region9: #{_lambda_.12} parent=5 // pred_check
      _
    $region10: #{_lambda_.12} parent=5 // pred_check_branch
      %160 = sbr.rel (%p157) target = $region12
    $region11: #{_lambda_.12} parent=5 // pred_region
      %s161 = ssub.s32 %s11, 1
      // Predicated region
      $region13: #{_lambda_.12} parent=11 // pred_check
        %p162 = pneg %p58
      $region14: #{_lambda_.12} parent=11 // pred_check_branch
        %164 = sbr.rel (%p162) target = $region16
      $region15: #{_lambda_.12} parent=11 // pred_region
        _
      $region16: #{_lambda_.12} parent=11 // pred_fallthru
        _
      // Predicated region
      $region17: #{_lambda_.12} parent=11 // pred_check
        %p165 = pneg %p79
      $region18: #{_lambda_.12} parent=11 // pred_check_branch
        %167 = sbr.rel (%p165) target = $region20
      $region19: #{_lambda_.12} parent=11 // pred_region
        _
      $region20: #{_lambda_.12} parent=11 // pred_fallthru
        _
      // Predicated region
      $region21: #{_lambda_.12} parent=11 // pred_check
        %p168 = pneg %p100
      $region22: #{_lambda_.12} parent=11 // pred_check_branch
        %170 = sbr.rel (%p168) target = $region24
      $region23: #{_lambda_.12} parent=11 // pred_region
        _
      $region24: #{_lambda_.12} parent=11 // pred_fallthru
        _
      // Predicated region
      $region25: #{_lambda_.12} parent=11 // pred_check
        %p171 = pneg %p121
      $region26: #{_lambda_.12} parent=11 // pred_check_branch
        %173 = sbr.rel (%p171) target = $region28
      $region27: #{_lambda_.12} parent=11 // pred_region
        _
      $region28: #{_lambda_.12} parent=11 // pred_fallthru
        _
    $region12: #{_lambda_.12} parent=5 // pred_fallthru
      _
    %p174 = scmp.lt.s32.totalorder %s11, 2
    // Predicated region
    $region29: #{_lambda_.12} parent=5 // pred_check
      %p175 = pneg %p174
    $region30: #{_lambda_.12} parent=5 // pred_check_branch
      %177 = sbr.rel (%p175) target = $region32
    $region31: #{_lambda_.12} parent=5 // pred_region
      // Predicated region
      $region33: #{_lambda_.12} parent=31 // pred_check
        %p178 = pneg %p31
      $region34: #{_lambda_.12} parent=31 // pred_check_branch
        %180 = sbr.rel (%p178) target = $region36
      $region35: #{_lambda_.12} parent=31 // pred_region
        %p181 = scmp.lt.s32.totalorder %s11, 1
        %s182 = scalar_select %p181, %s11, 1
        %s183 = smul.addr %s182, 8
        %s184 = smul.addr %s183, 8
        %s185 = scalar_lea.vmem %s0, %s184
      $region36: #{_lambda_.12} parent=31 // pred_fallthru
        _
    $region32: #{_lambda_.12} parent=5 // pred_fallthru
      _
    %p186 = scmp.le.s32.totalorder 1, %s11
    %p187 = scmp.lt.s32.totalorder %s11, 3
    %p188 = pnand %p186, %p187
    %p189 = pneg %p188
    // Predicated region
    $region37: #{_lambda_.12} parent=5 // pred_check
      _
    $region38: #{_lambda_.12} parent=5 // pred_check_branch
      %191 = sbr.rel (%p188) target = $region40
    $region39: #{_lambda_.12} parent=5 // pred_region
      %s192 = ssub.s32 %s11, 1
      %p193 = scmp.lt.s32.totalorder %s16, 1
      %s194 = scalar_select %p193, %s16, 1
      %s195 = smul.addr %s194, 8
      %s196 = smul.addr %s195, 8
      %s197 = scalar_lea.vmem %s0, %s196
      %p198 = pneg %p37
      %p199 = pneg %p34
      %p200 = pneg %p58
      %p201 = pneg %p55
      %p202 = pneg %p79
      %p203 = pneg %p76
      %p204 = pneg %p100
      %p205 = pneg %p97
      %p206 = pneg %p121
      %p207 = pneg %p118
      %p208 = pneg %p147
      %p209 = pneg %p144
      %p210 = scmp.lt.s32.totalorder %s16, 1
      %s211 = scalar_select %p210, %s16, 1
      %s212 = smul.addr %s211, 8
      %s213 = smul.addr %s212, 8
      %s214 = scalar_lea.vmem %s5, %s213
      %p215 = scmp.lt.s32.totalorder %s16, 1
      %s216 = scalar_select %p215, %s16, 1
      %s217 = smul.addr %s216, 8
      %s218 = smul.addr %s217, 8
      %s219 = scalar_lea.vmem %s0, %s218
      %p220 = scmp.lt.s32.totalorder %s16, 1
      %s221 = scalar_select %p220, %s16, 1
      %s222 = smul.addr %s221, 8
      %s223 = smul.addr %s222, 8
      %s224 = scalar_lea.vmem %s5, %s223
      %vm226 = vcmask 392192
      %227 = vst.msk [vmem:[#allocation2] sm:$0xff] %vm226, 0.0
      %vm228 = vcmask 386048
      %229 = vst.msk [vmem:[#allocation2 + $0x8] sm:$0x3] %vm228, 0.0
      %230 = vst.msk [vmem:[#allocation2 + $0x10] sm:$0xff] %vm226, 0.0
      %231 = vst.msk [vmem:[#allocation2 + $0x18] sm:$0x3] %vm228, 0.0
      %232 = vst.msk [vmem:[#allocation2 + $0x20] sm:$0xff] %vm226, 0.0
      %233 = vst.msk [vmem:[#allocation2 + $0x28] sm:$0x3] %vm228, 0.0
      %234 = vst.msk [vmem:[#allocation2 + $0x30] sm:$0xff] %vm226, 0.0
      %235 = vst.msk [vmem:[#allocation2 + $0x38] sm:$0x3] %vm228, 0.0
      %236 = vst.msk [vmem:[#allocation2 + $0x40] sm:$0xff] %vm226, 0.0
      %237 = vst.msk [vmem:[#allocation2 + $0x48] sm:$0x3] %vm228, 0.0
      %238 = vst.msk [vmem:[#allocation2 + $0x50] sm:$0xff] %vm226, 0.0
      %239 = vst.msk [vmem:[#allocation2 + $0x58] sm:$0x3] %vm228, 0.0
      %240 = vst.msk [vmem:[#allocation2 + $0x60] sm:$0xff] %vm226, 0.0
      %241 = vst.msk [vmem:[#allocation2 + $0x68] sm:$0x3] %vm228, 0.0
      %242 = vst.msk [vmem:[#allocation2 + $0x70] sm:$0xff] %vm226, 0.0
      %243 = vst.msk [vmem:[#allocation2 + $0x78] sm:$0x3] %vm228, 0.0
      %244 = vst.msk [vmem:[#allocation2 + $0x80] sm:$0xff] %vm226, 0.0
      %245 = vst.msk [vmem:[#allocation2 + $0x88] sm:$0x3] %vm228, 0.0
      %246 = vst.msk [vmem:[#allocation2 + $0x90] sm:$0xff] %vm226, 0.0
      %247 = vst.msk [vmem:[#allocation2 + $0x98] sm:$0x3] %vm228, 0.0
      %v248 = vld [vmem:[%s219] sm:$0xff]
      %v249 = vld [vmem:[%s219 + $0x8] sm:$0xff]
      %v250 = vld [vmem:[%s219 + $0x10] sm:$0xff]
      %v251 = vld [vmem:[%s219 + $0x18] sm:$0xff]
      %v252 = vld [vmem:[%s219 + $0x20] sm:$0xff]
      %v253 = vld [vmem:[%s219 + $0x28] sm:$0xff]
      %v254 = vld [vmem:[%s219 + $0x30] sm:$0xff]
      %v255 = vld [vmem:[%s219 + $0x38] sm:$0xff]
      %v256 = vld [vmem:[%s1] sm:$0xf]
      %v257 = vld [vmem:[%s1 + $0x4] sm:$0xf]
      %v258 = vld [vmem:[%s1 + $0x8] sm:$0xf]
      %v259 = vld [vmem:[%s1 + $0xc] sm:$0xf]
      %v260 = vld [vmem:[%s2] sm:$0x1]
      %v261 = vpack.c.bf16 %v248, %v248
      %v263 = vlaneseq
      %v264 = vshrl.u32 %v263, 7
      %v265 = vsub.s32 0, %v264
      %v266 = vrot.slane %v260, %v265
      %v272 = vunpack.c.l.b16 %v256
      %v273 = vunpack.c.l.b16 %v257
      %v274 = vunpack.c.l.b16 %v258
      %v275 = vunpack.c.l.b16 %v259
      %v276 = vpack.c.b16 %v273, %v272
      %v277 = vpack.c.b16 %v275, %v274
      %vm280 = vcmask 261120
      %v282 = vsel %vm280, %v261, 0
      %284 = vmatprep.subr.bf16.mxu0 0
      %285 = vmatpush1.bf16.msra.mxu0 %v276
      %286 = vmatprep.subr.bf16.mxu0 0
      %287 = vmatpush1.bf16.msra.mxu0 %v277
      %288 = vmatprep.subr.bf16.mxu0 0
      %289 = vmatpush1.bf16.msra.mxu0 0
      %290 = vmatprep.subr.bf16.mxu0 0
      %291 = vmatpush1.bf16.msra.mxu0 0
      %292 = vmatprep.subr.bf16.mxu0 0
      %293 = vmatpush1.bf16.msra.mxu0 0
      %294 = vmatprep.subr.bf16.mxu0 0
      %295 = vmatpush1.bf16.msra.mxu0 0
      %296 = vmatprep.subr.bf16.mxu0 0
      %297 = vmatpush1.bf16.msra.mxu0 0
      %298 = vmatprep.subr.bf16.mxu0 0
      %299 = vmatpush1.bf16.msra.mxu0 0
      %300 = vmatprep.subr.bf16.mxu0 0
      %301 = vmatpush1.bf16.msra.mxu0 0
      %302 = vmatprep.subr.bf16.mxu0 0
      %303 = vmatpush1.bf16.msra.mxu0 0
      %304 = vmatprep.subr.bf16.mxu0 0
      %305 = vmatpush1.bf16.msra.mxu0 0
      %306 = vmatprep.subr.bf16.mxu0 0
      %307 = vmatpush1.bf16.msra.mxu0 0
      %308 = vmatprep.subr.bf16.mxu0 0
      %309 = vmatpush1.bf16.msra.mxu0 0
      %310 = vmatprep.subr.bf16.mxu0 0
      %311 = vmatpush1.bf16.msra.mxu0 0
      %312 = vmatprep.subr.bf16.mxu0 0
      %313 = vmatpush1.bf16.msra.mxu0 0
      %314 = vmatprep.subr.bf16.mxu0 0
      %315 = vmatpush1.bf16.msra.mxu0 0
      %316 = vmatprep.mubr.bf16.mxu0 0
      %317 = vmatmul.mubr.bf16.gmra.mrb[0].mxu0 %v282
      %v318 = vpop.f32.mrb[0].mxu0
      %v319 = vadd.f32 %v266, %v318
      %v320 = vpop.f32.mrb[0].mxu0
      %v321 = vpop.f32.mrb[0].mxu0
      %v322 = vpop.f32.mrb[0].mxu0
      %323 = vdwg.mxu0
      %v324 = vmax.f32 %v319, 0.0
      %s325 = scalar_lea.vmem [#allocation2], 16
      %326 = vst.msk [vmem:[%s325 + $0x1] sm:$0xff] %vm226, %v324
      %v327 = vpack.c.bf16 %v249, %v249
      %v329 = vsel %vm280, %v327, 0
      %331 = vmatprep.subr.bf16.mxu0 0
      %332 = vmatpush1.bf16.msra.mxu0 %v276
      %333 = vmatprep.subr.bf16.mxu0 0
      %334 = vmatpush1.bf16.msra.mxu0 %v277
      %335 = vmatprep.subr.bf16.mxu0 0
      %336 = vmatpush1.bf16.msra.mxu0 0
      %337 = vmatprep.subr.bf16.mxu0 0
      %338 = vmatpush1.bf16.msra.mxu0 0
      %339 = vmatprep.subr.bf16.mxu0 0
      %340 = vmatpush1.bf16.msra.mxu0 0
      %341 = vmatprep.subr.bf16.mxu0 0
      %342 = vmatpush1.bf16.msra.mxu0 0
      %343 = vmatprep.subr.bf16.mxu0 0
      %344 = vmatpush1.bf16.msra.mxu0 0
      %345 = vmatprep.subr.bf16.mxu0 0
      %346 = vmatpush1.bf16.msra.mxu0 0
      %347 = vmatprep.subr.bf16.mxu0 0
      %348 = vmatpush1.bf16.msra.mxu0 0
      %349 = vmatprep.subr.bf16.mxu0 0
      %350 = vmatpush1.bf16.msra.mxu0 0
      %351 = vmatprep.subr.bf16.mxu0 0
      %352 = vmatpush1.bf16.msra.mxu0 0
      %353 = vmatprep.subr.bf16.mxu0 0
      %354 = vmatpush1.bf16.msra.mxu0 0
      %355 = vmatprep.subr.bf16.mxu0 0
      %356 = vmatpush1.bf16.msra.mxu0 0
      %357 = vmatprep.subr.bf16.mxu0 0
      %358 = vmatpush1.bf16.msra.mxu0 0
      %359 = vmatprep.subr.bf16.mxu0 0
      %360 = vmatpush1.bf16.msra.mxu0 0
      %361 = vmatprep.subr.bf16.mxu0 0
      %362 = vmatpush1.bf16.msra.mxu0 0
      %363 = vmatprep.mubr.bf16.mxu0 0
      %364 = vmatmul.mubr.bf16.gmra.mrb[0].mxu0 %v329
      %v365 = vpop.f32.mrb[0].mxu0
      %v366 = vadd.f32 %v266, %v365
      %v367 = vpop.f32.mrb[0].mxu0
      %v368 = vpop.f32.mrb[0].mxu0
      %v369 = vpop.f32.mrb[0].mxu0
      %370 = vdwg.mxu0
      %v371 = vmax.f32 %v366, 0.0
      %s372 = scalar_lea.vmem [#allocation2], 32
      %373 = vst.msk [vmem:[%s372 + $0x1] sm:$0xff] %vm226, %v371
      %v374 = vpack.c.bf16 %v250, %v250
      %v376 = vsel %vm280, %v374, 0
      %378 = vmatprep.subr.bf16.mxu0 0
      %379 = vmatpush1.bf16.msra.mxu0 %v276
      %380 = vmatprep.subr.bf16.mxu0 0
      %381 = vmatpush1.bf16.msra.mxu0 %v277
      %382 = vmatprep.subr.bf16.mxu0 0
      %383 = vmatpush1.bf16.msra.mxu0 0
      %384 = vmatprep.subr.bf16.mxu0 0
      %385 = vmatpush1.bf16.msra.mxu0 0
      %386 = vmatprep.subr.bf16.mxu0 0
      %387 = vmatpush1.bf16.msra.mxu0 0
      %388 = vmatprep.subr.bf16.mxu0 0
      %389 = vmatpush1.bf16.msra.mxu0 0
      %390 = vmatprep.subr.bf16.mxu0 0
      %391 = vmatpush1.bf16.msra.mxu0 0
      %392 = vmatprep.subr.bf16.mxu0 0
      %393 = vmatpush1.bf16.msra.mxu0 0
      %394 = vmatprep.subr.bf16.mxu0 0
      %395 = vmatpush1.bf16.msra.mxu0 0
      %396 = vmatprep.subr.bf16.mxu0 0
      %397 = vmatpush1.bf16.msra.mxu0 0
      %398 = vmatprep.subr.bf16.mxu0 0
      %399 = vmatpush1.bf16.msra.mxu0 0
      %400 = vmatprep.subr.bf16.mxu0 0
      %401 = vmatpush1.bf16.msra.mxu0 0
      %402 = vmatprep.subr.bf16.mxu0 0
      %403 = vmatpush1.bf16.msra.mxu0 0
      %404 = vmatprep.subr.bf16.mxu0 0
      %405 = vmatpush1.bf16.msra.mxu0 0
      %406 = vmatprep.subr.bf16.mxu0 0
      %407 = vmatpush1.bf16.msra.mxu0 0
      %408 = vmatprep.subr.bf16.mxu0 0
      %409 = vmatpush1.bf16.msra.mxu0 0
      %410 = vmatprep.mubr.bf16.mxu0 0
      %411 = vmatmul.mubr.bf16.gmra.mrb[0].mxu0 %v376
      %v412 = vpop.f32.mrb[0].mxu0
      %v413 = vadd.f32 %v266, %v412
      %v414 = vpop.f32.mrb[0].mxu0
      %v415 = vpop.f32.mrb[0].mxu0
      %v416 = vpop.f32.mrb[0].mxu0
      %417 = vdwg.mxu0
      %v418 = vmax.f32 %v413, 0.0
      %s419 = scalar_lea.vmem [#allocation2], 48
      %420 = vst.msk [vmem:[%s419 + $0x1] sm:$0xff] %vm226, %v418
      %v421 = vpack.c.bf16 %v251, %v251
      %v423 = vsel %vm280, %v421, 0
      %425 = vmatprep.subr.bf16.mxu0 0
      %426 = vmatpush1.bf16.msra.mxu0 %v276
      %427 = vmatprep.subr.bf16.mxu0 0
      %428 = vmatpush1.bf16.msra.mxu0 %v277
      %429 = vmatprep.subr.bf16.mxu0 0
      %430 = vmatpush1.bf16.msra.mxu0 0
      %431 = vmatprep.subr.bf16.mxu0 0
      %432 = vmatpush1.bf16.msra.mxu0 0
      %433 = vmatprep.subr.bf16.mxu0 0
      %434 = vmatpush1.bf16.msra.mxu0 0
      %435 = vmatprep.subr.bf16.mxu0 0
      %436 = vmatpush1.bf16.msra.mxu0 0
      %437 = vmatprep.subr.bf16.mxu0 0
      %438 = vmatpush1.bf16.msra.mxu0 0
      %439 = vmatprep.subr.bf16.mxu0 0
      %440 = vmatpush1.bf16.msra.mxu0 0
      %441 = vmatprep.subr.bf16.mxu0 0
      %442 = vmatpush1.bf16.msra.mxu0 0
      %443 = vmatprep.subr.bf16.mxu0 0
      %444 = vmatpush1.bf16.msra.mxu0 0
      %445 = vmatprep.subr.bf16.mxu0 0
      %446 = vmatpush1.bf16.msra.mxu0 0
      %447 = vmatprep.subr.bf16.mxu0 0
      %448 = vmatpush1.bf16.msra.mxu0 0
      %449 = vmatprep.subr.bf16.mxu0 0
      %450 = vmatpush1.bf16.msra.mxu0 0
      %451 = vmatprep.subr.bf16.mxu0 0
      %452 = vmatpush1.bf16.msra.mxu0 0
      %453 = vmatprep.subr.bf16.mxu0 0
      %454 = vmatpush1.bf16.msra.mxu0 0
      %455 = vmatprep.subr.bf16.mxu0 0
      %456 = vmatpush1.bf16.msra.mxu0 0
      %457 = vmatprep.mubr.bf16.mxu0 0
      %458 = vmatmul.mubr.bf16.gmra.mrb[0].mxu0 %v423
      %v459 = vpop.f32.mrb[0].mxu0
      %v460 = vadd.f32 %v266, %v459
      %v461 = vpop.f32.mrb[0].mxu0
      %v462 = vpop.f32.mrb[0].mxu0
      %v463 = vpop.f32.mrb[0].mxu0
      %464 = vdwg.mxu0
      %v465 = vmax.f32 %v460, 0.0
      %s466 = scalar_lea.vmem [#allocation2], 64
      %467 = vst.msk [vmem:[%s466 + $0x1] sm:$0xff] %vm226, %v465
      %v468 = vpack.c.bf16 %v252, %v252
      %v470 = vsel %vm280, %v468, 0
      %472 = vmatprep.subr.bf16.mxu0 0
      %473 = vmatpush1.bf16.msra.mxu0 %v276
      %474 = vmatprep.subr.bf16.mxu0 0
      %475 = vmatpush1.bf16.msra.mxu0 %v277
      %476 = vmatprep.subr.bf16.mxu0 0
      %477 = vmatpush1.bf16.msra.mxu0 0
      %478 = vmatprep.subr.bf16.mxu0 0
      %479 = vmatpush1.bf16.msra.mxu0 0
      %480 = vmatprep.subr.bf16.mxu0 0
      %481 = vmatpush1.bf16.msra.mxu0 0
      %482 = vmatprep.subr.bf16.mxu0 0
      %483 = vmatpush1.bf16.msra.mxu0 0
      %484 = vmatprep.subr.bf16.mxu0 0
      %485 = vmatpush1.bf16.msra.mxu0 0
      %486 = vmatprep.subr.bf16.mxu0 0
      %487 = vmatpush1.bf16.msra.mxu0 0
      %488 = vmatprep.subr.bf16.mxu0 0
      %489 = vmatpush1.bf16.msra.mxu0 0
      %490 = vmatprep.subr.bf16.mxu0 0
      %491 = vmatpush1.bf16.msra.mxu0 0
      %492 = vmatprep.subr.bf16.mxu0 0
      %493 = vmatpush1.bf16.msra.mxu0 0
      %494 = vmatprep.subr.bf16.mxu0 0
      %495 = vmatpush1.bf16.msra.mxu0 0
      %496 = vmatprep.subr.bf16.mxu0 0
      %497 = vmatpush1.bf16.msra.mxu0 0
      %498 = vmatprep.subr.bf16.mxu0 0
      %499 = vmatpush1.bf16.msra.mxu0 0
      %500 = vmatprep.subr.bf16.mxu0 0
      %501 = vmatpush1.bf16.msra.mxu0 0
      %502 = vmatprep.subr.bf16.mxu0 0
      %503 = vmatpush1.bf16.msra.mxu0 0
      %504 = vmatprep.mubr.bf16.mxu0 0
      %505 = vmatmul.mubr.bf16.gmra.mrb[0].mxu0 %v470
      %v506 = vpop.f32.mrb[0].mxu0
      %v507 = vadd.f32 %v266, %v506
      %v508 = vpop.f32.mrb[0].mxu0
      %v509 = vpop.f32.mrb[0].mxu0
      %v510 = vpop.f32.mrb[0].mxu0
      %511 = vdwg.mxu0
      %v512 = vmax.f32 %v507, 0.0
      %s513 = scalar_lea.vmem [#allocation2], 80
      %514 = vst.msk [vmem:[%s513 + $0x1] sm:$0xff] %vm226, %v512
      %v515 = vpack.c.bf16 %v253, %v253
      %v517 = vsel %vm280, %v515, 0
      %519 = vmatprep.subr.bf16.mxu0 0
      %520 = vmatpush1.bf16.msra.mxu0 %v276
      %521 = vmatprep.subr.bf16.mxu0 0
      %522 = vmatpush1.bf16.msra.mxu0 %v277
      %523 = vmatprep.subr.bf16.mxu0 0
      %524 = vmatpush1.bf16.msra.mxu0 0
      %525 = vmatprep.subr.bf16.mxu0 0
      %526 = vmatpush1.bf16.msra.mxu0 0
      %527 = vmatprep.subr.bf16.mxu0 0
      %528 = vmatpush1.bf16.msra.mxu0 0
      %529 = vmatprep.subr.bf16.mxu0 0
      %530 = vmatpush1.bf16.msra.mxu0 0
      %531 = vmatprep.subr.bf16.mxu0 0
      %532 = vmatpush1.bf16.msra.mxu0 0
      %533 = vmatprep.subr.bf16.mxu0 0
      %534 = vmatpush1.bf16.msra.mxu0 0
      %535 = vmatprep.subr.bf16.mxu0 0
      %536 = vmatpush1.bf16.msra.mxu0 0
      %537 = vmatprep.subr.bf16.mxu0 0
      %538 = vmatpush1.bf16.msra.mxu0 0
      %539 = vmatprep.subr.bf16.mxu0 0
      %540 = vmatpush1.bf16.msra.mxu0 0
      %541 = vmatprep.subr.bf16.mxu0 0
      %542 = vmatpush1.bf16.msra.mxu0 0
      %543 = vmatprep.subr.bf16.mxu0 0
      %544 = vmatpush1.bf16.msra.mxu0 0
      %545 = vmatprep.subr.bf16.mxu0 0
      %546 = vmatpush1.bf16.msra.mxu0 0
      %547 = vmatprep.subr.bf16.mxu0 0
      %548 = vmatpush1.bf16.msra.mxu0 0
      %549 = vmatprep.subr.bf16.mxu0 0
      %550 = vmatpush1.bf16.msra.mxu0 0
      %551 = vmatprep.mubr.bf16.mxu0 0
      %552 = vmatmul.mubr.bf16.gmra.mrb[0].mxu0 %v517
      %v553 = vpop.f32.mrb[0].mxu0
      %v554 = vadd.f32 %v266, %v553
      %v555 = vpop.f32.mrb[0].mxu0
      %v556 = vpop.f32.mrb[0].mxu0
      %v557 = vpop.f32.mrb[0].mxu0
      %558 = vdwg.mxu0
      %v559 = vmax.f32 %v554, 0.0
      %s560 = scalar_lea.vmem [#allocation2], 96
      %561 = vst.msk [vmem:[%s560 + $0x1] sm:$0xff] %vm226, %v559
      %v562 = vpack.c.bf16 %v254, %v254
      %v564 = vsel %vm280, %v562, 0
      %566 = vmatprep.subr.bf16.mxu0 0
      %567 = vmatpush1.bf16.msra.mxu0 %v276
      %568 = vmatprep.subr.bf16.mxu0 0
      %569 = vmatpush1.bf16.msra.mxu0 %v277
      %570 = vmatprep.subr.bf16.mxu0 0
      %571 = vmatpush1.bf16.msra.mxu0 0
      %572 = vmatprep.subr.bf16.mxu0 0
      %573 = vmatpush1.bf16.msra.mxu0 0
      %574 = vmatprep.subr.bf16.mxu0 0
      %575 = vmatpush1.bf16.msra.mxu0 0
      %576 = vmatprep.subr.bf16.mxu0 0
      %577 = vmatpush1.bf16.msra.mxu0 0
      %578 = vmatprep.subr.bf16.mxu0 0
      %579 = vmatpush1.bf16.msra.mxu0 0
      %580 = vmatprep.subr.bf16.mxu0 0
      %581 = vmatpush1.bf16.msra.mxu0 0
      %582 = vmatprep.subr.bf16.mxu0 0
      %583 = vmatpush1.bf16.msra.mxu0 0
      %584 = vmatprep.subr.bf16.mxu0 0
      %585 = vmatpush1.bf16.msra.mxu0 0
      %586 = vmatprep.subr.bf16.mxu0 0
      %587 = vmatpush1.bf16.msra.mxu0 0
      %588 = vmatprep.subr.bf16.mxu0 0
      %589 = vmatpush1.bf16.msra.mxu0 0
      %590 = vmatprep.subr.bf16.mxu0 0
      %591 = vmatpush1.bf16.msra.mxu0 0
      %592 = vmatprep.subr.bf16.mxu0 0
      %593 = vmatpush1.bf16.msra.mxu0 0
      %594 = vmatprep.subr.bf16.mxu0 0
      %595 = vmatpush1.bf16.msra.mxu0 0
      %596 = vmatprep.subr.bf16.mxu0 0
      %597 = vmatpush1.bf16.msra.mxu0 0
      %598 = vmatprep.mubr.bf16.mxu0 0
      %599 = vmatmul.mubr.bf16.gmra.mrb[0].mxu0 %v564
      %v600 = vpop.f32.mrb[0].mxu0
      %v601 = vadd.f32 %v266, %v600
      %v602 = vpop.f32.mrb[0].mxu0
      %v603 = vpop.f32.mrb[0].mxu0
      %v604 = vpop.f32.mrb[0].mxu0
      %605 = vdwg.mxu0
      %v606 = vmax.f32 %v601, 0.0
      %s607 = scalar_lea.vmem [#allocation2], 112
      %608 = vst.msk [vmem:[%s607 + $0x1] sm:$0xff] %vm226, %v606
      %v609 = vpack.c.bf16 %v255, %v255
      %v611 = vsel %vm280, %v609, 0
      %613 = vmatprep.subr.bf16.mxu0 0
      %614 = vmatpush1.bf16.msra.mxu0 %v276
      %615 = vmatprep.subr.bf16.mxu0 0
      %616 = vmatpush1.bf16.msra.mxu0 %v277
      %617 = vmatprep.subr.bf16.mxu0 0
      %618 = vmatpush1.bf16.msra.mxu0 0
      %619 = vmatprep.subr.bf16.mxu0 0
      %620 = vmatpush1.bf16.msra.mxu0 0
      %621 = vmatprep.subr.bf16.mxu0 0
      %622 = vmatpush1.bf16.msra.mxu0 0
      %623 = vmatprep.subr.bf16.mxu0 0
      %624 = vmatpush1.bf16.msra.mxu0 0
      %625 = vmatprep.subr.bf16.mxu0 0
      %626 = vmatpush1.bf16.msra.mxu0 0
      %627 = vmatprep.subr.bf16.mxu0 0
      %628 = vmatpush1.bf16.msra.mxu0 0
      %629 = vmatprep.subr.bf16.mxu0 0
      %630 = vmatpush1.bf16.msra.mxu0 0
      %631 = vmatprep.subr.bf16.mxu0 0
      %632 = vmatpush1.bf16.msra.mxu0 0
      %633 = vmatprep.subr.bf16.mxu0 0
      %634 = vmatpush1.bf16.msra.mxu0 0
      %635 = vmatprep.subr.bf16.mxu0 0
      %636 = vmatpush1.bf16.msra.mxu0 0
      %637 = vmatprep.subr.bf16.mxu0 0
      %638 = vmatpush1.bf16.msra.mxu0 0
      %639 = vmatprep.subr.bf16.mxu0 0
      %640 = vmatpush1.bf16.msra.mxu0 0
      %641 = vmatprep.subr.bf16.mxu0 0
      %642 = vmatpush1.bf16.msra.mxu0 0
      %643 = vmatprep.subr.bf16.mxu0 0
      %644 = vmatpush1.bf16.msra.mxu0 0
      %645 = vmatprep.mubr.bf16.mxu0 0
      %646 = vmatmul.mubr.bf16.gmra.mrb[0].mxu0 %v611
      %v647 = vpop.f32.mrb[0].mxu0
      %v648 = vadd.f32 %v266, %v647
      %v649 = vpop.f32.mrb[0].mxu0
      %v650 = vpop.f32.mrb[0].mxu0
      %v651 = vpop.f32.mrb[0].mxu0
      %652 = vdwg.mxu0
      %v653 = vmax.f32 %v648, 0.0
      %s654 = scalar_lea.vmem [#allocation2], 128
      %655 = vst.msk [vmem:[%s654 + $0x1] sm:$0xff] %vm226, %v653
      %v656 = vld [vmem:[%s3] sm:$0xff]
      %v657 = vld [vmem:[%s3 + $0x8] sm:$0x1]
      %v658 = vld [vmem:[%s4] sm:$0x1]
      %v660 = vlaneseq
      %v661 = vshrl.u32 %v660, 7
      %v662 = vsub.s32 0, %v661
      %v663 = vrot.slane %v658, %v662
      %v665 = vadd.f32 %v663, 0.0
      %v666 = vld [vmem:[#allocation2] sm:$0xff]
      %v667 = vld [vmem:[#allocation2 + $0x10] sm:$0xff]
      %v668 = vld [vmem:[#allocation2 + $0x20] sm:$0xff]
      %v669 = vld [vmem:[#allocation2 + $0x30] sm:$0xff]
      %v670 = vld [vmem:[#allocation2 + $0x40] sm:$0xff]
      %v671 = vld [vmem:[#allocation2 + $0x50] sm:$0xff]
      %v672 = vld [vmem:[#allocation2 + $0x60] sm:$0xff]
      %v673 = vld [vmem:[#allocation2 + $0x70] sm:$0xff]
      %v674 = vld [vmem:[#allocation2 + $0x80] sm:$0xff]
      %v675 = vld [vmem:[#allocation2 + $0x90] sm:$0xff]
      %v676 = vlaneseq
      %v677 = vshrl.u32 %v676, 7
      %v678 = vsub.s32 0, %v677
      %v679 = vrot.slane %v656, %v678
      %v680 = vmul.f32 %v666, %v679
      %v681 = vmul.f32 %v667, %v679
      %v682 = vmul.f32 %v668, %v679
      %v683 = vmul.f32 %v669, %v679
      %v684 = vmul.f32 %v670, %v679
      %v685 = vmul.f32 %v671, %v679
      %v686 = vmul.f32 %v672, %v679
      %v687 = vmul.f32 %v673, %v679
      %v688 = vadd.f32 %v665, %v680
      %v689 = vadd.f32 %v665, %v681
      %v690 = vadd.f32 %v665, %v682
      %v691 = vadd.f32 %v665, %v683
      %v692 = vadd.f32 %v665, %v684
      %v693 = vadd.f32 %v665, %v685
      %v694 = vadd.f32 %v665, %v686
      %v695 = vadd.f32 %v665, %v687
      %v696 = vlaneseq
      %v697 = vshrl.u32 %v696, 7
      %v698 = vsub.s32 3, %v697
      %v699 = vrot.slane %v656, %v698
      %v700 = vmul.f32 %v667, %v699
      %v701 = vmul.f32 %v668, %v699
      %v702 = vmul.f32 %v669, %v699
      %v703 = vmul.f32 %v670, %v699
      %v704 = vmul.f32 %v671, %v699
      %v705 = vmul.f32 %v672, %v699
      %v706 = vmul.f32 %v673, %v699
      %v707 = vmul.f32 %v674, %v699
      %v708 = vadd.f32 %v688, %v700
      %v709 = vadd.f32 %v689, %v701
      %v710 = vadd.f32 %v690, %v702
      %v711 = vadd.f32 %v691, %v703
      %v712 = vadd.f32 %v692, %v704
      %v713 = vadd.f32 %v693, %v705
      %v714 = vadd.f32 %v694, %v706
      %v715 = vadd.f32 %v695, %v707
      %v716 = vlaneseq
      %v717 = vshrl.u32 %v716, 7
      %v718 = vsub.s32 6, %v717
      %v719 = vrot.slane %v656, %v718
      %v720 = vmul.f32 %v668, %v719
      %v721 = vmul.f32 %v669, %v719
      %v722 = vmul.f32 %v670, %v719
      %v723 = vmul.f32 %v671, %v719
      %v724 = vmul.f32 %v672, %v719
      %v725 = vmul.f32 %v673, %v719
      %v726 = vmul.f32 %v674, %v719
      %v727 = vmul.f32 %v675, %v719
      %v728 = vadd.f32 %v708, %v720
      %v729 = vadd.f32 %v709, %v721
      %v730 = vadd.f32 %v710, %v722
      %v731 = vadd.f32 %v711, %v723
      %v732 = vadd.f32 %v712, %v724
      %v733 = vadd.f32 %v713, %v725
      %v734 = vadd.f32 %v714, %v726
      %v735 = vadd.f32 %v715, %v727
      %v736 = vld [vmem:[#allocation2 + $0x1] sm:$0xff]
      %v737 = vld [vmem:[#allocation2 + $0x11] sm:$0xff]
      %v738 = vld [vmem:[#allocation2 + $0x21] sm:$0xff]
      %v739 = vld [vmem:[#allocation2 + $0x31] sm:$0xff]
      %v740 = vld [vmem:[#allocation2 + $0x41] sm:$0xff]
      %v741 = vld [vmem:[#allocation2 + $0x51] sm:$0xff]
      %v742 = vld [vmem:[#allocation2 + $0x61] sm:$0xff]
      %v743 = vld [vmem:[#allocation2 + $0x71] sm:$0xff]
      %v744 = vld [vmem:[#allocation2 + $0x81] sm:$0xff]
      %v745 = vld [vmem:[#allocation2 + $0x91] sm:$0xff]
      %v746 = vlaneseq
      %v747 = vshrl.u32 %v746, 7
      %v748 = vsub.s32 1, %v747
      %v749 = vrot.slane %v656, %v748
      %v750 = vmul.f32 %v736, %v749
      %v751 = vmul.f32 %v737, %v749
      %v752 = vmul.f32 %v738, %v749
      %v753 = vmul.f32 %v739, %v749
      %v754 = vmul.f32 %v740, %v749
      %v755 = vmul.f32 %v741, %v749
      %v756 = vmul.f32 %v742, %v749
      %v757 = vmul.f32 %v743, %v749
      %v758 = vadd.f32 %v728, %v750
      %v759 = vadd.f32 %v729, %v751
      %v760 = vadd.f32 %v730, %v752
      %v761 = vadd.f32 %v731, %v753
      %v762 = vadd.f32 %v732, %v754
      %v763 = vadd.f32 %v733, %v755
      %v764 = vadd.f32 %v734, %v756
      %v765 = vadd.f32 %v735, %v757
      %v766 = vlaneseq
      %v767 = vshrl.u32 %v766, 7
      %v768 = vsub.s32 4, %v767
      %v769 = vrot.slane %v656, %v768
      %v770 = vmul.f32 %v737, %v769
      %v771 = vmul.f32 %v738, %v769
      %v772 = vmul.f32 %v739, %v769
      %v773 = vmul.f32 %v740, %v769
      %v774 = vmul.f32 %v741, %v769
      %v775 = vmul.f32 %v742, %v769
      %v776 = vmul.f32 %v743, %v769
      %v777 = vmul.f32 %v744, %v769
      %v778 = vadd.f32 %v758, %v770
      %v779 = vadd.f32 %v759, %v771
      %v780 = vadd.f32 %v760, %v772
      %v781 = vadd.f32 %v761, %v773
      %v782 = vadd.f32 %v762, %v774
      %v783 = vadd.f32 %v763, %v775
      %v784 = vadd.f32 %v764, %v776
      %v785 = vadd.f32 %v765, %v777
      %v786 = vlaneseq
      %v787 = vshrl.u32 %v786, 7
      %v788 = vsub.s32 7, %v787
      %v789 = vrot.slane %v656, %v788
      %v790 = vmul.f32 %v738, %v789
      %v791 = vmul.f32 %v739, %v789
      %v792 = vmul.f32 %v740, %v789
      %v793 = vmul.f32 %v741, %v789
      %v794 = vmul.f32 %v742, %v789
      %v795 = vmul.f32 %v743, %v789
      %v796 = vmul.f32 %v744, %v789
      %v797 = vmul.f32 %v745, %v789
      %v798 = vadd.f32 %v778, %v790
      %v799 = vadd.f32 %v779, %v791
      %v800 = vadd.f32 %v780, %v792
      %v801 = vadd.f32 %v781, %v793
      %v802 = vadd.f32 %v782, %v794
      %v803 = vadd.f32 %v783, %v795
      %v804 = vadd.f32 %v784, %v796
      %v805 = vadd.f32 %v785, %v797
      %v806 = vld [vmem:[#allocation2 + $0x2] sm:$0xff]
      %v807 = vld [vmem:[#allocation2 + $0x12] sm:$0xff]
      %v808 = vld [vmem:[#allocation2 + $0x22] sm:$0xff]
      %v809 = vld [vmem:[#allocation2 + $0x32] sm:$0xff]
      %v810 = vld [vmem:[#allocation2 + $0x42] sm:$0xff]
      %v811 = vld [vmem:[#allocation2 + $0x52] sm:$0xff]
      %v812 = vld [vmem:[#allocation2 + $0x62] sm:$0xff]
      %v813 = vld [vmem:[#allocation2 + $0x72] sm:$0xff]
      %v814 = vld [vmem:[#allocation2 + $0x82] sm:$0xff]
      %v815 = vld [vmem:[#allocation2 + $0x92] sm:$0xff]
      %v816 = vlaneseq
      %v817 = vshrl.u32 %v816, 7
      %v818 = vsub.s32 2, %v817
      %v819 = vrot.slane %v656, %v818
      %v820 = vmul.f32 %v806, %v819
      %v821 = vmul.f32 %v807, %v819
      %v822 = vmul.f32 %v808, %v819
      %v823 = vmul.f32 %v809, %v819
      %v824 = vmul.f32 %v810, %v819
      %v825 = vmul.f32 %v811, %v819
      %v826 = vmul.f32 %v812, %v819
      %v827 = vmul.f32 %v813, %v819
      %v828 = vadd.f32 %v798, %v820
      %v829 = vadd.f32 %v799, %v821
      %v830 = vadd.f32 %v800, %v822
      %v831 = vadd.f32 %v801, %v823
      %v832 = vadd.f32 %v802, %v824
      %v833 = vadd.f32 %v803, %v825
      %v834 = vadd.f32 %v804, %v826
      %v835 = vadd.f32 %v805, %v827
      %v836 = vlaneseq
      %v837 = vshrl.u32 %v836, 7
      %v838 = vsub.s32 5, %v837
      %v839 = vrot.slane %v656, %v838
      %v840 = vmul.f32 %v807, %v839
      %v841 = vmul.f32 %v808, %v839
      %v842 = vmul.f32 %v809, %v839
      %v843 = vmul.f32 %v810, %v839
      %v844 = vmul.f32 %v811, %v839
      %v845 = vmul.f32 %v812, %v839
      %v846 = vmul.f32 %v813, %v839
      %v847 = vmul.f32 %v814, %v839
      %v848 = vadd.f32 %v828, %v840
      %v849 = vadd.f32 %v829, %v841
      %v850 = vadd.f32 %v830, %v842
      %v851 = vadd.f32 %v831, %v843
      %v852 = vadd.f32 %v832, %v844
      %v853 = vadd.f32 %v833, %v845
      %v854 = vadd.f32 %v834, %v846
      %v855 = vadd.f32 %v835, %v847
      %v856 = vlaneseq
      %v857 = vshrl.u32 %v856, 7
      %v858 = vsub.s32 0, %v857
      %v859 = vrot.slane %v657, %v858
      %v860 = vmul.f32 %v808, %v859
      %v861 = vmul.f32 %v809, %v859
      %v862 = vmul.f32 %v810, %v859
      %v863 = vmul.f32 %v811, %v859
      %v864 = vmul.f32 %v812, %v859
      %v865 = vmul.f32 %v813, %v859
      %v866 = vmul.f32 %v814, %v859
      %v867 = vmul.f32 %v815, %v859
      %v868 = vadd.f32 %v848, %v860
      %v869 = vadd.f32 %v849, %v861
      %v870 = vadd.f32 %v850, %v862
      %v871 = vadd.f32 %v851, %v863
      %v872 = vadd.f32 %v852, %v864
      %v873 = vadd.f32 %v853, %v865
      %v874 = vadd.f32 %v854, %v866
      %v875 = vadd.f32 %v855, %v867
      %v876 = vmax.f32 %v868, 0.0
      %v877 = vmax.f32 %v869, 0.0
      %v878 = vmax.f32 %v870, 0.0
      %v879 = vmax.f32 %v871, 0.0
      %v880 = vmax.f32 %v872, 0.0
      %v881 = vmax.f32 %v873, 0.0
      %v882 = vmax.f32 %v874, 0.0
      %v883 = vmax.f32 %v875, 0.0
      %884 = vst.msk [vmem:[%s224] sm:$0xff] %vm226, %v876
      %885 = vst.msk [vmem:[%s224 + $0x8] sm:$0xff] %vm226, %v877
      %886 = vst.msk [vmem:[%s224 + $0x10] sm:$0xff] %vm226, %v878
      %887 = vst.msk [vmem:[%s224 + $0x18] sm:$0xff] %vm226, %v879
      %888 = vst.msk [vmem:[%s224 + $0x20] sm:$0xff] %vm226, %v880
      %889 = vst.msk [vmem:[%s224 + $0x28] sm:$0xff] %vm226, %v881
      %890 = vst.msk [vmem:[%s224 + $0x30] sm:$0xff] %vm226, %v882
      %891 = vst.msk [vmem:[%s224 + $0x38] sm:$0xff] %vm226, %v883
      %p892 = scmp.lt.s32.totalorder %s16, 1
      %s893 = scalar_select %p892, %s16, 1
      %s894 = smul.addr %s893, 8
      %s895 = smul.addr %s894, 8
      %s896 = scalar_lea.vmem %s5, %s895
      // Predicated region
      $region41: #{_lambda_.12} parent=39 // pred_check
        %p897 = pneg %p144
      $region42: #{_lambda_.12} parent=39 // pred_check_branch
        %899 = sbr.rel (%p897) target = $region44
      $region43: #{_lambda_.12} parent=39 // pred_region
        _
      $region44: #{_lambda_.12} parent=39 // pred_fallthru
        _
    $region40: #{_lambda_.12} parent=5 // pred_fallthru
      _
    %p900 = scmp.le.s32.totalorder 2, %s11
    // Predicated region
    $region45: #{_lambda_.12} parent=5 // pred_check
      %p901 = pneg %p900
    $region46: #{_lambda_.12} parent=5 // pred_check_branch
      %903 = sbr.rel (%p901) target = $region48
    $region47: #{_lambda_.12} parent=5 // pred_region
      %s904 = ssub.s32 %s11, 2
      // Predicated region
      $region49: #{_lambda_.12} parent=47 // pred_check
        %p905 = pneg %p150
      $region50: #{_lambda_.12} parent=47 // pred_check_branch
        %907 = sbr.rel (%p905) target = $region52
      $region51: #{_lambda_.12} parent=47 // pred_region
        %p908 = scmp.lt.s32.totalorder %s17, 1
        %s909 = scalar_select %p908, %s17, 1
        %s910 = smul.addr %s909, 8
        %s911 = smul.addr %s910, 8
        %s912 = scalar_lea.vmem %s5, %s911
      $region52: #{_lambda_.12} parent=47 // pred_fallthru
        _
    $region48: #{_lambda_.12} parent=5 // pred_fallthru
      _
  $region6: #{_lambda_.12} parent=0 // loop_footer
    %s15 = sadd.s32 1, %s11
  $region7: #{_lambda_.12} parent=0 // loop_footer_branch
    %10 = sbr.rel target = $region3
  $region8: #{_lambda_.12} parent=0 // loop_exit
    _

// kernel: _lambda_.14
$region0: #{_lambda_.14}
  #allocation0 [shape = 'u32[]', space=smem, size = 0x4, offset = 0x4, fixed_abs, tag = 'smem constant byte address 0x4 - core index']
  #allocation1 [shape = 'u32[144,128]{1,0:T(1,128)}', space=vmem, size = 0x12000, scoped, tag = 'internal scratch']
  #allocation2 [shape = 'f32[6,6,128]{2,1,0:T(8,128)}', space=vmem, size = 0x6000, scoped, tag = 'scratch operand']
  %s0 = inlined_call_operand.vmem [shape: f32[2,4,4,128], index: 0, kind: input, shape index: {}]
  %s1 = inlined_call_operand.vmem [shape: bf16[128,128], index: 1, kind: input, shape index: {}]
  %s2 = inlined_call_operand.vmem [shape: f32[1,128], index: 2, kind: input, shape index: {}]
  %s3 = inlined_call_operand.vmem [shape: f32[9,128], index: 3, kind: input, shape index: {}]
  %s4 = inlined_call_operand.vmem [shape: f32[1,128], index: 4, kind: input, shape index: {}]
  %s5 = inlined_call_operand.vmem [shape: f32[2,4,4,128], index: 5, kind: output, shape index: {}]
  %s6 = sld [smem:[#allocation0]]
  $region53: #{_lambda_.14} parent=0
    _
  %s8 = ssub.s32 1, %s6
  %s9 = scalar_select 0, %s8, %s6
  loop: start=0, step=1, limit=4
  $region2: #{_lambda_.14} parent=0 // loop_pre_header
    _
  $region3: #{_lambda_.14} parent=0 // loop_header
    %s11 = sphi 0, %s15
    %p12 = scmp.ge.s32.totalorder %s11, 4
    %s21 = sphi 0, %s23
    %s24 = sphi 0, %s21
    %s25 = sphi 0, %s24
    %s41 = sphi 0, %s25
    %s45 = sphi 0, %s45
    %s47 = sphi 0, %s45
    %s48 = sphi 0, %s47
    %s62 = sphi 0, %s48
    %s66 = sphi 0, %s66
    %s68 = sphi 0, %s66
    %s69 = sphi 0, %s68
    %s83 = sphi 0, %s69
    %s87 = sphi 0, %s87
    %s89 = sphi 0, %s87
    %s90 = sphi 0, %s89
    %s104 = sphi 0, %s90
    %s108 = sphi 0, %s108
    %s110 = sphi 0, %s108
    %s111 = sphi 0, %s110
    %s125 = sphi 0, %s111
    %s131 = sphi 0, %s133
    %s134 = sphi 0, %s131
    %s135 = sphi 0, %s134
    %s151 = sphi 0, %s135
  $region4: #{_lambda_.14} parent=0 // loop_header_branch
    %14 = sbr.rel (%p12) target = $region8
  $region5: #{_lambda_.14} parent=0 // loop_body
    %s16 = ssub.s32 %s11, 1
    %s17 = ssub.s32 %s11, 2
    %s18 = sadd.s32 %s11, 1
    %s19 = ssub.s32 %s11, %s18
    %p20 = scmp.eq.s32.totalorder %s19, 0
    %s22 = sadd.s32 %s21, 1
    %s23 = scalar_select %p20, %s21, %s22
    %p26 = pneg %p20
    %p27 = scmp.eq.s32.totalorder %s11, 1
    %p28 = por %p26, %p27
    %p29 = scmp.ne.s32.totalorder %s21, %s24
    %p30 = scmp.eq.s32.totalorder %s11, 0
    %p31 = por %p29, %p30
    %p32 = scmp.ne.s32.totalorder %s21, %s24
    %p33 = scmp.eq.s32.totalorder %s16, 1
    %p34 = por %p32, %p33
    %p35 = scmp.ne.s32.totalorder %s24, %s25
    %p36 = scmp.eq.s32.totalorder %s16, 0
    %p37 = por %p35, %p36
    %p38 = scmp.ne.s32.totalorder %s24, %s25
    %p39 = scmp.eq.s32.totalorder %s17, 1
    %p40 = por %p38, %p39
    %p42 = scmp.ne.s32.totalorder %s25, %s41
    %p43 = scmp.eq.s32.totalorder %s17, 0
    %p44 = por %p42, %p43
    %s46 = sadd.s32 %s45, 1
    %p49 = scmp.eq.s32.totalorder %s11, 1
    %p50 = scmp.ne.s32.totalorder %s45, %s47
    %p51 = scmp.eq.s32.totalorder %s11, 0
    %p52 = por %p50, %p51
    %p53 = scmp.ne.s32.totalorder %s45, %s47
    %p54 = scmp.eq.s32.totalorder %s16, 1
    %p55 = por %p53, %p54
    %p56 = scmp.ne.s32.totalorder %s47, %s48
    %p57 = scmp.eq.s32.totalorder %s16, 0
    %p58 = por %p56, %p57
    %p59 = scmp.ne.s32.totalorder %s47, %s48
    %p60 = scmp.eq.s32.totalorder %s17, 1
    %p61 = por %p59, %p60
    %p63 = scmp.ne.s32.totalorder %s48, %s62
    %p64 = scmp.eq.s32.totalorder %s17, 0
    %p65 = por %p63, %p64
    %s67 = sadd.s32 %s66, 1
    %p70 = scmp.eq.s32.totalorder %s11, 1
    %p71 = scmp.ne.s32.totalorder %s66, %s68
    %p72 = scmp.eq.s32.totalorder %s11, 0
    %p73 = por %p71, %p72
    %p74 = scmp.ne.s32.totalorder %s66, %s68
    %p75 = scmp.eq.s32.totalorder %s16, 1
    %p76 = por %p74, %p75
    %p77 = scmp.ne.s32.totalorder %s68, %s69
    %p78 = scmp.eq.s32.totalorder %s16, 0
    %p79 = por %p77, %p78
    %p80 = scmp.ne.s32.totalorder %s68, %s69
    %p81 = scmp.eq.s32.totalorder %s17, 1
    %p82 = por %p80, %p81
    %p84 = scmp.ne.s32.totalorder %s69, %s83
    %p85 = scmp.eq.s32.totalorder %s17, 0
    %p86 = por %p84, %p85
    %s88 = sadd.s32 %s87, 1
    %p91 = scmp.eq.s32.totalorder %s11, 1
    %p92 = scmp.ne.s32.totalorder %s87, %s89
    %p93 = scmp.eq.s32.totalorder %s11, 0
    %p94 = por %p92, %p93
    %p95 = scmp.ne.s32.totalorder %s87, %s89
    %p96 = scmp.eq.s32.totalorder %s16, 1
    %p97 = por %p95, %p96
    %p98 = scmp.ne.s32.totalorder %s89, %s90
    %p99 = scmp.eq.s32.totalorder %s16, 0
    %p100 = por %p98, %p99
    %p101 = scmp.ne.s32.totalorder %s89, %s90
    %p102 = scmp.eq.s32.totalorder %s17, 1
    %p103 = por %p101, %p102
    %p105 = scmp.ne.s32.totalorder %s90, %s104
    %p106 = scmp.eq.s32.totalorder %s17, 0
    %p107 = por %p105, %p106
    %s109 = sadd.s32 %s108, 1
    %p112 = scmp.eq.s32.totalorder %s11, 1
    %p113 = scmp.ne.s32.totalorder %s108, %s110
    %p114 = scmp.eq.s32.totalorder %s11, 0
    %p115 = por %p113, %p114
    %p116 = scmp.ne.s32.totalorder %s108, %s110
    %p117 = scmp.eq.s32.totalorder %s16, 1
    %p118 = por %p116, %p117
    %p119 = scmp.ne.s32.totalorder %s110, %s111
    %p120 = scmp.eq.s32.totalorder %s16, 0
    %p121 = por %p119, %p120
    %p122 = scmp.ne.s32.totalorder %s110, %s111
    %p123 = scmp.eq.s32.totalorder %s17, 1
    %p124 = por %p122, %p123
    %p126 = scmp.ne.s32.totalorder %s111, %s125
    %p127 = scmp.eq.s32.totalorder %s17, 0
    %p128 = por %p126, %p127
    %s129 = ssub.s32 %s11, %s18
    %p130 = scmp.eq.s32.totalorder %s129, 0
    %s132 = sadd.s32 %s131, 1
    %s133 = scalar_select %p130, %s131, %s132
    %p136 = pneg %p130
    %p137 = scmp.eq.s32.totalorder %s11, 1
    %p138 = por %p136, %p137
    %p139 = scmp.ne.s32.totalorder %s131, %s134
    %p140 = scmp.eq.s32.totalorder %s11, 0
    %p141 = por %p139, %p140
    %p142 = scmp.ne.s32.totalorder %s131, %s134
    %p143 = scmp.eq.s32.totalorder %s16, 1
    %p144 = por %p142, %p143
    %p145 = scmp.ne.s32.totalorder %s134, %s135
    %p146 = scmp.eq.s32.totalorder %s16, 0
    %p147 = por %p145, %p146
    %p148 = scmp.ne.s32.totalorder %s134, %s135
    %p149 = scmp.eq.s32.totalorder %s17, 1
    %p150 = por %p148, %p149
    %p152 = scmp.ne.s32.totalorder %s135, %s151
    %p153 = scmp.eq.s32.totalorder %s17, 0
    %p154 = por %p152, %p153
    %p155 = scmp.le.s32.totalorder 1, %s11
    %p156 = scmp.lt.s32.totalorder %s11, 3
    %p157 = pnand %p155, %p156
    %p158 = pneg %p157
    // Predicated region
    $region9: #{_lambda_.14} parent=5 // pred_check
      _
    $region10: #{_lambda_.14} parent=5 // pred_check_branch
      %160 = sbr.rel (%p157) target = $region12
    $region11: #{_lambda_.14} parent=5 // pred_region
      %s161 = ssub.s32 %s11, 1
      // Predicated region
      $region13: #{_lambda_.14} parent=11 // pred_check
        %p162 = pneg %p58
      $region14: #{_lambda_.14} parent=11 // pred_check_branch
        %164 = sbr.rel (%p162) target = $region16
      $region15: #{_lambda_.14} parent=11 // pred_region
        _
      $region16: #{_lambda_.14} parent=11 // pred_fallthru
        _
      // Predicated region
      $region17: #{_lambda_.14} parent=11 // pred_check
        %p165 = pneg %p79
      $region18: #{_lambda_.14} parent=11 // pred_check_branch
        %167 = sbr.rel (%p165) target = $region20
      $region19: #{_lambda_.14} parent=11 // pred_region
        _
      $region20: #{_lambda_.14} parent=11 // pred_fallthru
        _
      // Predicated region
      $region21: #{_lambda_.14} parent=11 // pred_check
        %p168 = pneg %p100
      $region22: #{_lambda_.14} parent=11 // pred_check_branch
        %170 = sbr.rel (%p168) target = $region24
      $region23: #{_lambda_.14} parent=11 // pred_region
        _
      $region24: #{_lambda_.14} parent=11 // pred_fallthru
        _
      // Predicated region
      $region25: #{_lambda_.14} parent=11 // pred_check
        %p171 = pneg %p121
      $region26: #{_lambda_.14} parent=11 // pred_check_branch
        %173 = sbr.rel (%p171) target = $region28
      $region27: #{_lambda_.14} parent=11 // pred_region
        _
      $region28: #{_lambda_.14} parent=11 // pred_fallthru
        _
    $region12: #{_lambda_.14} parent=5 // pred_fallthru
      _
    %p174 = scmp.lt.s32.totalorder %s11, 2
    // Predicated region
    $region29: #{_lambda_.14} parent=5 // pred_check
      %p175 = pneg %p174
    $region30: #{_lambda_.14} parent=5 // pred_check_branch
      %177 = sbr.rel (%p175) target = $region32
    $region31: #{_lambda_.14} parent=5 // pred_region
      // Predicated region
      $region33: #{_lambda_.14} parent=31 // pred_check
        %p178 = pneg %p31
      $region34: #{_lambda_.14} parent=31 // pred_check_branch
        %180 = sbr.rel (%p178) target = $region36
      $region35: #{_lambda_.14} parent=31 // pred_region
        %p181 = scmp.lt.s32.totalorder %s11, 1
        %s182 = scalar_select %p181, %s11, 1
        %s183 = smul.addr %s182, 4
        %s184 = smul.addr %s183, 4
        %s185 = scalar_lea.vmem %s0, %s184
      $region36: #{_lambda_.14} parent=31 // pred_fallthru
        _
    $region32: #{_lambda_.14} parent=5 // pred_fallthru
      _
    %p186 = scmp.le.s32.totalorder 1, %s11
    %p187 = scmp.lt.s32.totalorder %s11, 3
    %p188 = pnand %p186, %p187
    %p189 = pneg %p188
    // Predicated region
    $region37: #{_lambda_.14} parent=5 // pred_check
      _
    $region38: #{_lambda_.14} parent=5 // pred_check_branch
      %191 = sbr.rel (%p188) target = $region40
    $region39: #{_lambda_.14} parent=5 // pred_region
      %s192 = ssub.s32 %s11, 1
      %p193 = scmp.lt.s32.totalorder %s16, 1
      %s194 = scalar_select %p193, %s16, 1
      %s195 = smul.addr %s194, 4
      %s196 = smul.addr %s195, 4
      %s197 = scalar_lea.vmem %s0, %s196
      %p198 = pneg %p37
      %p199 = pneg %p34
      %p200 = pneg %p58
      %p201 = pneg %p55
      %p202 = pneg %p79
      %p203 = pneg %p76
      %p204 = pneg %p100
      %p205 = pneg %p97
      %p206 = pneg %p121
      %p207 = pneg %p118
      %p208 = pneg %p147
      %p209 = pneg %p144
      %p210 = scmp.lt.s32.totalorder %s16, 1
      %s211 = scalar_select %p210, %s16, 1
      %s212 = smul.addr %s211, 4
      %s213 = smul.addr %s212, 4
      %s214 = scalar_lea.vmem %s5, %s213
      %p215 = scmp.lt.s32.totalorder %s16, 1
      %s216 = scalar_select %p215, %s16, 1
      %s217 = smul.addr %s216, 4
      %s218 = smul.addr %s217, 4
      %s219 = scalar_lea.vmem %s0, %s218
      %p220 = scmp.lt.s32.totalorder %s16, 1
      %s221 = scalar_select %p220, %s16, 1
      %s222 = smul.addr %s221, 4
      %s223 = smul.addr %s222, 4
      %s224 = scalar_lea.vmem %s5, %s223
      %226 = vst [vmem:[#allocation2] sm:$0x3f] 0.0
      %227 = vst [vmem:[#allocation2 + $0x8] sm:$0x3f] 0.0
      %228 = vst [vmem:[#allocation2 + $0x10] sm:$0x3f] 0.0
      %229 = vst [vmem:[#allocation2 + $0x18] sm:$0x3f] 0.0
      %230 = vst [vmem:[#allocation2 + $0x20] sm:$0x3f] 0.0
      %231 = vst [vmem:[#allocation2 + $0x28] sm:$0x3f] 0.0
      %v232 = vld [vmem:[%s219] sm:$0xf]
      %v233 = vld [vmem:[%s219 + $0x4] sm:$0xf]
      %v234 = vld [vmem:[%s219 + $0x8] sm:$0xf]
      %v235 = vld [vmem:[%s219 + $0xc] sm:$0xf]
      %v236 = vld [vmem:[%s1] sm:$0xf]
      %v237 = vld [vmem:[%s1 + $0x4] sm:$0xf]
      %v238 = vld [vmem:[%s1 + $0x8] sm:$0xf]
      %v239 = vld [vmem:[%s1 + $0xc] sm:$0xf]
      %v240 = vld [vmem:[%s1 + $0x10] sm:$0xf]
      %v241 = vld [vmem:[%s1 + $0x14] sm:$0xf]
      %v242 = vld [vmem:[%s1 + $0x18] sm:$0xf]
      %v243 = vld [vmem:[%s1 + $0x1c] sm:$0xf]
      %v244 = vld [vmem:[%s1 + $0x20] sm:$0xf]
      %v245 = vld [vmem:[%s1 + $0x24] sm:$0xf]
      %v246 = vld [vmem:[%s1 + $0x28] sm:$0xf]
      %v247 = vld [vmem:[%s1 + $0x2c] sm:$0xf]
      %v248 = vld [vmem:[%s1 + $0x30] sm:$0xf]
      %v249 = vld [vmem:[%s1 + $0x34] sm:$0xf]
      %v250 = vld [vmem:[%s1 + $0x38] sm:$0xf]
      %v251 = vld [vmem:[%s1 + $0x3c] sm:$0xf]
      %v252 = vld [vmem:[%s2] sm:$0x1]
      %v253 = vpack.c.bf16 %v232, %v232
      %v255 = vlaneseq
      %v256 = vshrl.u32 %v255, 7
      %v257 = vsub.s32 0, %v256
      %v258 = vrot.slane %v252, %v257
      %v276 = vunpack.c.l.b16 %v236
      %v277 = vunpack.c.l.b16 %v237
      %v278 = vunpack.c.l.b16 %v238
      %v279 = vunpack.c.l.b16 %v239
      %v280 = vunpack.c.l.b16 %v240
      %v281 = vunpack.c.l.b16 %v241
      %v282 = vunpack.c.l.b16 %v242
      %v283 = vunpack.c.l.b16 %v243
      %v284 = vunpack.c.l.b16 %v244
      %v285 = vunpack.c.l.b16 %v245
      %v286 = vunpack.c.l.b16 %v246
      %v287 = vunpack.c.l.b16 %v247
      %v288 = vunpack.c.l.b16 %v248
      %v289 = vunpack.c.l.b16 %v249
      %v290 = vunpack.c.l.b16 %v250
      %v291 = vunpack.c.l.b16 %v251
      %v292 = vpack.c.b16 %v277, %v276
      %v293 = vpack.c.b16 %v279, %v278
      %v294 = vpack.c.b16 %v281, %v280
      %v295 = vpack.c.b16 %v283, %v282
      %v296 = vpack.c.b16 %v285, %v284
      %v297 = vpack.c.b16 %v287, %v286
      %v298 = vpack.c.b16 %v289, %v288
      %v299 = vpack.c.b16 %v291, %v290
      %308 = vmatprep.subr.bf16.mxu0 0
      %309 = vmatpush1.bf16.msra.mxu0 %v292
      %310 = vmatprep.subr.bf16.mxu0 0
      %311 = vmatpush1.bf16.msra.mxu0 %v293
      %312 = vmatprep.subr.bf16.mxu0 0
      %313 = vmatpush1.bf16.msra.mxu0 %v294
      %314 = vmatprep.subr.bf16.mxu0 0
      %315 = vmatpush1.bf16.msra.mxu0 %v295
      %316 = vmatprep.subr.bf16.mxu0 0
      %317 = vmatpush1.bf16.msra.mxu0 %v296
      %318 = vmatprep.subr.bf16.mxu0 0
      %319 = vmatpush1.bf16.msra.mxu0 %v297
      %320 = vmatprep.subr.bf16.mxu0 0
      %321 = vmatpush1.bf16.msra.mxu0 %v298
      %322 = vmatprep.subr.bf16.mxu0 0
      %323 = vmatpush1.bf16.msra.mxu0 %v299
      %324 = vmatprep.subr.bf16.mxu0 0
      %325 = vmatpush1.bf16.msra.mxu0 0
      %326 = vmatprep.subr.bf16.mxu0 0
      %327 = vmatpush1.bf16.msra.mxu0 0
      %328 = vmatprep.subr.bf16.mxu0 0
      %329 = vmatpush1.bf16.msra.mxu0 0
      %330 = vmatprep.subr.bf16.mxu0 0
      %331 = vmatpush1.bf16.msra.mxu0 0
      %332 = vmatprep.subr.bf16.mxu0 0
      %333 = vmatpush1.bf16.msra.mxu0 0
      %334 = vmatprep.subr.bf16.mxu0 0
      %335 = vmatpush1.bf16.msra.mxu0 0
      %336 = vmatprep.subr.bf16.mxu0 0
      %337 = vmatpush1.bf16.msra.mxu0 0
      %338 = vmatprep.subr.bf16.mxu0 0
      %339 = vmatpush1.bf16.msra.mxu0 0
      %340 = vmatprep.mubr.bf16.mxu0 0
      %341 = vmatmul.mubr.bf16.gmra.mrb[0].mxu0 %v253
      %v342 = vpop.f32.mrb[0].mxu0
      %v343 = vadd.f32 %v258, %v342
      %v344 = vpop.f32.mrb[0].mxu0
      %v345 = vpop.f32.mrb[0].mxu0
      %v346 = vpop.f32.mrb[0].mxu0
      %347 = vdwg.mxu0
      %v348 = vmax.f32 %v343, 0.0
      %s349 = scalar_lea.vmem [#allocation2], 8
      %350 = vst [vmem:[%s349 + $0x1] sm:$0xf] %v348
      %v351 = vpack.c.bf16 %v233, %v233
      %352 = vmatprep.subr.bf16.mxu0 0
      %353 = vmatpush1.bf16.msra.mxu0 %v292
      %354 = vmatprep.subr.bf16.mxu0 0
      %355 = vmatpush1.bf16.msra.mxu0 %v293
      %356 = vmatprep.subr.bf16.mxu0 0
      %357 = vmatpush1.bf16.msra.mxu0 %v294
      %358 = vmatprep.subr.bf16.mxu0 0
      %359 = vmatpush1.bf16.msra.mxu0 %v295
      %360 = vmatprep.subr.bf16.mxu0 0
      %361 = vmatpush1.bf16.msra.mxu0 %v296
      %362 = vmatprep.subr.bf16.mxu0 0
      %363 = vmatpush1.bf16.msra.mxu0 %v297
      %364 = vmatprep.subr.bf16.mxu0 0
      %365 = vmatpush1.bf16.msra.mxu0 %v298
      %366 = vmatprep.subr.bf16.mxu0 0
      %367 = vmatpush1.bf16.msra.mxu0 %v299
      %368 = vmatprep.subr.bf16.mxu0 0
      %369 = vmatpush1.bf16.msra.mxu0 0
      %370 = vmatprep.subr.bf16.mxu0 0
      %371 = vmatpush1.bf16.msra.mxu0 0
      %372 = vmatprep.subr.bf16.mxu0 0
      %373 = vmatpush1.bf16.msra.mxu0 0
      %374 = vmatprep.subr.bf16.mxu0 0
      %375 = vmatpush1.bf16.msra.mxu0 0
      %376 = vmatprep.subr.bf16.mxu0 0
      %377 = vmatpush1.bf16.msra.mxu0 0
      %378 = vmatprep.subr.bf16.mxu0 0
      %379 = vmatpush1.bf16.msra.mxu0 0
      %380 = vmatprep.subr.bf16.mxu0 0
      %381 = vmatpush1.bf16.msra.mxu0 0
      %382 = vmatprep.subr.bf16.mxu0 0
      %383 = vmatpush1.bf16.msra.mxu0 0
      %384 = vmatprep.mubr.bf16.mxu0 0
      %385 = vmatmul.mubr.bf16.gmra.mrb[0].mxu0 %v351
      %v386 = vpop.f32.mrb[0].mxu0
      %v387 = vadd.f32 %v258, %v386
      %v388 = vpop.f32.mrb[0].mxu0
      %v389 = vpop.f32.mrb[0].mxu0
      %v390 = vpop.f32.mrb[0].mxu0
      %391 = vdwg.mxu0
      %v392 = vmax.f32 %v387, 0.0
      %s393 = scalar_lea.vmem [#allocation2], 16
      %394 = vst [vmem:[%s393 + $0x1] sm:$0xf] %v392
      %v395 = vpack.c.bf16 %v234, %v234
      %396 = vmatprep.subr.bf16.mxu0 0
      %397 = vmatpush1.bf16.msra.mxu0 %v292
      %398 = vmatprep.subr.bf16.mxu0 0
      %399 = vmatpush1.bf16.msra.mxu0 %v293
      %400 = vmatprep.subr.bf16.mxu0 0
      %401 = vmatpush1.bf16.msra.mxu0 %v294
      %402 = vmatprep.subr.bf16.mxu0 0
      %403 = vmatpush1.bf16.msra.mxu0 %v295
      %404 = vmatprep.subr.bf16.mxu0 0
      %405 = vmatpush1.bf16.msra.mxu0 %v296
      %406 = vmatprep.subr.bf16.mxu0 0
      %407 = vmatpush1.bf16.msra.mxu0 %v297
      %408 = vmatprep.subr.bf16.mxu0 0
      %409 = vmatpush1.bf16.msra.mxu0 %v298
      %410 = vmatprep.subr.bf16.mxu0 0
      %411 = vmatpush1.bf16.msra.mxu0 %v299
      %412 = vmatprep.subr.bf16.mxu0 0
      %413 = vmatpush1.bf16.msra.mxu0 0
      %414 = vmatprep.subr.bf16.mxu0 0
      %415 = vmatpush1.bf16.msra.mxu0 0
      %416 = vmatprep.subr.bf16.mxu0 0
      %417 = vmatpush1.bf16.msra.mxu0 0
      %418 = vmatprep.subr.bf16.mxu0 0
      %419 = vmatpush1.bf16.msra.mxu0 0
      %420 = vmatprep.subr.bf16.mxu0 0
      %421 = vmatpush1.bf16.msra.mxu0 0
      %422 = vmatprep.subr.bf16.mxu0 0
      %423 = vmatpush1.bf16.msra.mxu0 0
      %424 = vmatprep.subr.bf16.mxu0 0
      %425 = vmatpush1.bf16.msra.mxu0 0
      %426 = vmatprep.subr.bf16.mxu0 0
      %427 = vmatpush1.bf16.msra.mxu0 0
      %428 = vmatprep.mubr.bf16.mxu0 0
      %429 = vmatmul.mubr.bf16.gmra.mrb[0].mxu0 %v395
      %v430 = vpop.f32.mrb[0].mxu0
      %v431 = vadd.f32 %v258, %v430
      %v432 = vpop.f32.mrb[0].mxu0
      %v433 = vpop.f32.mrb[0].mxu0
      %v434 = vpop.f32.mrb[0].mxu0
      %435 = vdwg.mxu0
      %v436 = vmax.f32 %v431, 0.0
      %s437 = scalar_lea.vmem [#allocation2], 24
      %438 = vst [vmem:[%s437 + $0x1] sm:$0xf] %v436
      %v439 = vpack.c.bf16 %v235, %v235
      %440 = vmatprep.subr.bf16.mxu0 0
      %441 = vmatpush1.bf16.msra.mxu0 %v292
      %442 = vmatprep.subr.bf16.mxu0 0
      %443 = vmatpush1.bf16.msra.mxu0 %v293
      %444 = vmatprep.subr.bf16.mxu0 0
      %445 = vmatpush1.bf16.msra.mxu0 %v294
      %446 = vmatprep.subr.bf16.mxu0 0
      %447 = vmatpush1.bf16.msra.mxu0 %v295
      %448 = vmatprep.subr.bf16.mxu0 0
      %449 = vmatpush1.bf16.msra.mxu0 %v296
      %450 = vmatprep.subr.bf16.mxu0 0
      %451 = vmatpush1.bf16.msra.mxu0 %v297
      %452 = vmatprep.subr.bf16.mxu0 0
      %453 = vmatpush1.bf16.msra.mxu0 %v298
      %454 = vmatprep.subr.bf16.mxu0 0
      %455 = vmatpush1.bf16.msra.mxu0 %v299
      %456 = vmatprep.subr.bf16.mxu0 0
      %457 = vmatpush1.bf16.msra.mxu0 0
      %458 = vmatprep.subr.bf16.mxu0 0
      %459 = vmatpush1.bf16.msra.mxu0 0
      %460 = vmatprep.subr.bf16.mxu0 0
      %461 = vmatpush1.bf16.msra.mxu0 0
      %462 = vmatprep.subr.bf16.mxu0 0
      %463 = vmatpush1.bf16.msra.mxu0 0
      %464 = vmatprep.subr.bf16.mxu0 0
      %465 = vmatpush1.bf16.msra.mxu0 0
      %466 = vmatprep.subr.bf16.mxu0 0
      %467 = vmatpush1.bf16.msra.mxu0 0
      %468 = vmatprep.subr.bf16.mxu0 0
      %469 = vmatpush1.bf16.msra.mxu0 0
      %470 = vmatprep.subr.bf16.mxu0 0
      %471 = vmatpush1.bf16.msra.mxu0 0
      %472 = vmatprep.mubr.bf16.mxu0 0
      %473 = vmatmul.mubr.bf16.gmra.mrb[0].mxu0 %v439
      %v474 = vpop.f32.mrb[0].mxu0
      %v475 = vadd.f32 %v258, %v474
      %v476 = vpop.f32.mrb[0].mxu0
      %v477 = vpop.f32.mrb[0].mxu0
      %v478 = vpop.f32.mrb[0].mxu0
      %479 = vdwg.mxu0
      %v480 = vmax.f32 %v475, 0.0
      %s481 = scalar_lea.vmem [#allocation2], 32
      %482 = vst [vmem:[%s481 + $0x1] sm:$0xf] %v480
      %v483 = vld [vmem:[%s3] sm:$0xff]
      %v484 = vld [vmem:[%s3 + $0x8] sm:$0x1]
      %v485 = vld [vmem:[%s4] sm:$0x1]
      %v487 = vlaneseq
      %v488 = vshrl.u32 %v487, 7
      %v489 = vsub.s32 0, %v488
      %v490 = vrot.slane %v485, %v489
      %v492 = vadd.f32 %v490, 0.0
      %v493 = vld [vmem:[#allocation2] sm:$0xf]
      %v494 = vld [vmem:[#allocation2 + $0x8] sm:$0xf]
      %v495 = vld [vmem:[#allocation2 + $0x10] sm:$0xf]
      %v496 = vld [vmem:[#allocation2 + $0x18] sm:$0xf]
      %v497 = vld [vmem:[#allocation2 + $0x20] sm:$0xf]
      %v498 = vld [vmem:[#allocation2 + $0x28] sm:$0xf]
      %v499 = vlaneseq
      %v500 = vshrl.u32 %v499, 7
      %v501 = vsub.s32 0, %v500
      %v502 = vrot.slane %v483, %v501
      %v503 = vmul.f32 %v493, %v502
      %v504 = vmul.f32 %v494, %v502
      %v505 = vmul.f32 %v495, %v502
      %v506 = vmul.f32 %v496, %v502
      %v507 = vadd.f32 %v492, %v503
      %v508 = vadd.f32 %v492, %v504
      %v509 = vadd.f32 %v492, %v505
      %v510 = vadd.f32 %v492, %v506
      %v511 = vlaneseq
      %v512 = vshrl.u32 %v511, 7
      %v513 = vsub.s32 3, %v512
      %v514 = vrot.slane %v483, %v513
      %v515 = vmul.f32 %v494, %v514
      %v516 = vmul.f32 %v495, %v514
      %v517 = vmul.f32 %v496, %v514
      %v518 = vmul.f32 %v497, %v514
      %v519 = vadd.f32 %v507, %v515
      %v520 = vadd.f32 %v508, %v516
      %v521 = vadd.f32 %v509, %v517
      %v522 = vadd.f32 %v510, %v518
      %v523 = vlaneseq
      %v524 = vshrl.u32 %v523, 7
      %v525 = vsub.s32 6, %v524
      %v526 = vrot.slane %v483, %v525
      %v527 = vmul.f32 %v495, %v526
      %v528 = vmul.f32 %v496, %v526
      %v529 = vmul.f32 %v497, %v526
      %v530 = vmul.f32 %v498, %v526
      %v531 = vadd.f32 %v519, %v527
      %v532 = vadd.f32 %v520, %v528
      %v533 = vadd.f32 %v521, %v529
      %v534 = vadd.f32 %v522, %v530
      %v535 = vld [vmem:[#allocation2 + $0x1] sm:$0xf]
      %v536 = vld [vmem:[#allocation2 + $0x9] sm:$0xf]
      %v537 = vld [vmem:[#allocation2 + $0x11] sm:$0xf]
      %v538 = vld [vmem:[#allocation2 + $0x19] sm:$0xf]
      %v539 = vld [vmem:[#allocation2 + $0x21] sm:$0xf]
      %v540 = vld [vmem:[#allocation2 + $0x29] sm:$0xf]
      %v541 = vlaneseq
      %v542 = vshrl.u32 %v541, 7
      %v543 = vsub.s32 1, %v542
      %v544 = vrot.slane %v483, %v543
      %v545 = vmul.f32 %v535, %v544
      %v546 = vmul.f32 %v536, %v544
      %v547 = vmul.f32 %v537, %v544
      %v548 = vmul.f32 %v538, %v544
      %v549 = vadd.f32 %v531, %v545
      %v550 = vadd.f32 %v532, %v546
      %v551 = vadd.f32 %v533, %v547
      %v552 = vadd.f32 %v534, %v548
      %v553 = vlaneseq
      %v554 = vshrl.u32 %v553, 7
      %v555 = vsub.s32 4, %v554
      %v556 = vrot.slane %v483, %v555
      %v557 = vmul.f32 %v536, %v556
      %v558 = vmul.f32 %v537, %v556
      %v559 = vmul.f32 %v538, %v556
      %v560 = vmul.f32 %v539, %v556
      %v561 = vadd.f32 %v549, %v557
      %v562 = vadd.f32 %v550, %v558
      %v563 = vadd.f32 %v551, %v559
      %v564 = vadd.f32 %v552, %v560
      %v565 = vlaneseq
      %v566 = vshrl.u32 %v565, 7
      %v567 = vsub.s32 7, %v566
      %v568 = vrot.slane %v483, %v567
      %v569 = vmul.f32 %v537, %v568
      %v570 = vmul.f32 %v538, %v568
      %v571 = vmul.f32 %v539, %v568
      %v572 = vmul.f32 %v540, %v568
      %v573 = vadd.f32 %v561, %v569
      %v574 = vadd.f32 %v562, %v570
      %v575 = vadd.f32 %v563, %v571
      %v576 = vadd.f32 %v564, %v572
      %v577 = vld [vmem:[#allocation2 + $0x2] sm:$0xf]
      %v578 = vld [vmem:[#allocation2 + $0xa] sm:$0xf]
      %v579 = vld [vmem:[#allocation2 + $0x12] sm:$0xf]
      %v580 = vld [vmem:[#allocation2 + $0x1a] sm:$0xf]
      %v581 = vld [vmem:[#allocation2 + $0x22] sm:$0xf]
      %v582 = vld [vmem:[#allocation2 + $0x2a] sm:$0xf]
      %v583 = vlaneseq
      %v584 = vshrl.u32 %v583, 7
      %v585 = vsub.s32 2, %v584
      %v586 = vrot.slane %v483, %v585
      %v587 = vmul.f32 %v577, %v586
      %v588 = vmul.f32 %v578, %v586
      %v589 = vmul.f32 %v579, %v586
      %v590 = vmul.f32 %v580, %v586
      %v591 = vadd.f32 %v573, %v587
      %v592 = vadd.f32 %v574, %v588
      %v593 = vadd.f32 %v575, %v589
      %v594 = vadd.f32 %v576, %v590
      %v595 = vlaneseq
      %v596 = vshrl.u32 %v595, 7
      %v597 = vsub.s32 5, %v596
      %v598 = vrot.slane %v483, %v597
      %v599 = vmul.f32 %v578, %v598
      %v600 = vmul.f32 %v579, %v598
      %v601 = vmul.f32 %v580, %v598
      %v602 = vmul.f32 %v581, %v598
      %v603 = vadd.f32 %v591, %v599
      %v604 = vadd.f32 %v592, %v600
      %v605 = vadd.f32 %v593, %v601
      %v606 = vadd.f32 %v594, %v602
      %v607 = vlaneseq
      %v608 = vshrl.u32 %v607, 7
      %v609 = vsub.s32 0, %v608
      %v610 = vrot.slane %v484, %v609
      %v611 = vmul.f32 %v579, %v610
      %v612 = vmul.f32 %v580, %v610
      %v613 = vmul.f32 %v581, %v610
      %v614 = vmul.f32 %v582, %v610
      %v615 = vadd.f32 %v603, %v611
      %v616 = vadd.f32 %v604, %v612
      %v617 = vadd.f32 %v605, %v613
      %v618 = vadd.f32 %v606, %v614
      %v619 = vmax.f32 %v615, 0.0
      %v620 = vmax.f32 %v616, 0.0
      %v621 = vmax.f32 %v617, 0.0
      %v622 = vmax.f32 %v618, 0.0
      %623 = vst [vmem:[%s224] sm:$0xf] %v619
      %624 = vst [vmem:[%s224 + $0x4] sm:$0xf] %v620
      %625 = vst [vmem:[%s224 + $0x8] sm:$0xf] %v621
      %626 = vst [vmem:[%s224 + $0xc] sm:$0xf] %v622
      %p627 = scmp.lt.s32.totalorder %s16, 1
      %s628 = scalar_select %p627, %s16, 1
      %s629 = smul.addr %s628, 4
      %s630 = smul.addr %s629, 4
      %s631 = scalar_lea.vmem %s5, %s630
      // Predicated region
      $region41: #{_lambda_.14} parent=39 // pred_check
        %p632 = pneg %p144
      $region42: #{_lambda_.14} parent=39 // pred_check_branch
        %634 = sbr.rel (%p632) target = $region44
      $region43: #{_lambda_.14} parent=39 // pred_region
        _
      $region44: #{_lambda_.14} parent=39 // pred_fallthru
        _
    $region40: #{_lambda_.14} parent=5 // pred_fallthru
      _
    %p635 = scmp.le.s32.totalorder 2, %s11
    // Predicated region
    $region45: #{_lambda_.14} parent=5 // pred_check
      %p636 = pneg %p635
    $region46: #{_lambda_.14} parent=5 // pred_check_branch
      %638 = sbr.rel (%p636) target = $region48
    $region47: #{_lambda_.14} parent=5 // pred_region
      %s639 = ssub.s32 %s11, 2
      // Predicated region
      $region49: #{_lambda_.14} parent=47 // pred_check
        %p640 = pneg %p150
      $region50: #{_lambda_.14} parent=47 // pred_check_branch
        %642 = sbr.rel (%p640) target = $region52
      $region51: #{_lambda_.14} parent=47 // pred_region
        %p643 = scmp.lt.s32.totalorder %s17, 1
        %s644 = scalar_select %p643, %s17, 1
        %s645 = smul.addr %s644, 4
        %s646 = smul.addr %s645, 4
        %s647 = scalar_lea.vmem %s5, %s646
      $region52: #{_lambda_.14} parent=47 // pred_fallthru
        _
    $region48: #{_lambda_.14} parent=5 // pred_fallthru
      _
  $region6: #{_lambda_.14} parent=0 // loop_footer
    %s15 = sadd.s32 1, %s11
  $region7: #{_lambda_.14} parent=0 // loop_footer_branch
    %10 = sbr.rel target = $region3
  $region8: #{_lambda_.14} parent=0 // loop_exit
    _

// kernel: _lambda_.15
$region0: #{_lambda_.15}
  #allocation0 [shape = 'u32[]', space=smem, size = 0x4, offset = 0x4, fixed_abs, tag = 'smem constant byte address 0x4 - core index']
  #allocation1 [shape = 'u32[144,128]{1,0:T(1,128)}', space=vmem, size = 0x12000, scoped, tag = 'internal scratch']
  #allocation2 [shape = 'f32[4,4,256]{2,1,0:T(4,128)}', space=vmem, size = 0x4000, scoped, tag = 'scratch operand']
  %s0 = inlined_call_operand.vmem [shape: f32[2,2,2,128], index: 0, kind: input, shape index: {}]
  %s1 = inlined_call_operand.vmem [shape: bf16[128,256], index: 1, kind: input, shape index: {}]
  %s2 = inlined_call_operand.vmem [shape: f32[1,256], index: 2, kind: input, shape index: {}]
  %s3 = inlined_call_operand.vmem [shape: f32[9,256], index: 3, kind: input, shape index: {}]
  %s4 = inlined_call_operand.vmem [shape: f32[1,256], index: 4, kind: input, shape index: {}]
  %s5 = inlined_call_operand.vmem [shape: f32[2,2,2,256], index: 5, kind: output, shape index: {}]
  %s6 = sld [smem:[#allocation0]]
  $region53: #{_lambda_.15} parent=0
    _
  %s8 = ssub.s32 1, %s6
  %s9 = scalar_select 0, %s8, %s6
  loop: start=0, step=1, limit=4
  $region2: #{_lambda_.15} parent=0 // loop_pre_header
    _
  $region3: #{_lambda_.15} parent=0 // loop_header
    %s11 = sphi 0, %s15
    %p12 = scmp.ge.s32.totalorder %s11, 4
    %s21 = sphi 0, %s23
    %s24 = sphi 0, %s21
    %s25 = sphi 0, %s24
    %s41 = sphi 0, %s25
    %s45 = sphi 0, %s45
    %s47 = sphi 0, %s45
    %s48 = sphi 0, %s47
    %s62 = sphi 0, %s48
    %s66 = sphi 0, %s66
    %s68 = sphi 0, %s66
    %s69 = sphi 0, %s68
    %s83 = sphi 0, %s69
    %s87 = sphi 0, %s87
    %s89 = sphi 0, %s87
    %s90 = sphi 0, %s89
    %s104 = sphi 0, %s90
    %s108 = sphi 0, %s108
    %s110 = sphi 0, %s108
    %s111 = sphi 0, %s110
    %s125 = sphi 0, %s111
    %s131 = sphi 0, %s133
    %s134 = sphi 0, %s131
    %s135 = sphi 0, %s134
    %s151 = sphi 0, %s135
  $region4: #{_lambda_.15} parent=0 // loop_header_branch
    %14 = sbr.rel (%p12) target = $region8
  $region5: #{_lambda_.15} parent=0 // loop_body
    %s16 = ssub.s32 %s11, 1
    %s17 = ssub.s32 %s11, 2
    %s18 = sadd.s32 %s11, 1
    %s19 = ssub.s32 %s11, %s18
    %p20 = scmp.eq.s32.totalorder %s19, 0
    %s22 = sadd.s32 %s21, 1
    %s23 = scalar_select %p20, %s21, %s22
    %p26 = pneg %p20
    %p27 = scmp.eq.s32.totalorder %s11, 1
    %p28 = por %p26, %p27
    %p29 = scmp.ne.s32.totalorder %s21, %s24
    %p30 = scmp.eq.s32.totalorder %s11, 0
    %p31 = por %p29, %p30
    %p32 = scmp.ne.s32.totalorder %s21, %s24
    %p33 = scmp.eq.s32.totalorder %s16, 1
    %p34 = por %p32, %p33
    %p35 = scmp.ne.s32.totalorder %s24, %s25
    %p36 = scmp.eq.s32.totalorder %s16, 0
    %p37 = por %p35, %p36
    %p38 = scmp.ne.s32.totalorder %s24, %s25
    %p39 = scmp.eq.s32.totalorder %s17, 1
    %p40 = por %p38, %p39
    %p42 = scmp.ne.s32.totalorder %s25, %s41
    %p43 = scmp.eq.s32.totalorder %s17, 0
    %p44 = por %p42, %p43
    %s46 = sadd.s32 %s45, 1
    %p49 = scmp.eq.s32.totalorder %s11, 1
    %p50 = scmp.ne.s32.totalorder %s45, %s47
    %p51 = scmp.eq.s32.totalorder %s11, 0
    %p52 = por %p50, %p51
    %p53 = scmp.ne.s32.totalorder %s45, %s47
    %p54 = scmp.eq.s32.totalorder %s16, 1
    %p55 = por %p53, %p54
    %p56 = scmp.ne.s32.totalorder %s47, %s48
    %p57 = scmp.eq.s32.totalorder %s16, 0
    %p58 = por %p56, %p57
    %p59 = scmp.ne.s32.totalorder %s47, %s48
    %p60 = scmp.eq.s32.totalorder %s17, 1
    %p61 = por %p59, %p60
    %p63 = scmp.ne.s32.totalorder %s48, %s62
    %p64 = scmp.eq.s32.totalorder %s17, 0
    %p65 = por %p63, %p64
    %s67 = sadd.s32 %s66, 1
    %p70 = scmp.eq.s32.totalorder %s11, 1
    %p71 = scmp.ne.s32.totalorder %s66, %s68
    %p72 = scmp.eq.s32.totalorder %s11, 0
    %p73 = por %p71, %p72
    %p74 = scmp.ne.s32.totalorder %s66, %s68
    %p75 = scmp.eq.s32.totalorder %s16, 1
    %p76 = por %p74, %p75
    %p77 = scmp.ne.s32.totalorder %s68, %s69
    %p78 = scmp.eq.s32.totalorder %s16, 0
    %p79 = por %p77, %p78
    %p80 = scmp.ne.s32.totalorder %s68, %s69
    %p81 = scmp.eq.s32.totalorder %s17, 1
    %p82 = por %p80, %p81
    %p84 = scmp.ne.s32.totalorder %s69, %s83
    %p85 = scmp.eq.s32.totalorder %s17, 0
    %p86 = por %p84, %p85
    %s88 = sadd.s32 %s87, 1
    %p91 = scmp.eq.s32.totalorder %s11, 1
    %p92 = scmp.ne.s32.totalorder %s87, %s89
    %p93 = scmp.eq.s32.totalorder %s11, 0
    %p94 = por %p92, %p93
    %p95 = scmp.ne.s32.totalorder %s87, %s89
    %p96 = scmp.eq.s32.totalorder %s16, 1
    %p97 = por %p95, %p96
    %p98 = scmp.ne.s32.totalorder %s89, %s90
    %p99 = scmp.eq.s32.totalorder %s16, 0
    %p100 = por %p98, %p99
    %p101 = scmp.ne.s32.totalorder %s89, %s90
    %p102 = scmp.eq.s32.totalorder %s17, 1
    %p103 = por %p101, %p102
    %p105 = scmp.ne.s32.totalorder %s90, %s104
    %p106 = scmp.eq.s32.totalorder %s17, 0
    %p107 = por %p105, %p106
    %s109 = sadd.s32 %s108, 1
    %p112 = scmp.eq.s32.totalorder %s11, 1
    %p113 = scmp.ne.s32.totalorder %s108, %s110
    %p114 = scmp.eq.s32.totalorder %s11, 0
    %p115 = por %p113, %p114
    %p116 = scmp.ne.s32.totalorder %s108, %s110
    %p117 = scmp.eq.s32.totalorder %s16, 1
    %p118 = por %p116, %p117
    %p119 = scmp.ne.s32.totalorder %s110, %s111
    %p120 = scmp.eq.s32.totalorder %s16, 0
    %p121 = por %p119, %p120
    %p122 = scmp.ne.s32.totalorder %s110, %s111
    %p123 = scmp.eq.s32.totalorder %s17, 1
    %p124 = por %p122, %p123
    %p126 = scmp.ne.s32.totalorder %s111, %s125
    %p127 = scmp.eq.s32.totalorder %s17, 0
    %p128 = por %p126, %p127
    %s129 = ssub.s32 %s11, %s18
    %p130 = scmp.eq.s32.totalorder %s129, 0
    %s132 = sadd.s32 %s131, 1
    %s133 = scalar_select %p130, %s131, %s132
    %p136 = pneg %p130
    %p137 = scmp.eq.s32.totalorder %s11, 1
    %p138 = por %p136, %p137
    %p139 = scmp.ne.s32.totalorder %s131, %s134
    %p140 = scmp.eq.s32.totalorder %s11, 0
    %p141 = por %p139, %p140
    %p142 = scmp.ne.s32.totalorder %s131, %s134
    %p143 = scmp.eq.s32.totalorder %s16, 1
    %p144 = por %p142, %p143
    %p145 = scmp.ne.s32.totalorder %s134, %s135
    %p146 = scmp.eq.s32.totalorder %s16, 0
    %p147 = por %p145, %p146
    %p148 = scmp.ne.s32.totalorder %s134, %s135
    %p149 = scmp.eq.s32.totalorder %s17, 1
    %p150 = por %p148, %p149
    %p152 = scmp.ne.s32.totalorder %s135, %s151
    %p153 = scmp.eq.s32.totalorder %s17, 0
    %p154 = por %p152, %p153
    %p155 = scmp.le.s32.totalorder 1, %s11
    %p156 = scmp.lt.s32.totalorder %s11, 3
    %p157 = pnand %p155, %p156
    %p158 = pneg %p157
    // Predicated region
    $region9: #{_lambda_.15} parent=5 // pred_check
      _
    $region10: #{_lambda_.15} parent=5 // pred_check_branch
      %160 = sbr.rel (%p157) target = $region12
    $region11: #{_lambda_.15} parent=5 // pred_region
      %s161 = ssub.s32 %s11, 1
      // Predicated region
      $region13: #{_lambda_.15} parent=11 // pred_check
        %p162 = pneg %p58
      $region14: #{_lambda_.15} parent=11 // pred_check_branch
        %164 = sbr.rel (%p162) target = $region16
      $region15: #{_lambda_.15} parent=11 // pred_region
        _
      $region16: #{_lambda_.15} parent=11 // pred_fallthru
        _
      // Predicated region
      $region17: #{_lambda_.15} parent=11 // pred_check
        %p165 = pneg %p79
      $region18: #{_lambda_.15} parent=11 // pred_check_branch
        %167 = sbr.rel (%p165) target = $region20
      $region19: #{_lambda_.15} parent=11 // pred_region
        _
      $region20: #{_lambda_.15} parent=11 // pred_fallthru
        _
      // Predicated region
      $region21: #{_lambda_.15} parent=11 // pred_check
        %p168 = pneg %p100
      $region22: #{_lambda_.15} parent=11 // pred_check_branch
        %170 = sbr.rel (%p168) target = $region24
      $region23: #{_lambda_.15} parent=11 // pred_region
        _
      $region24: #{_lambda_.15} parent=11 // pred_fallthru
        _
      // Predicated region
      $region25: #{_lambda_.15} parent=11 // pred_check
        %p171 = pneg %p121
      $region26: #{_lambda_.15} parent=11 // pred_check_branch
        %173 = sbr.rel (%p171) target = $region28
      $region27: #{_lambda_.15} parent=11 // pred_region
        _
      $region28: #{_lambda_.15} parent=11 // pred_fallthru
        _
    $region12: #{_lambda_.15} parent=5 // pred_fallthru
      _
    %p174 = scmp.lt.s32.totalorder %s11, 2
    // Predicated region
    $region29: #{_lambda_.15} parent=5 // pred_check
      %p175 = pneg %p174
    $region30: #{_lambda_.15} parent=5 // pred_check_branch
      %177 = sbr.rel (%p175) target = $region32
    $region31: #{_lambda_.15} parent=5 // pred_region
      // Predicated region
      $region33: #{_lambda_.15} parent=31 // pred_check
        %p178 = pneg %p31
      $region34: #{_lambda_.15} parent=31 // pred_check_branch
        %180 = sbr.rel (%p178) target = $region36
      $region35: #{_lambda_.15} parent=31 // pred_region
        %p181 = scmp.lt.s32.totalorder %s11, 1
        %s182 = scalar_select %p181, %s11, 1
        %s183 = smul.addr %s182, 2
        %s184 = smul.addr %s183, 2
        %s185 = scalar_lea.vmem %s0, %s184
      $region36: #{_lambda_.15} parent=31 // pred_fallthru
        _
    $region32: #{_lambda_.15} parent=5 // pred_fallthru
      _
    %p186 = scmp.le.s32.totalorder 1, %s11
    %p187 = scmp.lt.s32.totalorder %s11, 3
    %p188 = pnand %p186, %p187
    %p189 = pneg %p188
    // Predicated region
    $region37: #{_lambda_.15} parent=5 // pred_check
      _
    $region38: #{_lambda_.15} parent=5 // pred_check_branch
      %191 = sbr.rel (%p188) target = $region40
    $region39: #{_lambda_.15} parent=5 // pred_region
      %s192 = ssub.s32 %s11, 1
      %p193 = scmp.lt.s32.totalorder %s16, 1
      %s194 = scalar_select %p193, %s16, 1
      %s195 = smul.addr %s194, 2
      %s196 = smul.addr %s195, 2
      %s197 = scalar_lea.vmem %s0, %s196
      %p198 = pneg %p37
      %p199 = pneg %p34
      %p200 = pneg %p58
      %p201 = pneg %p55
      %p202 = pneg %p79
      %p203 = pneg %p76
      %p204 = pneg %p100
      %p205 = pneg %p97
      %p206 = pneg %p121
      %p207 = pneg %p118
      %p208 = pneg %p147
      %p209 = pneg %p144
      %p210 = scmp.lt.s32.totalorder %s16, 1
      %s211 = scalar_select %p210, %s16, 1
      %s212 = smul.addr %s211, 4
      %s213 = smul.addr %s212, 2
      %s214 = scalar_lea.vmem %s5, %s213
      %p215 = scmp.lt.s32.totalorder %s16, 1
      %s216 = scalar_select %p215, %s16, 1
      %s217 = smul.addr %s216, 2
      %s218 = smul.addr %s217, 2
      %s219 = scalar_lea.vmem %s0, %s218
      %p220 = scmp.lt.s32.totalorder %s16, 1
      %s221 = scalar_select %p220, %s16, 1
      %s222 = smul.addr %s221, 4
      %s223 = smul.addr %s222, 2
      %s224 = scalar_lea.vmem %s5, %s223
      %226 = vst [vmem:[#allocation2] sm:$0xff] 0.0
      %227 = vst [vmem:[#allocation2 + $0x8] sm:$0xff] 0.0
      %228 = vst [vmem:[#allocation2 + $0x10] sm:$0xff] 0.0
      %229 = vst [vmem:[#allocation2 + $0x18] sm:$0xff] 0.0
      %v230 = vld [vmem:[%s219] sm:$0x3]
      %v231 = vld [vmem:[%s219 + $0x2] sm:$0x3]
      %v232 = vld [vmem:[%s1] sm:$0xff]
      %v233 = vld [vmem:[%s1 + $0x8] sm:$0xff]
      %v234 = vld [vmem:[%s1 + $0x10] sm:$0xff]
      %v235 = vld [vmem:[%s1 + $0x18] sm:$0xff]
      %v236 = vld [vmem:[%s1 + $0x20] sm:$0xff]
      %v237 = vld [vmem:[%s1 + $0x28] sm:$0xff]
      %v238 = vld [vmem:[%s1 + $0x30] sm:$0xff]
      %v239 = vld [vmem:[%s1 + $0x38] sm:$0xff]
      %v240 = vld [vmem:[%s1 + $0x40] sm:$0xff]
      %v241 = vld [vmem:[%s1 + $0x48] sm:$0xff]
      %v242 = vld [vmem:[%s1 + $0x50] sm:$0xff]
      %v243 = vld [vmem:[%s1 + $0x58] sm:$0xff]
      %v244 = vld [vmem:[%s1 + $0x60] sm:$0xff]
      %v245 = vld [vmem:[%s1 + $0x68] sm:$0xff]
      %v246 = vld [vmem:[%s1 + $0x70] sm:$0xff]
      %v247 = vld [vmem:[%s1 + $0x78] sm:$0xff]
      %v248 = vld [vmem:[%s2] sm:$0x3]
      %v249 = vpack.c.bf16 %v230, %v230
      %v251 = vlaneseq
      %v252 = vshrl.u32 %v251, 7
      %v253 = vsub.s32 0, %v252
      %v254 = vrot.slane %v248, %v253
      %v255 = vlaneseq
      %v256 = vshrl.u32 %v255, 7
      %v257 = vsub.s32 1, %v256
      %v258 = vrot.slane %v248, %v257
      %v277 = vunpack.c.l.b16 %v232
      %v278 = vunpack.c.h.b16 %v232
      %v279 = vunpack.c.l.b16 %v233
      %v280 = vunpack.c.h.b16 %v233
      %v281 = vunpack.c.l.b16 %v234
      %v282 = vunpack.c.h.b16 %v234
      %v283 = vunpack.c.l.b16 %v235
      %v284 = vunpack.c.h.b16 %v235
      %v285 = vunpack.c.l.b16 %v236
      %v286 = vunpack.c.h.b16 %v236
      %v287 = vunpack.c.l.b16 %v237
      %v288 = vunpack.c.h.b16 %v237
      %v289 = vunpack.c.l.b16 %v238
      %v290 = vunpack.c.h.b16 %v238
      %v291 = vunpack.c.l.b16 %v239
      %v292 = vunpack.c.h.b16 %v239
      %v293 = vunpack.c.l.b16 %v240
      %v294 = vunpack.c.h.b16 %v240
      %v295 = vunpack.c.l.b16 %v241
      %v296 = vunpack.c.h.b16 %v241
      %v297 = vunpack.c.l.b16 %v242
      %v298 = vunpack.c.h.b16 %v242
      %v299 = vunpack.c.l.b16 %v243
      %v300 = vunpack.c.h.b16 %v243
      %v301 = vunpack.c.l.b16 %v244
      %v302 = vunpack.c.h.b16 %v244
      %v303 = vunpack.c.l.b16 %v245
      %v304 = vunpack.c.h.b16 %v245
      %v305 = vunpack.c.l.b16 %v246
      %v306 = vunpack.c.h.b16 %v246
      %v307 = vunpack.c.l.b16 %v247
      %v308 = vunpack.c.h.b16 %v247
      %v309 = vpack.c.b16 %v279, %v277
      %v310 = vpack.c.b16 %v280, %v278
      %v311 = vpack.c.b16 %v283, %v281
      %v312 = vpack.c.b16 %v284, %v282
      %v313 = vpack.c.b16 %v287, %v285
      %v314 = vpack.c.b16 %v288, %v286
      %v315 = vpack.c.b16 %v291, %v289
      %v316 = vpack.c.b16 %v292, %v290
      %v317 = vpack.c.b16 %v295, %v293
      %v318 = vpack.c.b16 %v296, %v294
      %v319 = vpack.c.b16 %v299, %v297
      %v320 = vpack.c.b16 %v300, %v298
      %v321 = vpack.c.b16 %v303, %v301
      %v322 = vpack.c.b16 %v304, %v302
      %v323 = vpack.c.b16 %v307, %v305
      %v324 = vpack.c.b16 %v308, %v306
      %341 = vmatprep.subr.bf16.mxu0 %v310
      %342 = vmatpush1.bf16.msra.mxu0 %v309
      %343 = vmatprep.subr.bf16.mxu0 %v312
      %344 = vmatpush1.bf16.msra.mxu0 %v311
      %345 = vmatprep.subr.bf16.mxu0 %v314
      %346 = vmatpush1.bf16.msra.mxu0 %v313
      %347 = vmatprep.subr.bf16.mxu0 %v316
      %348 = vmatpush1.bf16.msra.mxu0 %v315
      %349 = vmatprep.subr.bf16.mxu0 %v318
      %350 = vmatpush1.bf16.msra.mxu0 %v317
      %351 = vmatprep.subr.bf16.mxu0 %v320
      %352 = vmatpush1.bf16.msra.mxu0 %v319
      %353 = vmatprep.subr.bf16.mxu0 %v322
      %354 = vmatpush1.bf16.msra.mxu0 %v321
      %355 = vmatprep.subr.bf16.mxu0 %v324
      %356 = vmatpush1.bf16.msra.mxu0 %v323
      %357 = vmatprep.subr.bf16.mxu0 0
      %358 = vmatpush1.bf16.msra.mxu0 0
      %359 = vmatprep.subr.bf16.mxu0 0
      %360 = vmatpush1.bf16.msra.mxu0 0
      %361 = vmatprep.subr.bf16.mxu0 0
      %362 = vmatpush1.bf16.msra.mxu0 0
      %363 = vmatprep.subr.bf16.mxu0 0
      %364 = vmatpush1.bf16.msra.mxu0 0
      %365 = vmatprep.subr.bf16.mxu0 0
      %366 = vmatpush1.bf16.msra.mxu0 0
      %367 = vmatprep.subr.bf16.mxu0 0
      %368 = vmatpush1.bf16.msra.mxu0 0
      %369 = vmatprep.subr.bf16.mxu0 0
      %370 = vmatpush1.bf16.msra.mxu0 0
      %371 = vmatprep.subr.bf16.mxu0 0
      %372 = vmatpush1.bf16.msra.mxu0 0
      %373 = vmatprep.mubr.bf16.mxu0 0
      %374 = vmatmul.mubr.bf16.gmra.mrb[0].mxu0 %v249
      %v375 = vpop.f32.mrb[0].mxu0
      %v376 = vadd.f32 %v254, %v375
      %v377 = vpop.f32.mrb[0].mxu0
      %v378 = vadd.f32 %v258, %v377
      %v379 = vpop.f32.mrb[0].mxu0
      %v380 = vpop.f32.mrb[0].mxu0
      %381 = vdwg.mxu0
      %v382 = vmax.f32 %v376, 0.0
      %v383 = vmax.f32 %v378, 0.0
      %v386 = vcombine.low %v382, %v383
      %v387 = vrot.slane %v386, 7
      %s389 = scalar_lea.vmem [#allocation2], 8
      %390 = vst [vmem:[%s389] sm:$0x66] %v387
      %v391 = vpack.c.bf16 %v231, %v231
      %392 = vmatprep.subr.bf16.mxu0 %v310
      %393 = vmatpush1.bf16.msra.mxu0 %v309
      %394 = vmatprep.subr.bf16.mxu0 %v312
      %395 = vmatpush1.bf16.msra.mxu0 %v311
      %396 = vmatprep.subr.bf16.mxu0 %v314
      %397 = vmatpush1.bf16.msra.mxu0 %v313
      %398 = vmatprep.subr.bf16.mxu0 %v316
      %399 = vmatpush1.bf16.msra.mxu0 %v315
      %400 = vmatprep.subr.bf16.mxu0 %v318
      %401 = vmatpush1.bf16.msra.mxu0 %v317
      %402 = vmatprep.subr.bf16.mxu0 %v320
      %403 = vmatpush1.bf16.msra.mxu0 %v319
      %404 = vmatprep.subr.bf16.mxu0 %v322
      %405 = vmatpush1.bf16.msra.mxu0 %v321
      %406 = vmatprep.subr.bf16.mxu0 %v324
      %407 = vmatpush1.bf16.msra.mxu0 %v323
      %408 = vmatprep.subr.bf16.mxu0 0
      %409 = vmatpush1.bf16.msra.mxu0 0
      %410 = vmatprep.subr.bf16.mxu0 0
      %411 = vmatpush1.bf16.msra.mxu0 0
      %412 = vmatprep.subr.bf16.mxu0 0
      %413 = vmatpush1.bf16.msra.mxu0 0
      %414 = vmatprep.subr.bf16.mxu0 0
      %415 = vmatpush1.bf16.msra.mxu0 0
      %416 = vmatprep.subr.bf16.mxu0 0
      %417 = vmatpush1.bf16.msra.mxu0 0
      %418 = vmatprep.subr.bf16.mxu0 0
      %419 = vmatpush1.bf16.msra.mxu0 0
      %420 = vmatprep.subr.bf16.mxu0 0
      %421 = vmatpush1.bf16.msra.mxu0 0
      %422 = vmatprep.subr.bf16.mxu0 0
      %423 = vmatpush1.bf16.msra.mxu0 0
      %424 = vmatprep.mubr.bf16.mxu0 0
      %425 = vmatmul.mubr.bf16.gmra.mrb[0].mxu0 %v391
      %v426 = vpop.f32.mrb[0].mxu0
      %v427 = vadd.f32 %v254, %v426
      %v428 = vpop.f32.mrb[0].mxu0
      %v429 = vadd.f32 %v258, %v428
      %v430 = vpop.f32.mrb[0].mxu0
      %v431 = vpop.f32.mrb[0].mxu0
      %432 = vdwg.mxu0
      %v433 = vmax.f32 %v427, 0.0
      %v434 = vmax.f32 %v429, 0.0
      %v437 = vcombine.low %v433, %v434
      %v438 = vrot.slane %v437, 7
      %s440 = scalar_lea.vmem [#allocation2], 16
      %441 = vst [vmem:[%s440] sm:$0x66] %v438
      %v442 = vld [vmem:[%s3] sm:$0xff]
      %v443 = vld [vmem:[%s3 + $0x8] sm:$0xff]
      %v444 = vld [vmem:[%s3 + $0x10] sm:$0x1]
      %v445 = vld [vmem:[%s3 + $0x18] sm:$0x1]
      %v446 = vld [vmem:[%s4] sm:$0x3]
      %v448 = vlaneseq
      %v449 = vshrl.u32 %v448, 7
      %v450 = vsub.s32 0, %v449
      %v451 = vrot.slane %v446, %v450
      %v452 = vlaneseq
      %v453 = vshrl.u32 %v452, 7
      %v454 = vsub.s32 1, %v453
      %v455 = vrot.slane %v446, %v454
      %v458 = vadd.f32 %v451, 0.0
      %v459 = vadd.f32 %v455, 0.0
      %v460 = vld [vmem:[#allocation2] sm:$0x33]
      %v461 = vld [vmem:[#allocation2 + $0x8] sm:$0x33]
      %v462 = vld [vmem:[#allocation2 + $0x10] sm:$0x33]
      %v463 = vld [vmem:[#allocation2 + $0x18] sm:$0x33]
      %v464 = vlaneseq
      %v465 = vshrl.u32 %v464, 7
      %v466 = vsub.s32 0, %v465
      %v467 = vrot.slane %v442, %v466
      %v468 = vlaneseq
      %v469 = vshrl.u32 %v468, 7
      %v470 = vsub.s32 0, %v469
      %v471 = vrot.slane %v443, %v470
      %v474 = vcombine.low %v467, %v471
      %v476 = vmul.f32 %v460, %v474
      %v477 = vmul.f32 %v461, %v474
      %v480 = vcombine.high %v476, %v476
      %v481 = vcombine.high %v477, %v477
      %v484 = vadd.f32 %v458, %v476
      %v485 = vadd.f32 %v459, %v480
      %v486 = vadd.f32 %v458, %v477
      %v487 = vadd.f32 %v459, %v481
      %v488 = vlaneseq
      %v489 = vshrl.u32 %v488, 7
      %v490 = vsub.s32 3, %v489
      %v491 = vrot.slane %v442, %v490
      %v492 = vlaneseq
      %v493 = vshrl.u32 %v492, 7
      %v494 = vsub.s32 3, %v493
      %v495 = vrot.slane %v443, %v494
      %v498 = vcombine.low %v491, %v495
      %v500 = vmul.f32 %v461, %v498
      %v501 = vmul.f32 %v462, %v498
      %v504 = vcombine.high %v500, %v500
      %v505 = vcombine.high %v501, %v501
      %v508 = vadd.f32 %v484, %v500
      %v509 = vadd.f32 %v485, %v504
      %v510 = vadd.f32 %v486, %v501
      %v511 = vadd.f32 %v487, %v505
      %v512 = vlaneseq
      %v513 = vshrl.u32 %v512, 7
      %v514 = vsub.s32 6, %v513
      %v515 = vrot.slane %v442, %v514
      %v516 = vlaneseq
      %v517 = vshrl.u32 %v516, 7
      %v518 = vsub.s32 6, %v517
      %v519 = vrot.slane %v443, %v518
      %v522 = vcombine.low %v515, %v519
      %v524 = vmul.f32 %v462, %v522
      %v525 = vmul.f32 %v463, %v522
      %v528 = vcombine.high %v524, %v524
      %v529 = vcombine.high %v525, %v525
      %v532 = vadd.f32 %v508, %v524
      %v533 = vadd.f32 %v509, %v528
      %v534 = vadd.f32 %v510, %v525
      %v535 = vadd.f32 %v511, %v529
      %v536 = vld [vmem:[#allocation2] sm:$0x66]
      %v537 = vld [vmem:[#allocation2 + $0x8] sm:$0x66]
      %v538 = vld [vmem:[#allocation2 + $0x10] sm:$0x66]
      %v539 = vld [vmem:[#allocation2 + $0x18] sm:$0x66]
      %v540 = vlaneseq
      %v541 = vshrl.u32 %v540, 7
      %v542 = vsub.s32 1, %v541
      %v543 = vrot.slane %v442, %v542
      %v544 = vlaneseq
      %v545 = vshrl.u32 %v544, 7
      %v546 = vsub.s32 1, %v545
      %v547 = vrot.slane %v443, %v546
      %v550 = vcombine.low %v543, %v547
      %v551 = vrot.slane %v550, 7
      %v553 = vmul.f32 %v536, %v551
      %v554 = vmul.f32 %v537, %v551
      %v557 = vcombine.high %v553, %v553
      %v558 = vcombine.high %v554, %v554
      %v559 = vrot.slane %v553, 1
      %v560 = vrot.slane %v557, 1
      %v561 = vrot.slane %v554, 1
      %v562 = vrot.slane %v558, 1
      %v567 = vadd.f32 %v532, %v559
      %v568 = vadd.f32 %v533, %v560
      %v569 = vadd.f32 %v534, %v561
      %v570 = vadd.f32 %v535, %v562
      %v571 = vlaneseq
      %v572 = vshrl.u32 %v571, 7
      %v573 = vsub.s32 4, %v572
      %v574 = vrot.slane %v442, %v573
      %v575 = vlaneseq
      %v576 = vshrl.u32 %v575, 7
      %v577 = vsub.s32 4, %v576
      %v578 = vrot.slane %v443, %v577
      %v581 = vcombine.low %v574, %v578
      %v582 = vrot.slane %v581, 7
      %v584 = vmul.f32 %v537, %v582
      %v585 = vmul.f32 %v538, %v582
      %v588 = vcombine.high %v584, %v584
      %v589 = vcombine.high %v585, %v585
      %v590 = vrot.slane %v584, 1
      %v591 = vrot.slane %v588, 1
      %v592 = vrot.slane %v585, 1
      %v593 = vrot.slane %v589, 1
      %v598 = vadd.f32 %v567, %v590
      %v599 = vadd.f32 %v568, %v591
      %v600 = vadd.f32 %v569, %v592
      %v601 = vadd.f32 %v570, %v593
      %v602 = vlaneseq
      %v603 = vshrl.u32 %v602, 7
      %v604 = vsub.s32 7, %v603
      %v605 = vrot.slane %v442, %v604
      %v606 = vlaneseq
      %v607 = vshrl.u32 %v606, 7
      %v608 = vsub.s32 7, %v607
      %v609 = vrot.slane %v443, %v608
      %v612 = vcombine.low %v605, %v609
      %v613 = vrot.slane %v612, 7
      %v615 = vmul.f32 %v538, %v613
      %v616 = vmul.f32 %v539, %v613
      %v619 = vcombine.high %v615, %v615
      %v620 = vcombine.high %v616, %v616
      %v621 = vrot.slane %v615, 1
      %v622 = vrot.slane %v619, 1
      %v623 = vrot.slane %v616, 1
      %v624 = vrot.slane %v620, 1
      %v629 = vadd.f32 %v598, %v621
      %v630 = vadd.f32 %v599, %v622
      %v631 = vadd.f32 %v600, %v623
      %v632 = vadd.f32 %v601, %v624
      %v633 = vld [vmem:[#allocation2] sm:$0xcc]
      %v634 = vld [vmem:[#allocation2 + $0x8] sm:$0xcc]
      %v635 = vld [vmem:[#allocation2 + $0x10] sm:$0xcc]
      %v636 = vld [vmem:[#allocation2 + $0x18] sm:$0xcc]
      %v637 = vlaneseq
      %v638 = vshrl.u32 %v637, 7
      %v639 = vsub.s32 2, %v638
      %v640 = vrot.slane %v442, %v639
      %v641 = vlaneseq
      %v642 = vshrl.u32 %v641, 7
      %v643 = vsub.s32 2, %v642
      %v644 = vrot.slane %v443, %v643
      %v647 = vcombine.low %v640, %v644
      %v648 = vrot.slane %v647, 6
      %v650 = vmul.f32 %v633, %v648
      %v651 = vmul.f32 %v634, %v648
      %v654 = vcombine.high %v650, %v650
      %v655 = vcombine.high %v651, %v651
      %v656 = vrot.slane %v650, 2
      %v657 = vrot.slane %v654, 2
      %v658 = vrot.slane %v651, 2
      %v659 = vrot.slane %v655, 2
      %v664 = vadd.f32 %v629, %v656
      %v665 = vadd.f32 %v630, %v657
      %v666 = vadd.f32 %v631, %v658
      %v667 = vadd.f32 %v632, %v659
      %v668 = vlaneseq
      %v669 = vshrl.u32 %v668, 7
      %v670 = vsub.s32 5, %v669
      %v671 = vrot.slane %v442, %v670
      %v672 = vlaneseq
      %v673 = vshrl.u32 %v672, 7
      %v674 = vsub.s32 5, %v673
      %v675 = vrot.slane %v443, %v674
      %v678 = vcombine.low %v671, %v675
      %v679 = vrot.slane %v678, 6
      %v681 = vmul.f32 %v634, %v679
      %v682 = vmul.f32 %v635, %v679
      %v685 = vcombine.high %v681, %v681
      %v686 = vcombine.high %v682, %v682
      %v687 = vrot.slane %v681, 2
      %v688 = vrot.slane %v685, 2
      %v689 = vrot.slane %v682, 2
      %v690 = vrot.slane %v686, 2
      %v695 = vadd.f32 %v664, %v687
      %v696 = vadd.f32 %v665, %v688
      %v697 = vadd.f32 %v666, %v689
      %v698 = vadd.f32 %v667, %v690
      %v699 = vlaneseq
      %v700 = vshrl.u32 %v699, 7
      %v701 = vsub.s32 0, %v700
      %v702 = vrot.slane %v444, %v701
      %v703 = vlaneseq
      %v704 = vshrl.u32 %v703, 7
      %v705 = vsub.s32 0, %v704
      %v706 = vrot.slane %v445, %v705
      %v709 = vcombine.low %v702, %v706
      %v710 = vrot.slane %v709, 6
      %v712 = vmul.f32 %v635, %v710
      %v713 = vmul.f32 %v636, %v710
      %v716 = vcombine.high %v712, %v712
      %v717 = vcombine.high %v713, %v713
      %v718 = vrot.slane %v712, 2
      %v719 = vrot.slane %v716, 2
      %v720 = vrot.slane %v713, 2
      %v721 = vrot.slane %v717, 2
      %v726 = vadd.f32 %v695, %v718
      %v727 = vadd.f32 %v696, %v719
      %v728 = vadd.f32 %v697, %v720
      %v729 = vadd.f32 %v698, %v721
      %v730 = vmax.f32 %v726, 0.0
      %v731 = vmax.f32 %v727, 0.0
      %v732 = vmax.f32 %v728, 0.0
      %v733 = vmax.f32 %v729, 0.0
      %v738 = vcombine.low %v730, %v731
      %v740 = vunpack.c.l.s4 1983009808
      %v741 = vunpack.c.0.s8 %v740
      %v742 = vlaneseq
      %v743 = vshrl.u32 %v742, 7
      %v744 = vsub.s32 %v741, %v743
      %v745 = vrot.slane %v738, %v744
      %v746 = vcombine.low %v732, %v733
      %v748 = vunpack.c.l.s4 1983009808
      %v749 = vunpack.c.0.s8 %v748
      %v750 = vlaneseq
      %v751 = vshrl.u32 %v750, 7
      %v752 = vsub.s32 %v749, %v751
      %v753 = vrot.slane %v746, %v752
      %756 = vst [vmem:[%s224] sm:$0xf] %v745
      %757 = vst [vmem:[%s224 + $0x4] sm:$0xf] %v753
      %p758 = scmp.lt.s32.totalorder %s16, 1
      %s759 = scalar_select %p758, %s16, 1
      %s760 = smul.addr %s759, 4
      %s761 = smul.addr %s760, 2
      %s762 = scalar_lea.vmem %s5, %s761
      // Predicated region
      $region41: #{_lambda_.15} parent=39 // pred_check
        %p763 = pneg %p144
      $region42: #{_lambda_.15} parent=39 // pred_check_branch
        %765 = sbr.rel (%p763) target = $region44
      $region43: #{_lambda_.15} parent=39 // pred_region
        _
      $region44: #{_lambda_.15} parent=39 // pred_fallthru
        _
    $region40: #{_lambda_.15} parent=5 // pred_fallthru
      _
    %p766 = scmp.le.s32.totalorder 2, %s11
    // Predicated region
    $region45: #{_lambda_.15} parent=5 // pred_check
      %p767 = pneg %p766
    $region46: #{_lambda_.15} parent=5 // pred_check_branch
      %769 = sbr.rel (%p767) target = $region48
    $region47: #{_lambda_.15} parent=5 // pred_region
      %s770 = ssub.s32 %s11, 2
      // Predicated region
      $region49: #{_lambda_.15} parent=47 // pred_check
        %p771 = pneg %p150
      $region50: #{_lambda_.15} parent=47 // pred_check_branch
        %773 = sbr.rel (%p771) target = $region52
      $region51: #{_lambda_.15} parent=47 // pred_region
        %p774 = scmp.lt.s32.totalorder %s17, 1
        %s775 = scalar_select %p774, %s17, 1
        %s776 = smul.addr %s775, 4
        %s777 = smul.addr %s776, 2
        %s778 = scalar_lea.vmem %s5, %s777
      $region52: #{_lambda_.15} parent=47 // pred_fallthru
        _
    $region48: #{_lambda_.15} parent=5 // pred_fallthru
      _
  $region6: #{_lambda_.15} parent=0 // loop_footer
    %s15 = sadd.s32 1, %s11
  $region7: #{_lambda_.15} parent=0 // loop_footer_branch
    %10 = sbr.rel target = $region3
  $region8: #{_lambda_.15} parent=0 // loop_exit
    _

// kernel: _lambda_.16
$region0: #{_lambda_.16}
  #allocation0 [shape = 'u32[]', space=smem, size = 0x4, offset = 0x4, fixed_abs, tag = 'smem constant byte address 0x4 - core index']
  #allocation1 [shape = 'u32[144,128]{1,0:T(1,128)}', space=vmem, size = 0x12000, scoped, tag = 'internal scratch']
  #allocation2 [shape = 'f32[2,2,256]{2,1,0:T(2,128)}', space=vmem, size = 0x1000, scoped, tag = 'scratch operand']
  %s0 = inlined_call_operand.vmem [shape: f32[2,2,2,256], index: 0, kind: input, shape index: {}]
  %s1 = inlined_call_operand.vmem [shape: bf16[256,256], index: 1, kind: input, shape index: {}]
  %s2 = inlined_call_operand.vmem [shape: f32[1,256], index: 2, kind: input, shape index: {}]
  %s3 = inlined_call_operand.vmem [shape: f32[9,256], index: 3, kind: input, shape index: {}]
  %s4 = inlined_call_operand.vmem [shape: f32[1,256], index: 4, kind: input, shape index: {}]
  %s5 = inlined_call_operand.vmem [shape: f32[2,2,2,256], index: 5, kind: output, shape index: {}]
  %s6 = sld [smem:[#allocation0]]
  $region53: #{_lambda_.16} parent=0
    _
  %s8 = ssub.s32 1, %s6
  %s9 = scalar_select 0, %s8, %s6
  loop: start=0, step=1, limit=4
  $region2: #{_lambda_.16} parent=0 // loop_pre_header
    _
  $region3: #{_lambda_.16} parent=0 // loop_header
    %s11 = sphi 0, %s15
    %p12 = scmp.ge.s32.totalorder %s11, 4
    %s21 = sphi 0, %s23
    %s24 = sphi 0, %s21
    %s25 = sphi 0, %s24
    %s41 = sphi 0, %s25
    %s45 = sphi 0, %s45
    %s47 = sphi 0, %s45
    %s48 = sphi 0, %s47
    %s62 = sphi 0, %s48
    %s66 = sphi 0, %s66
    %s68 = sphi 0, %s66
    %s69 = sphi 0, %s68
    %s83 = sphi 0, %s69
    %s87 = sphi 0, %s87
    %s89 = sphi 0, %s87
    %s90 = sphi 0, %s89
    %s104 = sphi 0, %s90
    %s108 = sphi 0, %s108
    %s110 = sphi 0, %s108
    %s111 = sphi 0, %s110
    %s125 = sphi 0, %s111
    %s131 = sphi 0, %s133
    %s134 = sphi 0, %s131
    %s135 = sphi 0, %s134
    %s151 = sphi 0, %s135
  $region4: #{_lambda_.16} parent=0 // loop_header_branch
    %14 = sbr.rel (%p12) target = $region8
  $region5: #{_lambda_.16} parent=0 // loop_body
    %s16 = ssub.s32 %s11, 1
    %s17 = ssub.s32 %s11, 2
    %s18 = sadd.s32 %s11, 1
    %s19 = ssub.s32 %s11, %s18
    %p20 = scmp.eq.s32.totalorder %s19, 0
    %s22 = sadd.s32 %s21, 1
    %s23 = scalar_select %p20, %s21, %s22
    %p26 = pneg %p20
    %p27 = scmp.eq.s32.totalorder %s11, 1
    %p28 = por %p26, %p27
    %p29 = scmp.ne.s32.totalorder %s21, %s24
    %p30 = scmp.eq.s32.totalorder %s11, 0
    %p31 = por %p29, %p30
    %p32 = scmp.ne.s32.totalorder %s21, %s24
    %p33 = scmp.eq.s32.totalorder %s16, 1
    %p34 = por %p32, %p33
    %p35 = scmp.ne.s32.totalorder %s24, %s25
    %p36 = scmp.eq.s32.totalorder %s16, 0
    %p37 = por %p35, %p36
    %p38 = scmp.ne.s32.totalorder %s24, %s25
    %p39 = scmp.eq.s32.totalorder %s17, 1
    %p40 = por %p38, %p39
    %p42 = scmp.ne.s32.totalorder %s25, %s41
    %p43 = scmp.eq.s32.totalorder %s17, 0
    %p44 = por %p42, %p43
    %s46 = sadd.s32 %s45, 1
    %p49 = scmp.eq.s32.totalorder %s11, 1
    %p50 = scmp.ne.s32.totalorder %s45, %s47
    %p51 = scmp.eq.s32.totalorder %s11, 0
    %p52 = por %p50, %p51
    %p53 = scmp.ne.s32.totalorder %s45, %s47
    %p54 = scmp.eq.s32.totalorder %s16, 1
    %p55 = por %p53, %p54
    %p56 = scmp.ne.s32.totalorder %s47, %s48
    %p57 = scmp.eq.s32.totalorder %s16, 0
    %p58 = por %p56, %p57
    %p59 = scmp.ne.s32.totalorder %s47, %s48
    %p60 = scmp.eq.s32.totalorder %s17, 1
    %p61 = por %p59, %p60
    %p63 = scmp.ne.s32.totalorder %s48, %s62
    %p64 = scmp.eq.s32.totalorder %s17, 0
    %p65 = por %p63, %p64
    %s67 = sadd.s32 %s66, 1
    %p70 = scmp.eq.s32.totalorder %s11, 1
    %p71 = scmp.ne.s32.totalorder %s66, %s68
    %p72 = scmp.eq.s32.totalorder %s11, 0
    %p73 = por %p71, %p72
    %p74 = scmp.ne.s32.totalorder %s66, %s68
    %p75 = scmp.eq.s32.totalorder %s16, 1
    %p76 = por %p74, %p75
    %p77 = scmp.ne.s32.totalorder %s68, %s69
    %p78 = scmp.eq.s32.totalorder %s16, 0
    %p79 = por %p77, %p78
    %p80 = scmp.ne.s32.totalorder %s68, %s69
    %p81 = scmp.eq.s32.totalorder %s17, 1
    %p82 = por %p80, %p81
    %p84 = scmp.ne.s32.totalorder %s69, %s83
    %p85 = scmp.eq.s32.totalorder %s17, 0
    %p86 = por %p84, %p85
    %s88 = sadd.s32 %s87, 1
    %p91 = scmp.eq.s32.totalorder %s11, 1
    %p92 = scmp.ne.s32.totalorder %s87, %s89
    %p93 = scmp.eq.s32.totalorder %s11, 0
    %p94 = por %p92, %p93
    %p95 = scmp.ne.s32.totalorder %s87, %s89
    %p96 = scmp.eq.s32.totalorder %s16, 1
    %p97 = por %p95, %p96
    %p98 = scmp.ne.s32.totalorder %s89, %s90
    %p99 = scmp.eq.s32.totalorder %s16, 0
    %p100 = por %p98, %p99
    %p101 = scmp.ne.s32.totalorder %s89, %s90
    %p102 = scmp.eq.s32.totalorder %s17, 1
    %p103 = por %p101, %p102
    %p105 = scmp.ne.s32.totalorder %s90, %s104
    %p106 = scmp.eq.s32.totalorder %s17, 0
    %p107 = por %p105, %p106
    %s109 = sadd.s32 %s108, 1
    %p112 = scmp.eq.s32.totalorder %s11, 1
    %p113 = scmp.ne.s32.totalorder %s108, %s110
    %p114 = scmp.eq.s32.totalorder %s11, 0
    %p115 = por %p113, %p114
    %p116 = scmp.ne.s32.totalorder %s108, %s110
    %p117 = scmp.eq.s32.totalorder %s16, 1
    %p118 = por %p116, %p117
    %p119 = scmp.ne.s32.totalorder %s110, %s111
    %p120 = scmp.eq.s32.totalorder %s16, 0
    %p121 = por %p119, %p120
    %p122 = scmp.ne.s32.totalorder %s110, %s111
    %p123 = scmp.eq.s32.totalorder %s17, 1
    %p124 = por %p122, %p123
    %p126 = scmp.ne.s32.totalorder %s111, %s125
    %p127 = scmp.eq.s32.totalorder %s17, 0
    %p128 = por %p126, %p127
    %s129 = ssub.s32 %s11, %s18
    %p130 = scmp.eq.s32.totalorder %s129, 0
    %s132 = sadd.s32 %s131, 1
    %s133 = scalar_select %p130, %s131, %s132
    %p136 = pneg %p130
    %p137 = scmp.eq.s32.totalorder %s11, 1
    %p138 = por %p136, %p137
    %p139 = scmp.ne.s32.totalorder %s131, %s134
    %p140 = scmp.eq.s32.totalorder %s11, 0
    %p141 = por %p139, %p140
    %p142 = scmp.ne.s32.totalorder %s131, %s134
    %p143 = scmp.eq.s32.totalorder %s16, 1
    %p144 = por %p142, %p143
    %p145 = scmp.ne.s32.totalorder %s134, %s135
    %p146 = scmp.eq.s32.totalorder %s16, 0
    %p147 = por %p145, %p146
    %p148 = scmp.ne.s32.totalorder %s134, %s135
    %p149 = scmp.eq.s32.totalorder %s17, 1
    %p150 = por %p148, %p149
    %p152 = scmp.ne.s32.totalorder %s135, %s151
    %p153 = scmp.eq.s32.totalorder %s17, 0
    %p154 = por %p152, %p153
    %p155 = scmp.le.s32.totalorder 1, %s11
    %p156 = scmp.lt.s32.totalorder %s11, 3
    %p157 = pnand %p155, %p156
    %p158 = pneg %p157
    // Predicated region
    $region9: #{_lambda_.16} parent=5 // pred_check
      _
    $region10: #{_lambda_.16} parent=5 // pred_check_branch
      %160 = sbr.rel (%p157) target = $region12
    $region11: #{_lambda_.16} parent=5 // pred_region
      %s161 = ssub.s32 %s11, 1
      // Predicated region
      $region13: #{_lambda_.16} parent=11 // pred_check
        %p162 = pneg %p58
      $region14: #{_lambda_.16} parent=11 // pred_check_branch
        %164 = sbr.rel (%p162) target = $region16
      $region15: #{_lambda_.16} parent=11 // pred_region
        _
      $region16: #{_lambda_.16} parent=11 // pred_fallthru
        _
      // Predicated region
      $region17: #{_lambda_.16} parent=11 // pred_check
        %p165 = pneg %p79
      $region18: #{_lambda_.16} parent=11 // pred_check_branch
        %167 = sbr.rel (%p165) target = $region20
      $region19: #{_lambda_.16} parent=11 // pred_region
        _
      $region20: #{_lambda_.16} parent=11 // pred_fallthru
        _
      // Predicated region
      $region21: #{_lambda_.16} parent=11 // pred_check
        %p168 = pneg %p100
      $region22: #{_lambda_.16} parent=11 // pred_check_branch
        %170 = sbr.rel (%p168) target = $region24
      $region23: #{_lambda_.16} parent=11 // pred_region
        _
      $region24: #{_lambda_.16} parent=11 // pred_fallthru
        _
      // Predicated region
      $region25: #{_lambda_.16} parent=11 // pred_check
        %p171 = pneg %p121
      $region26: #{_lambda_.16} parent=11 // pred_check_branch
        %173 = sbr.rel (%p171) target = $region28
      $region27: #{_lambda_.16} parent=11 // pred_region
        _
      $region28: #{_lambda_.16} parent=11 // pred_fallthru
        _
    $region12: #{_lambda_.16} parent=5 // pred_fallthru
      _
    %p174 = scmp.lt.s32.totalorder %s11, 2
    // Predicated region
    $region29: #{_lambda_.16} parent=5 // pred_check
      %p175 = pneg %p174
    $region30: #{_lambda_.16} parent=5 // pred_check_branch
      %177 = sbr.rel (%p175) target = $region32
    $region31: #{_lambda_.16} parent=5 // pred_region
      // Predicated region
      $region33: #{_lambda_.16} parent=31 // pred_check
        %p178 = pneg %p31
      $region34: #{_lambda_.16} parent=31 // pred_check_branch
        %180 = sbr.rel (%p178) target = $region36
      $region35: #{_lambda_.16} parent=31 // pred_region
        %p181 = scmp.lt.s32.totalorder %s11, 1
        %s182 = scalar_select %p181, %s11, 1
        %s183 = smul.addr %s182, 4
        %s184 = smul.addr %s183, 2
        %s185 = scalar_lea.vmem %s0, %s184
      $region36: #{_lambda_.16} parent=31 // pred_fallthru
        _
    $region32: #{_lambda_.16} parent=5 // pred_fallthru
      _
    %p186 = scmp.le.s32.totalorder 1, %s11
    %p187 = scmp.lt.s32.totalorder %s11, 3
    %p188 = pnand %p186, %p187
    %p189 = pneg %p188
    // Predicated region
    $region37: #{_lambda_.16} parent=5 // pred_check
      _
    $region38: #{_lambda_.16} parent=5 // pred_check_branch
      %191 = sbr.rel (%p188) target = $region40
    $region39: #{_lambda_.16} parent=5 // pred_region
      %s192 = ssub.s32 %s11, 1
      %p193 = scmp.lt.s32.totalorder %s16, 1
      %s194 = scalar_select %p193, %s16, 1
      %s195 = smul.addr %s194, 4
      %s196 = smul.addr %s195, 2
      %s197 = scalar_lea.vmem %s0, %s196
      %p198 = pneg %p37
      %p199 = pneg %p34
      %p200 = pneg %p58
      %p201 = pneg %p55
      %p202 = pneg %p79
      %p203 = pneg %p76
      %p204 = pneg %p100
      %p205 = pneg %p97
      %p206 = pneg %p121
      %p207 = pneg %p118
      %p208 = pneg %p147
      %p209 = pneg %p144
      %p210 = scmp.lt.s32.totalorder %s16, 1
      %s211 = scalar_select %p210, %s16, 1
      %s212 = smul.addr %s211, 4
      %s213 = smul.addr %s212, 2
      %s214 = scalar_lea.vmem %s5, %s213
      %p215 = scmp.lt.s32.totalorder %s16, 1
      %s216 = scalar_select %p215, %s16, 1
      %s217 = smul.addr %s216, 4
      %s218 = smul.addr %s217, 2
      %s219 = scalar_lea.vmem %s0, %s218
      %p220 = scmp.lt.s32.totalorder %s16, 1
      %s221 = scalar_select %p220, %s16, 1
      %s222 = smul.addr %s221, 4
      %s223 = smul.addr %s222, 2
      %s224 = scalar_lea.vmem %s5, %s223
      %v225 = vld [vmem:[%s219] sm:$0xf]
      %v226 = vld [vmem:[%s219 + $0x4] sm:$0xf]
      %v227 = vld [vmem:[%s1] sm:$0xff]
      %v228 = vld [vmem:[%s1 + $0x8] sm:$0xff]
      %v229 = vld [vmem:[%s1 + $0x10] sm:$0xff]
      %v230 = vld [vmem:[%s1 + $0x18] sm:$0xff]
      %v231 = vld [vmem:[%s1 + $0x20] sm:$0xff]
      %v232 = vld [vmem:[%s1 + $0x28] sm:$0xff]
      %v233 = vld [vmem:[%s1 + $0x30] sm:$0xff]
      %v234 = vld [vmem:[%s1 + $0x38] sm:$0xff]
      %v235 = vld [vmem:[%s1 + $0x40] sm:$0xff]
      %v236 = vld [vmem:[%s1 + $0x48] sm:$0xff]
      %v237 = vld [vmem:[%s1 + $0x50] sm:$0xff]
      %v238 = vld [vmem:[%s1 + $0x58] sm:$0xff]
      %v239 = vld [vmem:[%s1 + $0x60] sm:$0xff]
      %v240 = vld [vmem:[%s1 + $0x68] sm:$0xff]
      %v241 = vld [vmem:[%s1 + $0x70] sm:$0xff]
      %v242 = vld [vmem:[%s1 + $0x78] sm:$0xff]
      %v243 = vld [vmem:[%s1 + $0x80] sm:$0xff]
      %v244 = vld [vmem:[%s1 + $0x88] sm:$0xff]
      %v245 = vld [vmem:[%s1 + $0x90] sm:$0xff]
      %v246 = vld [vmem:[%s1 + $0x98] sm:$0xff]
      %v247 = vld [vmem:[%s1 + $0xa0] sm:$0xff]
      %v248 = vld [vmem:[%s1 + $0xa8] sm:$0xff]
      %v249 = vld [vmem:[%s1 + $0xb0] sm:$0xff]
      %v250 = vld [vmem:[%s1 + $0xb8] sm:$0xff]
      %v251 = vld [vmem:[%s1 + $0xc0] sm:$0xff]
      %v252 = vld [vmem:[%s1 + $0xc8] sm:$0xff]
      %v253 = vld [vmem:[%s1 + $0xd0] sm:$0xff]
      %v254 = vld [vmem:[%s1 + $0xd8] sm:$0xff]
      %v255 = vld [vmem:[%s1 + $0xe0] sm:$0xff]
      %v256 = vld [vmem:[%s1 + $0xe8] sm:$0xff]
      %v257 = vld [vmem:[%s1 + $0xf0] sm:$0xff]
      %v258 = vld [vmem:[%s1 + $0xf8] sm:$0xff]
      %v259 = vld [vmem:[%s2] sm:$0x3]
      %v262 = vunpack.c.l.s4 1983009808
      %v263 = vunpack.c.0.s8 %v262
      %v264 = vlaneseq
      %v265 = vshrl.u32 %v264, 7
      %v266 = vsub.s32 %v263, %v265
      %v267 = vrot.slane %v225, %v266
      %v268 = vcombine.high %v267, %v267
      %v271 = vpack.c.bf16 %v267, %v267
      %v272 = vpack.c.bf16 %v268, %v268
      %v274 = vlaneseq
      %v275 = vshrl.u32 %v274, 7
      %v276 = vsub.s32 0, %v275
      %v277 = vrot.slane %v259, %v276
      %v278 = vlaneseq
      %v279 = vshrl.u32 %v278, 7
      %v280 = vsub.s32 1, %v279
      %v281 = vrot.slane %v259, %v280
      %v316 = vunpack.c.l.b16 %v227
      %v317 = vunpack.c.h.b16 %v227
      %v318 = vunpack.c.l.b16 %v228
      %v319 = vunpack.c.h.b16 %v228
      %v320 = vunpack.c.l.b16 %v229
      %v321 = vunpack.c.h.b16 %v229
      %v322 = vunpack.c.l.b16 %v230
      %v323 = vunpack.c.h.b16 %v230
      %v324 = vunpack.c.l.b16 %v231
      %v325 = vunpack.c.h.b16 %v231
      %v326 = vunpack.c.l.b16 %v232
      %v327 = vunpack.c.h.b16 %v232
      %v328 = vunpack.c.l.b16 %v233
      %v329 = vunpack.c.h.b16 %v233
      %v330 = vunpack.c.l.b16 %v234
      %v331 = vunpack.c.h.b16 %v234
      %v332 = vunpack.c.l.b16 %v235
      %v333 = vunpack.c.h.b16 %v235
      %v334 = vunpack.c.l.b16 %v236
      %v335 = vunpack.c.h.b16 %v236
      %v336 = vunpack.c.l.b16 %v237
      %v337 = vunpack.c.h.b16 %v237
      %v338 = vunpack.c.l.b16 %v238
      %v339 = vunpack.c.h.b16 %v238
      %v340 = vunpack.c.l.b16 %v239
      %v341 = vunpack.c.h.b16 %v239
      %v342 = vunpack.c.l.b16 %v240
      %v343 = vunpack.c.h.b16 %v240
      %v344 = vunpack.c.l.b16 %v241
      %v345 = vunpack.c.h.b16 %v241
      %v346 = vunpack.c.l.b16 %v242
      %v347 = vunpack.c.h.b16 %v242
      %v348 = vunpack.c.l.b16 %v243
      %v349 = vunpack.c.h.b16 %v243
      %v350 = vunpack.c.l.b16 %v244
      %v351 = vunpack.c.h.b16 %v244
      %v352 = vunpack.c.l.b16 %v245
      %v353 = vunpack.c.h.b16 %v245
      %v354 = vunpack.c.l.b16 %v246
      %v355 = vunpack.c.h.b16 %v246
      %v356 = vunpack.c.l.b16 %v247
      %v357 = vunpack.c.h.b16 %v247
      %v358 = vunpack.c.l.b16 %v248
      %v359 = vunpack.c.h.b16 %v248
      %v360 = vunpack.c.l.b16 %v249
      %v361 = vunpack.c.h.b16 %v249
      %v362 = vunpack.c.l.b16 %v250
      %v363 = vunpack.c.h.b16 %v250
      %v364 = vunpack.c.l.b16 %v251
      %v365 = vunpack.c.h.b16 %v251
      %v366 = vunpack.c.l.b16 %v252
      %v367 = vunpack.c.h.b16 %v252
      %v368 = vunpack.c.l.b16 %v253
      %v369 = vunpack.c.h.b16 %v253
      %v370 = vunpack.c.l.b16 %v254
      %v371 = vunpack.c.h.b16 %v254
      %v372 = vunpack.c.l.b16 %v255
      %v373 = vunpack.c.h.b16 %v255
      %v374 = vunpack.c.l.b16 %v256
      %v375 = vunpack.c.h.b16 %v256
      %v376 = vunpack.c.l.b16 %v257
      %v377 = vunpack.c.h.b16 %v257
      %v378 = vunpack.c.l.b16 %v258
      %v379 = vunpack.c.h.b16 %v258
      %v380 = vpack.c.b16 %v318, %v316
      %v381 = vpack.c.b16 %v319, %v317
      %v382 = vpack.c.b16 %v322, %v320
      %v383 = vpack.c.b16 %v323, %v321
      %v384 = vpack.c.b16 %v326, %v324
      %v385 = vpack.c.b16 %v327, %v325
      %v386 = vpack.c.b16 %v330, %v328
      %v387 = vpack.c.b16 %v331, %v329
      %v388 = vpack.c.b16 %v334, %v332
      %v389 = vpack.c.b16 %v335, %v333
      %v390 = vpack.c.b16 %v338, %v336
      %v391 = vpack.c.b16 %v339, %v337
      %v392 = vpack.c.b16 %v342, %v340
      %v393 = vpack.c.b16 %v343, %v341
      %v394 = vpack.c.b16 %v346, %v344
      %v395 = vpack.c.b16 %v347, %v345
      %v396 = vpack.c.b16 %v350, %v348
      %v397 = vpack.c.b16 %v351, %v349
      %v398 = vpack.c.b16 %v354, %v352
      %v399 = vpack.c.b16 %v355, %v353
      %v400 = vpack.c.b16 %v358, %v356
      %v401 = vpack.c.b16 %v359, %v357
      %v402 = vpack.c.b16 %v362, %v360
      %v403 = vpack.c.b16 %v363, %v361
      %v404 = vpack.c.b16 %v366, %v364
      %v405 = vpack.c.b16 %v367, %v365
      %v406 = vpack.c.b16 %v370, %v368
      %v407 = vpack.c.b16 %v371, %v369
      %v408 = vpack.c.b16 %v374, %v372
      %v409 = vpack.c.b16 %v375, %v373
      %v410 = vpack.c.b16 %v378, %v376
      %v411 = vpack.c.b16 %v379, %v377
      %444 = vmatprep.subr.bf16.mxu0 %v381
      %445 = vmatpush1.bf16.msra.mxu0 %v380
      %446 = vmatprep.subr.bf16.mxu0 %v383
      %447 = vmatpush1.bf16.msra.mxu0 %v382
      %448 = vmatprep.subr.bf16.mxu0 %v385
      %449 = vmatpush1.bf16.msra.mxu0 %v384
      %450 = vmatprep.subr.bf16.mxu0 %v387
      %451 = vmatpush1.bf16.msra.mxu0 %v386
      %452 = vmatprep.subr.bf16.mxu0 %v389
      %453 = vmatpush1.bf16.msra.mxu0 %v388
      %454 = vmatprep.subr.bf16.mxu0 %v391
      %455 = vmatpush1.bf16.msra.mxu0 %v390
      %456 = vmatprep.subr.bf16.mxu0 %v393
      %457 = vmatpush1.bf16.msra.mxu0 %v392
      %458 = vmatprep.subr.bf16.mxu0 %v395
      %459 = vmatpush1.bf16.msra.mxu0 %v394
      %460 = vmatprep.subr.bf16.mxu0 %v397
      %461 = vmatpush1.bf16.msra.mxu0 %v396
      %462 = vmatprep.subr.bf16.mxu0 %v399
      %463 = vmatpush1.bf16.msra.mxu0 %v398
      %464 = vmatprep.subr.bf16.mxu0 %v401
      %465 = vmatpush1.bf16.msra.mxu0 %v400
      %466 = vmatprep.subr.bf16.mxu0 %v403
      %467 = vmatpush1.bf16.msra.mxu0 %v402
      %468 = vmatprep.subr.bf16.mxu0 %v405
      %469 = vmatpush1.bf16.msra.mxu0 %v404
      %470 = vmatprep.subr.bf16.mxu0 %v407
      %471 = vmatpush1.bf16.msra.mxu0 %v406
      %472 = vmatprep.subr.bf16.mxu0 %v409
      %473 = vmatpush1.bf16.msra.mxu0 %v408
      %474 = vmatprep.subr.bf16.mxu0 %v411
      %475 = vmatpush1.bf16.msra.mxu0 %v410
      %476 = vmatprep.mubr.bf16.mxu0 %v272
      %477 = vmatmul.mubr.bf16.gmra.mrb[0].mxu0 %v271
      %v478 = vpop.f32.mrb[0].mxu0
      %v479 = vadd.f32 %v277, %v478
      %v480 = vpop.f32.mrb[0].mxu0
      %v481 = vadd.f32 %v281, %v480
      %v482 = vpop.f32.mrb[0].mxu0
      %v483 = vpop.f32.mrb[0].mxu0
      %484 = vdwg.mxu0
      %v485 = vmax.f32 %v479, 0.0
      %v486 = vmax.f32 %v481, 0.0
      %v489 = vcombine.low %v485, %v486
      %v491 = vunpack.c.l.s4 1983009808
      %v492 = vunpack.c.0.s8 %v491
      %v493 = vlaneseq
      %v494 = vshrl.u32 %v493, 7
      %v495 = vsub.s32 %v492, %v494
      %v496 = vrot.slane %v489, %v495
      %498 = vst [vmem:[#allocation2] sm:$0xf] %v496
      %v501 = vunpack.c.l.s4 1983009808
      %v502 = vunpack.c.0.s8 %v501
      %v503 = vlaneseq
      %v504 = vshrl.u32 %v503, 7
      %v505 = vsub.s32 %v502, %v504
      %v506 = vrot.slane %v226, %v505
      %v507 = vcombine.high %v506, %v506
      %v510 = vpack.c.bf16 %v506, %v506
      %v511 = vpack.c.bf16 %v507, %v507
      %512 = vmatprep.subr.bf16.mxu0 %v381
      %513 = vmatpush1.bf16.msra.mxu0 %v380
      %514 = vmatprep.subr.bf16.mxu0 %v383
      %515 = vmatpush1.bf16.msra.mxu0 %v382
      %516 = vmatprep.subr.bf16.mxu0 %v385
      %517 = vmatpush1.bf16.msra.mxu0 %v384
      %518 = vmatprep.subr.bf16.mxu0 %v387
      %519 = vmatpush1.bf16.msra.mxu0 %v386
      %520 = vmatprep.subr.bf16.mxu0 %v389
      %521 = vmatpush1.bf16.msra.mxu0 %v388
      %522 = vmatprep.subr.bf16.mxu0 %v391
      %523 = vmatpush1.bf16.msra.mxu0 %v390
      %524 = vmatprep.subr.bf16.mxu0 %v393
      %525 = vmatpush1.bf16.msra.mxu0 %v392
      %526 = vmatprep.subr.bf16.mxu0 %v395
      %527 = vmatpush1.bf16.msra.mxu0 %v394
      %528 = vmatprep.subr.bf16.mxu0 %v397
      %529 = vmatpush1.bf16.msra.mxu0 %v396
      %530 = vmatprep.subr.bf16.mxu0 %v399
      %531 = vmatpush1.bf16.msra.mxu0 %v398
      %532 = vmatprep.subr.bf16.mxu0 %v401
      %533 = vmatpush1.bf16.msra.mxu0 %v400
      %534 = vmatprep.subr.bf16.mxu0 %v403
      %535 = vmatpush1.bf16.msra.mxu0 %v402
      %536 = vmatprep.subr.bf16.mxu0 %v405
      %537 = vmatpush1.bf16.msra.mxu0 %v404
      %538 = vmatprep.subr.bf16.mxu0 %v407
      %539 = vmatpush1.bf16.msra.mxu0 %v406
      %540 = vmatprep.subr.bf16.mxu0 %v409
      %541 = vmatpush1.bf16.msra.mxu0 %v408
      %542 = vmatprep.subr.bf16.mxu0 %v411
      %543 = vmatpush1.bf16.msra.mxu0 %v410
      %544 = vmatprep.mubr.bf16.mxu0 %v511
      %545 = vmatmul.mubr.bf16.gmra.mrb[0].mxu0 %v510
      %v546 = vpop.f32.mrb[0].mxu0
      %v547 = vadd.f32 %v277, %v546
      %v548 = vpop.f32.mrb[0].mxu0
      %v549 = vadd.f32 %v281, %v548
      %v550 = vpop.f32.mrb[0].mxu0
      %v551 = vpop.f32.mrb[0].mxu0
      %552 = vdwg.mxu0
      %v553 = vmax.f32 %v547, 0.0
      %v554 = vmax.f32 %v549, 0.0
      %v557 = vcombine.low %v553, %v554
      %v559 = vunpack.c.l.s4 1983009808
      %v560 = vunpack.c.0.s8 %v559
      %v561 = vlaneseq
      %v562 = vshrl.u32 %v561, 7
      %v563 = vsub.s32 %v560, %v562
      %v564 = vrot.slane %v557, %v563
      %s566 = scalar_lea.vmem [#allocation2], 4
      %567 = vst [vmem:[%s566] sm:$0xf] %v564
      %v568 = vld [vmem:[%s3] sm:$0xff]
      %v569 = vld [vmem:[%s3 + $0x8] sm:$0xff]
      %v570 = vld [vmem:[%s4] sm:$0x3]
      %v572 = vlaneseq
      %v573 = vshrl.u32 %v572, 7
      %v574 = vsub.s32 0, %v573
      %v575 = vrot.slane %v570, %v574
      %v576 = vlaneseq
      %v577 = vshrl.u32 %v576, 7
      %v578 = vsub.s32 1, %v577
      %v579 = vrot.slane %v570, %v578
      %v582 = vadd.f32 %v575, 0.0
      %v583 = vadd.f32 %v579, 0.0
      %v584 = vld [vmem:[#allocation2] sm:$0xf]
      %v585 = vld [vmem:[#allocation2 + $0x4] sm:$0xf]
      %v586 = vlaneseq
      %v587 = vshrl.u32 %v586, 7
      %v588 = vsub.s32 4, %v587
      %v589 = vrot.slane %v568, %v588
      %v590 = vlaneseq
      %v591 = vshrl.u32 %v590, 7
      %v592 = vsub.s32 4, %v591
      %v593 = vrot.slane %v569, %v592
      %v596 = vcombine.low %v589, %v593
      %v598 = vunpack.c.l.s4 1983009808
      %v599 = vunpack.c.0.s8 %v598
      %v600 = vlaneseq
      %v601 = vshrl.u32 %v600, 7
      %v602 = vsub.s32 %v599, %v601
      %v603 = vrot.slane %v596, %v602
      %v605 = vmul.f32 %v584, %v603
      %v606 = vmul.f32 %v585, %v603
      %v610 = vunpack.c.l.s4 1983009808
      %v611 = vunpack.c.0.s8 %v610
      %v612 = vlaneseq
      %v613 = vshrl.u32 %v612, 7
      %v614 = vsub.s32 %v611, %v613
      %v615 = vrot.slane %v605, %v614
      %v616 = vcombine.high %v615, %v615
      %v618 = vunpack.c.l.s4 1983009808
      %v619 = vunpack.c.0.s8 %v618
      %v620 = vlaneseq
      %v621 = vshrl.u32 %v620, 7
      %v622 = vsub.s32 %v619, %v621
      %v623 = vrot.slane %v606, %v622
      %v624 = vcombine.high %v623, %v623
      %v629 = vadd.f32 %v582, %v615
      %v630 = vadd.f32 %v583, %v616
      %v631 = vadd.f32 %v582, %v623
      %v632 = vadd.f32 %v583, %v624
      %v633 = vmax.f32 %v629, 0.0
      %v634 = vmax.f32 %v630, 0.0
      %v635 = vmax.f32 %v631, 0.0
      %v636 = vmax.f32 %v632, 0.0
      %v641 = vcombine.low %v633, %v634
      %v643 = vunpack.c.l.s4 1983009808
      %v644 = vunpack.c.0.s8 %v643
      %v645 = vlaneseq
      %v646 = vshrl.u32 %v645, 7
      %v647 = vsub.s32 %v644, %v646
      %v648 = vrot.slane %v641, %v647
      %v649 = vcombine.low %v635, %v636
      %v651 = vunpack.c.l.s4 1983009808
      %v652 = vunpack.c.0.s8 %v651
      %v653 = vlaneseq
      %v654 = vshrl.u32 %v653, 7
      %v655 = vsub.s32 %v652, %v654
      %v656 = vrot.slane %v649, %v655
      %659 = vst [vmem:[%s224] sm:$0xf] %v648
      %660 = vst [vmem:[%s224 + $0x4] sm:$0xf] %v656
      %p661 = scmp.lt.s32.totalorder %s16, 1
      %s662 = scalar_select %p661, %s16, 1
      %s663 = smul.addr %s662, 4
      %s664 = smul.addr %s663, 2
      %s665 = scalar_lea.vmem %s5, %s664
      // Predicated region
      $region41: #{_lambda_.16} parent=39 // pred_check
        %p666 = pneg %p144
      $region42: #{_lambda_.16} parent=39 // pred_check_branch
        %668 = sbr.rel (%p666) target = $region44
      $region43: #{_lambda_.16} parent=39 // pred_region
        _
      $region44: #{_lambda_.16} parent=39 // pred_fallthru
        _
    $region40: #{_lambda_.16} parent=5 // pred_fallthru
      _
    %p669 = scmp.le.s32.totalorder 2, %s11
    // Predicated region
    $region45: #{_lambda_.16} parent=5 // pred_check
      %p670 = pneg %p669
    $region46: #{_lambda_.16} parent=5 // pred_check_branch
      %672 = sbr.rel (%p670) target = $region48
    $region47: #{_lambda_.16} parent=5 // pred_region
      %s673 = ssub.s32 %s11, 2
      // Predicated region
      $region49: #{_lambda_.16} parent=47 // pred_check
        %p674 = pneg %p150
      $region50: #{_lambda_.16} parent=47 // pred_check_branch
        %676 = sbr.rel (%p674) target = $region52
      $region51: #{_lambda_.16} parent=47 // pred_region
        %p677 = scmp.lt.s32.totalorder %s17, 1
        %s678 = scalar_select %p677, %s17, 1
        %s679 = smul.addr %s678, 4
        %s680 = smul.addr %s679, 2
        %s681 = scalar_lea.vmem %s5, %s680
      $region52: #{_lambda_.16} parent=47 // pred_fallthru
        _
    $region48: #{_lambda_.16} parent=5 // pred_fallthru
      _
  $region6: #{_lambda_.16} parent=0 // loop_footer
    %s15 = sadd.s32 1, %s11
  $region7: #{_lambda_.16} parent=0 // loop_footer_branch
    %10 = sbr.rel target = $region3
  $region8: #{_lambda_.16} parent=0 // loop_exit
    _

// kernel: _lambda_.18
$region0: #{_lambda_.18}
  #allocation0 [shape = 'u32[]', space=smem, size = 0x4, offset = 0x4, fixed_abs, tag = 'smem constant byte address 0x4 - core index']
  #allocation1 [shape = 'u32[144,128]{1,0:T(1,128)}', space=vmem, size = 0x12000, scoped, tag = 'internal scratch']
  #allocation2 [shape = 'f32[1,1,256]{2,1,0:T(1,128)}', space=vmem, size = 0x400, scoped, tag = 'scratch operand']
  %s0 = inlined_call_operand.vmem [shape: f32[2,1,1,256], index: 0, kind: input, shape index: {}]
  %s1 = inlined_call_operand.vmem [shape: bf16[256,256], index: 1, kind: input, shape index: {}]
  %s2 = inlined_call_operand.vmem [shape: f32[1,256], index: 2, kind: input, shape index: {}]
  %s3 = inlined_call_operand.vmem [shape: f32[9,256], index: 3, kind: input, shape index: {}]
  %s4 = inlined_call_operand.vmem [shape: f32[1,256], index: 4, kind: input, shape index: {}]
  %s5 = inlined_call_operand.vmem [shape: f32[2,1,1,256], index: 5, kind: output, shape index: {}]
  %s6 = sld [smem:[#allocation0]]
  $region53: #{_lambda_.18} parent=0
    _
  %s8 = ssub.s32 1, %s6
  %s9 = scalar_select 0, %s8, %s6
  loop: start=0, step=1, limit=4
  $region2: #{_lambda_.18} parent=0 // loop_pre_header
    _
  $region3: #{_lambda_.18} parent=0 // loop_header
    %s11 = sphi 0, %s15
    %p12 = scmp.ge.s32.totalorder %s11, 4
    %s21 = sphi 0, %s23
    %s24 = sphi 0, %s21
    %s25 = sphi 0, %s24
    %s41 = sphi 0, %s25
    %s45 = sphi 0, %s45
    %s47 = sphi 0, %s45
    %s48 = sphi 0, %s47
    %s62 = sphi 0, %s48
    %s66 = sphi 0, %s66
    %s68 = sphi 0, %s66
    %s69 = sphi 0, %s68
    %s83 = sphi 0, %s69
    %s87 = sphi 0, %s87
    %s89 = sphi 0, %s87
    %s90 = sphi 0, %s89
    %s104 = sphi 0, %s90
    %s108 = sphi 0, %s108
    %s110 = sphi 0, %s108
    %s111 = sphi 0, %s110
    %s125 = sphi 0, %s111
    %s131 = sphi 0, %s133
    %s134 = sphi 0, %s131
    %s135 = sphi 0, %s134
    %s151 = sphi 0, %s135
  $region4: #{_lambda_.18} parent=0 // loop_header_branch
    %14 = sbr.rel (%p12) target = $region8
  $region5: #{_lambda_.18} parent=0 // loop_body
    %s16 = ssub.s32 %s11, 1
    %s17 = ssub.s32 %s11, 2
    %s18 = sadd.s32 %s11, 1
    %s19 = ssub.s32 %s11, %s18
    %p20 = scmp.eq.s32.totalorder %s19, 0
    %s22 = sadd.s32 %s21, 1
    %s23 = scalar_select %p20, %s21, %s22
    %p26 = pneg %p20
    %p27 = scmp.eq.s32.totalorder %s11, 1
    %p28 = por %p26, %p27
    %p29 = scmp.ne.s32.totalorder %s21, %s24
    %p30 = scmp.eq.s32.totalorder %s11, 0
    %p31 = por %p29, %p30
    %p32 = scmp.ne.s32.totalorder %s21, %s24
    %p33 = scmp.eq.s32.totalorder %s16, 1
    %p34 = por %p32, %p33
    %p35 = scmp.ne.s32.totalorder %s24, %s25
    %p36 = scmp.eq.s32.totalorder %s16, 0
    %p37 = por %p35, %p36
    %p38 = scmp.ne.s32.totalorder %s24, %s25
    %p39 = scmp.eq.s32.totalorder %s17, 1
    %p40 = por %p38, %p39
    %p42 = scmp.ne.s32.totalorder %s25, %s41
    %p43 = scmp.eq.s32.totalorder %s17, 0
    %p44 = por %p42, %p43
    %s46 = sadd.s32 %s45, 1
    %p49 = scmp.eq.s32.totalorder %s11, 1
    %p50 = scmp.ne.s32.totalorder %s45, %s47
    %p51 = scmp.eq.s32.totalorder %s11, 0
    %p52 = por %p50, %p51
    %p53 = scmp.ne.s32.totalorder %s45, %s47
    %p54 = scmp.eq.s32.totalorder %s16, 1
    %p55 = por %p53, %p54
    %p56 = scmp.ne.s32.totalorder %s47, %s48
    %p57 = scmp.eq.s32.totalorder %s16, 0
    %p58 = por %p56, %p57
    %p59 = scmp.ne.s32.totalorder %s47, %s48
    %p60 = scmp.eq.s32.totalorder %s17, 1
    %p61 = por %p59, %p60
    %p63 = scmp.ne.s32.totalorder %s48, %s62
    %p64 = scmp.eq.s32.totalorder %s17, 0
    %p65 = por %p63, %p64
    %s67 = sadd.s32 %s66, 1
    %p70 = scmp.eq.s32.totalorder %s11, 1
    %p71 = scmp.ne.s32.totalorder %s66, %s68
    %p72 = scmp.eq.s32.totalorder %s11, 0
    %p73 = por %p71, %p72
    %p74 = scmp.ne.s32.totalorder %s66, %s68
    %p75 = scmp.eq.s32.totalorder %s16, 1
    %p76 = por %p74, %p75
    %p77 = scmp.ne.s32.totalorder %s68, %s69
    %p78 = scmp.eq.s32.totalorder %s16, 0
    %p79 = por %p77, %p78
    %p80 = scmp.ne.s32.totalorder %s68, %s69
    %p81 = scmp.eq.s32.totalorder %s17, 1
    %p82 = por %p80, %p81
    %p84 = scmp.ne.s32.totalorder %s69, %s83
    %p85 = scmp.eq.s32.totalorder %s17, 0
    %p86 = por %p84, %p85
    %s88 = sadd.s32 %s87, 1
    %p91 = scmp.eq.s32.totalorder %s11, 1
    %p92 = scmp.ne.s32.totalorder %s87, %s89
    %p93 = scmp.eq.s32.totalorder %s11, 0
    %p94 = por %p92, %p93
    %p95 = scmp.ne.s32.totalorder %s87, %s89
    %p96 = scmp.eq.s32.totalorder %s16, 1
    %p97 = por %p95, %p96
    %p98 = scmp.ne.s32.totalorder %s89, %s90
    %p99 = scmp.eq.s32.totalorder %s16, 0
    %p100 = por %p98, %p99
    %p101 = scmp.ne.s32.totalorder %s89, %s90
    %p102 = scmp.eq.s32.totalorder %s17, 1
    %p103 = por %p101, %p102
    %p105 = scmp.ne.s32.totalorder %s90, %s104
    %p106 = scmp.eq.s32.totalorder %s17, 0
    %p107 = por %p105, %p106
    %s109 = sadd.s32 %s108, 1
    %p112 = scmp.eq.s32.totalorder %s11, 1
    %p113 = scmp.ne.s32.totalorder %s108, %s110
    %p114 = scmp.eq.s32.totalorder %s11, 0
    %p115 = por %p113, %p114
    %p116 = scmp.ne.s32.totalorder %s108, %s110
    %p117 = scmp.eq.s32.totalorder %s16, 1
    %p118 = por %p116, %p117
    %p119 = scmp.ne.s32.totalorder %s110, %s111
    %p120 = scmp.eq.s32.totalorder %s16, 0
    %p121 = por %p119, %p120
    %p122 = scmp.ne.s32.totalorder %s110, %s111
    %p123 = scmp.eq.s32.totalorder %s17, 1
    %p124 = por %p122, %p123
    %p126 = scmp.ne.s32.totalorder %s111, %s125
    %p127 = scmp.eq.s32.totalorder %s17, 0
    %p128 = por %p126, %p127
    %s129 = ssub.s32 %s11, %s18
    %p130 = scmp.eq.s32.totalorder %s129, 0
    %s132 = sadd.s32 %s131, 1
    %s133 = scalar_select %p130, %s131, %s132
    %p136 = pneg %p130
    %p137 = scmp.eq.s32.totalorder %s11, 1
    %p138 = por %p136, %p137
    %p139 = scmp.ne.s32.totalorder %s131, %s134
    %p140 = scmp.eq.s32.totalorder %s11, 0
    %p141 = por %p139, %p140
    %p142 = scmp.ne.s32.totalorder %s131, %s134
    %p143 = scmp.eq.s32.totalorder %s16, 1
    %p144 = por %p142, %p143
    %p145 = scmp.ne.s32.totalorder %s134, %s135
    %p146 = scmp.eq.s32.totalorder %s16, 0
    %p147 = por %p145, %p146
    %p148 = scmp.ne.s32.totalorder %s134, %s135
    %p149 = scmp.eq.s32.totalorder %s17, 1
    %p150 = por %p148, %p149
    %p152 = scmp.ne.s32.totalorder %s135, %s151
    %p153 = scmp.eq.s32.totalorder %s17, 0
    %p154 = por %p152, %p153
    %p155 = scmp.le.s32.totalorder 1, %s11
    %p156 = scmp.lt.s32.totalorder %s11, 3
    %p157 = pnand %p155, %p156
    %p158 = pneg %p157
    // Predicated region
    $region9: #{_lambda_.18} parent=5 // pred_check
      _
    $region10: #{_lambda_.18} parent=5 // pred_check_branch
      %160 = sbr.rel (%p157) target = $region12
    $region11: #{_lambda_.18} parent=5 // pred_region
      %s161 = ssub.s32 %s11, 1
      // Predicated region
      $region13: #{_lambda_.18} parent=11 // pred_check
        %p162 = pneg %p58
      $region14: #{_lambda_.18} parent=11 // pred_check_branch
        %164 = sbr.rel (%p162) target = $region16
      $region15: #{_lambda_.18} parent=11 // pred_region
        _
      $region16: #{_lambda_.18} parent=11 // pred_fallthru
        _
      // Predicated region
      $region17: #{_lambda_.18} parent=11 // pred_check
        %p165 = pneg %p79
      $region18: #{_lambda_.18} parent=11 // pred_check_branch
        %167 = sbr.rel (%p165) target = $region20
      $region19: #{_lambda_.18} parent=11 // pred_region
        _
      $region20: #{_lambda_.18} parent=11 // pred_fallthru
        _
      // Predicated region
      $region21: #{_lambda_.18} parent=11 // pred_check
        %p168 = pneg %p100
      $region22: #{_lambda_.18} parent=11 // pred_check_branch
        %170 = sbr.rel (%p168) target = $region24
      $region23: #{_lambda_.18} parent=11 // pred_region
        _
      $region24: #{_lambda_.18} parent=11 // pred_fallthru
        _
      // Predicated region
      $region25: #{_lambda_.18} parent=11 // pred_check
        %p171 = pneg %p121
      $region26: #{_lambda_.18} parent=11 // pred_check_branch
        %173 = sbr.rel (%p171) target = $region28
      $region27: #{_lambda_.18} parent=11 // pred_region
        _
      $region28: #{_lambda_.18} parent=11 // pred_fallthru
        _
    $region12: #{_lambda_.18} parent=5 // pred_fallthru
      _
    %p174 = scmp.lt.s32.totalorder %s11, 2
    // Predicated region
    $region29: #{_lambda_.18} parent=5 // pred_check
      %p175 = pneg %p174
    $region30: #{_lambda_.18} parent=5 // pred_check_branch
      %177 = sbr.rel (%p175) target = $region32
    $region31: #{_lambda_.18} parent=5 // pred_region
      // Predicated region
      $region33: #{_lambda_.18} parent=31 // pred_check
        %p178 = pneg %p31
      $region34: #{_lambda_.18} parent=31 // pred_check_branch
        %180 = sbr.rel (%p178) target = $region36
      $region35: #{_lambda_.18} parent=31 // pred_region
        %p181 = scmp.lt.s32.totalorder %s11, 1
        %s182 = scalar_select %p181, %s11, 1
        %s183 = smul.addr %s182, 2
        %s184 = scalar_lea.vmem %s0, %s183
      $region36: #{_lambda_.18} parent=31 // pred_fallthru
        _
    $region32: #{_lambda_.18} parent=5 // pred_fallthru
      _
    %p185 = scmp.le.s32.totalorder 1, %s11
    %p186 = scmp.lt.s32.totalorder %s11, 3
    %p187 = pnand %p185, %p186
    %p188 = pneg %p187
    // Predicated region
    $region37: #{_lambda_.18} parent=5 // pred_check
      _
    $region38: #{_lambda_.18} parent=5 // pred_check_branch
      %190 = sbr.rel (%p187) target = $region40
    $region39: #{_lambda_.18} parent=5 // pred_region
      %s191 = ssub.s32 %s11, 1
      %p192 = scmp.lt.s32.totalorder %s16, 1
      %s193 = scalar_select %p192, %s16, 1
      %s194 = smul.addr %s193, 2
      %s195 = scalar_lea.vmem %s0, %s194
      %p196 = pneg %p37
      %p197 = pneg %p34
      %p198 = pneg %p58
      %p199 = pneg %p55
      %p200 = pneg %p79
      %p201 = pneg %p76
      %p202 = pneg %p100
      %p203 = pneg %p97
      %p204 = pneg %p121
      %p205 = pneg %p118
      %p206 = pneg %p147
      %p207 = pneg %p144
      %p208 = scmp.lt.s32.totalorder %s16, 1
      %s209 = scalar_select %p208, %s16, 1
      %s210 = smul.addr %s209, 2
      %s211 = scalar_lea.vmem %s5, %s210
      %p212 = scmp.lt.s32.totalorder %s16, 1
      %s213 = scalar_select %p212, %s16, 1
      %s214 = smul.addr %s213, 2
      %s215 = scalar_lea.vmem %s0, %s214
      %p216 = scmp.lt.s32.totalorder %s16, 1
      %s217 = scalar_select %p216, %s16, 1
      %s218 = smul.addr %s217, 2
      %s219 = scalar_lea.vmem %s5, %s218
      %v220 = vld [vmem:[%s215] sm:$0x3]
      %v221 = vld [vmem:[%s1] sm:$0xff]
      %v222 = vld [vmem:[%s1 + $0x8] sm:$0xff]
      %v223 = vld [vmem:[%s1 + $0x10] sm:$0xff]
      %v224 = vld [vmem:[%s1 + $0x18] sm:$0xff]
      %v225 = vld [vmem:[%s1 + $0x20] sm:$0xff]
      %v226 = vld [vmem:[%s1 + $0x28] sm:$0xff]
      %v227 = vld [vmem:[%s1 + $0x30] sm:$0xff]
      %v228 = vld [vmem:[%s1 + $0x38] sm:$0xff]
      %v229 = vld [vmem:[%s1 + $0x40] sm:$0xff]
      %v230 = vld [vmem:[%s1 + $0x48] sm:$0xff]
      %v231 = vld [vmem:[%s1 + $0x50] sm:$0xff]
      %v232 = vld [vmem:[%s1 + $0x58] sm:$0xff]
      %v233 = vld [vmem:[%s1 + $0x60] sm:$0xff]
      %v234 = vld [vmem:[%s1 + $0x68] sm:$0xff]
      %v235 = vld [vmem:[%s1 + $0x70] sm:$0xff]
      %v236 = vld [vmem:[%s1 + $0x78] sm:$0xff]
      %v237 = vld [vmem:[%s1 + $0x80] sm:$0xff]
      %v238 = vld [vmem:[%s1 + $0x88] sm:$0xff]
      %v239 = vld [vmem:[%s1 + $0x90] sm:$0xff]
      %v240 = vld [vmem:[%s1 + $0x98] sm:$0xff]
      %v241 = vld [vmem:[%s1 + $0xa0] sm:$0xff]
      %v242 = vld [vmem:[%s1 + $0xa8] sm:$0xff]
      %v243 = vld [vmem:[%s1 + $0xb0] sm:$0xff]
      %v244 = vld [vmem:[%s1 + $0xb8] sm:$0xff]
      %v245 = vld [vmem:[%s1 + $0xc0] sm:$0xff]
      %v246 = vld [vmem:[%s1 + $0xc8] sm:$0xff]
      %v247 = vld [vmem:[%s1 + $0xd0] sm:$0xff]
      %v248 = vld [vmem:[%s1 + $0xd8] sm:$0xff]
      %v249 = vld [vmem:[%s1 + $0xe0] sm:$0xff]
      %v250 = vld [vmem:[%s1 + $0xe8] sm:$0xff]
      %v251 = vld [vmem:[%s1 + $0xf0] sm:$0xff]
      %v252 = vld [vmem:[%s1 + $0xf8] sm:$0xff]
      %v253 = vld [vmem:[%s2] sm:$0x3]
      %v255 = vlaneseq
      %v256 = vshrl.u32 %v255, 7
      %v257 = vsub.s32 0, %v256
      %v258 = vrot.slane %v220, %v257
      %v259 = vlaneseq
      %v260 = vshrl.u32 %v259, 7
      %v261 = vsub.s32 1, %v260
      %v262 = vrot.slane %v220, %v261
      %v265 = vpack.c.bf16 %v258, %v258
      %v266 = vpack.c.bf16 %v262, %v262
      %v299 = vunpack.c.l.b16 %v221
      %v300 = vunpack.c.h.b16 %v221
      %v301 = vunpack.c.l.b16 %v222
      %v302 = vunpack.c.h.b16 %v222
      %v303 = vunpack.c.l.b16 %v223
      %v304 = vunpack.c.h.b16 %v223
      %v305 = vunpack.c.l.b16 %v224
      %v306 = vunpack.c.h.b16 %v224
      %v307 = vunpack.c.l.b16 %v225
      %v308 = vunpack.c.h.b16 %v225
      %v309 = vunpack.c.l.b16 %v226
      %v310 = vunpack.c.h.b16 %v226
      %v311 = vunpack.c.l.b16 %v227
      %v312 = vunpack.c.h.b16 %v227
      %v313 = vunpack.c.l.b16 %v228
      %v314 = vunpack.c.h.b16 %v228
      %v315 = vunpack.c.l.b16 %v229
      %v316 = vunpack.c.h.b16 %v229
      %v317 = vunpack.c.l.b16 %v230
      %v318 = vunpack.c.h.b16 %v230
      %v319 = vunpack.c.l.b16 %v231
      %v320 = vunpack.c.h.b16 %v231
      %v321 = vunpack.c.l.b16 %v232
      %v322 = vunpack.c.h.b16 %v232
      %v323 = vunpack.c.l.b16 %v233
      %v324 = vunpack.c.h.b16 %v233
      %v325 = vunpack.c.l.b16 %v234
      %v326 = vunpack.c.h.b16 %v234
      %v327 = vunpack.c.l.b16 %v235
      %v328 = vunpack.c.h.b16 %v235
      %v329 = vunpack.c.l.b16 %v236
      %v330 = vunpack.c.h.b16 %v236
      %v331 = vunpack.c.l.b16 %v237
      %v332 = vunpack.c.h.b16 %v237
      %v333 = vunpack.c.l.b16 %v238
      %v334 = vunpack.c.h.b16 %v238
      %v335 = vunpack.c.l.b16 %v239
      %v336 = vunpack.c.h.b16 %v239
      %v337 = vunpack.c.l.b16 %v240
      %v338 = vunpack.c.h.b16 %v240
      %v339 = vunpack.c.l.b16 %v241
      %v340 = vunpack.c.h.b16 %v241
      %v341 = vunpack.c.l.b16 %v242
      %v342 = vunpack.c.h.b16 %v242
      %v343 = vunpack.c.l.b16 %v243
      %v344 = vunpack.c.h.b16 %v243
      %v345 = vunpack.c.l.b16 %v244
      %v346 = vunpack.c.h.b16 %v244
      %v347 = vunpack.c.l.b16 %v245
      %v348 = vunpack.c.h.b16 %v245
      %v349 = vunpack.c.l.b16 %v246
      %v350 = vunpack.c.h.b16 %v246
      %v351 = vunpack.c.l.b16 %v247
      %v352 = vunpack.c.h.b16 %v247
      %v353 = vunpack.c.l.b16 %v248
      %v354 = vunpack.c.h.b16 %v248
      %v355 = vunpack.c.l.b16 %v249
      %v356 = vunpack.c.h.b16 %v249
      %v357 = vunpack.c.l.b16 %v250
      %v358 = vunpack.c.h.b16 %v250
      %v359 = vunpack.c.l.b16 %v251
      %v360 = vunpack.c.h.b16 %v251
      %v361 = vunpack.c.l.b16 %v252
      %v362 = vunpack.c.h.b16 %v252
      %v363 = vpack.c.b16 %v301, %v299
      %v364 = vpack.c.b16 %v302, %v300
      %v365 = vpack.c.b16 %v305, %v303
      %v366 = vpack.c.b16 %v306, %v304
      %v367 = vpack.c.b16 %v309, %v307
      %v368 = vpack.c.b16 %v310, %v308
      %v369 = vpack.c.b16 %v313, %v311
      %v370 = vpack.c.b16 %v314, %v312
      %v371 = vpack.c.b16 %v317, %v315
      %v372 = vpack.c.b16 %v318, %v316
      %v373 = vpack.c.b16 %v321, %v319
      %v374 = vpack.c.b16 %v322, %v320
      %v375 = vpack.c.b16 %v325, %v323
      %v376 = vpack.c.b16 %v326, %v324
      %v377 = vpack.c.b16 %v329, %v327
      %v378 = vpack.c.b16 %v330, %v328
      %v379 = vpack.c.b16 %v333, %v331
      %v380 = vpack.c.b16 %v334, %v332
      %v381 = vpack.c.b16 %v337, %v335
      %v382 = vpack.c.b16 %v338, %v336
      %v383 = vpack.c.b16 %v341, %v339
      %v384 = vpack.c.b16 %v342, %v340
      %v385 = vpack.c.b16 %v345, %v343
      %v386 = vpack.c.b16 %v346, %v344
      %v387 = vpack.c.b16 %v349, %v347
      %v388 = vpack.c.b16 %v350, %v348
      %v389 = vpack.c.b16 %v353, %v351
      %v390 = vpack.c.b16 %v354, %v352
      %v391 = vpack.c.b16 %v357, %v355
      %v392 = vpack.c.b16 %v358, %v356
      %v393 = vpack.c.b16 %v361, %v359
      %v394 = vpack.c.b16 %v362, %v360
      %v428 = vlaneseq
      %v429 = vshrl.u32 %v428, 7
      %v430 = vsub.s32 0, %v429
      %v431 = vrot.slane %v253, %v430
      %v432 = vlaneseq
      %v433 = vshrl.u32 %v432, 7
      %v434 = vsub.s32 1, %v433
      %v435 = vrot.slane %v253, %v434
      %438 = vmatprep.subr.bf16.mxu0 %v364
      %439 = vmatpush1.bf16.msra.mxu0 %v363
      %440 = vmatprep.subr.bf16.mxu0 %v366
      %441 = vmatpush1.bf16.msra.mxu0 %v365
      %442 = vmatprep.subr.bf16.mxu0 %v368
      %443 = vmatpush1.bf16.msra.mxu0 %v367
      %444 = vmatprep.subr.bf16.mxu0 %v370
      %445 = vmatpush1.bf16.msra.mxu0 %v369
      %446 = vmatprep.subr.bf16.mxu0 %v372
      %447 = vmatpush1.bf16.msra.mxu0 %v371
      %448 = vmatprep.subr.bf16.mxu0 %v374
      %449 = vmatpush1.bf16.msra.mxu0 %v373
      %450 = vmatprep.subr.bf16.mxu0 %v376
      %451 = vmatpush1.bf16.msra.mxu0 %v375
      %452 = vmatprep.subr.bf16.mxu0 %v378
      %453 = vmatpush1.bf16.msra.mxu0 %v377
      %454 = vmatprep.subr.bf16.mxu0 %v380
      %455 = vmatpush1.bf16.msra.mxu0 %v379
      %456 = vmatprep.subr.bf16.mxu0 %v382
      %457 = vmatpush1.bf16.msra.mxu0 %v381
      %458 = vmatprep.subr.bf16.mxu0 %v384
      %459 = vmatpush1.bf16.msra.mxu0 %v383
      %460 = vmatprep.subr.bf16.mxu0 %v386
      %461 = vmatpush1.bf16.msra.mxu0 %v385
      %462 = vmatprep.subr.bf16.mxu0 %v388
      %463 = vmatpush1.bf16.msra.mxu0 %v387
      %464 = vmatprep.subr.bf16.mxu0 %v390
      %465 = vmatpush1.bf16.msra.mxu0 %v389
      %466 = vmatprep.subr.bf16.mxu0 %v392
      %467 = vmatpush1.bf16.msra.mxu0 %v391
      %468 = vmatprep.subr.bf16.mxu0 %v394
      %469 = vmatpush1.bf16.msra.mxu0 %v393
      %470 = vmatprep.mubr.bf16.mxu0 %v266
      %471 = vmatmul.mubr.bf16.gmra.mrb[0].mxu0 %v265
      %v472 = vpop.f32.mrb[0].mxu0
      %v473 = vadd.f32 %v431, %v472
      %v474 = vpop.f32.mrb[0].mxu0
      %v475 = vadd.f32 %v435, %v474
      %v476 = vpop.f32.mrb[0].mxu0
      %v477 = vpop.f32.mrb[0].mxu0
      %478 = vdwg.mxu0
      %v479 = vmax.f32 %v473, 0.0
      %v480 = vmax.f32 %v475, 0.0
      %v483 = vcombine.low %v479, %v480
      %v485 = vunpack.c.l.s4 1966171168
      %v486 = vunpack.c.0.s8 %v485
      %v487 = vlaneseq
      %v488 = vshrl.u32 %v487, 7
      %v489 = vsub.s32 %v486, %v488
      %v490 = vrot.slane %v483, %v489
      %v492 = vunpack.c.l.s4 1966171168
      %v493 = vunpack.c.0.s8 %v492
      %v494 = vlaneseq
      %v495 = vshrl.u32 %v494, 7
      %v496 = vsub.s32 %v493, %v495
      %v497 = vrot.slane %v490, %v496
      %v499 = vlaneseq
      %vm500 = vcmp.ge.s32.totalorder %v499, 0
      %vm501 = vcmp.lt.s32.totalorder %v499, 256
      %vm502 = vmand %vm500, %vm501
      %503 = vst.msk [vmem:[#allocation2] sm:$0x3] %vm502, %v497
      %v504 = vld [vmem:[%s3] sm:$0xff]
      %v505 = vld [vmem:[%s3 + $0x8] sm:$0xff]
      %v506 = vld [vmem:[%s4] sm:$0x3]
      %v507 = vadd.f32 %v506, 0.0
      %v508 = vld [vmem:[#allocation2] sm:$0x3]
      %v511 = vcombine.high %v504, %v505
      %v513 = vunpack.c.l.s4 1966171168
      %v514 = vunpack.c.0.s8 %v513
      %v515 = vlaneseq
      %v516 = vshrl.u32 %v515, 7
      %v517 = vsub.s32 %v514, %v516
      %v518 = vrot.slane %v511, %v517
      %v520 = vunpack.c.l.s4 1966171168
      %v521 = vunpack.c.0.s8 %v520
      %v522 = vlaneseq
      %v523 = vshrl.u32 %v522, 7
      %v524 = vsub.s32 %v521, %v523
      %v525 = vrot.slane %v518, %v524
      %v527 = vmul.f32 %v508, %v525
      %v528 = vadd.f32 %v507, %v527
      %v529 = vmax.f32 %v528, 0.0
      %530 = vst.msk [vmem:[%s219] sm:$0x3] %vm502, %v529
      %p531 = scmp.lt.s32.totalorder %s16, 1
      %s532 = scalar_select %p531, %s16, 1
      %s533 = smul.addr %s532, 2
      %s534 = scalar_lea.vmem %s5, %s533
      // Predicated region
      $region41: #{_lambda_.18} parent=39 // pred_check
        %p535 = pneg %p144
      $region42: #{_lambda_.18} parent=39 // pred_check_branch
        %537 = sbr.rel (%p535) target = $region44
      $region43: #{_lambda_.18} parent=39 // pred_region
        _
      $region44: #{_lambda_.18} parent=39 // pred_fallthru
        _
    $region40: #{_lambda_.18} parent=5 // pred_fallthru
      _
    %p538 = scmp.le.s32.totalorder 2, %s11
    // Predicated region
    $region45: #{_lambda_.18} parent=5 // pred_check
      %p539 = pneg %p538
    $region46: #{_lambda_.18} parent=5 // pred_check_branch
      %541 = sbr.rel (%p539) target = $region48
    $region47: #{_lambda_.18} parent=5 // pred_region
      %s542 = ssub.s32 %s11, 2
      // Predicated region
      $region49: #{_lambda_.18} parent=47 // pred_check
        %p543 = pneg %p150
      $region50: #{_lambda_.18} parent=47 // pred_check_branch
        %545 = sbr.rel (%p543) target = $region52
      $region51: #{_lambda_.18} parent=47 // pred_region
        %p546 = scmp.lt.s32.totalorder %s17, 1
        %s547 = scalar_select %p546, %s17, 1
        %s548 = smul.addr %s547, 2
        %s549 = scalar_lea.vmem %s5, %s548
      $region52: #{_lambda_.18} parent=47 // pred_fallthru
        _
    $region48: #{_lambda_.18} parent=5 // pred_fallthru
      _
  $region6: #{_lambda_.18} parent=0 // loop_footer
    %s15 = sadd.s32 1, %s11
  $region7: #{_lambda_.18} parent=0 // loop_footer_branch
    %10 = sbr.rel target = $region3
  $region8: #{_lambda_.18} parent=0 // loop_exit
    _

// kernel: _lambda_.11
$region0: #{_lambda_.11}
  #allocation0 [shape = 'u32[]', space=smem, size = 0x4, offset = 0x4, fixed_abs, tag = 'smem constant byte address 0x4 - core index']
  #allocation1 [shape = 'u32[144,128]{1,0:T(1,128)}', space=vmem, size = 0x12000, scoped, tag = 'internal scratch']
  #allocation2 [shape = 'f32[18,18,3]{2,1,0:T(8,128)}', space=vmem, size = 0x36000, scoped, tag = 'scratch operand']
  %s0 = inlined_call_operand.vmem [shape: f32[2,16,16,3], index: 0, kind: input, shape index: {}]
  %s1 = inlined_call_operand.vmem [shape: f32[2,16,16,3], index: 1, kind: input, shape index: {}]
  %s2 = inlined_call_operand.vmem [shape: f32[2,16,16,3], index: 2, kind: input, shape index: {}]
  %s3 = inlined_call_operand.vmem [shape: f32[2,16,16,3], index: 3, kind: input, shape index: {}]
  %s4 = inlined_call_operand.vmem [shape: f32[16,16,1], index: 4, kind: input, shape index: {}]
  %s5 = inlined_call_operand.vmem [shape: f32[9,3,32], index: 5, kind: input, shape index: {}]
  %s6 = inlined_call_operand.vmem [shape: f32[1,32], index: 6, kind: input, shape index: {}]
  %s7 = inlined_call_operand.vmem [shape: f32[2,16,16,32], index: 7, kind: output, shape index: {}]
  %s8 = sld [smem:[#allocation0]]
  $region61: #{_lambda_.11} parent=0
    _
  %s10 = ssub.s32 1, %s8
  %s11 = scalar_select 0, %s10, %s8
  loop: start=0, step=1, limit=4
  $region2: #{_lambda_.11} parent=0 // loop_pre_header
    _
  $region3: #{_lambda_.11} parent=0 // loop_header
    %s13 = sphi 0, %s17
    %p14 = scmp.ge.s32.totalorder %s13, 4
    %s23 = sphi 0, %s25
    %s26 = sphi 0, %s23
    %s27 = sphi 0, %s26
    %s43 = sphi 0, %s27
    %s49 = sphi 0, %s51
    %s52 = sphi 0, %s49
    %s53 = sphi 0, %s52
    %s69 = sphi 0, %s53
    %s75 = sphi 0, %s77
    %s78 = sphi 0, %s75
    %s79 = sphi 0, %s78
    %s95 = sphi 0, %s79
    %s101 = sphi 0, %s103
    %s104 = sphi 0, %s101
    %s105 = sphi 0, %s104
    %s121 = sphi 0, %s105
    %s125 = sphi 0, %s125
    %s127 = sphi 0, %s125
    %s128 = sphi 0, %s127
    %s142 = sphi 0, %s128
    %s146 = sphi 0, %s146
    %s148 = sphi 0, %s146
    %s149 = sphi 0, %s148
    %s163 = sphi 0, %s149
    %s167 = sphi 0, %s167
    %s169 = sphi 0, %s167
    %s170 = sphi 0, %s169
    %s184 = sphi 0, %s170
    %s190 = sphi 0, %s192
    %s193 = sphi 0, %s190
    %s194 = sphi 0, %s193
    %s210 = sphi 0, %s194
  $region4: #{_lambda_.11} parent=0 // loop_header_branch
    %16 = sbr.rel (%p14) target = $region8
  $region5: #{_lambda_.11} parent=0 // loop_body
    %s18 = ssub.s32 %s13, 1
    %s19 = ssub.s32 %s13, 2
    %s20 = sadd.s32 %s13, 1
    %s21 = ssub.s32 %s13, %s20
    %p22 = scmp.eq.s32.totalorder %s21, 0
    %s24 = sadd.s32 %s23, 1
    %s25 = scalar_select %p22, %s23, %s24
    %p28 = pneg %p22
    %p29 = scmp.eq.s32.totalorder %s13, 1
    %p30 = por %p28, %p29
    %p31 = scmp.ne.s32.totalorder %s23, %s26
    %p32 = scmp.eq.s32.totalorder %s13, 0
    %p33 = por %p31, %p32
    %p34 = scmp.ne.s32.totalorder %s23, %s26
    %p35 = scmp.eq.s32.totalorder %s18, 1
    %p36 = por %p34, %p35
    %p37 = scmp.ne.s32.totalorder %s26, %s27
    %p38 = scmp.eq.s32.totalorder %s18, 0
    %p39 = por %p37, %p38
    %p40 = scmp.ne.s32.totalorder %s26, %s27
    %p41 = scmp.eq.s32.totalorder %s19, 1
    %p42 = por %p40, %p41
    %p44 = scmp.ne.s32.totalorder %s27, %s43
    %p45 = scmp.eq.s32.totalorder %s19, 0
    %p46 = por %p44, %p45
    %s47 = ssub.s32 %s13, %s20
    %p48 = scmp.eq.s32.totalorder %s47, 0
    %s50 = sadd.s32 %s49, 1
    %s51 = scalar_select %p48, %s49, %s50
    %p54 = pneg %p48
    %p55 = scmp.eq.s32.totalorder %s13, 1
    %p56 = por %p54, %p55
    %p57 = scmp.ne.s32.totalorder %s49, %s52
    %p58 = scmp.eq.s32.totalorder %s13, 0
    %p59 = por %p57, %p58
    %p60 = scmp.ne.s32.totalorder %s49, %s52
    %p61 = scmp.eq.s32.totalorder %s18, 1
    %p62 = por %p60, %p61
    %p63 = scmp.ne.s32.totalorder %s52, %s53
    %p64 = scmp.eq.s32.totalorder %s18, 0
    %p65 = por %p63, %p64
    %p66 = scmp.ne.s32.totalorder %s52, %s53
    %p67 = scmp.eq.s32.totalorder %s19, 1
    %p68 = por %p66, %p67
    %p70 = scmp.ne.s32.totalorder %s53, %s69
    %p71 = scmp.eq.s32.totalorder %s19, 0
    %p72 = por %p70, %p71
    %s73 = ssub.s32 %s13, %s20
    %p74 = scmp.eq.s32.totalorder %s73, 0
    %s76 = sadd.s32 %s75, 1
    %s77 = scalar_select %p74, %s75, %s76
    %p80 = pneg %p74
    %p81 = scmp.eq.s32.totalorder %s13, 1
    %p82 = por %p80, %p81
    %p83 = scmp.ne.s32.totalorder %s75, %s78
    %p84 = scmp.eq.s32.totalorder %s13, 0
    %p85 = por %p83, %p84
    %p86 = scmp.ne.s32.totalorder %s75, %s78
    %p87 = scmp.eq.s32.totalorder %s18, 1
    %p88 = por %p86, %p87
    %p89 = scmp.ne.s32.totalorder %s78, %s79
    %p90 = scmp.eq.s32.totalorder %s18, 0
    %p91 = por %p89, %p90
    %p92 = scmp.ne.s32.totalorder %s78, %s79
    %p93 = scmp.eq.s32.totalorder %s19, 1
    %p94 = por %p92, %p93
    %p96 = scmp.ne.s32.totalorder %s79, %s95
    %p97 = scmp.eq.s32.totalorder %s19, 0
    %p98 = por %p96, %p97
    %s99 = ssub.s32 %s13, %s20
    %p100 = scmp.eq.s32.totalorder %s99, 0
    %s102 = sadd.s32 %s101, 1
    %s103 = scalar_select %p100, %s101, %s102
    %p106 = pneg %p100
    %p107 = scmp.eq.s32.totalorder %s13, 1
    %p108 = por %p106, %p107
    %p109 = scmp.ne.s32.totalorder %s101, %s104
    %p110 = scmp.eq.s32.totalorder %s13, 0
    %p111 = por %p109, %p110
    %p112 = scmp.ne.s32.totalorder %s101, %s104
    %p113 = scmp.eq.s32.totalorder %s18, 1
    %p114 = por %p112, %p113
    %p115 = scmp.ne.s32.totalorder %s104, %s105
    %p116 = scmp.eq.s32.totalorder %s18, 0
    %p117 = por %p115, %p116
    %p118 = scmp.ne.s32.totalorder %s104, %s105
    %p119 = scmp.eq.s32.totalorder %s19, 1
    %p120 = por %p118, %p119
    %p122 = scmp.ne.s32.totalorder %s105, %s121
    %p123 = scmp.eq.s32.totalorder %s19, 0
    %p124 = por %p122, %p123
    %s126 = sadd.s32 %s125, 1
    %p129 = scmp.eq.s32.totalorder %s13, 1
    %p130 = scmp.ne.s32.totalorder %s125, %s127
    %p131 = scmp.eq.s32.totalorder %s13, 0
    %p132 = por %p130, %p131
    %p133 = scmp.ne.s32.totalorder %s125, %s127
    %p134 = scmp.eq.s32.totalorder %s18, 1
    %p135 = por %p133, %p134
    %p136 = scmp.ne.s32.totalorder %s127, %s128
    %p137 = scmp.eq.s32.totalorder %s18, 0
    %p138 = por %p136, %p137
    %p139 = scmp.ne.s32.totalorder %s127, %s128
    %p140 = scmp.eq.s32.totalorder %s19, 1
    %p141 = por %p139, %p140
    %p143 = scmp.ne.s32.totalorder %s128, %s142
    %p144 = scmp.eq.s32.totalorder %s19, 0
    %p145 = por %p143, %p144
    %s147 = sadd.s32 %s146, 1
    %p150 = scmp.eq.s32.totalorder %s13, 1
    %p151 = scmp.ne.s32.totalorder %s146, %s148
    %p152 = scmp.eq.s32.totalorder %s13, 0
    %p153 = por %p151, %p152
    %p154 = scmp.ne.s32.totalorder %s146, %s148
    %p155 = scmp.eq.s32.totalorder %s18, 1
    %p156 = por %p154, %p155
    %p157 = scmp.ne.s32.totalorder %s148, %s149
    %p158 = scmp.eq.s32.totalorder %s18, 0
    %p159 = por %p157, %p158
    %p160 = scmp.ne.s32.totalorder %s148, %s149
    %p161 = scmp.eq.s32.totalorder %s19, 1
    %p162 = por %p160, %p161
    %p164 = scmp.ne.s32.totalorder %s149, %s163
    %p165 = scmp.eq.s32.totalorder %s19, 0
    %p166 = por %p164, %p165
    %s168 = sadd.s32 %s167, 1
    %p171 = scmp.eq.s32.totalorder %s13, 1
    %p172 = scmp.ne.s32.totalorder %s167, %s169
    %p173 = scmp.eq.s32.totalorder %s13, 0
    %p174 = por %p172, %p173
    %p175 = scmp.ne.s32.totalorder %s167, %s169
    %p176 = scmp.eq.s32.totalorder %s18, 1
    %p177 = por %p175, %p176
    %p178 = scmp.ne.s32.totalorder %s169, %s170
    %p179 = scmp.eq.s32.totalorder %s18, 0
    %p180 = por %p178, %p179
    %p181 = scmp.ne.s32.totalorder %s169, %s170
    %p182 = scmp.eq.s32.totalorder %s19, 1
    %p183 = por %p181, %p182
    %p185 = scmp.ne.s32.totalorder %s170, %s184
    %p186 = scmp.eq.s32.totalorder %s19, 0
    %p187 = por %p185, %p186
    %s188 = ssub.s32 %s13, %s20
    %p189 = scmp.eq.s32.totalorder %s188, 0
    %s191 = sadd.s32 %s190, 1
    %s192 = scalar_select %p189, %s190, %s191
    %p195 = pneg %p189
    %p196 = scmp.eq.s32.totalorder %s13, 1
    %p197 = por %p195, %p196
    %p198 = scmp.ne.s32.totalorder %s190, %s193
    %p199 = scmp.eq.s32.totalorder %s13, 0
    %p200 = por %p198, %p199
    %p201 = scmp.ne.s32.totalorder %s190, %s193
    %p202 = scmp.eq.s32.totalorder %s18, 1
    %p203 = por %p201, %p202
    %p204 = scmp.ne.s32.totalorder %s193, %s194
    %p205 = scmp.eq.s32.totalorder %s18, 0
    %p206 = por %p204, %p205
    %p207 = scmp.ne.s32.totalorder %s193, %s194
    %p208 = scmp.eq.s32.totalorder %s19, 1
    %p209 = por %p207, %p208
    %p211 = scmp.ne.s32.totalorder %s194, %s210
    %p212 = scmp.eq.s32.totalorder %s19, 0
    %p213 = por %p211, %p212
    %p214 = scmp.le.s32.totalorder 1, %s13
    %p215 = scmp.lt.s32.totalorder %s13, 3
    %p216 = pnand %p214, %p215
    %p217 = pneg %p216
    // Predicated region
    $region9: #{_lambda_.11} parent=5 // pred_check
      _
    $region10: #{_lambda_.11} parent=5 // pred_check_branch
      %219 = sbr.rel (%p216) target = $region12
    $region11: #{_lambda_.11} parent=5 // pred_region
      %s220 = ssub.s32 %s13, 1
      // Predicated region
      $region13: #{_lambda_.11} parent=11 // pred_check
        %p221 = pneg %p138
      $region14: #{_lambda_.11} parent=11 // pred_check_branch
        %223 = sbr.rel (%p221) target = $region16
      $region15: #{_lambda_.11} parent=11 // pred_region
        _
      $region16: #{_lambda_.11} parent=11 // pred_fallthru
        _
      // Predicated region
      $region17: #{_lambda_.11} parent=11 // pred_check
        %p224 = pneg %p159
      $region18: #{_lambda_.11} parent=11 // pred_check_branch
        %226 = sbr.rel (%p224) target = $region20
      $region19: #{_lambda_.11} parent=11 // pred_region
        _
      $region20: #{_lambda_.11} parent=11 // pred_fallthru
        _
      // Predicated region
      $region21: #{_lambda_.11} parent=11 // pred_check
        %p227 = pneg %p180
      $region22: #{_lambda_.11} parent=11 // pred_check_branch
        %229 = sbr.rel (%p227) target = $region24
      $region23: #{_lambda_.11} parent=11 // pred_region
        _
      $region24: #{_lambda_.11} parent=11 // pred_fallthru
        _
    $region12: #{_lambda_.11} parent=5 // pred_fallthru
      _
    %p230 = scmp.lt.s32.totalorder %s13, 2
    // Predicated region
    $region25: #{_lambda_.11} parent=5 // pred_check
      %p231 = pneg %p230
    $region26: #{_lambda_.11} parent=5 // pred_check_branch
      %233 = sbr.rel (%p231) target = $region28
    $region27: #{_lambda_.11} parent=5 // pred_region
      // Predicated region
      $region29: #{_lambda_.11} parent=27 // pred_check
        %p234 = pneg %p33
      $region30: #{_lambda_.11} parent=27 // pred_check_branch
        %236 = sbr.rel (%p234) target = $region32
      $region31: #{_lambda_.11} parent=27 // pred_region
        %p237 = scmp.lt.s32.totalorder %s13, 1
        %s238 = scalar_select %p237, %s13, 1
        %s239 = smul.addr %s238, 32
        %s240 = smul.addr %s239, 8
        %s241 = scalar_lea.vmem %s0, %s240
      $region32: #{_lambda_.11} parent=27 // pred_fallthru
        _
      // Predicated region
      $region33: #{_lambda_.11} parent=27 // pred_check
        %p242 = pneg %p59
      $region34: #{_lambda_.11} parent=27 // pred_check_branch
        %244 = sbr.rel (%p242) target = $region36
      $region35: #{_lambda_.11} parent=27 // pred_region
        %p245 = scmp.lt.s32.totalorder %s13, 1
        %s246 = scalar_select %p245, %s13, 1
        %s247 = smul.addr %s246, 32
        %s248 = smul.addr %s247, 8
        %s249 = scalar_lea.vmem %s1, %s248
      $region36: #{_lambda_.11} parent=27 // pred_fallthru
        _
      // Predicated region
      $region37: #{_lambda_.11} parent=27 // pred_check
        %p250 = pneg %p85
      $region38: #{_lambda_.11} parent=27 // pred_check_branch
        %252 = sbr.rel (%p250) target = $region40
      $region39: #{_lambda_.11} parent=27 // pred_region
        %p253 = scmp.lt.s32.totalorder %s13, 1
        %s254 = scalar_select %p253, %s13, 1
        %s255 = smul.addr %s254, 32
        %s256 = smul.addr %s255, 8
        %s257 = scalar_lea.vmem %s2, %s256
      $region40: #{_lambda_.11} parent=27 // pred_fallthru
        _
      // Predicated region
      $region41: #{_lambda_.11} parent=27 // pred_check
        %p258 = pneg %p111
      $region42: #{_lambda_.11} parent=27 // pred_check_branch
        %260 = sbr.rel (%p258) target = $region44
      $region43: #{_lambda_.11} parent=27 // pred_region
        %p261 = scmp.lt.s32.totalorder %s13, 1
        %s262 = scalar_select %p261, %s13, 1
        %s263 = smul.addr %s262, 32
        %s264 = smul.addr %s263, 8
        %s265 = scalar_lea.vmem %s3, %s264
      $region44: #{_lambda_.11} parent=27 // pred_fallthru
        _
    $region28: #{_lambda_.11} parent=5 // pred_fallthru
      _
    %p266 = scmp.le.s32.totalorder 1, %s13
    %p267 = scmp.lt.s32.totalorder %s13, 3
    %p268 = pnand %p266, %p267
    %p269 = pneg %p268
    // Predicated region
    $region45: #{_lambda_.11} parent=5 // pred_check
      _
    $region46: #{_lambda_.11} parent=5 // pred_check_branch
      %271 = sbr.rel (%p268) target = $region48
    $region47: #{_lambda_.11} parent=5 // pred_region
      %s272 = ssub.s32 %s13, 1
      %p273 = scmp.lt.s32.totalorder %s18, 1
      %s274 = scalar_select %p273, %s18, 1
      %s275 = smul.addr %s274, 32
      %s276 = smul.addr %s275, 8
      %s277 = scalar_lea.vmem %s0, %s276
      %p278 = pneg %p39
      %p279 = pneg %p36
      %p280 = scmp.lt.s32.totalorder %s18, 1
      %s281 = scalar_select %p280, %s18, 1
      %s282 = smul.addr %s281, 32
      %s283 = smul.addr %s282, 8
      %s284 = scalar_lea.vmem %s1, %s283
      %p285 = pneg %p65
      %p286 = pneg %p62
      %p287 = scmp.lt.s32.totalorder %s18, 1
      %s288 = scalar_select %p287, %s18, 1
      %s289 = smul.addr %s288, 32
      %s290 = smul.addr %s289, 8
      %s291 = scalar_lea.vmem %s2, %s290
      %p292 = pneg %p91
      %p293 = pneg %p88
      %p294 = scmp.lt.s32.totalorder %s18, 1
      %s295 = scalar_select %p294, %s18, 1
      %s296 = smul.addr %s295, 32
      %s297 = smul.addr %s296, 8
      %s298 = scalar_lea.vmem %s3, %s297
      %p299 = pneg %p117
      %p300 = pneg %p114
      %p301 = pneg %p138
      %p302 = pneg %p135
      %p303 = pneg %p159
      %p304 = pneg %p156
      %p305 = pneg %p180
      %p306 = pneg %p177
      %p307 = pneg %p206
      %p308 = pneg %p203
      %p309 = scmp.lt.s32.totalorder %s18, 1
      %s310 = scalar_select %p309, %s18, 1
      %s311 = smul.addr %s310, 32
      %s312 = smul.addr %s311, 8
      %s313 = scalar_lea.vmem %s7, %s312
      %p314 = scmp.lt.s32.totalorder %s18, 1
      %s315 = scalar_select %p314, %s18, 1
      %s316 = smul.addr %s315, 32
      %s317 = smul.addr %s316, 8
      %s318 = scalar_lea.vmem %s0, %s317
      %p319 = scmp.lt.s32.totalorder %s18, 1
      %s320 = scalar_select %p319, %s18, 1
      %s321 = smul.addr %s320, 32
      %s322 = smul.addr %s321, 8
      %s323 = scalar_lea.vmem %s1, %s322
      %p324 = scmp.lt.s32.totalorder %s18, 1
      %s325 = scalar_select %p324, %s18, 1
      %s326 = smul.addr %s325, 32
      %s327 = smul.addr %s326, 8
      %s328 = scalar_lea.vmem %s2, %s327
      %p329 = scmp.lt.s32.totalorder %s18, 1
      %s330 = scalar_select %p329, %s18, 1
      %s331 = smul.addr %s330, 32
      %s332 = smul.addr %s331, 8
      %s333 = scalar_lea.vmem %s3, %s332
      %p334 = scmp.lt.s32.totalorder %s18, 1
      %s335 = scalar_select %p334, %s18, 1
      %s336 = smul.addr %s335, 32
      %s337 = smul.addr %s336, 8
      %s338 = scalar_lea.vmem %s7, %s337
      %v339 = vld [vmem:[%s318] sm:$0xff]
      %v340 = vld [vmem:[%s318 + $0x8] sm:$0xff]
      %v341 = vld [vmem:[%s318 + $0x10] sm:$0xff]
      %v342 = vld [vmem:[%s318 + $0x18] sm:$0xff]
      %v343 = vld [vmem:[%s318 + $0x20] sm:$0xff]
      %v344 = vld [vmem:[%s318 + $0x28] sm:$0xff]
      %v345 = vld [vmem:[%s318 + $0x30] sm:$0xff]
      %v346 = vld [vmem:[%s318 + $0x38] sm:$0xff]
      %v347 = vld [vmem:[%s318 + $0x40] sm:$0xff]
      %v348 = vld [vmem:[%s318 + $0x48] sm:$0xff]
      %v349 = vld [vmem:[%s318 + $0x50] sm:$0xff]
      %v350 = vld [vmem:[%s318 + $0x58] sm:$0xff]
      %v351 = vld [vmem:[%s318 + $0x60] sm:$0xff]
      %v352 = vld [vmem:[%s318 + $0x68] sm:$0xff]
      %v353 = vld [vmem:[%s318 + $0x70] sm:$0xff]
      %v354 = vld [vmem:[%s318 + $0x78] sm:$0xff]
      %v355 = vld [vmem:[%s318 + $0x80] sm:$0xff]
      %v356 = vld [vmem:[%s318 + $0x88] sm:$0xff]
      %v357 = vld [vmem:[%s318 + $0x90] sm:$0xff]
      %v358 = vld [vmem:[%s318 + $0x98] sm:$0xff]
      %v359 = vld [vmem:[%s318 + $0xa0] sm:$0xff]
      %v360 = vld [vmem:[%s318 + $0xa8] sm:$0xff]
      %v361 = vld [vmem:[%s318 + $0xb0] sm:$0xff]
      %v362 = vld [vmem:[%s318 + $0xb8] sm:$0xff]
      %v363 = vld [vmem:[%s318 + $0xc0] sm:$0xff]
      %v364 = vld [vmem:[%s318 + $0xc8] sm:$0xff]
      %v365 = vld [vmem:[%s318 + $0xd0] sm:$0xff]
      %v366 = vld [vmem:[%s318 + $0xd8] sm:$0xff]
      %v367 = vld [vmem:[%s318 + $0xe0] sm:$0xff]
      %v368 = vld [vmem:[%s318 + $0xe8] sm:$0xff]
      %v369 = vld [vmem:[%s318 + $0xf0] sm:$0xff]
      %v370 = vld [vmem:[%s318 + $0xf8] sm:$0xff]
      %v371 = vld [vmem:[%s323] sm:$0xff]
      %v372 = vld [vmem:[%s323 + $0x8] sm:$0xff]
      %v373 = vld [vmem:[%s323 + $0x10] sm:$0xff]
      %v374 = vld [vmem:[%s323 + $0x18] sm:$0xff]
      %v375 = vld [vmem:[%s323 + $0x20] sm:$0xff]
      %v376 = vld [vmem:[%s323 + $0x28] sm:$0xff]
      %v377 = vld [vmem:[%s323 + $0x30] sm:$0xff]
      %v378 = vld [vmem:[%s323 + $0x38] sm:$0xff]
      %v379 = vld [vmem:[%s323 + $0x40] sm:$0xff]
      %v380 = vld [vmem:[%s323 + $0x48] sm:$0xff]
      %v381 = vld [vmem:[%s323 + $0x50] sm:$0xff]
      %v382 = vld [vmem:[%s323 + $0x58] sm:$0xff]
      %v383 = vld [vmem:[%s323 + $0x60] sm:$0xff]
      %v384 = vld [vmem:[%s323 + $0x68] sm:$0xff]
      %v385 = vld [vmem:[%s323 + $0x70] sm:$0xff]
      %v386 = vld [vmem:[%s323 + $0x78] sm:$0xff]
      %v387 = vld [vmem:[%s323 + $0x80] sm:$0xff]
      %v388 = vld [vmem:[%s323 + $0x88] sm:$0xff]
      %v389 = vld [vmem:[%s323 + $0x90] sm:$0xff]
      %v390 = vld [vmem:[%s323 + $0x98] sm:$0xff]
      %v391 = vld [vmem:[%s323 + $0xa0] sm:$0xff]
      %v392 = vld [vmem:[%s323 + $0xa8] sm:$0xff]
      %v393 = vld [vmem:[%s323 + $0xb0] sm:$0xff]
      %v394 = vld [vmem:[%s323 + $0xb8] sm:$0xff]
      %v395 = vld [vmem:[%s323 + $0xc0] sm:$0xff]
      %v396 = vld [vmem:[%s323 + $0xc8] sm:$0xff]
      %v397 = vld [vmem:[%s323 + $0xd0] sm:$0xff]
      %v398 = vld [vmem:[%s323 + $0xd8] sm:$0xff]
      %v399 = vld [vmem:[%s323 + $0xe0] sm:$0xff]
      %v400 = vld [vmem:[%s323 + $0xe8] sm:$0xff]
      %v401 = vld [vmem:[%s323 + $0xf0] sm:$0xff]
      %v402 = vld [vmem:[%s323 + $0xf8] sm:$0xff]
      %v403 = vadd.f32 %v339, %v371
      %v404 = vadd.f32 %v340, %v372
      %v405 = vadd.f32 %v341, %v373
      %v406 = vadd.f32 %v342, %v374
      %v407 = vadd.f32 %v343, %v375
      %v408 = vadd.f32 %v344, %v376
      %v409 = vadd.f32 %v345, %v377
      %v410 = vadd.f32 %v346, %v378
      %v411 = vadd.f32 %v347, %v379
      %v412 = vadd.f32 %v348, %v380
      %v413 = vadd.f32 %v349, %v381
      %v414 = vadd.f32 %v350, %v382
      %v415 = vadd.f32 %v351, %v383
      %v416 = vadd.f32 %v352, %v384
      %v417 = vadd.f32 %v353, %v385
      %v418 = vadd.f32 %v354, %v386
      %v419 = vadd.f32 %v355, %v387
      %v420 = vadd.f32 %v356, %v388
      %v421 = vadd.f32 %v357, %v389
      %v422 = vadd.f32 %v358, %v390
      %v423 = vadd.f32 %v359, %v391
      %v424 = vadd.f32 %v360, %v392
      %v425 = vadd.f32 %v361, %v393
      %v426 = vadd.f32 %v362, %v394
      %v427 = vadd.f32 %v363, %v395
      %v428 = vadd.f32 %v364, %v396
      %v429 = vadd.f32 %v365, %v397
      %v430 = vadd.f32 %v366, %v398
      %v431 = vadd.f32 %v367, %v399
      %v432 = vadd.f32 %v368, %v400
      %v433 = vadd.f32 %v369, %v401
      %v434 = vadd.f32 %v370, %v402
      %v435 = vld [vmem:[%s328] sm:$0xff]
      %v436 = vld [vmem:[%s328 + $0x8] sm:$0xff]
      %v437 = vld [vmem:[%s328 + $0x10] sm:$0xff]
      %v438 = vld [vmem:[%s328 + $0x18] sm:$0xff]
      %v439 = vld [vmem:[%s328 + $0x20] sm:$0xff]
      %v440 = vld [vmem:[%s328 + $0x28] sm:$0xff]
      %v441 = vld [vmem:[%s328 + $0x30] sm:$0xff]
      %v442 = vld [vmem:[%s328 + $0x38] sm:$0xff]
      %v443 = vld [vmem:[%s328 + $0x40] sm:$0xff]
      %v444 = vld [vmem:[%s328 + $0x48] sm:$0xff]
      %v445 = vld [vmem:[%s328 + $0x50] sm:$0xff]
      %v446 = vld [vmem:[%s328 + $0x58] sm:$0xff]
      %v447 = vld [vmem:[%s328 + $0x60] sm:$0xff]
      %v448 = vld [vmem:[%s328 + $0x68] sm:$0xff]
      %v449 = vld [vmem:[%s328 + $0x70] sm:$0xff]
      %v450 = vld [vmem:[%s328 + $0x78] sm:$0xff]
      %v451 = vld [vmem:[%s328 + $0x80] sm:$0xff]
      %v452 = vld [vmem:[%s328 + $0x88] sm:$0xff]
      %v453 = vld [vmem:[%s328 + $0x90] sm:$0xff]
      %v454 = vld [vmem:[%s328 + $0x98] sm:$0xff]
      %v455 = vld [vmem:[%s328 + $0xa0] sm:$0xff]
      %v456 = vld [vmem:[%s328 + $0xa8] sm:$0xff]
      %v457 = vld [vmem:[%s328 + $0xb0] sm:$0xff]
      %v458 = vld [vmem:[%s328 + $0xb8] sm:$0xff]
      %v459 = vld [vmem:[%s328 + $0xc0] sm:$0xff]
      %v460 = vld [vmem:[%s328 + $0xc8] sm:$0xff]
      %v461 = vld [vmem:[%s328 + $0xd0] sm:$0xff]
      %v462 = vld [vmem:[%s328 + $0xd8] sm:$0xff]
      %v463 = vld [vmem:[%s328 + $0xe0] sm:$0xff]
      %v464 = vld [vmem:[%s328 + $0xe8] sm:$0xff]
      %v465 = vld [vmem:[%s328 + $0xf0] sm:$0xff]
      %v466 = vld [vmem:[%s328 + $0xf8] sm:$0xff]
      %v467 = vadd.f32 %v403, %v435
      %v468 = vadd.f32 %v404, %v436
      %v469 = vadd.f32 %v405, %v437
      %v470 = vadd.f32 %v406, %v438
      %v471 = vadd.f32 %v407, %v439
      %v472 = vadd.f32 %v408, %v440
      %v473 = vadd.f32 %v409, %v441
      %v474 = vadd.f32 %v410, %v442
      %v475 = vadd.f32 %v411, %v443
      %v476 = vadd.f32 %v412, %v444
      %v477 = vadd.f32 %v413, %v445
      %v478 = vadd.f32 %v414, %v446
      %v479 = vadd.f32 %v415, %v447
      %v480 = vadd.f32 %v416, %v448
      %v481 = vadd.f32 %v417, %v449
      %v482 = vadd.f32 %v418, %v450
      %v483 = vadd.f32 %v419, %v451
      %v484 = vadd.f32 %v420, %v452
      %v485 = vadd.f32 %v421, %v453
      %v486 = vadd.f32 %v422, %v454
      %v487 = vadd.f32 %v423, %v455
      %v488 = vadd.f32 %v424, %v456
      %v489 = vadd.f32 %v425, %v457
      %v490 = vadd.f32 %v426, %v458
      %v491 = vadd.f32 %v427, %v459
      %v492 = vadd.f32 %v428, %v460
      %v493 = vadd.f32 %v429, %v461
      %v494 = vadd.f32 %v430, %v462
      %v495 = vadd.f32 %v431, %v463
      %v496 = vadd.f32 %v432, %v464
      %v497 = vadd.f32 %v433, %v465
      %v498 = vadd.f32 %v434, %v466
      %v499 = vld [vmem:[%s333] sm:$0xff]
      %v500 = vld [vmem:[%s333 + $0x8] sm:$0xff]
      %v501 = vld [vmem:[%s333 + $0x10] sm:$0xff]
      %v502 = vld [vmem:[%s333 + $0x18] sm:$0xff]
      %v503 = vld [vmem:[%s333 + $0x20] sm:$0xff]
      %v504 = vld [vmem:[%s333 + $0x28] sm:$0xff]
      %v505 = vld [vmem:[%s333 + $0x30] sm:$0xff]
      %v506 = vld [vmem:[%s333 + $0x38] sm:$0xff]
      %v507 = vld [vmem:[%s333 + $0x40] sm:$0xff]
      %v508 = vld [vmem:[%s333 + $0x48] sm:$0xff]
      %v509 = vld [vmem:[%s333 + $0x50] sm:$0xff]
      %v510 = vld [vmem:[%s333 + $0x58] sm:$0xff]
      %v511 = vld [vmem:[%s333 + $0x60] sm:$0xff]
      %v512 = vld [vmem:[%s333 + $0x68] sm:$0xff]
      %v513 = vld [vmem:[%s333 + $0x70] sm:$0xff]
      %v514 = vld [vmem:[%s333 + $0x78] sm:$0xff]
      %v515 = vld [vmem:[%s333 + $0x80] sm:$0xff]
      %v516 = vld [vmem:[%s333 + $0x88] sm:$0xff]
      %v517 = vld [vmem:[%s333 + $0x90] sm:$0xff]
      %v518 = vld [vmem:[%s333 + $0x98] sm:$0xff]
      %v519 = vld [vmem:[%s333 + $0xa0] sm:$0xff]
      %v520 = vld [vmem:[%s333 + $0xa8] sm:$0xff]
      %v521 = vld [vmem:[%s333 + $0xb0] sm:$0xff]
      %v522 = vld [vmem:[%s333 + $0xb8] sm:$0xff]
      %v523 = vld [vmem:[%s333 + $0xc0] sm:$0xff]
      %v524 = vld [vmem:[%s333 + $0xc8] sm:$0xff]
      %v525 = vld [vmem:[%s333 + $0xd0] sm:$0xff]
      %v526 = vld [vmem:[%s333 + $0xd8] sm:$0xff]
      %v527 = vld [vmem:[%s333 + $0xe0] sm:$0xff]
      %v528 = vld [vmem:[%s333 + $0xe8] sm:$0xff]
      %v529 = vld [vmem:[%s333 + $0xf0] sm:$0xff]
      %v530 = vld [vmem:[%s333 + $0xf8] sm:$0xff]
      %v531 = vadd.f32 %v467, %v499
      %v532 = vadd.f32 %v468, %v500
      %v533 = vadd.f32 %v469, %v501
      %v534 = vadd.f32 %v470, %v502
      %v535 = vadd.f32 %v471, %v503
      %v536 = vadd.f32 %v472, %v504
      %v537 = vadd.f32 %v473, %v505
      %v538 = vadd.f32 %v474, %v506
      %v539 = vadd.f32 %v475, %v507
      %v540 = vadd.f32 %v476, %v508
      %v541 = vadd.f32 %v477, %v509
      %v542 = vadd.f32 %v478, %v510
      %v543 = vadd.f32 %v479, %v511
      %v544 = vadd.f32 %v480, %v512
      %v545 = vadd.f32 %v481, %v513
      %v546 = vadd.f32 %v482, %v514
      %v547 = vadd.f32 %v483, %v515
      %v548 = vadd.f32 %v484, %v516
      %v549 = vadd.f32 %v485, %v517
      %v550 = vadd.f32 %v486, %v518
      %v551 = vadd.f32 %v487, %v519
      %v552 = vadd.f32 %v488, %v520
      %v553 = vadd.f32 %v489, %v521
      %v554 = vadd.f32 %v490, %v522
      %v555 = vadd.f32 %v491, %v523
      %v556 = vadd.f32 %v492, %v524
      %v557 = vadd.f32 %v493, %v525
      %v558 = vadd.f32 %v494, %v526
      %v559 = vadd.f32 %v495, %v527
      %v560 = vadd.f32 %v496, %v528
      %v561 = vadd.f32 %v497, %v529
      %v562 = vadd.f32 %v498, %v530
      %v563 = vld [vmem:[%s4] sm:$0xff]
      %v564 = vld [vmem:[%s4 + $0x8] sm:$0xff]
      %v565 = vld [vmem:[%s4 + $0x10] sm:$0xff]
      %v566 = vld [vmem:[%s4 + $0x18] sm:$0xff]
      %v567 = vld [vmem:[%s4 + $0x20] sm:$0xff]
      %v568 = vld [vmem:[%s4 + $0x28] sm:$0xff]
      %v569 = vld [vmem:[%s4 + $0x30] sm:$0xff]
      %v570 = vld [vmem:[%s4 + $0x38] sm:$0xff]
      %v571 = vld [vmem:[%s4 + $0x40] sm:$0xff]
      %v572 = vld [vmem:[%s4 + $0x48] sm:$0xff]
      %v573 = vld [vmem:[%s4 + $0x50] sm:$0xff]
      %v574 = vld [vmem:[%s4 + $0x58] sm:$0xff]
      %v575 = vld [vmem:[%s4 + $0x60] sm:$0xff]
      %v576 = vld [vmem:[%s4 + $0x68] sm:$0xff]
      %v577 = vld [vmem:[%s4 + $0x70] sm:$0xff]
      %v578 = vld [vmem:[%s4 + $0x78] sm:$0xff]
      %v579 = vld [vmem:[%s4 + $0x80] sm:$0xff]
      %v580 = vld [vmem:[%s4 + $0x88] sm:$0xff]
      %v581 = vld [vmem:[%s4 + $0x90] sm:$0xff]
      %v582 = vld [vmem:[%s4 + $0x98] sm:$0xff]
      %v583 = vld [vmem:[%s4 + $0xa0] sm:$0xff]
      %v584 = vld [vmem:[%s4 + $0xa8] sm:$0xff]
      %v585 = vld [vmem:[%s4 + $0xb0] sm:$0xff]
      %v586 = vld [vmem:[%s4 + $0xb8] sm:$0xff]
      %v587 = vld [vmem:[%s4 + $0xc0] sm:$0xff]
      %v588 = vld [vmem:[%s4 + $0xc8] sm:$0xff]
      %v589 = vld [vmem:[%s4 + $0xd0] sm:$0xff]
      %v590 = vld [vmem:[%s4 + $0xd8] sm:$0xff]
      %v591 = vld [vmem:[%s4 + $0xe0] sm:$0xff]
      %v592 = vld [vmem:[%s4 + $0xe8] sm:$0xff]
      %v593 = vld [vmem:[%s4 + $0xf0] sm:$0xff]
      %v594 = vld [vmem:[%s4 + $0xf8] sm:$0xff]
      %596 = vset.pattern.permute.xlu0 0
      %597 = vperm.xlu0 %596, %v563
      %v598 = vpop.permute.xlu0 %597
      %601 = vset.pattern.permute.xlu0 0
      %602 = vperm.xlu0 %601, %v564
      %v603 = vpop.permute.xlu0 %602
      %606 = vset.pattern.permute.xlu0 0
      %607 = vperm.xlu0 %606, %v565
      %v608 = vpop.permute.xlu0 %607
      %611 = vset.pattern.permute.xlu0 0
      %612 = vperm.xlu0 %611, %v566
      %v613 = vpop.permute.xlu0 %612
      %616 = vset.pattern.permute.xlu0 0
      %617 = vperm.xlu0 %616, %v567
      %v618 = vpop.permute.xlu0 %617
      %621 = vset.pattern.permute.xlu0 0
      %622 = vperm.xlu0 %621, %v568
      %v623 = vpop.permute.xlu0 %622
      %626 = vset.pattern.permute.xlu0 0
      %627 = vperm.xlu0 %626, %v569
      %v628 = vpop.permute.xlu0 %627
      %631 = vset.pattern.permute.xlu0 0
      %632 = vperm.xlu0 %631, %v570
      %v633 = vpop.permute.xlu0 %632
      %636 = vset.pattern.permute.xlu0 0
      %637 = vperm.xlu0 %636, %v571
      %v638 = vpop.permute.xlu0 %637
      %641 = vset.pattern.permute.xlu0 0
      %642 = vperm.xlu0 %641, %v572
      %v643 = vpop.permute.xlu0 %642
      %646 = vset.pattern.permute.xlu0 0
      %647 = vperm.xlu0 %646, %v573
      %v648 = vpop.permute.xlu0 %647
      %651 = vset.pattern.permute.xlu0 0
      %652 = vperm.xlu0 %651, %v574
      %v653 = vpop.permute.xlu0 %652
      %656 = vset.pattern.permute.xlu0 0
      %657 = vperm.xlu0 %656, %v575
      %v658 = vpop.permute.xlu0 %657
      %661 = vset.pattern.permute.xlu0 0
      %662 = vperm.xlu0 %661, %v576
      %v663 = vpop.permute.xlu0 %662
      %666 = vset.pattern.permute.xlu0 0
      %667 = vperm.xlu0 %666, %v577
      %v668 = vpop.permute.xlu0 %667
      %671 = vset.pattern.permute.xlu0 0
      %672 = vperm.xlu0 %671, %v578
      %v673 = vpop.permute.xlu0 %672
      %676 = vset.pattern.permute.xlu0 0
      %677 = vperm.xlu0 %676, %v579
      %v678 = vpop.permute.xlu0 %677
      %681 = vset.pattern.permute.xlu0 0
      %682 = vperm.xlu0 %681, %v580
      %v683 = vpop.permute.xlu0 %682
      %686 = vset.pattern.permute.xlu0 0
      %687 = vperm.xlu0 %686, %v581
      %v688 = vpop.permute.xlu0 %687
      %691 = vset.pattern.permute.xlu0 0
      %692 = vperm.xlu0 %691, %v582
      %v693 = vpop.permute.xlu0 %692
      %696 = vset.pattern.permute.xlu0 0
      %697 = vperm.xlu0 %696, %v583
      %v698 = vpop.permute.xlu0 %697
      %701 = vset.pattern.permute.xlu0 0
      %702 = vperm.xlu0 %701, %v584
      %v703 = vpop.permute.xlu0 %702
      %706 = vset.pattern.permute.xlu0 0
      %707 = vperm.xlu0 %706, %v585
      %v708 = vpop.permute.xlu0 %707
      %711 = vset.pattern.permute.xlu0 0
      %712 = vperm.xlu0 %711, %v586
      %v713 = vpop.permute.xlu0 %712
      %716 = vset.pattern.permute.xlu0 0
      %717 = vperm.xlu0 %716, %v587
      %v718 = vpop.permute.xlu0 %717
      %721 = vset.pattern.permute.xlu0 0
      %722 = vperm.xlu0 %721, %v588
      %v723 = vpop.permute.xlu0 %722
      %726 = vset.pattern.permute.xlu0 0
      %727 = vperm.xlu0 %726, %v589
      %v728 = vpop.permute.xlu0 %727
      %731 = vset.pattern.permute.xlu0 0
      %732 = vperm.xlu0 %731, %v590
      %v733 = vpop.permute.xlu0 %732
      %736 = vset.pattern.permute.xlu0 0
      %737 = vperm.xlu0 %736, %v591
      %v738 = vpop.permute.xlu0 %737
      %741 = vset.pattern.permute.xlu0 0
      %742 = vperm.xlu0 %741, %v592
      %v743 = vpop.permute.xlu0 %742
      %746 = vset.pattern.permute.xlu0 0
      %747 = vperm.xlu0 %746, %v593
      %v748 = vpop.permute.xlu0 %747
      %751 = vset.pattern.permute.xlu0 0
      %752 = vperm.xlu0 %751, %v594
      %v753 = vpop.permute.xlu0 %752
      %v755 = vmul.f32 %v531, %v598
      %v756 = vmul.f32 %v532, %v603
      %v757 = vmul.f32 %v533, %v608
      %v758 = vmul.f32 %v534, %v613
      %v759 = vmul.f32 %v535, %v618
      %v760 = vmul.f32 %v536, %v623
      %v761 = vmul.f32 %v537, %v628
      %v762 = vmul.f32 %v538, %v633
      %v763 = vmul.f32 %v539, %v638
      %v764 = vmul.f32 %v540, %v643
      %v765 = vmul.f32 %v541, %v648
      %v766 = vmul.f32 %v542, %v653
      %v767 = vmul.f32 %v543, %v658
      %v768 = vmul.f32 %v544, %v663
      %v769 = vmul.f32 %v545, %v668
      %v770 = vmul.f32 %v546, %v673
      %v771 = vmul.f32 %v547, %v678
      %v772 = vmul.f32 %v548, %v683
      %v773 = vmul.f32 %v549, %v688
      %v774 = vmul.f32 %v550, %v693
      %v775 = vmul.f32 %v551, %v698
      %v776 = vmul.f32 %v552, %v703
      %v777 = vmul.f32 %v553, %v708
      %v778 = vmul.f32 %v554, %v713
      %v779 = vmul.f32 %v555, %v718
      %v780 = vmul.f32 %v556, %v723
      %v781 = vmul.f32 %v557, %v728
      %v782 = vmul.f32 %v558, %v733
      %v783 = vmul.f32 %v559, %v738
      %v784 = vmul.f32 %v560, %v743
      %v785 = vmul.f32 %v561, %v748
      %v786 = vmul.f32 %v562, %v753
      %vm787 = vcmask 23552
      %788 = vst.msk [vmem:[#allocation2] sm:$0xff] %vm787, 0.0
      %789 = vst.msk [vmem:[#allocation2 + $0x8] sm:$0xff] %vm787, 0.0
      %vm790 = vcmask 17408
      %791 = vst.msk [vmem:[#allocation2 + $0x10] sm:$0x3] %vm790, 0.0
      %792 = vst.msk [vmem:[#allocation2 + $0x18] sm:$0xff] %vm787, 0.0
      %793 = vst.msk [vmem:[#allocation2 + $0x20] sm:$0xff] %vm787, 0.0
      %794 = vst.msk [vmem:[#allocation2 + $0x28] sm:$0x3] %vm790, 0.0
      %795 = vst.msk [vmem:[#allocation2 + $0x30] sm:$0xff] %vm787, 0.0
      %796 = vst.msk [vmem:[#allocation2 + $0x38] sm:$0xff] %vm787, 0.0
      %797 = vst.msk [vmem:[#allocation2 + $0x40] sm:$0x3] %vm790, 0.0
      %798 = vst.msk [vmem:[#allocation2 + $0x48] sm:$0xff] %vm787, 0.0
      %799 = vst.msk [vmem:[#allocation2 + $0x50] sm:$0xff] %vm787, 0.0
      %800 = vst.msk [vmem:[#allocation2 + $0x58] sm:$0x3] %vm790, 0.0
      %801 = vst.msk [vmem:[#allocation2 + $0x60] sm:$0xff] %vm787, 0.0
      %802 = vst.msk [vmem:[#allocation2 + $0x68] sm:$0xff] %vm787, 0.0
      %803 = vst.msk [vmem:[#allocation2 + $0x70] sm:$0x3] %vm790, 0.0
      %804 = vst.msk [vmem:[#allocation2 + $0x78] sm:$0xff] %vm787, 0.0
      %805 = vst.msk [vmem:[#allocation2 + $0x80] sm:$0xff] %vm787, 0.0
      %806 = vst.msk [vmem:[#allocation2 + $0x88] sm:$0x3] %vm790, 0.0
      %807 = vst.msk [vmem:[#allocation2 + $0x90] sm:$0xff] %vm787, 0.0
      %808 = vst.msk [vmem:[#allocation2 + $0x98] sm:$0xff] %vm787, 0.0
      %809 = vst.msk [vmem:[#allocation2 + $0xa0] sm:$0x3] %vm790, 0.0
      %810 = vst.msk [vmem:[#allocation2 + $0xa8] sm:$0xff] %vm787, 0.0
      %811 = vst.msk [vmem:[#allocation2 + $0xb0] sm:$0xff] %vm787, 0.0
      %812 = vst.msk [vmem:[#allocation2 + $0xb8] sm:$0x3] %vm790, 0.0
      %813 = vst.msk [vmem:[#allocation2 + $0xc0] sm:$0xff] %vm787, 0.0
      %814 = vst.msk [vmem:[#allocation2 + $0xc8] sm:$0xff] %vm787, 0.0
      %815 = vst.msk [vmem:[#allocation2 + $0xd0] sm:$0x3] %vm790, 0.0
      %816 = vst.msk [vmem:[#allocation2 + $0xd8] sm:$0xff] %vm787, 0.0
      %817 = vst.msk [vmem:[#allocation2 + $0xe0] sm:$0xff] %vm787, 0.0
      %818 = vst.msk [vmem:[#allocation2 + $0xe8] sm:$0x3] %vm790, 0.0
      %819 = vst.msk [vmem:[#allocation2 + $0xf0] sm:$0xff] %vm787, 0.0
      %820 = vst.msk [vmem:[#allocation2 + $0xf8] sm:$0xff] %vm787, 0.0
      %821 = vst.msk [vmem:[#allocation2 + $0x100] sm:$0x3] %vm790, 0.0
      %822 = vst.msk [vmem:[#allocation2 + $0x108] sm:$0xff] %vm787, 0.0
      %823 = vst.msk [vmem:[#allocation2 + $0x110] sm:$0xff] %vm787, 0.0
      %824 = vst.msk [vmem:[#allocation2 + $0x118] sm:$0x3] %vm790, 0.0
      %825 = vst.msk [vmem:[#allocation2 + $0x120] sm:$0xff] %vm787, 0.0
      %826 = vst.msk [vmem:[#allocation2 + $0x128] sm:$0xff] %vm787, 0.0
      %827 = vst.msk [vmem:[#allocation2 + $0x130] sm:$0x3] %vm790, 0.0
      %828 = vst.msk [vmem:[#allocation2 + $0x138] sm:$0xff] %vm787, 0.0
      %829 = vst.msk [vmem:[#allocation2 + $0x140] sm:$0xff] %vm787, 0.0
      %830 = vst.msk [vmem:[#allocation2 + $0x148] sm:$0x3] %vm790, 0.0
      %831 = vst.msk [vmem:[#allocation2 + $0x150] sm:$0xff] %vm787, 0.0
      %832 = vst.msk [vmem:[#allocation2 + $0x158] sm:$0xff] %vm787, 0.0
      %833 = vst.msk [vmem:[#allocation2 + $0x160] sm:$0x3] %vm790, 0.0
      %834 = vst.msk [vmem:[#allocation2 + $0x168] sm:$0xff] %vm787, 0.0
      %835 = vst.msk [vmem:[#allocation2 + $0x170] sm:$0xff] %vm787, 0.0
      %836 = vst.msk [vmem:[#allocation2 + $0x178] sm:$0x3] %vm790, 0.0
      %837 = vst.msk [vmem:[#allocation2 + $0x180] sm:$0xff] %vm787, 0.0
      %838 = vst.msk [vmem:[#allocation2 + $0x188] sm:$0xff] %vm787, 0.0
      %839 = vst.msk [vmem:[#allocation2 + $0x190] sm:$0x3] %vm790, 0.0
      %840 = vst.msk [vmem:[#allocation2 + $0x198] sm:$0xff] %vm787, 0.0
      %841 = vst.msk [vmem:[#allocation2 + $0x1a0] sm:$0xff] %vm787, 0.0
      %842 = vst.msk [vmem:[#allocation2 + $0x1a8] sm:$0x3] %vm790, 0.0
      %s843 = scalar_lea.vmem [#allocation2], 24
      %844 = vst.msk [vmem:[%s843 + $0x1] sm:$0xff] %vm787, %v755
      %845 = vst.msk [vmem:[%s843 + $0x9] sm:$0xff] %vm787, %v756
      %846 = vst.msk [vmem:[%s843 + $0x19] sm:$0xff] %vm787, %v757
      %847 = vst.msk [vmem:[%s843 + $0x21] sm:$0xff] %vm787, %v758
      %848 = vst.msk [vmem:[%s843 + $0x31] sm:$0xff] %vm787, %v759
      %849 = vst.msk [vmem:[%s843 + $0x39] sm:$0xff] %vm787, %v760
      %850 = vst.msk [vmem:[%s843 + $0x49] sm:$0xff] %vm787, %v761
      %851 = vst.msk [vmem:[%s843 + $0x51] sm:$0xff] %vm787, %v762
      %852 = vst.msk [vmem:[%s843 + $0x61] sm:$0xff] %vm787, %v763
      %853 = vst.msk [vmem:[%s843 + $0x69] sm:$0xff] %vm787, %v764
      %854 = vst.msk [vmem:[%s843 + $0x79] sm:$0xff] %vm787, %v765
      %855 = vst.msk [vmem:[%s843 + $0x81] sm:$0xff] %vm787, %v766
      %856 = vst.msk [vmem:[%s843 + $0x91] sm:$0xff] %vm787, %v767
      %857 = vst.msk [vmem:[%s843 + $0x99] sm:$0xff] %vm787, %v768
      %858 = vst.msk [vmem:[%s843 + $0xa9] sm:$0xff] %vm787, %v769
      %859 = vst.msk [vmem:[%s843 + $0xb1] sm:$0xff] %vm787, %v770
      %860 = vst.msk [vmem:[%s843 + $0xc1] sm:$0xff] %vm787, %v771
      %861 = vst.msk [vmem:[%s843 + $0xc9] sm:$0xff] %vm787, %v772
      %862 = vst.msk [vmem:[%s843 + $0xd9] sm:$0xff] %vm787, %v773
      %863 = vst.msk [vmem:[%s843 + $0xe1] sm:$0xff] %vm787, %v774
      %864 = vst.msk [vmem:[%s843 + $0xf1] sm:$0xff] %vm787, %v775
      %865 = vst.msk [vmem:[%s843 + $0xf9] sm:$0xff] %vm787, %v776
      %866 = vst.msk [vmem:[%s843 + $0x109] sm:$0xff] %vm787, %v777
      %867 = vst.msk [vmem:[%s843 + $0x111] sm:$0xff] %vm787, %v778
      %868 = vst.msk [vmem:[%s843 + $0x121] sm:$0xff] %vm787, %v779
      %869 = vst.msk [vmem:[%s843 + $0x129] sm:$0xff] %vm787, %v780
      %870 = vst.msk [vmem:[%s843 + $0x139] sm:$0xff] %vm787, %v781
      %871 = vst.msk [vmem:[%s843 + $0x141] sm:$0xff] %vm787, %v782
      %872 = vst.msk [vmem:[%s843 + $0x151] sm:$0xff] %vm787, %v783
      %873 = vst.msk [vmem:[%s843 + $0x159] sm:$0xff] %vm787, %v784
      %874 = vst.msk [vmem:[%s843 + $0x169] sm:$0xff] %vm787, %v785
      %875 = vst.msk [vmem:[%s843 + $0x171] sm:$0xff] %vm787, %v786
      %v876 = vld [vmem:[%s5] sm:$0x7]
      %v877 = vld [vmem:[%s5 + $0x4] sm:$0x7]
      %v878 = vld [vmem:[%s5 + $0x8] sm:$0x7]
      %v879 = vld [vmem:[%s5 + $0xc] sm:$0x7]
      %v880 = vld [vmem:[%s5 + $0x10] sm:$0x7]
      %v881 = vld [vmem:[%s5 + $0x14] sm:$0x7]
      %v882 = vld [vmem:[%s5 + $0x18] sm:$0x7]
      %v883 = vld [vmem:[%s5 + $0x1c] sm:$0x7]
      %v884 = vld [vmem:[%s5 + $0x20] sm:$0x7]
      %v885 = vld [vmem:[%s6] sm:$0x1]
      %v887 = vlaneseq
      %v888 = vshrl.u32 %v887, 7
      %v889 = vsub.s32 0, %v888
      %v890 = vrot.slane %v885, %v889
      %v892 = vadd.f32 %v890, 0.0
      %v893 = vld [vmem:[#allocation2] sm:$0xff]
      %v894 = vld [vmem:[#allocation2 + $0x8] sm:$0xff]
      %v895 = vld [vmem:[#allocation2 + $0x18] sm:$0xff]
      %v896 = vld [vmem:[#allocation2 + $0x20] sm:$0xff]
      %v897 = vld [vmem:[#allocation2 + $0x30] sm:$0xff]
      %v898 = vld [vmem:[#allocation2 + $0x38] sm:$0xff]
      %v899 = vld [vmem:[#allocation2 + $0x48] sm:$0xff]
      %v900 = vld [vmem:[#allocation2 + $0x50] sm:$0xff]
      %v901 = vld [vmem:[#allocation2 + $0x60] sm:$0xff]
      %v902 = vld [vmem:[#allocation2 + $0x68] sm:$0xff]
      %v903 = vld [vmem:[#allocation2 + $0x78] sm:$0xff]
      %v904 = vld [vmem:[#allocation2 + $0x80] sm:$0xff]
      %v905 = vld [vmem:[#allocation2 + $0x90] sm:$0xff]
      %v906 = vld [vmem:[#allocation2 + $0x98] sm:$0xff]
      %v907 = vld [vmem:[#allocation2 + $0xa8] sm:$0xff]
      %v908 = vld [vmem:[#allocation2 + $0xb0] sm:$0xff]
      %v909 = vld [vmem:[#allocation2 + $0xc0] sm:$0xff]
      %v910 = vld [vmem:[#allocation2 + $0xc8] sm:$0xff]
      %v911 = vld [vmem:[#allocation2 + $0xd8] sm:$0xff]
      %v912 = vld [vmem:[#allocation2 + $0xe0] sm:$0xff]
      %v913 = vld [vmem:[#allocation2 + $0xf0] sm:$0xff]
      %v914 = vld [vmem:[#allocation2 + $0xf8] sm:$0xff]
      %v915 = vld [vmem:[#allocation2 + $0x108] sm:$0xff]
      %v916 = vld [vmem:[#allocation2 + $0x110] sm:$0xff]
      %v917 = vld [vmem:[#allocation2 + $0x120] sm:$0xff]
      %v918 = vld [vmem:[#allocation2 + $0x128] sm:$0xff]
      %v919 = vld [vmem:[#allocation2 + $0x138] sm:$0xff]
      %v920 = vld [vmem:[#allocation2 + $0x140] sm:$0xff]
      %v921 = vld [vmem:[#allocation2 + $0x150] sm:$0xff]
      %v922 = vld [vmem:[#allocation2 + $0x158] sm:$0xff]
      %v923 = vld [vmem:[#allocation2 + $0x168] sm:$0xff]
      %v924 = vld [vmem:[#allocation2 + $0x170] sm:$0xff]
      %v925 = vld [vmem:[#allocation2 + $0x180] sm:$0xff]
      %v926 = vld [vmem:[#allocation2 + $0x188] sm:$0xff]
      %v927 = vld [vmem:[#allocation2 + $0x198] sm:$0xff]
      %v928 = vld [vmem:[#allocation2 + $0x1a0] sm:$0xff]
      %930 = vset.pattern.permute.xlu0 0
      %931 = vperm.xlu0 %930, %v893
      %v932 = vpop.permute.xlu0 %931
      %935 = vset.pattern.permute.xlu0 0
      %936 = vperm.xlu0 %935, %v894
      %v937 = vpop.permute.xlu0 %936
      %940 = vset.pattern.permute.xlu0 0
      %941 = vperm.xlu0 %940, %v895
      %v942 = vpop.permute.xlu0 %941
      %945 = vset.pattern.permute.xlu0 0
      %946 = vperm.xlu0 %945, %v896
      %v947 = vpop.permute.xlu0 %946
      %950 = vset.pattern.permute.xlu0 0
      %951 = vperm.xlu0 %950, %v897
      %v952 = vpop.permute.xlu0 %951
      %955 = vset.pattern.permute.xlu0 0
      %956 = vperm.xlu0 %955, %v898
      %v957 = vpop.permute.xlu0 %956
      %960 = vset.pattern.permute.xlu0 0
      %961 = vperm.xlu0 %960, %v899
      %v962 = vpop.permute.xlu0 %961
      %965 = vset.pattern.permute.xlu0 0
      %966 = vperm.xlu0 %965, %v900
      %v967 = vpop.permute.xlu0 %966
      %970 = vset.pattern.permute.xlu0 0
      %971 = vperm.xlu0 %970, %v901
      %v972 = vpop.permute.xlu0 %971
      %975 = vset.pattern.permute.xlu0 0
      %976 = vperm.xlu0 %975, %v902
      %v977 = vpop.permute.xlu0 %976
      %980 = vset.pattern.permute.xlu0 0
      %981 = vperm.xlu0 %980, %v903
      %v982 = vpop.permute.xlu0 %981
      %985 = vset.pattern.permute.xlu0 0
      %986 = vperm.xlu0 %985, %v904
      %v987 = vpop.permute.xlu0 %986
      %990 = vset.pattern.permute.xlu0 0
      %991 = vperm.xlu0 %990, %v905
      %v992 = vpop.permute.xlu0 %991
      %995 = vset.pattern.permute.xlu0 0
      %996 = vperm.xlu0 %995, %v906
      %v997 = vpop.permute.xlu0 %996
      %1000 = vset.pattern.permute.xlu0 0
      %1001 = vperm.xlu0 %1000, %v907
      %v1002 = vpop.permute.xlu0 %1001
      %1005 = vset.pattern.permute.xlu0 0
      %1006 = vperm.xlu0 %1005, %v908
      %v1007 = vpop.permute.xlu0 %1006
      %1010 = vset.pattern.permute.xlu0 0
      %1011 = vperm.xlu0 %1010, %v909
      %v1012 = vpop.permute.xlu0 %1011
      %1015 = vset.pattern.permute.xlu0 0
      %1016 = vperm.xlu0 %1015, %v910
      %v1017 = vpop.permute.xlu0 %1016
      %1020 = vset.pattern.permute.xlu0 0
      %1021 = vperm.xlu0 %1020, %v911
      %v1022 = vpop.permute.xlu0 %1021
      %1025 = vset.pattern.permute.xlu0 0
      %1026 = vperm.xlu0 %1025, %v912
      %v1027 = vpop.permute.xlu0 %1026
      %1030 = vset.pattern.permute.xlu0 0
      %1031 = vperm.xlu0 %1030, %v913
      %v1032 = vpop.permute.xlu0 %1031
      %1035 = vset.pattern.permute.xlu0 0
      %1036 = vperm.xlu0 %1035, %v914
      %v1037 = vpop.permute.xlu0 %1036
      %1040 = vset.pattern.permute.xlu0 0
      %1041 = vperm.xlu0 %1040, %v915
      %v1042 = vpop.permute.xlu0 %1041
      %1045 = vset.pattern.permute.xlu0 0
      %1046 = vperm.xlu0 %1045, %v916
      %v1047 = vpop.permute.xlu0 %1046
      %1050 = vset.pattern.permute.xlu0 0
      %1051 = vperm.xlu0 %1050, %v917
      %v1052 = vpop.permute.xlu0 %1051
      %1055 = vset.pattern.permute.xlu0 0
      %1056 = vperm.xlu0 %1055, %v918
      %v1057 = vpop.permute.xlu0 %1056
      %1060 = vset.pattern.permute.xlu0 0
      %1061 = vperm.xlu0 %1060, %v919
      %v1062 = vpop.permute.xlu0 %1061
      %1065 = vset.pattern.permute.xlu0 0
      %1066 = vperm.xlu0 %1065, %v920
      %v1067 = vpop.permute.xlu0 %1066
      %1070 = vset.pattern.permute.xlu0 0
      %1071 = vperm.xlu0 %1070, %v921
      %v1072 = vpop.permute.xlu0 %1071
      %1075 = vset.pattern.permute.xlu0 0
      %1076 = vperm.xlu0 %1075, %v922
      %v1077 = vpop.permute.xlu0 %1076
      %1080 = vset.pattern.permute.xlu0 0
      %1081 = vperm.xlu0 %1080, %v923
      %v1082 = vpop.permute.xlu0 %1081
      %1085 = vset.pattern.permute.xlu0 0
      %1086 = vperm.xlu0 %1085, %v924
      %v1087 = vpop.permute.xlu0 %1086
      %v1089 = vlaneseq
      %v1090 = vshrl.u32 %v1089, 7
      %v1091 = vsub.s32 0, %v1090
      %v1092 = vrot.slane %v876, %v1091
      %v1093 = vmul.f32 %v932, %v1092
      %v1094 = vmul.f32 %v937, %v1092
      %v1095 = vmul.f32 %v942, %v1092
      %v1096 = vmul.f32 %v947, %v1092
      %v1097 = vmul.f32 %v952, %v1092
      %v1098 = vmul.f32 %v957, %v1092
      %v1099 = vmul.f32 %v962, %v1092
      %v1100 = vmul.f32 %v967, %v1092
      %v1101 = vmul.f32 %v972, %v1092
      %v1102 = vmul.f32 %v977, %v1092
      %v1103 = vmul.f32 %v982, %v1092
      %v1104 = vmul.f32 %v987, %v1092
      %v1105 = vmul.f32 %v992, %v1092
      %v1106 = vmul.f32 %v997, %v1092
      %v1107 = vmul.f32 %v1002, %v1092
      %v1108 = vmul.f32 %v1007, %v1092
      %v1109 = vmul.f32 %v1012, %v1092
      %v1110 = vmul.f32 %v1017, %v1092
      %v1111 = vmul.f32 %v1022, %v1092
      %v1112 = vmul.f32 %v1027, %v1092
      %v1113 = vmul.f32 %v1032, %v1092
      %v1114 = vmul.f32 %v1037, %v1092
      %v1115 = vmul.f32 %v1042, %v1092
      %v1116 = vmul.f32 %v1047, %v1092
      %v1117 = vmul.f32 %v1052, %v1092
      %v1118 = vmul.f32 %v1057, %v1092
      %v1119 = vmul.f32 %v1062, %v1092
      %v1120 = vmul.f32 %v1067, %v1092
      %v1121 = vmul.f32 %v1072, %v1092
      %v1122 = vmul.f32 %v1077, %v1092
      %v1123 = vmul.f32 %v1082, %v1092
      %v1124 = vmul.f32 %v1087, %v1092
      %v1125 = vadd.f32 %v892, %v1093
      %v1126 = vadd.f32 %v892, %v1094
      %v1127 = vadd.f32 %v892, %v1095
      %v1128 = vadd.f32 %v892, %v1096
      %v1129 = vadd.f32 %v892, %v1097
      %v1130 = vadd.f32 %v892, %v1098
      %v1131 = vadd.f32 %v892, %v1099
      %v1132 = vadd.f32 %v892, %v1100
      %v1133 = vadd.f32 %v892, %v1101
      %v1134 = vadd.f32 %v892, %v1102
      %v1135 = vadd.f32 %v892, %v1103
      %v1136 = vadd.f32 %v892, %v1104
      %v1137 = vadd.f32 %v892, %v1105
      %v1138 = vadd.f32 %v892, %v1106
      %v1139 = vadd.f32 %v892, %v1107
      %v1140 = vadd.f32 %v892, %v1108
      %v1141 = vadd.f32 %v892, %v1109
      %v1142 = vadd.f32 %v892, %v1110
      %v1143 = vadd.f32 %v892, %v1111
      %v1144 = vadd.f32 %v892, %v1112
      %v1145 = vadd.f32 %v892, %v1113
      %v1146 = vadd.f32 %v892, %v1114
      %v1147 = vadd.f32 %v892, %v1115
      %v1148 = vadd.f32 %v892, %v1116
      %v1149 = vadd.f32 %v892, %v1117
      %v1150 = vadd.f32 %v892, %v1118
      %v1151 = vadd.f32 %v892, %v1119
      %v1152 = vadd.f32 %v892, %v1120
      %v1153 = vadd.f32 %v892, %v1121
      %v1154 = vadd.f32 %v892, %v1122
      %v1155 = vadd.f32 %v892, %v1123
      %v1156 = vadd.f32 %v892, %v1124
      %1157 = vset.pattern.permute.xlu0 1
      %1158 = vperm.xlu0 %1157, %v893
      %v1159 = vpop.permute.xlu0 %1158
      %1161 = vset.pattern.permute.xlu0 1
      %1162 = vperm.xlu0 %1161, %v894
      %v1163 = vpop.permute.xlu0 %1162
      %1165 = vset.pattern.permute.xlu0 1
      %1166 = vperm.xlu0 %1165, %v895
      %v1167 = vpop.permute.xlu0 %1166
      %1169 = vset.pattern.permute.xlu0 1
      %1170 = vperm.xlu0 %1169, %v896
      %v1171 = vpop.permute.xlu0 %1170
      %1173 = vset.pattern.permute.xlu0 1
      %1174 = vperm.xlu0 %1173, %v897
      %v1175 = vpop.permute.xlu0 %1174
      %1177 = vset.pattern.permute.xlu0 1
      %1178 = vperm.xlu0 %1177, %v898
      %v1179 = vpop.permute.xlu0 %1178
      %1181 = vset.pattern.permute.xlu0 1
      %1182 = vperm.xlu0 %1181, %v899
      %v1183 = vpop.permute.xlu0 %1182
      %1185 = vset.pattern.permute.xlu0 1
      %1186 = vperm.xlu0 %1185, %v900
      %v1187 = vpop.permute.xlu0 %1186
      %1189 = vset.pattern.permute.xlu0 1
      %1190 = vperm.xlu0 %1189, %v901
      %v1191 = vpop.permute.xlu0 %1190
      %1193 = vset.pattern.permute.xlu0 1
      %1194 = vperm.xlu0 %1193, %v902
      %v1195 = vpop.permute.xlu0 %1194
      %1197 = vset.pattern.permute.xlu0 1
      %1198 = vperm.xlu0 %1197, %v903
      %v1199 = vpop.permute.xlu0 %1198
      %1201 = vset.pattern.permute.xlu0 1
      %1202 = vperm.xlu0 %1201, %v904
      %v1203 = vpop.permute.xlu0 %1202
      %1205 = vset.pattern.permute.xlu0 1
      %1206 = vperm.xlu0 %1205, %v905
      %v1207 = vpop.permute.xlu0 %1206
      %1209 = vset.pattern.permute.xlu0 1
      %1210 = vperm.xlu0 %1209, %v906
      %v1211 = vpop.permute.xlu0 %1210
      %1213 = vset.pattern.permute.xlu0 1
      %1214 = vperm.xlu0 %1213, %v907
      %v1215 = vpop.permute.xlu0 %1214
      %1217 = vset.pattern.permute.xlu0 1
      %1218 = vperm.xlu0 %1217, %v908
      %v1219 = vpop.permute.xlu0 %1218
      %1221 = vset.pattern.permute.xlu0 1
      %1222 = vperm.xlu0 %1221, %v909
      %v1223 = vpop.permute.xlu0 %1222
      %1225 = vset.pattern.permute.xlu0 1
      %1226 = vperm.xlu0 %1225, %v910
      %v1227 = vpop.permute.xlu0 %1226
      %1229 = vset.pattern.permute.xlu0 1
      %1230 = vperm.xlu0 %1229, %v911
      %v1231 = vpop.permute.xlu0 %1230
      %1233 = vset.pattern.permute.xlu0 1
      %1234 = vperm.xlu0 %1233, %v912
      %v1235 = vpop.permute.xlu0 %1234
      %1237 = vset.pattern.permute.xlu0 1
      %1238 = vperm.xlu0 %1237, %v913
      %v1239 = vpop.permute.xlu0 %1238
      %1241 = vset.pattern.permute.xlu0 1
      %1242 = vperm.xlu0 %1241, %v914
      %v1243 = vpop.permute.xlu0 %1242
      %1245 = vset.pattern.permute.xlu0 1
      %1246 = vperm.xlu0 %1245, %v915
      %v1247 = vpop.permute.xlu0 %1246
      %1249 = vset.pattern.permute.xlu0 1
      %1250 = vperm.xlu0 %1249, %v916
      %v1251 = vpop.permute.xlu0 %1250
      %1253 = vset.pattern.permute.xlu0 1
      %1254 = vperm.xlu0 %1253, %v917
      %v1255 = vpop.permute.xlu0 %1254
      %1257 = vset.pattern.permute.xlu0 1
      %1258 = vperm.xlu0 %1257, %v918
      %v1259 = vpop.permute.xlu0 %1258
      %1261 = vset.pattern.permute.xlu0 1
      %1262 = vperm.xlu0 %1261, %v919
      %v1263 = vpop.permute.xlu0 %1262
      %1265 = vset.pattern.permute.xlu0 1
      %1266 = vperm.xlu0 %1265, %v920
      %v1267 = vpop.permute.xlu0 %1266
      %1269 = vset.pattern.permute.xlu0 1
      %1270 = vperm.xlu0 %1269, %v921
      %v1271 = vpop.permute.xlu0 %1270
      %1273 = vset.pattern.permute.xlu0 1
      %1274 = vperm.xlu0 %1273, %v922
      %v1275 = vpop.permute.xlu0 %1274
      %1277 = vset.pattern.permute.xlu0 1
      %1278 = vperm.xlu0 %1277, %v923
      %v1279 = vpop.permute.xlu0 %1278
      %1281 = vset.pattern.permute.xlu0 1
      %1282 = vperm.xlu0 %1281, %v924
      %v1283 = vpop.permute.xlu0 %1282
      %v1285 = vlaneseq
      %v1286 = vshrl.u32 %v1285, 7
      %v1287 = vsub.s32 1, %v1286
      %v1288 = vrot.slane %v876, %v1287
      %v1289 = vmul.f32 %v1159, %v1288
      %v1290 = vmul.f32 %v1163, %v1288
      %v1291 = vmul.f32 %v1167, %v1288
      %v1292 = vmul.f32 %v1171, %v1288
      %v1293 = vmul.f32 %v1175, %v1288
      %v1294 = vmul.f32 %v1179, %v1288
      %v1295 = vmul.f32 %v1183, %v1288
      %v1296 = vmul.f32 %v1187, %v1288
      %v1297 = vmul.f32 %v1191, %v1288
      %v1298 = vmul.f32 %v1195, %v1288
      %v1299 = vmul.f32 %v1199, %v1288
      %v1300 = vmul.f32 %v1203, %v1288
      %v1301 = vmul.f32 %v1207, %v1288
      %v1302 = vmul.f32 %v1211, %v1288
      %v1303 = vmul.f32 %v1215, %v1288
      %v1304 = vmul.f32 %v1219, %v1288
      %v1305 = vmul.f32 %v1223, %v1288
      %v1306 = vmul.f32 %v1227, %v1288
      %v1307 = vmul.f32 %v1231, %v1288
      %v1308 = vmul.f32 %v1235, %v1288
      %v1309 = vmul.f32 %v1239, %v1288
      %v1310 = vmul.f32 %v1243, %v1288
      %v1311 = vmul.f32 %v1247, %v1288
      %v1312 = vmul.f32 %v1251, %v1288
      %v1313 = vmul.f32 %v1255, %v1288
      %v1314 = vmul.f32 %v1259, %v1288
      %v1315 = vmul.f32 %v1263, %v1288
      %v1316 = vmul.f32 %v1267, %v1288
      %v1317 = vmul.f32 %v1271, %v1288
      %v1318 = vmul.f32 %v1275, %v1288
      %v1319 = vmul.f32 %v1279, %v1288
      %v1320 = vmul.f32 %v1283, %v1288
      %v1321 = vadd.f32 %v1125, %v1289
      %v1322 = vadd.f32 %v1126, %v1290
      %v1323 = vadd.f32 %v1127, %v1291
      %v1324 = vadd.f32 %v1128, %v1292
      %v1325 = vadd.f32 %v1129, %v1293
      %v1326 = vadd.f32 %v1130, %v1294
      %v1327 = vadd.f32 %v1131, %v1295
      %v1328 = vadd.f32 %v1132, %v1296
      %v1329 = vadd.f32 %v1133, %v1297
      %v1330 = vadd.f32 %v1134, %v1298
      %v1331 = vadd.f32 %v1135, %v1299
      %v1332 = vadd.f32 %v1136, %v1300
      %v1333 = vadd.f32 %v1137, %v1301
      %v1334 = vadd.f32 %v1138, %v1302
      %v1335 = vadd.f32 %v1139, %v1303
      %v1336 = vadd.f32 %v1140, %v1304
      %v1337 = vadd.f32 %v1141, %v1305
      %v1338 = vadd.f32 %v1142, %v1306
      %v1339 = vadd.f32 %v1143, %v1307
      %v1340 = vadd.f32 %v1144, %v1308
      %v1341 = vadd.f32 %v1145, %v1309
      %v1342 = vadd.f32 %v1146, %v1310
      %v1343 = vadd.f32 %v1147, %v1311
      %v1344 = vadd.f32 %v1148, %v1312
      %v1345 = vadd.f32 %v1149, %v1313
      %v1346 = vadd.f32 %v1150, %v1314
      %v1347 = vadd.f32 %v1151, %v1315
      %v1348 = vadd.f32 %v1152, %v1316
      %v1349 = vadd.f32 %v1153, %v1317
      %v1350 = vadd.f32 %v1154, %v1318
      %v1351 = vadd.f32 %v1155, %v1319
      %v1352 = vadd.f32 %v1156, %v1320
      %1353 = vset.pattern.permute.xlu0 2
      %1354 = vperm.xlu0 %1353, %v893
      %v1355 = vpop.permute.xlu0 %1354
      %1357 = vset.pattern.permute.xlu0 2
      %1358 = vperm.xlu0 %1357, %v894
      %v1359 = vpop.permute.xlu0 %1358
      %1361 = vset.pattern.permute.xlu0 2
      %1362 = vperm.xlu0 %1361, %v895
      %v1363 = vpop.permute.xlu0 %1362
      %1365 = vset.pattern.permute.xlu0 2
      %1366 = vperm.xlu0 %1365, %v896
      %v1367 = vpop.permute.xlu0 %1366
      %1369 = vset.pattern.permute.xlu0 2
      %1370 = vperm.xlu0 %1369, %v897
      %v1371 = vpop.permute.xlu0 %1370
      %1373 = vset.pattern.permute.xlu0 2
      %1374 = vperm.xlu0 %1373, %v898
      %v1375 = vpop.permute.xlu0 %1374
      %1377 = vset.pattern.permute.xlu0 2
      %1378 = vperm.xlu0 %1377, %v899
      %v1379 = vpop.permute.xlu0 %1378
      %1381 = vset.pattern.permute.xlu0 2
      %1382 = vperm.xlu0 %1381, %v900
      %v1383 = vpop.permute.xlu0 %1382
      %1385 = vset.pattern.permute.xlu0 2
      %1386 = vperm.xlu0 %1385, %v901
      %v1387 = vpop.permute.xlu0 %1386
      %1389 = vset.pattern.permute.xlu0 2
      %1390 = vperm.xlu0 %1389, %v902
      %v1391 = vpop.permute.xlu0 %1390
      %1393 = vset.pattern.permute.xlu0 2
      %1394 = vperm.xlu0 %1393, %v903
      %v1395 = vpop.permute.xlu0 %1394
      %1397 = vset.pattern.permute.xlu0 2
      %1398 = vperm.xlu0 %1397, %v904
      %v1399 = vpop.permute.xlu0 %1398
      %1401 = vset.pattern.permute.xlu0 2
      %1402 = vperm.xlu0 %1401, %v905
      %v1403 = vpop.permute.xlu0 %1402
      %1405 = vset.pattern.permute.xlu0 2
      %1406 = vperm.xlu0 %1405, %v906
      %v1407 = vpop.permute.xlu0 %1406
      %1409 = vset.pattern.permute.xlu0 2
      %1410 = vperm.xlu0 %1409, %v907
      %v1411 = vpop.permute.xlu0 %1410
      %1413 = vset.pattern.permute.xlu0 2
      %1414 = vperm.xlu0 %1413, %v908
      %v1415 = vpop.permute.xlu0 %1414
      %1417 = vset.pattern.permute.xlu0 2
      %1418 = vperm.xlu0 %1417, %v909
      %v1419 = vpop.permute.xlu0 %1418
      %1421 = vset.pattern.permute.xlu0 2
      %1422 = vperm.xlu0 %1421, %v910
      %v1423 = vpop.permute.xlu0 %1422
      %1425 = vset.pattern.permute.xlu0 2
      %1426 = vperm.xlu0 %1425, %v911
      %v1427 = vpop.permute.xlu0 %1426
      %1429 = vset.pattern.permute.xlu0 2
      %1430 = vperm.xlu0 %1429, %v912
      %v1431 = vpop.permute.xlu0 %1430
      %1433 = vset.pattern.permute.xlu0 2
      %1434 = vperm.xlu0 %1433, %v913
      %v1435 = vpop.permute.xlu0 %1434
      %1437 = vset.pattern.permute.xlu0 2
      %1438 = vperm.xlu0 %1437, %v914
      %v1439 = vpop.permute.xlu0 %1438
      %1441 = vset.pattern.permute.xlu0 2
      %1442 = vperm.xlu0 %1441, %v915
      %v1443 = vpop.permute.xlu0 %1442
      %1445 = vset.pattern.permute.xlu0 2
      %1446 = vperm.xlu0 %1445, %v916
      %v1447 = vpop.permute.xlu0 %1446
      %1449 = vset.pattern.permute.xlu0 2
      %1450 = vperm.xlu0 %1449, %v917
      %v1451 = vpop.permute.xlu0 %1450
      %1453 = vset.pattern.permute.xlu0 2
      %1454 = vperm.xlu0 %1453, %v918
      %v1455 = vpop.permute.xlu0 %1454
      %1457 = vset.pattern.permute.xlu0 2
      %1458 = vperm.xlu0 %1457, %v919
      %v1459 = vpop.permute.xlu0 %1458
      %1461 = vset.pattern.permute.xlu0 2
      %1462 = vperm.xlu0 %1461, %v920
      %v1463 = vpop.permute.xlu0 %1462
      %1465 = vset.pattern.permute.xlu0 2
      %1466 = vperm.xlu0 %1465, %v921
      %v1467 = vpop.permute.xlu0 %1466
      %1469 = vset.pattern.permute.xlu0 2
      %1470 = vperm.xlu0 %1469, %v922
      %v1471 = vpop.permute.xlu0 %1470
      %1473 = vset.pattern.permute.xlu0 2
      %1474 = vperm.xlu0 %1473, %v923
      %v1475 = vpop.permute.xlu0 %1474
      %1477 = vset.pattern.permute.xlu0 2
      %1478 = vperm.xlu0 %1477, %v924
      %v1479 = vpop.permute.xlu0 %1478
      %v1481 = vlaneseq
      %v1482 = vshrl.u32 %v1481, 7
      %v1483 = vsub.s32 2, %v1482
      %v1484 = vrot.slane %v876, %v1483
      %v1485 = vmul.f32 %v1355, %v1484
      %v1486 = vmul.f32 %v1359, %v1484
      %v1487 = vmul.f32 %v1363, %v1484
      %v1488 = vmul.f32 %v1367, %v1484
      %v1489 = vmul.f32 %v1371, %v1484
      %v1490 = vmul.f32 %v1375, %v1484
      %v1491 = vmul.f32 %v1379, %v1484
      %v1492 = vmul.f32 %v1383, %v1484
      %v1493 = vmul.f32 %v1387, %v1484
      %v1494 = vmul.f32 %v1391, %v1484
      %v1495 = vmul.f32 %v1395, %v1484
      %v1496 = vmul.f32 %v1399, %v1484
      %v1497 = vmul.f32 %v1403, %v1484
      %v1498 = vmul.f32 %v1407, %v1484
      %v1499 = vmul.f32 %v1411, %v1484
      %v1500 = vmul.f32 %v1415, %v1484
      %v1501 = vmul.f32 %v1419, %v1484
      %v1502 = vmul.f32 %v1423, %v1484
      %v1503 = vmul.f32 %v1427, %v1484
      %v1504 = vmul.f32 %v1431, %v1484
      %v1505 = vmul.f32 %v1435, %v1484
      %v1506 = vmul.f32 %v1439, %v1484
      %v1507 = vmul.f32 %v1443, %v1484
      %v1508 = vmul.f32 %v1447, %v1484
      %v1509 = vmul.f32 %v1451, %v1484
      %v1510 = vmul.f32 %v1455, %v1484
      %v1511 = vmul.f32 %v1459, %v1484
      %v1512 = vmul.f32 %v1463, %v1484
      %v1513 = vmul.f32 %v1467, %v1484
      %v1514 = vmul.f32 %v1471, %v1484
      %v1515 = vmul.f32 %v1475, %v1484
      %v1516 = vmul.f32 %v1479, %v1484
      %v1517 = vadd.f32 %v1321, %v1485
      %v1518 = vadd.f32 %v1322, %v1486
      %v1519 = vadd.f32 %v1323, %v1487
      %v1520 = vadd.f32 %v1324, %v1488
      %v1521 = vadd.f32 %v1325, %v1489
      %v1522 = vadd.f32 %v1326, %v1490
      %v1523 = vadd.f32 %v1327, %v1491
      %v1524 = vadd.f32 %v1328, %v1492
      %v1525 = vadd.f32 %v1329, %v1493
      %v1526 = vadd.f32 %v1330, %v1494
      %v1527 = vadd.f32 %v1331, %v1495
      %v1528 = vadd.f32 %v1332, %v1496
      %v1529 = vadd.f32 %v1333, %v1497
      %v1530 = vadd.f32 %v1334, %v1498
      %v1531 = vadd.f32 %v1335, %v1499
      %v1532 = vadd.f32 %v1336, %v1500
      %v1533 = vadd.f32 %v1337, %v1501
      %v1534 = vadd.f32 %v1338, %v1502
      %v1535 = vadd.f32 %v1339, %v1503
      %v1536 = vadd.f32 %v1340, %v1504
      %v1537 = vadd.f32 %v1341, %v1505
      %v1538 = vadd.f32 %v1342, %v1506
      %v1539 = vadd.f32 %v1343, %v1507
      %v1540 = vadd.f32 %v1344, %v1508
      %v1541 = vadd.f32 %v1345, %v1509
      %v1542 = vadd.f32 %v1346, %v1510
      %v1543 = vadd.f32 %v1347, %v1511
      %v1544 = vadd.f32 %v1348, %v1512
      %v1545 = vadd.f32 %v1349, %v1513
      %v1546 = vadd.f32 %v1350, %v1514
      %v1547 = vadd.f32 %v1351, %v1515
      %v1548 = vadd.f32 %v1352, %v1516
      %1550 = vset.pattern.permute.xlu0 0
      %1551 = vperm.xlu0 %1550, %v925
      %v1552 = vpop.permute.xlu0 %1551
      %1555 = vset.pattern.permute.xlu0 0
      %1556 = vperm.xlu0 %1555, %v926
      %v1557 = vpop.permute.xlu0 %1556
      %v1559 = vlaneseq
      %v1560 = vshrl.u32 %v1559, 7
      %v1561 = vsub.s32 0, %v1560
      %v1562 = vrot.slane %v879, %v1561
      %v1563 = vmul.f32 %v942, %v1562
      %v1564 = vmul.f32 %v947, %v1562
      %v1565 = vmul.f32 %v952, %v1562
      %v1566 = vmul.f32 %v957, %v1562
      %v1567 = vmul.f32 %v962, %v1562
      %v1568 = vmul.f32 %v967, %v1562
      %v1569 = vmul.f32 %v972, %v1562
      %v1570 = vmul.f32 %v977, %v1562
      %v1571 = vmul.f32 %v982, %v1562
      %v1572 = vmul.f32 %v987, %v1562
      %v1573 = vmul.f32 %v992, %v1562
      %v1574 = vmul.f32 %v997, %v1562
      %v1575 = vmul.f32 %v1002, %v1562
      %v1576 = vmul.f32 %v1007, %v1562
      %v1577 = vmul.f32 %v1012, %v1562
      %v1578 = vmul.f32 %v1017, %v1562
      %v1579 = vmul.f32 %v1022, %v1562
      %v1580 = vmul.f32 %v1027, %v1562
      %v1581 = vmul.f32 %v1032, %v1562
      %v1582 = vmul.f32 %v1037, %v1562
      %v1583 = vmul.f32 %v1042, %v1562
      %v1584 = vmul.f32 %v1047, %v1562
      %v1585 = vmul.f32 %v1052, %v1562
      %v1586 = vmul.f32 %v1057, %v1562
      %v1587 = vmul.f32 %v1062, %v1562
      %v1588 = vmul.f32 %v1067, %v1562
      %v1589 = vmul.f32 %v1072, %v1562
      %v1590 = vmul.f32 %v1077, %v1562
      %v1591 = vmul.f32 %v1082, %v1562
      %v1592 = vmul.f32 %v1087, %v1562
      %v1593 = vmul.f32 %v1552, %v1562
      %v1594 = vmul.f32 %v1557, %v1562
      %v1595 = vadd.f32 %v1517, %v1563
      %v1596 = vadd.f32 %v1518, %v1564
      %v1597 = vadd.f32 %v1519, %v1565
      %v1598 = vadd.f32 %v1520, %v1566
      %v1599 = vadd.f32 %v1521, %v1567
      %v1600 = vadd.f32 %v1522, %v1568
      %v1601 = vadd.f32 %v1523, %v1569
      %v1602 = vadd.f32 %v1524, %v1570
      %v1603 = vadd.f32 %v1525, %v1571
      %v1604 = vadd.f32 %v1526, %v1572
      %v1605 = vadd.f32 %v1527, %v1573
      %v1606 = vadd.f32 %v1528, %v1574
      %v1607 = vadd.f32 %v1529, %v1575
      %v1608 = vadd.f32 %v1530, %v1576
      %v1609 = vadd.f32 %v1531, %v1577
      %v1610 = vadd.f32 %v1532, %v1578
      %v1611 = vadd.f32 %v1533, %v1579
      %v1612 = vadd.f32 %v1534, %v1580
      %v1613 = vadd.f32 %v1535, %v1581
      %v1614 = vadd.f32 %v1536, %v1582
      %v1615 = vadd.f32 %v1537, %v1583
      %v1616 = vadd.f32 %v1538, %v1584
      %v1617 = vadd.f32 %v1539, %v1585
      %v1618 = vadd.f32 %v1540, %v1586
      %v1619 = vadd.f32 %v1541, %v1587
      %v1620 = vadd.f32 %v1542, %v1588
      %v1621 = vadd.f32 %v1543, %v1589
      %v1622 = vadd.f32 %v1544, %v1590
      %v1623 = vadd.f32 %v1545, %v1591
      %v1624 = vadd.f32 %v1546, %v1592
      %v1625 = vadd.f32 %v1547, %v1593
      %v1626 = vadd.f32 %v1548, %v1594
      %1627 = vset.pattern.permute.xlu0 1
      %1628 = vperm.xlu0 %1627, %v925
      %v1629 = vpop.permute.xlu0 %1628
      %1631 = vset.pattern.permute.xlu0 1
      %1632 = vperm.xlu0 %1631, %v926
      %v1633 = vpop.permute.xlu0 %1632
      %v1635 = vlaneseq
      %v1636 = vshrl.u32 %v1635, 7
      %v1637 = vsub.s32 1, %v1636
      %v1638 = vrot.slane %v879, %v1637
      %v1639 = vmul.f32 %v1167, %v1638
      %v1640 = vmul.f32 %v1171, %v1638
      %v1641 = vmul.f32 %v1175, %v1638
      %v1642 = vmul.f32 %v1179, %v1638
      %v1643 = vmul.f32 %v1183, %v1638
      %v1644 = vmul.f32 %v1187, %v1638
      %v1645 = vmul.f32 %v1191, %v1638
      %v1646 = vmul.f32 %v1195, %v1638
      %v1647 = vmul.f32 %v1199, %v1638
      %v1648 = vmul.f32 %v1203, %v1638
      %v1649 = vmul.f32 %v1207, %v1638
      %v1650 = vmul.f32 %v1211, %v1638
      %v1651 = vmul.f32 %v1215, %v1638
      %v1652 = vmul.f32 %v1219, %v1638
      %v1653 = vmul.f32 %v1223, %v1638
      %v1654 = vmul.f32 %v1227, %v1638
      %v1655 = vmul.f32 %v1231, %v1638
      %v1656 = vmul.f32 %v1235, %v1638
      %v1657 = vmul.f32 %v1239, %v1638
      %v1658 = vmul.f32 %v1243, %v1638
      %v1659 = vmul.f32 %v1247, %v1638
      %v1660 = vmul.f32 %v1251, %v1638
      %v1661 = vmul.f32 %v1255, %v1638
      %v1662 = vmul.f32 %v1259, %v1638
      %v1663 = vmul.f32 %v1263, %v1638
      %v1664 = vmul.f32 %v1267, %v1638
      %v1665 = vmul.f32 %v1271, %v1638
      %v1666 = vmul.f32 %v1275, %v1638
      %v1667 = vmul.f32 %v1279, %v1638
      %v1668 = vmul.f32 %v1283, %v1638
      %v1669 = vmul.f32 %v1629, %v1638
      %v1670 = vmul.f32 %v1633, %v1638
      %v1671 = vadd.f32 %v1595, %v1639
      %v1672 = vadd.f32 %v1596, %v1640
      %v1673 = vadd.f32 %v1597, %v1641
      %v1674 = vadd.f32 %v1598, %v1642
      %v1675 = vadd.f32 %v1599, %v1643
      %v1676 = vadd.f32 %v1600, %v1644
      %v1677 = vadd.f32 %v1601, %v1645
      %v1678 = vadd.f32 %v1602, %v1646
      %v1679 = vadd.f32 %v1603, %v1647
      %v1680 = vadd.f32 %v1604, %v1648
      %v1681 = vadd.f32 %v1605, %v1649
      %v1682 = vadd.f32 %v1606, %v1650
      %v1683 = vadd.f32 %v1607, %v1651
      %v1684 = vadd.f32 %v1608, %v1652
      %v1685 = vadd.f32 %v1609, %v1653
      %v1686 = vadd.f32 %v1610, %v1654
      %v1687 = vadd.f32 %v1611, %v1655
      %v1688 = vadd.f32 %v1612, %v1656
      %v1689 = vadd.f32 %v1613, %v1657
      %v1690 = vadd.f32 %v1614, %v1658
      %v1691 = vadd.f32 %v1615, %v1659
      %v1692 = vadd.f32 %v1616, %v1660
      %v1693 = vadd.f32 %v1617, %v1661
      %v1694 = vadd.f32 %v1618, %v1662
      %v1695 = vadd.f32 %v1619, %v1663
      %v1696 = vadd.f32 %v1620, %v1664
      %v1697 = vadd.f32 %v1621, %v1665
      %v1698 = vadd.f32 %v1622, %v1666
      %v1699 = vadd.f32 %v1623, %v1667
      %v1700 = vadd.f32 %v1624, %v1668
      %v1701 = vadd.f32 %v1625, %v1669
      %v1702 = vadd.f32 %v1626, %v1670
      %1703 = vset.pattern.permute.xlu0 2
      %1704 = vperm.xlu0 %1703, %v925
      %v1705 = vpop.permute.xlu0 %1704
      %1707 = vset.pattern.permute.xlu0 2
      %1708 = vperm.xlu0 %1707, %v926
      %v1709 = vpop.permute.xlu0 %1708
      %v1711 = vlaneseq
      %v1712 = vshrl.u32 %v1711, 7
      %v1713 = vsub.s32 2, %v1712
      %v1714 = vrot.slane %v879, %v1713
      %v1715 = vmul.f32 %v1363, %v1714
      %v1716 = vmul.f32 %v1367, %v1714
      %v1717 = vmul.f32 %v1371, %v1714
      %v1718 = vmul.f32 %v1375, %v1714
      %v1719 = vmul.f32 %v1379, %v1714
      %v1720 = vmul.f32 %v1383, %v1714
      %v1721 = vmul.f32 %v1387, %v1714
      %v1722 = vmul.f32 %v1391, %v1714
      %v1723 = vmul.f32 %v1395, %v1714
      %v1724 = vmul.f32 %v1399, %v1714
      %v1725 = vmul.f32 %v1403, %v1714
      %v1726 = vmul.f32 %v1407, %v1714
      %v1727 = vmul.f32 %v1411, %v1714
      %v1728 = vmul.f32 %v1415, %v1714
      %v1729 = vmul.f32 %v1419, %v1714
      %v1730 = vmul.f32 %v1423, %v1714
      %v1731 = vmul.f32 %v1427, %v1714
      %v1732 = vmul.f32 %v1431, %v1714
      %v1733 = vmul.f32 %v1435, %v1714
      %v1734 = vmul.f32 %v1439, %v1714
      %v1735 = vmul.f32 %v1443, %v1714
      %v1736 = vmul.f32 %v1447, %v1714
      %v1737 = vmul.f32 %v1451, %v1714
      %v1738 = vmul.f32 %v1455, %v1714
      %v1739 = vmul.f32 %v1459, %v1714
      %v1740 = vmul.f32 %v1463, %v1714
      %v1741 = vmul.f32 %v1467, %v1714
      %v1742 = vmul.f32 %v1471, %v1714
      %v1743 = vmul.f32 %v1475, %v1714
      %v1744 = vmul.f32 %v1479, %v1714
      %v1745 = vmul.f32 %v1705, %v1714
      %v1746 = vmul.f32 %v1709, %v1714
      %v1747 = vadd.f32 %v1671, %v1715
      %v1748 = vadd.f32 %v1672, %v1716
      %v1749 = vadd.f32 %v1673, %v1717
      %v1750 = vadd.f32 %v1674, %v1718
      %v1751 = vadd.f32 %v1675, %v1719
      %v1752 = vadd.f32 %v1676, %v1720
      %v1753 = vadd.f32 %v1677, %v1721
      %v1754 = vadd.f32 %v1678, %v1722
      %v1755 = vadd.f32 %v1679, %v1723
      %v1756 = vadd.f32 %v1680, %v1724
      %v1757 = vadd.f32 %v1681, %v1725
      %v1758 = vadd.f32 %v1682, %v1726
      %v1759 = vadd.f32 %v1683, %v1727
      %v1760 = vadd.f32 %v1684, %v1728
      %v1761 = vadd.f32 %v1685, %v1729
      %v1762 = vadd.f32 %v1686, %v1730
      %v1763 = vadd.f32 %v1687, %v1731
      %v1764 = vadd.f32 %v1688, %v1732
      %v1765 = vadd.f32 %v1689, %v1733
      %v1766 = vadd.f32 %v1690, %v1734
      %v1767 = vadd.f32 %v1691, %v1735
      %v1768 = vadd.f32 %v1692, %v1736
      %v1769 = vadd.f32 %v1693, %v1737
      %v1770 = vadd.f32 %v1694, %v1738
      %v1771 = vadd.f32 %v1695, %v1739
      %v1772 = vadd.f32 %v1696, %v1740
      %v1773 = vadd.f32 %v1697, %v1741
      %v1774 = vadd.f32 %v1698, %v1742
      %v1775 = vadd.f32 %v1699, %v1743
      %v1776 = vadd.f32 %v1700, %v1744
      %v1777 = vadd.f32 %v1701, %v1745
      %v1778 = vadd.f32 %v1702, %v1746
      %1780 = vset.pattern.permute.xlu0 0
      %1781 = vperm.xlu0 %1780, %v927
      %v1782 = vpop.permute.xlu0 %1781
      %1785 = vset.pattern.permute.xlu0 0
      %1786 = vperm.xlu0 %1785, %v928
      %v1787 = vpop.permute.xlu0 %1786
      %v1789 = vlaneseq
      %v1790 = vshrl.u32 %v1789, 7
      %v1791 = vsub.s32 0, %v1790
      %v1792 = vrot.slane %v882, %v1791
      %v1793 = vmul.f32 %v952, %v1792
      %v1794 = vmul.f32 %v957, %v1792
      %v1795 = vmul.f32 %v962, %v1792
      %v1796 = vmul.f32 %v967, %v1792
      %v1797 = vmul.f32 %v972, %v1792
      %v1798 = vmul.f32 %v977, %v1792
      %v1799 = vmul.f32 %v982, %v1792
      %v1800 = vmul.f32 %v987, %v1792
      %v1801 = vmul.f32 %v992, %v1792
      %v1802 = vmul.f32 %v997, %v1792
      %v1803 = vmul.f32 %v1002, %v1792
      %v1804 = vmul.f32 %v1007, %v1792
      %v1805 = vmul.f32 %v1012, %v1792
      %v1806 = vmul.f32 %v1017, %v1792
      %v1807 = vmul.f32 %v1022, %v1792
      %v1808 = vmul.f32 %v1027, %v1792
      %v1809 = vmul.f32 %v1032, %v1792
      %v1810 = vmul.f32 %v1037, %v1792
      %v1811 = vmul.f32 %v1042, %v1792
      %v1812 = vmul.f32 %v1047, %v1792
      %v1813 = vmul.f32 %v1052, %v1792
      %v1814 = vmul.f32 %v1057, %v1792
      %v1815 = vmul.f32 %v1062, %v1792
      %v1816 = vmul.f32 %v1067, %v1792
      %v1817 = vmul.f32 %v1072, %v1792
      %v1818 = vmul.f32 %v1077, %v1792
      %v1819 = vmul.f32 %v1082, %v1792
      %v1820 = vmul.f32 %v1087, %v1792
      %v1821 = vmul.f32 %v1552, %v1792
      %v1822 = vmul.f32 %v1557, %v1792
      %v1823 = vmul.f32 %v1782, %v1792
      %v1824 = vmul.f32 %v1787, %v1792
      %v1825 = vadd.f32 %v1747, %v1793
      %v1826 = vadd.f32 %v1748, %v1794
      %v1827 = vadd.f32 %v1749, %v1795
      %v1828 = vadd.f32 %v1750, %v1796
      %v1829 = vadd.f32 %v1751, %v1797
      %v1830 = vadd.f32 %v1752, %v1798
      %v1831 = vadd.f32 %v1753, %v1799
      %v1832 = vadd.f32 %v1754, %v1800
      %v1833 = vadd.f32 %v1755, %v1801
      %v1834 = vadd.f32 %v1756, %v1802
      %v1835 = vadd.f32 %v1757, %v1803
      %v1836 = vadd.f32 %v1758, %v1804
      %v1837 = vadd.f32 %v1759, %v1805
      %v1838 = vadd.f32 %v1760, %v1806
      %v1839 = vadd.f32 %v1761, %v1807
      %v1840 = vadd.f32 %v1762, %v1808
      %v1841 = vadd.f32 %v1763, %v1809
      %v1842 = vadd.f32 %v1764, %v1810
      %v1843 = vadd.f32 %v1765, %v1811
      %v1844 = vadd.f32 %v1766, %v1812
      %v1845 = vadd.f32 %v1767, %v1813
      %v1846 = vadd.f32 %v1768, %v1814
      %v1847 = vadd.f32 %v1769, %v1815
      %v1848 = vadd.f32 %v1770, %v1816
      %v1849 = vadd.f32 %v1771, %v1817
      %v1850 = vadd.f32 %v1772, %v1818
      %v1851 = vadd.f32 %v1773, %v1819
      %v1852 = vadd.f32 %v1774, %v1820
      %v1853 = vadd.f32 %v1775, %v1821
      %v1854 = vadd.f32 %v1776, %v1822
      %v1855 = vadd.f32 %v1777, %v1823
      %v1856 = vadd.f32 %v1778, %v1824
      %1857 = vset.pattern.permute.xlu0 1
      %1858 = vperm.xlu0 %1857, %v927
      %v1859 = vpop.permute.xlu0 %1858
      %1861 = vset.pattern.permute.xlu0 1
      %1862 = vperm.xlu0 %1861, %v928
      %v1863 = vpop.permute.xlu0 %1862
      %v1865 = vlaneseq
      %v1866 = vshrl.u32 %v1865, 7
      %v1867 = vsub.s32 1, %v1866
      %v1868 = vrot.slane %v882, %v1867
      %v1869 = vmul.f32 %v1175, %v1868
      %v1870 = vmul.f32 %v1179, %v1868
      %v1871 = vmul.f32 %v1183, %v1868
      %v1872 = vmul.f32 %v1187, %v1868
      %v1873 = vmul.f32 %v1191, %v1868
      %v1874 = vmul.f32 %v1195, %v1868
      %v1875 = vmul.f32 %v1199, %v1868
      %v1876 = vmul.f32 %v1203, %v1868
      %v1877 = vmul.f32 %v1207, %v1868
      %v1878 = vmul.f32 %v1211, %v1868
      %v1879 = vmul.f32 %v1215, %v1868
      %v1880 = vmul.f32 %v1219, %v1868
      %v1881 = vmul.f32 %v1223, %v1868
      %v1882 = vmul.f32 %v1227, %v1868
      %v1883 = vmul.f32 %v1231, %v1868
      %v1884 = vmul.f32 %v1235, %v1868
      %v1885 = vmul.f32 %v1239, %v1868
      %v1886 = vmul.f32 %v1243, %v1868
      %v1887 = vmul.f32 %v1247, %v1868
      %v1888 = vmul.f32 %v1251, %v1868
      %v1889 = vmul.f32 %v1255, %v1868
      %v1890 = vmul.f32 %v1259, %v1868
      %v1891 = vmul.f32 %v1263, %v1868
      %v1892 = vmul.f32 %v1267, %v1868
      %v1893 = vmul.f32 %v1271, %v1868
      %v1894 = vmul.f32 %v1275, %v1868
      %v1895 = vmul.f32 %v1279, %v1868
      %v1896 = vmul.f32 %v1283, %v1868
      %v1897 = vmul.f32 %v1629, %v1868
      %v1898 = vmul.f32 %v1633, %v1868
      %v1899 = vmul.f32 %v1859, %v1868
      %v1900 = vmul.f32 %v1863, %v1868
      %v1901 = vadd.f32 %v1825, %v1869
      %v1902 = vadd.f32 %v1826, %v1870
      %v1903 = vadd.f32 %v1827, %v1871
      %v1904 = vadd.f32 %v1828, %v1872
      %v1905 = vadd.f32 %v1829, %v1873
      %v1906 = vadd.f32 %v1830, %v1874
      %v1907 = vadd.f32 %v1831, %v1875
      %v1908 = vadd.f32 %v1832, %v1876
      %v1909 = vadd.f32 %v1833, %v1877
      %v1910 = vadd.f32 %v1834, %v1878
      %v1911 = vadd.f32 %v1835, %v1879
      %v1912 = vadd.f32 %v1836, %v1880
      %v1913 = vadd.f32 %v1837, %v1881
      %v1914 = vadd.f32 %v1838, %v1882
      %v1915 = vadd.f32 %v1839, %v1883
      %v1916 = vadd.f32 %v1840, %v1884
      %v1917 = vadd.f32 %v1841, %v1885
      %v1918 = vadd.f32 %v1842, %v1886
      %v1919 = vadd.f32 %v1843, %v1887
      %v1920 = vadd.f32 %v1844, %v1888
      %v1921 = vadd.f32 %v1845, %v1889
      %v1922 = vadd.f32 %v1846, %v1890
      %v1923 = vadd.f32 %v1847, %v1891
      %v1924 = vadd.f32 %v1848, %v1892
      %v1925 = vadd.f32 %v1849, %v1893
      %v1926 = vadd.f32 %v1850, %v1894
      %v1927 = vadd.f32 %v1851, %v1895
      %v1928 = vadd.f32 %v1852, %v1896
      %v1929 = vadd.f32 %v1853, %v1897
      %v1930 = vadd.f32 %v1854, %v1898
      %v1931 = vadd.f32 %v1855, %v1899
      %v1932 = vadd.f32 %v1856, %v1900
      %1933 = vset.pattern.permute.xlu0 2
      %1934 = vperm.xlu0 %1933, %v927
      %v1935 = vpop.permute.xlu0 %1934
      %1937 = vset.pattern.permute.xlu0 2
      %1938 = vperm.xlu0 %1937, %v928
      %v1939 = vpop.permute.xlu0 %1938
      %v1941 = vlaneseq
      %v1942 = vshrl.u32 %v1941, 7
      %v1943 = vsub.s32 2, %v1942
      %v1944 = vrot.slane %v882, %v1943
      %v1945 = vmul.f32 %v1371, %v1944
      %v1946 = vmul.f32 %v1375, %v1944
      %v1947 = vmul.f32 %v1379, %v1944
      %v1948 = vmul.f32 %v1383, %v1944
      %v1949 = vmul.f32 %v1387, %v1944
      %v1950 = vmul.f32 %v1391, %v1944
      %v1951 = vmul.f32 %v1395, %v1944
      %v1952 = vmul.f32 %v1399, %v1944
      %v1953 = vmul.f32 %v1403, %v1944
      %v1954 = vmul.f32 %v1407, %v1944
      %v1955 = vmul.f32 %v1411, %v1944
      %v1956 = vmul.f32 %v1415, %v1944
      %v1957 = vmul.f32 %v1419, %v1944
      %v1958 = vmul.f32 %v1423, %v1944
      %v1959 = vmul.f32 %v1427, %v1944
      %v1960 = vmul.f32 %v1431, %v1944
      %v1961 = vmul.f32 %v1435, %v1944
      %v1962 = vmul.f32 %v1439, %v1944
      %v1963 = vmul.f32 %v1443, %v1944
      %v1964 = vmul.f32 %v1447, %v1944
      %v1965 = vmul.f32 %v1451, %v1944
      %v1966 = vmul.f32 %v1455, %v1944
      %v1967 = vmul.f32 %v1459, %v1944
      %v1968 = vmul.f32 %v1463, %v1944
      %v1969 = vmul.f32 %v1467, %v1944
      %v1970 = vmul.f32 %v1471, %v1944
      %v1971 = vmul.f32 %v1475, %v1944
      %v1972 = vmul.f32 %v1479, %v1944
      %v1973 = vmul.f32 %v1705, %v1944
      %v1974 = vmul.f32 %v1709, %v1944
      %v1975 = vmul.f32 %v1935, %v1944
      %v1976 = vmul.f32 %v1939, %v1944
      %v1977 = vadd.f32 %v1901, %v1945
      %v1978 = vadd.f32 %v1902, %v1946
      %v1979 = vadd.f32 %v1903, %v1947
      %v1980 = vadd.f32 %v1904, %v1948
      %v1981 = vadd.f32 %v1905, %v1949
      %v1982 = vadd.f32 %v1906, %v1950
      %v1983 = vadd.f32 %v1907, %v1951
      %v1984 = vadd.f32 %v1908, %v1952
      %v1985 = vadd.f32 %v1909, %v1953
      %v1986 = vadd.f32 %v1910, %v1954
      %v1987 = vadd.f32 %v1911, %v1955
      %v1988 = vadd.f32 %v1912, %v1956
      %v1989 = vadd.f32 %v1913, %v1957
      %v1990 = vadd.f32 %v1914, %v1958
      %v1991 = vadd.f32 %v1915, %v1959
      %v1992 = vadd.f32 %v1916, %v1960
      %v1993 = vadd.f32 %v1917, %v1961
      %v1994 = vadd.f32 %v1918, %v1962
      %v1995 = vadd.f32 %v1919, %v1963
      %v1996 = vadd.f32 %v1920, %v1964
      %v1997 = vadd.f32 %v1921, %v1965
      %v1998 = vadd.f32 %v1922, %v1966
      %v1999 = vadd.f32 %v1923, %v1967
      %v2000 = vadd.f32 %v1924, %v1968
      %v2001 = vadd.f32 %v1925, %v1969
      %v2002 = vadd.f32 %v1926, %v1970
      %v2003 = vadd.f32 %v1927, %v1971
      %v2004 = vadd.f32 %v1928, %v1972
      %v2005 = vadd.f32 %v1929, %v1973
      %v2006 = vadd.f32 %v1930, %v1974
      %v2007 = vadd.f32 %v1931, %v1975
      %v2008 = vadd.f32 %v1932, %v1976
      %v2009 = vld [vmem:[#allocation2 + $0x1] sm:$0xff]
      %v2010 = vld [vmem:[#allocation2 + $0x9] sm:$0xff]
      %v2011 = vld [vmem:[#allocation2 + $0x19] sm:$0xff]
      %v2012 = vld [vmem:[#allocation2 + $0x21] sm:$0xff]
      %v2013 = vld [vmem:[#allocation2 + $0x31] sm:$0xff]
      %v2014 = vld [vmem:[#allocation2 + $0x39] sm:$0xff]
      %v2015 = vld [vmem:[#allocation2 + $0x49] sm:$0xff]
      %v2016 = vld [vmem:[#allocation2 + $0x51] sm:$0xff]
      %v2017 = vld [vmem:[#allocation2 + $0x61] sm:$0xff]
      %v2018 = vld [vmem:[#allocation2 + $0x69] sm:$0xff]
      %v2019 = vld [vmem:[#allocation2 + $0x79] sm:$0xff]
      %v2020 = vld [vmem:[#allocation2 + $0x81] sm:$0xff]
      %v2021 = vld [vmem:[#allocation2 + $0x91] sm:$0xff]
      %v2022 = vld [vmem:[#allocation2 + $0x99] sm:$0xff]
      %v2023 = vld [vmem:[#allocation2 + $0xa9] sm:$0xff]
      %v2024 = vld [vmem:[#allocation2 + $0xb1] sm:$0xff]
      %v2025 = vld [vmem:[#allocation2 + $0xc1] sm:$0xff]
      %v2026 = vld [vmem:[#allocation2 + $0xc9] sm:$0xff]
      %v2027 = vld [vmem:[#allocation2 + $0xd9] sm:$0xff]
      %v2028 = vld [vmem:[#allocation2 + $0xe1] sm:$0xff]
      %v2029 = vld [vmem:[#allocation2 + $0xf1] sm:$0xff]
      %v2030 = vld [vmem:[#allocation2 + $0xf9] sm:$0xff]
      %v2031 = vld [vmem:[#allocation2 + $0x109] sm:$0xff]
      %v2032 = vld [vmem:[#allocation2 + $0x111] sm:$0xff]
      %v2033 = vld [vmem:[#allocation2 + $0x121] sm:$0xff]
      %v2034 = vld [vmem:[#allocation2 + $0x129] sm:$0xff]
      %v2035 = vld [vmem:[#allocation2 + $0x139] sm:$0xff]
      %v2036 = vld [vmem:[#allocation2 + $0x141] sm:$0xff]
      %v2037 = vld [vmem:[#allocation2 + $0x151] sm:$0xff]
      %v2038 = vld [vmem:[#allocation2 + $0x159] sm:$0xff]
      %v2039 = vld [vmem:[#allocation2 + $0x169] sm:$0xff]
      %v2040 = vld [vmem:[#allocation2 + $0x171] sm:$0xff]
      %v2041 = vld [vmem:[#allocation2 + $0x181] sm:$0xff]
      %v2042 = vld [vmem:[#allocation2 + $0x189] sm:$0xff]
      %v2043 = vld [vmem:[#allocation2 + $0x199] sm:$0xff]
      %v2044 = vld [vmem:[#allocation2 + $0x1a1] sm:$0xff]
      %2046 = vset.pattern.permute.xlu0 0
      %2047 = vperm.xlu0 %2046, %v2009
      %v2048 = vpop.permute.xlu0 %2047
      %2051 = vset.pattern.permute.xlu0 0
      %2052 = vperm.xlu0 %2051, %v2010
      %v2053 = vpop.permute.xlu0 %2052
      %2056 = vset.pattern.permute.xlu0 0
      %2057 = vperm.xlu0 %2056, %v2011
      %v2058 = vpop.permute.xlu0 %2057
      %2061 = vset.pattern.permute.xlu0 0
      %2062 = vperm.xlu0 %2061, %v2012
      %v2063 = vpop.permute.xlu0 %2062
      %2066 = vset.pattern.permute.xlu0 0
      %2067 = vperm.xlu0 %2066, %v2013
      %v2068 = vpop.permute.xlu0 %2067
      %2071 = vset.pattern.permute.xlu0 0
      %2072 = vperm.xlu0 %2071, %v2014
      %v2073 = vpop.permute.xlu0 %2072
      %2076 = vset.pattern.permute.xlu0 0
      %2077 = vperm.xlu0 %2076, %v2015
      %v2078 = vpop.permute.xlu0 %2077
      %2081 = vset.pattern.permute.xlu0 0
      %2082 = vperm.xlu0 %2081, %v2016
      %v2083 = vpop.permute.xlu0 %2082
      %2086 = vset.pattern.permute.xlu0 0
      %2087 = vperm.xlu0 %2086, %v2017
      %v2088 = vpop.permute.xlu0 %2087
      %2091 = vset.pattern.permute.xlu0 0
      %2092 = vperm.xlu0 %2091, %v2018
      %v2093 = vpop.permute.xlu0 %2092
      %2096 = vset.pattern.permute.xlu0 0
      %2097 = vperm.xlu0 %2096, %v2019
      %v2098 = vpop.permute.xlu0 %2097
      %2101 = vset.pattern.permute.xlu0 0
      %2102 = vperm.xlu0 %2101, %v2020
      %v2103 = vpop.permute.xlu0 %2102
      %2106 = vset.pattern.permute.xlu0 0
      %2107 = vperm.xlu0 %2106, %v2021
      %v2108 = vpop.permute.xlu0 %2107
      %2111 = vset.pattern.permute.xlu0 0
      %2112 = vperm.xlu0 %2111, %v2022
      %v2113 = vpop.permute.xlu0 %2112
      %2116 = vset.pattern.permute.xlu0 0
      %2117 = vperm.xlu0 %2116, %v2023
      %v2118 = vpop.permute.xlu0 %2117
      %2121 = vset.pattern.permute.xlu0 0
      %2122 = vperm.xlu0 %2121, %v2024
      %v2123 = vpop.permute.xlu0 %2122
      %2126 = vset.pattern.permute.xlu0 0
      %2127 = vperm.xlu0 %2126, %v2025
      %v2128 = vpop.permute.xlu0 %2127
      %2131 = vset.pattern.permute.xlu0 0
      %2132 = vperm.xlu0 %2131, %v2026
      %v2133 = vpop.permute.xlu0 %2132
      %2136 = vset.pattern.permute.xlu0 0
      %2137 = vperm.xlu0 %2136, %v2027
      %v2138 = vpop.permute.xlu0 %2137
      %2141 = vset.pattern.permute.xlu0 0
      %2142 = vperm.xlu0 %2141, %v2028
      %v2143 = vpop.permute.xlu0 %2142
      %2146 = vset.pattern.permute.xlu0 0
      %2147 = vperm.xlu0 %2146, %v2029
      %v2148 = vpop.permute.xlu0 %2147
      %2151 = vset.pattern.permute.xlu0 0
      %2152 = vperm.xlu0 %2151, %v2030
      %v2153 = vpop.permute.xlu0 %2152
      %2156 = vset.pattern.permute.xlu0 0
      %2157 = vperm.xlu0 %2156, %v2031
      %v2158 = vpop.permute.xlu0 %2157
      %2161 = vset.pattern.permute.xlu0 0
      %2162 = vperm.xlu0 %2161, %v2032
      %v2163 = vpop.permute.xlu0 %2162
      %2166 = vset.pattern.permute.xlu0 0
      %2167 = vperm.xlu0 %2166, %v2033
      %v2168 = vpop.permute.xlu0 %2167
      %2171 = vset.pattern.permute.xlu0 0
      %2172 = vperm.xlu0 %2171, %v2034
      %v2173 = vpop.permute.xlu0 %2172
      %2176 = vset.pattern.permute.xlu0 0
      %2177 = vperm.xlu0 %2176, %v2035
      %v2178 = vpop.permute.xlu0 %2177
      %2181 = vset.pattern.permute.xlu0 0
      %2182 = vperm.xlu0 %2181, %v2036
      %v2183 = vpop.permute.xlu0 %2182
      %2186 = vset.pattern.permute.xlu0 0
      %2187 = vperm.xlu0 %2186, %v2037
      %v2188 = vpop.permute.xlu0 %2187
      %2191 = vset.pattern.permute.xlu0 0
      %2192 = vperm.xlu0 %2191, %v2038
      %v2193 = vpop.permute.xlu0 %2192
      %2196 = vset.pattern.permute.xlu0 0
      %2197 = vperm.xlu0 %2196, %v2039
      %v2198 = vpop.permute.xlu0 %2197
      %2201 = vset.pattern.permute.xlu0 0
      %2202 = vperm.xlu0 %2201, %v2040
      %v2203 = vpop.permute.xlu0 %2202
      %v2205 = vlaneseq
      %v2206 = vshrl.u32 %v2205, 7
      %v2207 = vsub.s32 0, %v2206
      %v2208 = vrot.slane %v877, %v2207
      %v2209 = vmul.f32 %v2048, %v2208
      %v2210 = vmul.f32 %v2053, %v2208
      %v2211 = vmul.f32 %v2058, %v2208
      %v2212 = vmul.f32 %v2063, %v2208
      %v2213 = vmul.f32 %v2068, %v2208
      %v2214 = vmul.f32 %v2073, %v2208
      %v2215 = vmul.f32 %v2078, %v2208
      %v2216 = vmul.f32 %v2083, %v2208
      %v2217 = vmul.f32 %v2088, %v2208
      %v2218 = vmul.f32 %v2093, %v2208
      %v2219 = vmul.f32 %v2098, %v2208
      %v2220 = vmul.f32 %v2103, %v2208
      %v2221 = vmul.f32 %v2108, %v2208
      %v2222 = vmul.f32 %v2113, %v2208
      %v2223 = vmul.f32 %v2118, %v2208
      %v2224 = vmul.f32 %v2123, %v2208
      %v2225 = vmul.f32 %v2128, %v2208
      %v2226 = vmul.f32 %v2133, %v2208
      %v2227 = vmul.f32 %v2138, %v2208
      %v2228 = vmul.f32 %v2143, %v2208
      %v2229 = vmul.f32 %v2148, %v2208
      %v2230 = vmul.f32 %v2153, %v2208
      %v2231 = vmul.f32 %v2158, %v2208
      %v2232 = vmul.f32 %v2163, %v2208
      %v2233 = vmul.f32 %v2168, %v2208
      %v2234 = vmul.f32 %v2173, %v2208
      %v2235 = vmul.f32 %v2178, %v2208
      %v2236 = vmul.f32 %v2183, %v2208
      %v2237 = vmul.f32 %v2188, %v2208
      %v2238 = vmul.f32 %v2193, %v2208
      %v2239 = vmul.f32 %v2198, %v2208
      %v2240 = vmul.f32 %v2203, %v2208
      %v2241 = vadd.f32 %v1977, %v2209
      %v2242 = vadd.f32 %v1978, %v2210
      %v2243 = vadd.f32 %v1979, %v2211
      %v2244 = vadd.f32 %v1980, %v2212
      %v2245 = vadd.f32 %v1981, %v2213
      %v2246 = vadd.f32 %v1982, %v2214
      %v2247 = vadd.f32 %v1983, %v2215
      %v2248 = vadd.f32 %v1984, %v2216
      %v2249 = vadd.f32 %v1985, %v2217
      %v2250 = vadd.f32 %v1986, %v2218
      %v2251 = vadd.f32 %v1987, %v2219
      %v2252 = vadd.f32 %v1988, %v2220
      %v2253 = vadd.f32 %v1989, %v2221
      %v2254 = vadd.f32 %v1990, %v2222
      %v2255 = vadd.f32 %v1991, %v2223
      %v2256 = vadd.f32 %v1992, %v2224
      %v2257 = vadd.f32 %v1993, %v2225
      %v2258 = vadd.f32 %v1994, %v2226
      %v2259 = vadd.f32 %v1995, %v2227
      %v2260 = vadd.f32 %v1996, %v2228
      %v2261 = vadd.f32 %v1997, %v2229
      %v2262 = vadd.f32 %v1998, %v2230
      %v2263 = vadd.f32 %v1999, %v2231
      %v2264 = vadd.f32 %v2000, %v2232
      %v2265 = vadd.f32 %v2001, %v2233
      %v2266 = vadd.f32 %v2002, %v2234
      %v2267 = vadd.f32 %v2003, %v2235
      %v2268 = vadd.f32 %v2004, %v2236
      %v2269 = vadd.f32 %v2005, %v2237
      %v2270 = vadd.f32 %v2006, %v2238
      %v2271 = vadd.f32 %v2007, %v2239
      %v2272 = vadd.f32 %v2008, %v2240
      %2273 = vset.pattern.permute.xlu0 1
      %2274 = vperm.xlu0 %2273, %v2009
      %v2275 = vpop.permute.xlu0 %2274
      %2277 = vset.pattern.permute.xlu0 1
      %2278 = vperm.xlu0 %2277, %v2010
      %v2279 = vpop.permute.xlu0 %2278
      %2281 = vset.pattern.permute.xlu0 1
      %2282 = vperm.xlu0 %2281, %v2011
      %v2283 = vpop.permute.xlu0 %2282
      %2285 = vset.pattern.permute.xlu0 1
      %2286 = vperm.xlu0 %2285, %v2012
      %v2287 = vpop.permute.xlu0 %2286
      %2289 = vset.pattern.permute.xlu0 1
      %2290 = vperm.xlu0 %2289, %v2013
      %v2291 = vpop.permute.xlu0 %2290
      %2293 = vset.pattern.permute.xlu0 1
      %2294 = vperm.xlu0 %2293, %v2014
      %v2295 = vpop.permute.xlu0 %2294
      %2297 = vset.pattern.permute.xlu0 1
      %2298 = vperm.xlu0 %2297, %v2015
      %v2299 = vpop.permute.xlu0 %2298
      %2301 = vset.pattern.permute.xlu0 1
      %2302 = vperm.xlu0 %2301, %v2016
      %v2303 = vpop.permute.xlu0 %2302
      %2305 = vset.pattern.permute.xlu0 1
      %2306 = vperm.xlu0 %2305, %v2017
      %v2307 = vpop.permute.xlu0 %2306
      %2309 = vset.pattern.permute.xlu0 1
      %2310 = vperm.xlu0 %2309, %v2018
      %v2311 = vpop.permute.xlu0 %2310
      %2313 = vset.pattern.permute.xlu0 1
      %2314 = vperm.xlu0 %2313, %v2019
      %v2315 = vpop.permute.xlu0 %2314
      %2317 = vset.pattern.permute.xlu0 1
      %2318 = vperm.xlu0 %2317, %v2020
      %v2319 = vpop.permute.xlu0 %2318
      %2321 = vset.pattern.permute.xlu0 1
      %2322 = vperm.xlu0 %2321, %v2021
      %v2323 = vpop.permute.xlu0 %2322
      %2325 = vset.pattern.permute.xlu0 1
      %2326 = vperm.xlu0 %2325, %v2022
      %v2327 = vpop.permute.xlu0 %2326
      %2329 = vset.pattern.permute.xlu0 1
      %2330 = vperm.xlu0 %2329, %v2023
      %v2331 = vpop.permute.xlu0 %2330
      %2333 = vset.pattern.permute.xlu0 1
      %2334 = vperm.xlu0 %2333, %v2024
      %v2335 = vpop.permute.xlu0 %2334
      %2337 = vset.pattern.permute.xlu0 1
      %2338 = vperm.xlu0 %2337, %v2025
      %v2339 = vpop.permute.xlu0 %2338
      %2341 = vset.pattern.permute.xlu0 1
      %2342 = vperm.xlu0 %2341, %v2026
      %v2343 = vpop.permute.xlu0 %2342
      %2345 = vset.pattern.permute.xlu0 1
      %2346 = vperm.xlu0 %2345, %v2027
      %v2347 = vpop.permute.xlu0 %2346
      %2349 = vset.pattern.permute.xlu0 1
      %2350 = vperm.xlu0 %2349, %v2028
      %v2351 = vpop.permute.xlu0 %2350
      %2353 = vset.pattern.permute.xlu0 1
      %2354 = vperm.xlu0 %2353, %v2029
      %v2355 = vpop.permute.xlu0 %2354
      %2357 = vset.pattern.permute.xlu0 1
      %2358 = vperm.xlu0 %2357, %v2030
      %v2359 = vpop.permute.xlu0 %2358
      %2361 = vset.pattern.permute.xlu0 1
      %2362 = vperm.xlu0 %2361, %v2031
      %v2363 = vpop.permute.xlu0 %2362
      %2365 = vset.pattern.permute.xlu0 1
      %2366 = vperm.xlu0 %2365, %v2032
      %v2367 = vpop.permute.xlu0 %2366
      %2369 = vset.pattern.permute.xlu0 1
      %2370 = vperm.xlu0 %2369, %v2033
      %v2371 = vpop.permute.xlu0 %2370
      %2373 = vset.pattern.permute.xlu0 1
      %2374 = vperm.xlu0 %2373, %v2034
      %v2375 = vpop.permute.xlu0 %2374
      %2377 = vset.pattern.permute.xlu0 1
      %2378 = vperm.xlu0 %2377, %v2035
      %v2379 = vpop.permute.xlu0 %2378
      %2381 = vset.pattern.permute.xlu0 1
      %2382 = vperm.xlu0 %2381, %v2036
      %v2383 = vpop.permute.xlu0 %2382
      %2385 = vset.pattern.permute.xlu0 1
      %2386 = vperm.xlu0 %2385, %v2037
      %v2387 = vpop.permute.xlu0 %2386
      %2389 = vset.pattern.permute.xlu0 1
      %2390 = vperm.xlu0 %2389, %v2038
      %v2391 = vpop.permute.xlu0 %2390
      %2393 = vset.pattern.permute.xlu0 1
      %2394 = vperm.xlu0 %2393, %v2039
      %v2395 = vpop.permute.xlu0 %2394
      %2397 = vset.pattern.permute.xlu0 1
      %2398 = vperm.xlu0 %2397, %v2040
      %v2399 = vpop.permute.xlu0 %2398
      %v2401 = vlaneseq
      %v2402 = vshrl.u32 %v2401, 7
      %v2403 = vsub.s32 1, %v2402
      %v2404 = vrot.slane %v877, %v2403
      %v2405 = vmul.f32 %v2275, %v2404
      %v2406 = vmul.f32 %v2279, %v2404
      %v2407 = vmul.f32 %v2283, %v2404
      %v2408 = vmul.f32 %v2287, %v2404
      %v2409 = vmul.f32 %v2291, %v2404
      %v2410 = vmul.f32 %v2295, %v2404
      %v2411 = vmul.f32 %v2299, %v2404
      %v2412 = vmul.f32 %v2303, %v2404
      %v2413 = vmul.f32 %v2307, %v2404
      %v2414 = vmul.f32 %v2311, %v2404
      %v2415 = vmul.f32 %v2315, %v2404
      %v2416 = vmul.f32 %v2319, %v2404
      %v2417 = vmul.f32 %v2323, %v2404
      %v2418 = vmul.f32 %v2327, %v2404
      %v2419 = vmul.f32 %v2331, %v2404
      %v2420 = vmul.f32 %v2335, %v2404
      %v2421 = vmul.f32 %v2339, %v2404
      %v2422 = vmul.f32 %v2343, %v2404
      %v2423 = vmul.f32 %v2347, %v2404
      %v2424 = vmul.f32 %v2351, %v2404
      %v2425 = vmul.f32 %v2355, %v2404
      %v2426 = vmul.f32 %v2359, %v2404
      %v2427 = vmul.f32 %v2363, %v2404
      %v2428 = vmul.f32 %v2367, %v2404
      %v2429 = vmul.f32 %v2371, %v2404
      %v2430 = vmul.f32 %v2375, %v2404
      %v2431 = vmul.f32 %v2379, %v2404
      %v2432 = vmul.f32 %v2383, %v2404
      %v2433 = vmul.f32 %v2387, %v2404
      %v2434 = vmul.f32 %v2391, %v2404
      %v2435 = vmul.f32 %v2395, %v2404
      %v2436 = vmul.f32 %v2399, %v2404
      %v2437 = vadd.f32 %v2241, %v2405
      %v2438 = vadd.f32 %v2242, %v2406
      %v2439 = vadd.f32 %v2243, %v2407
      %v2440 = vadd.f32 %v2244, %v2408
      %v2441 = vadd.f32 %v2245, %v2409
      %v2442 = vadd.f32 %v2246, %v2410
      %v2443 = vadd.f32 %v2247, %v2411
      %v2444 = vadd.f32 %v2248, %v2412
      %v2445 = vadd.f32 %v2249, %v2413
      %v2446 = vadd.f32 %v2250, %v2414
      %v2447 = vadd.f32 %v2251, %v2415
      %v2448 = vadd.f32 %v2252, %v2416
      %v2449 = vadd.f32 %v2253, %v2417
      %v2450 = vadd.f32 %v2254, %v2418
      %v2451 = vadd.f32 %v2255, %v2419
      %v2452 = vadd.f32 %v2256, %v2420
      %v2453 = vadd.f32 %v2257, %v2421
      %v2454 = vadd.f32 %v2258, %v2422
      %v2455 = vadd.f32 %v2259, %v2423
      %v2456 = vadd.f32 %v2260, %v2424
      %v2457 = vadd.f32 %v2261, %v2425
      %v2458 = vadd.f32 %v2262, %v2426
      %v2459 = vadd.f32 %v2263, %v2427
      %v2460 = vadd.f32 %v2264, %v2428
      %v2461 = vadd.f32 %v2265, %v2429
      %v2462 = vadd.f32 %v2266, %v2430
      %v2463 = vadd.f32 %v2267, %v2431
      %v2464 = vadd.f32 %v2268, %v2432
      %v2465 = vadd.f32 %v2269, %v2433
      %v2466 = vadd.f32 %v2270, %v2434
      %v2467 = vadd.f32 %v2271, %v2435
      %v2468 = vadd.f32 %v2272, %v2436
      %2469 = vset.pattern.permute.xlu0 2
      %2470 = vperm.xlu0 %2469, %v2009
      %v2471 = vpop.permute.xlu0 %2470
      %2473 = vset.pattern.permute.xlu0 2
      %2474 = vperm.xlu0 %2473, %v2010
      %v2475 = vpop.permute.xlu0 %2474
      %2477 = vset.pattern.permute.xlu0 2
      %2478 = vperm.xlu0 %2477, %v2011
      %v2479 = vpop.permute.xlu0 %2478
      %2481 = vset.pattern.permute.xlu0 2
      %2482 = vperm.xlu0 %2481, %v2012
      %v2483 = vpop.permute.xlu0 %2482
      %2485 = vset.pattern.permute.xlu0 2
      %2486 = vperm.xlu0 %2485, %v2013
      %v2487 = vpop.permute.xlu0 %2486
      %2489 = vset.pattern.permute.xlu0 2
      %2490 = vperm.xlu0 %2489, %v2014
      %v2491 = vpop.permute.xlu0 %2490
      %2493 = vset.pattern.permute.xlu0 2
      %2494 = vperm.xlu0 %2493, %v2015
      %v2495 = vpop.permute.xlu0 %2494
      %2497 = vset.pattern.permute.xlu0 2
      %2498 = vperm.xlu0 %2497, %v2016
      %v2499 = vpop.permute.xlu0 %2498
      %2501 = vset.pattern.permute.xlu0 2
      %2502 = vperm.xlu0 %2501, %v2017
      %v2503 = vpop.permute.xlu0 %2502
      %2505 = vset.pattern.permute.xlu0 2
      %2506 = vperm.xlu0 %2505, %v2018
      %v2507 = vpop.permute.xlu0 %2506
      %2509 = vset.pattern.permute.xlu0 2
      %2510 = vperm.xlu0 %2509, %v2019
      %v2511 = vpop.permute.xlu0 %2510
      %2513 = vset.pattern.permute.xlu0 2
      %2514 = vperm.xlu0 %2513, %v2020
      %v2515 = vpop.permute.xlu0 %2514
      %2517 = vset.pattern.permute.xlu0 2
      %2518 = vperm.xlu0 %2517, %v2021
      %v2519 = vpop.permute.xlu0 %2518
      %2521 = vset.pattern.permute.xlu0 2
      %2522 = vperm.xlu0 %2521, %v2022
      %v2523 = vpop.permute.xlu0 %2522
      %2525 = vset.pattern.permute.xlu0 2
      %2526 = vperm.xlu0 %2525, %v2023
      %v2527 = vpop.permute.xlu0 %2526
      %2529 = vset.pattern.permute.xlu0 2
      %2530 = vperm.xlu0 %2529, %v2024
      %v2531 = vpop.permute.xlu0 %2530
      %2533 = vset.pattern.permute.xlu0 2
      %2534 = vperm.xlu0 %2533, %v2025
      %v2535 = vpop.permute.xlu0 %2534
      %2537 = vset.pattern.permute.xlu0 2
      %2538 = vperm.xlu0 %2537, %v2026
      %v2539 = vpop.permute.xlu0 %2538
      %2541 = vset.pattern.permute.xlu0 2
      %2542 = vperm.xlu0 %2541, %v2027
      %v2543 = vpop.permute.xlu0 %2542
      %2545 = vset.pattern.permute.xlu0 2
      %2546 = vperm.xlu0 %2545, %v2028
      %v2547 = vpop.permute.xlu0 %2546
      %2549 = vset.pattern.permute.xlu0 2
      %2550 = vperm.xlu0 %2549, %v2029
      %v2551 = vpop.permute.xlu0 %2550
      %2553 = vset.pattern.permute.xlu0 2
      %2554 = vperm.xlu0 %2553, %v2030
      %v2555 = vpop.permute.xlu0 %2554
      %2557 = vset.pattern.permute.xlu0 2
      %2558 = vperm.xlu0 %2557, %v2031
      %v2559 = vpop.permute.xlu0 %2558
      %2561 = vset.pattern.permute.xlu0 2
      %2562 = vperm.xlu0 %2561, %v2032
      %v2563 = vpop.permute.xlu0 %2562
      %2565 = vset.pattern.permute.xlu0 2
      %2566 = vperm.xlu0 %2565, %v2033
      %v2567 = vpop.permute.xlu0 %2566
      %2569 = vset.pattern.permute.xlu0 2
      %2570 = vperm.xlu0 %2569, %v2034
      %v2571 = vpop.permute.xlu0 %2570
      %2573 = vset.pattern.permute.xlu0 2
      %2574 = vperm.xlu0 %2573, %v2035
      %v2575 = vpop.permute.xlu0 %2574
      %2577 = vset.pattern.permute.xlu0 2
      %2578 = vperm.xlu0 %2577, %v2036
      %v2579 = vpop.permute.xlu0 %2578
      %2581 = vset.pattern.permute.xlu0 2
      %2582 = vperm.xlu0 %2581, %v2037
      %v2583 = vpop.permute.xlu0 %2582
      %2585 = vset.pattern.permute.xlu0 2
      %2586 = vperm.xlu0 %2585, %v2038
      %v2587 = vpop.permute.xlu0 %2586
      %2589 = vset.pattern.permute.xlu0 2
      %2590 = vperm.xlu0 %2589, %v2039
      %v2591 = vpop.permute.xlu0 %2590
      %2593 = vset.pattern.permute.xlu0 2
      %2594 = vperm.xlu0 %2593, %v2040
      %v2595 = vpop.permute.xlu0 %2594
      %v2597 = vlaneseq
      %v2598 = vshrl.u32 %v2597, 7
      %v2599 = vsub.s32 2, %v2598
      %v2600 = vrot.slane %v877, %v2599
      %v2601 = vmul.f32 %v2471, %v2600
      %v2602 = vmul.f32 %v2475, %v2600
      %v2603 = vmul.f32 %v2479, %v2600
      %v2604 = vmul.f32 %v2483, %v2600
      %v2605 = vmul.f32 %v2487, %v2600
      %v2606 = vmul.f32 %v2491, %v2600
      %v2607 = vmul.f32 %v2495, %v2600
      %v2608 = vmul.f32 %v2499, %v2600
      %v2609 = vmul.f32 %v2503, %v2600
      %v2610 = vmul.f32 %v2507, %v2600
      %v2611 = vmul.f32 %v2511, %v2600
      %v2612 = vmul.f32 %v2515, %v2600
      %v2613 = vmul.f32 %v2519, %v2600
      %v2614 = vmul.f32 %v2523, %v2600
      %v2615 = vmul.f32 %v2527, %v2600
      %v2616 = vmul.f32 %v2531, %v2600
      %v2617 = vmul.f32 %v2535, %v2600
      %v2618 = vmul.f32 %v2539, %v2600
      %v2619 = vmul.f32 %v2543, %v2600
      %v2620 = vmul.f32 %v2547, %v2600
      %v2621 = vmul.f32 %v2551, %v2600
      %v2622 = vmul.f32 %v2555, %v2600
      %v2623 = vmul.f32 %v2559, %v2600
      %v2624 = vmul.f32 %v2563, %v2600
      %v2625 = vmul.f32 %v2567, %v2600
      %v2626 = vmul.f32 %v2571, %v2600
      %v2627 = vmul.f32 %v2575, %v2600
      %v2628 = vmul.f32 %v2579, %v2600
      %v2629 = vmul.f32 %v2583, %v2600
      %v2630 = vmul.f32 %v2587, %v2600
      %v2631 = vmul.f32 %v2591, %v2600
      %v2632 = vmul.f32 %v2595, %v2600
      %v2633 = vadd.f32 %v2437, %v2601
      %v2634 = vadd.f32 %v2438, %v2602
      %v2635 = vadd.f32 %v2439, %v2603
      %v2636 = vadd.f32 %v2440, %v2604
      %v2637 = vadd.f32 %v2441, %v2605
      %v2638 = vadd.f32 %v2442, %v2606
      %v2639 = vadd.f32 %v2443, %v2607
      %v2640 = vadd.f32 %v2444, %v2608
      %v2641 = vadd.f32 %v2445, %v2609
      %v2642 = vadd.f32 %v2446, %v2610
      %v2643 = vadd.f32 %v2447, %v2611
      %v2644 = vadd.f32 %v2448, %v2612
      %v2645 = vadd.f32 %v2449, %v2613
      %v2646 = vadd.f32 %v2450, %v2614
      %v2647 = vadd.f32 %v2451, %v2615
      %v2648 = vadd.f32 %v2452, %v2616
      %v2649 = vadd.f32 %v2453, %v2617
      %v2650 = vadd.f32 %v2454, %v2618
      %v2651 = vadd.f32 %v2455, %v2619
      %v2652 = vadd.f32 %v2456, %v2620
      %v2653 = vadd.f32 %v2457, %v2621
      %v2654 = vadd.f32 %v2458, %v2622
      %v2655 = vadd.f32 %v2459, %v2623
      %v2656 = vadd.f32 %v2460, %v2624
      %v2657 = vadd.f32 %v2461, %v2625
      %v2658 = vadd.f32 %v2462, %v2626
      %v2659 = vadd.f32 %v2463, %v2627
      %v2660 = vadd.f32 %v2464, %v2628
      %v2661 = vadd.f32 %v2465, %v2629
      %v2662 = vadd.f32 %v2466, %v2630
      %v2663 = vadd.f32 %v2467, %v2631
      %v2664 = vadd.f32 %v2468, %v2632
      %2666 = vset.pattern.permute.xlu0 0
      %2667 = vperm.xlu0 %2666, %v2041
      %v2668 = vpop.permute.xlu0 %2667
      %2671 = vset.pattern.permute.xlu0 0
      %2672 = vperm.xlu0 %2671, %v2042
      %v2673 = vpop.permute.xlu0 %2672
      %v2675 = vlaneseq
      %v2676 = vshrl.u32 %v2675, 7
      %v2677 = vsub.s32 0, %v2676
      %v2678 = vrot.slane %v880, %v2677
      %v2679 = vmul.f32 %v2058, %v2678
      %v2680 = vmul.f32 %v2063, %v2678
      %v2681 = vmul.f32 %v2068, %v2678
      %v2682 = vmul.f32 %v2073, %v2678
      %v2683 = vmul.f32 %v2078, %v2678
      %v2684 = vmul.f32 %v2083, %v2678
      %v2685 = vmul.f32 %v2088, %v2678
      %v2686 = vmul.f32 %v2093, %v2678
      %v2687 = vmul.f32 %v2098, %v2678
      %v2688 = vmul.f32 %v2103, %v2678
      %v2689 = vmul.f32 %v2108, %v2678
      %v2690 = vmul.f32 %v2113, %v2678
      %v2691 = vmul.f32 %v2118, %v2678
      %v2692 = vmul.f32 %v2123, %v2678
      %v2693 = vmul.f32 %v2128, %v2678
      %v2694 = vmul.f32 %v2133, %v2678
      %v2695 = vmul.f32 %v2138, %v2678
      %v2696 = vmul.f32 %v2143, %v2678
      %v2697 = vmul.f32 %v2148, %v2678
      %v2698 = vmul.f32 %v2153, %v2678
      %v2699 = vmul.f32 %v2158, %v2678
      %v2700 = vmul.f32 %v2163, %v2678
      %v2701 = vmul.f32 %v2168, %v2678
      %v2702 = vmul.f32 %v2173, %v2678
      %v2703 = vmul.f32 %v2178, %v2678
      %v2704 = vmul.f32 %v2183, %v2678
      %v2705 = vmul.f32 %v2188, %v2678
      %v2706 = vmul.f32 %v2193, %v2678
      %v2707 = vmul.f32 %v2198, %v2678
      %v2708 = vmul.f32 %v2203, %v2678
      %v2709 = vmul.f32 %v2668, %v2678
      %v2710 = vmul.f32 %v2673, %v2678
      %v2711 = vadd.f32 %v2633, %v2679
      %v2712 = vadd.f32 %v2634, %v2680
      %v2713 = vadd.f32 %v2635, %v2681
      %v2714 = vadd.f32 %v2636, %v2682
      %v2715 = vadd.f32 %v2637, %v2683
      %v2716 = vadd.f32 %v2638, %v2684
      %v2717 = vadd.f32 %v2639, %v2685
      %v2718 = vadd.f32 %v2640, %v2686
      %v2719 = vadd.f32 %v2641, %v2687
      %v2720 = vadd.f32 %v2642, %v2688
      %v2721 = vadd.f32 %v2643, %v2689
      %v2722 = vadd.f32 %v2644, %v2690
      %v2723 = vadd.f32 %v2645, %v2691
      %v2724 = vadd.f32 %v2646, %v2692
      %v2725 = vadd.f32 %v2647, %v2693
      %v2726 = vadd.f32 %v2648, %v2694
      %v2727 = vadd.f32 %v2649, %v2695
      %v2728 = vadd.f32 %v2650, %v2696
      %v2729 = vadd.f32 %v2651, %v2697
      %v2730 = vadd.f32 %v2652, %v2698
      %v2731 = vadd.f32 %v2653, %v2699
      %v2732 = vadd.f32 %v2654, %v2700
      %v2733 = vadd.f32 %v2655, %v2701
      %v2734 = vadd.f32 %v2656, %v2702
      %v2735 = vadd.f32 %v2657, %v2703
      %v2736 = vadd.f32 %v2658, %v2704
      %v2737 = vadd.f32 %v2659, %v2705
      %v2738 = vadd.f32 %v2660, %v2706
      %v2739 = vadd.f32 %v2661, %v2707
      %v2740 = vadd.f32 %v2662, %v2708
      %v2741 = vadd.f32 %v2663, %v2709
      %v2742 = vadd.f32 %v2664, %v2710
      %2743 = vset.pattern.permute.xlu0 1
      %2744 = vperm.xlu0 %2743, %v2041
      %v2745 = vpop.permute.xlu0 %2744
      %2747 = vset.pattern.permute.xlu0 1
      %2748 = vperm.xlu0 %2747, %v2042
      %v2749 = vpop.permute.xlu0 %2748
      %v2751 = vlaneseq
      %v2752 = vshrl.u32 %v2751, 7
      %v2753 = vsub.s32 1, %v2752
      %v2754 = vrot.slane %v880, %v2753
      %v2755 = vmul.f32 %v2283, %v2754
      %v2756 = vmul.f32 %v2287, %v2754
      %v2757 = vmul.f32 %v2291, %v2754
      %v2758 = vmul.f32 %v2295, %v2754
      %v2759 = vmul.f32 %v2299, %v2754
      %v2760 = vmul.f32 %v2303, %v2754
      %v2761 = vmul.f32 %v2307, %v2754
      %v2762 = vmul.f32 %v2311, %v2754
      %v2763 = vmul.f32 %v2315, %v2754
      %v2764 = vmul.f32 %v2319, %v2754
      %v2765 = vmul.f32 %v2323, %v2754
      %v2766 = vmul.f32 %v2327, %v2754
      %v2767 = vmul.f32 %v2331, %v2754
      %v2768 = vmul.f32 %v2335, %v2754
      %v2769 = vmul.f32 %v2339, %v2754
      %v2770 = vmul.f32 %v2343, %v2754
      %v2771 = vmul.f32 %v2347, %v2754
      %v2772 = vmul.f32 %v2351, %v2754
      %v2773 = vmul.f32 %v2355, %v2754
      %v2774 = vmul.f32 %v2359, %v2754
      %v2775 = vmul.f32 %v2363, %v2754
      %v2776 = vmul.f32 %v2367, %v2754
      %v2777 = vmul.f32 %v2371, %v2754
      %v2778 = vmul.f32 %v2375, %v2754
      %v2779 = vmul.f32 %v2379, %v2754
      %v2780 = vmul.f32 %v2383, %v2754
      %v2781 = vmul.f32 %v2387, %v2754
      %v2782 = vmul.f32 %v2391, %v2754
      %v2783 = vmul.f32 %v2395, %v2754
      %v2784 = vmul.f32 %v2399, %v2754
      %v2785 = vmul.f32 %v2745, %v2754
      %v2786 = vmul.f32 %v2749, %v2754
      %v2787 = vadd.f32 %v2711, %v2755
      %v2788 = vadd.f32 %v2712, %v2756
      %v2789 = vadd.f32 %v2713, %v2757
      %v2790 = vadd.f32 %v2714, %v2758
      %v2791 = vadd.f32 %v2715, %v2759
      %v2792 = vadd.f32 %v2716, %v2760
      %v2793 = vadd.f32 %v2717, %v2761
      %v2794 = vadd.f32 %v2718, %v2762
      %v2795 = vadd.f32 %v2719, %v2763
      %v2796 = vadd.f32 %v2720, %v2764
      %v2797 = vadd.f32 %v2721, %v2765
      %v2798 = vadd.f32 %v2722, %v2766
      %v2799 = vadd.f32 %v2723, %v2767
      %v2800 = vadd.f32 %v2724, %v2768
      %v2801 = vadd.f32 %v2725, %v2769
      %v2802 = vadd.f32 %v2726, %v2770
      %v2803 = vadd.f32 %v2727, %v2771
      %v2804 = vadd.f32 %v2728, %v2772
      %v2805 = vadd.f32 %v2729, %v2773
      %v2806 = vadd.f32 %v2730, %v2774
      %v2807 = vadd.f32 %v2731, %v2775
      %v2808 = vadd.f32 %v2732, %v2776
      %v2809 = vadd.f32 %v2733, %v2777
      %v2810 = vadd.f32 %v2734, %v2778
      %v2811 = vadd.f32 %v2735, %v2779
      %v2812 = vadd.f32 %v2736, %v2780
      %v2813 = vadd.f32 %v2737, %v2781
      %v2814 = vadd.f32 %v2738, %v2782
      %v2815 = vadd.f32 %v2739, %v2783
      %v2816 = vadd.f32 %v2740, %v2784
      %v2817 = vadd.f32 %v2741, %v2785
      %v2818 = vadd.f32 %v2742, %v2786
      %2819 = vset.pattern.permute.xlu0 2
      %2820 = vperm.xlu0 %2819, %v2041
      %v2821 = vpop.permute.xlu0 %2820
      %2823 = vset.pattern.permute.xlu0 2
      %2824 = vperm.xlu0 %2823, %v2042
      %v2825 = vpop.permute.xlu0 %2824
      %v2827 = vlaneseq
      %v2828 = vshrl.u32 %v2827, 7
      %v2829 = vsub.s32 2, %v2828
      %v2830 = vrot.slane %v880, %v2829
      %v2831 = vmul.f32 %v2479, %v2830
      %v2832 = vmul.f32 %v2483, %v2830
      %v2833 = vmul.f32 %v2487, %v2830
      %v2834 = vmul.f32 %v2491, %v2830
      %v2835 = vmul.f32 %v2495, %v2830
      %v2836 = vmul.f32 %v2499, %v2830
      %v2837 = vmul.f32 %v2503, %v2830
      %v2838 = vmul.f32 %v2507, %v2830
      %v2839 = vmul.f32 %v2511, %v2830
      %v2840 = vmul.f32 %v2515, %v2830
      %v2841 = vmul.f32 %v2519, %v2830
      %v2842 = vmul.f32 %v2523, %v2830
      %v2843 = vmul.f32 %v2527, %v2830
      %v2844 = vmul.f32 %v2531, %v2830
      %v2845 = vmul.f32 %v2535, %v2830
      %v2846 = vmul.f32 %v2539, %v2830
      %v2847 = vmul.f32 %v2543, %v2830
      %v2848 = vmul.f32 %v2547, %v2830
      %v2849 = vmul.f32 %v2551, %v2830
      %v2850 = vmul.f32 %v2555, %v2830
      %v2851 = vmul.f32 %v2559, %v2830
      %v2852 = vmul.f32 %v2563, %v2830
      %v2853 = vmul.f32 %v2567, %v2830
      %v2854 = vmul.f32 %v2571, %v2830
      %v2855 = vmul.f32 %v2575, %v2830
      %v2856 = vmul.f32 %v2579, %v2830
      %v2857 = vmul.f32 %v2583, %v2830
      %v2858 = vmul.f32 %v2587, %v2830
      %v2859 = vmul.f32 %v2591, %v2830
      %v2860 = vmul.f32 %v2595, %v2830
      %v2861 = vmul.f32 %v2821, %v2830
      %v2862 = vmul.f32 %v2825, %v2830
      %v2863 = vadd.f32 %v2787, %v2831
      %v2864 = vadd.f32 %v2788, %v2832
      %v2865 = vadd.f32 %v2789, %v2833
      %v2866 = vadd.f32 %v2790, %v2834
      %v2867 = vadd.f32 %v2791, %v2835
      %v2868 = vadd.f32 %v2792, %v2836
      %v2869 = vadd.f32 %v2793, %v2837
      %v2870 = vadd.f32 %v2794, %v2838
      %v2871 = vadd.f32 %v2795, %v2839
      %v2872 = vadd.f32 %v2796, %v2840
      %v2873 = vadd.f32 %v2797, %v2841
      %v2874 = vadd.f32 %v2798, %v2842
      %v2875 = vadd.f32 %v2799, %v2843
      %v2876 = vadd.f32 %v2800, %v2844
      %v2877 = vadd.f32 %v2801, %v2845
      %v2878 = vadd.f32 %v2802, %v2846
      %v2879 = vadd.f32 %v2803, %v2847
      %v2880 = vadd.f32 %v2804, %v2848
      %v2881 = vadd.f32 %v2805, %v2849
      %v2882 = vadd.f32 %v2806, %v2850
      %v2883 = vadd.f32 %v2807, %v2851
      %v2884 = vadd.f32 %v2808, %v2852
      %v2885 = vadd.f32 %v2809, %v2853
      %v2886 = vadd.f32 %v2810, %v2854
      %v2887 = vadd.f32 %v2811, %v2855
      %v2888 = vadd.f32 %v2812, %v2856
      %v2889 = vadd.f32 %v2813, %v2857
      %v2890 = vadd.f32 %v2814, %v2858
      %v2891 = vadd.f32 %v2815, %v2859
      %v2892 = vadd.f32 %v2816, %v2860
      %v2893 = vadd.f32 %v2817, %v2861
      %v2894 = vadd.f32 %v2818, %v2862
      %2896 = vset.pattern.permute.xlu0 0
      %2897 = vperm.xlu0 %2896, %v2043
      %v2898 = vpop.permute.xlu0 %2897
      %2901 = vset.pattern.permute.xlu0 0
      %2902 = vperm.xlu0 %2901, %v2044
      %v2903 = vpop.permute.xlu0 %2902
      %v2905 = vlaneseq
      %v2906 = vshrl.u32 %v2905, 7
      %v2907 = vsub.s32 0, %v2906
      %v2908 = vrot.slane %v883, %v2907
      %v2909 = vmul.f32 %v2068, %v2908
      %v2910 = vmul.f32 %v2073, %v2908
      %v2911 = vmul.f32 %v2078, %v2908
      %v2912 = vmul.f32 %v2083, %v2908
      %v2913 = vmul.f32 %v2088, %v2908
      %v2914 = vmul.f32 %v2093, %v2908
      %v2915 = vmul.f32 %v2098, %v2908
      %v2916 = vmul.f32 %v2103, %v2908
      %v2917 = vmul.f32 %v2108, %v2908
      %v2918 = vmul.f32 %v2113, %v2908
      %v2919 = vmul.f32 %v2118, %v2908
      %v2920 = vmul.f32 %v2123, %v2908
      %v2921 = vmul.f32 %v2128, %v2908
      %v2922 = vmul.f32 %v2133, %v2908
      %v2923 = vmul.f32 %v2138, %v2908
      %v2924 = vmul.f32 %v2143, %v2908
      %v2925 = vmul.f32 %v2148, %v2908
      %v2926 = vmul.f32 %v2153, %v2908
      %v2927 = vmul.f32 %v2158, %v2908
      %v2928 = vmul.f32 %v2163, %v2908
      %v2929 = vmul.f32 %v2168, %v2908
      %v2930 = vmul.f32 %v2173, %v2908
      %v2931 = vmul.f32 %v2178, %v2908
      %v2932 = vmul.f32 %v2183, %v2908
      %v2933 = vmul.f32 %v2188, %v2908
      %v2934 = vmul.f32 %v2193, %v2908
      %v2935 = vmul.f32 %v2198, %v2908
      %v2936 = vmul.f32 %v2203, %v2908
      %v2937 = vmul.f32 %v2668, %v2908
      %v2938 = vmul.f32 %v2673, %v2908
      %v2939 = vmul.f32 %v2898, %v2908
      %v2940 = vmul.f32 %v2903, %v2908
      %v2941 = vadd.f32 %v2863, %v2909
      %v2942 = vadd.f32 %v2864, %v2910
      %v2943 = vadd.f32 %v2865, %v2911
      %v2944 = vadd.f32 %v2866, %v2912
      %v2945 = vadd.f32 %v2867, %v2913
      %v2946 = vadd.f32 %v2868, %v2914
      %v2947 = vadd.f32 %v2869, %v2915
      %v2948 = vadd.f32 %v2870, %v2916
      %v2949 = vadd.f32 %v2871, %v2917
      %v2950 = vadd.f32 %v2872, %v2918
      %v2951 = vadd.f32 %v2873, %v2919
      %v2952 = vadd.f32 %v2874, %v2920
      %v2953 = vadd.f32 %v2875, %v2921
      %v2954 = vadd.f32 %v2876, %v2922
      %v2955 = vadd.f32 %v2877, %v2923
      %v2956 = vadd.f32 %v2878, %v2924
      %v2957 = vadd.f32 %v2879, %v2925
      %v2958 = vadd.f32 %v2880, %v2926
      %v2959 = vadd.f32 %v2881, %v2927
      %v2960 = vadd.f32 %v2882, %v2928
      %v2961 = vadd.f32 %v2883, %v2929
      %v2962 = vadd.f32 %v2884, %v2930
      %v2963 = vadd.f32 %v2885, %v2931
      %v2964 = vadd.f32 %v2886, %v2932
      %v2965 = vadd.f32 %v2887, %v2933
      %v2966 = vadd.f32 %v2888, %v2934
      %v2967 = vadd.f32 %v2889, %v2935
      %v2968 = vadd.f32 %v2890, %v2936
      %v2969 = vadd.f32 %v2891, %v2937
      %v2970 = vadd.f32 %v2892, %v2938
      %v2971 = vadd.f32 %v2893, %v2939
      %v2972 = vadd.f32 %v2894, %v2940
      %2973 = vset.pattern.permute.xlu0 1
      %2974 = vperm.xlu0 %2973, %v2043
      %v2975 = vpop.permute.xlu0 %2974
      %2977 = vset.pattern.permute.xlu0 1
      %2978 = vperm.xlu0 %2977, %v2044
      %v2979 = vpop.permute.xlu0 %2978
      %v2981 = vlaneseq
      %v2982 = vshrl.u32 %v2981, 7
      %v2983 = vsub.s32 1, %v2982
      %v2984 = vrot.slane %v883, %v2983
      %v2985 = vmul.f32 %v2291, %v2984
      %v2986 = vmul.f32 %v2295, %v2984
      %v2987 = vmul.f32 %v2299, %v2984
      %v2988 = vmul.f32 %v2303, %v2984
      %v2989 = vmul.f32 %v2307, %v2984
      %v2990 = vmul.f32 %v2311, %v2984
      %v2991 = vmul.f32 %v2315, %v2984
      %v2992 = vmul.f32 %v2319, %v2984
      %v2993 = vmul.f32 %v2323, %v2984
      %v2994 = vmul.f32 %v2327, %v2984
      %v2995 = vmul.f32 %v2331, %v2984
      %v2996 = vmul.f32 %v2335, %v2984
      %v2997 = vmul.f32 %v2339, %v2984
      %v2998 = vmul.f32 %v2343, %v2984
      %v2999 = vmul.f32 %v2347, %v2984
      %v3000 = vmul.f32 %v2351, %v2984
      %v3001 = vmul.f32 %v2355, %v2984
      %v3002 = vmul.f32 %v2359, %v2984
      %v3003 = vmul.f32 %v2363, %v2984
      %v3004 = vmul.f32 %v2367, %v2984
      %v3005 = vmul.f32 %v2371, %v2984
      %v3006 = vmul.f32 %v2375, %v2984
      %v3007 = vmul.f32 %v2379, %v2984
      %v3008 = vmul.f32 %v2383, %v2984
      %v3009 = vmul.f32 %v2387, %v2984
      %v3010 = vmul.f32 %v2391, %v2984
      %v3011 = vmul.f32 %v2395, %v2984
      %v3012 = vmul.f32 %v2399, %v2984
      %v3013 = vmul.f32 %v2745, %v2984
      %v3014 = vmul.f32 %v2749, %v2984
      %v3015 = vmul.f32 %v2975, %v2984
      %v3016 = vmul.f32 %v2979, %v2984
      %v3017 = vadd.f32 %v2941, %v2985
      %v3018 = vadd.f32 %v2942, %v2986
      %v3019 = vadd.f32 %v2943, %v2987
      %v3020 = vadd.f32 %v2944, %v2988
      %v3021 = vadd.f32 %v2945, %v2989
      %v3022 = vadd.f32 %v2946, %v2990
      %v3023 = vadd.f32 %v2947, %v2991
      %v3024 = vadd.f32 %v2948, %v2992
      %v3025 = vadd.f32 %v2949, %v2993
      %v3026 = vadd.f32 %v2950, %v2994
      %v3027 = vadd.f32 %v2951, %v2995
      %v3028 = vadd.f32 %v2952, %v2996
      %v3029 = vadd.f32 %v2953, %v2997
      %v3030 = vadd.f32 %v2954, %v2998
      %v3031 = vadd.f32 %v2955, %v2999
      %v3032 = vadd.f32 %v2956, %v3000
      %v3033 = vadd.f32 %v2957, %v3001
      %v3034 = vadd.f32 %v2958, %v3002
      %v3035 = vadd.f32 %v2959, %v3003
      %v3036 = vadd.f32 %v2960, %v3004
      %v3037 = vadd.f32 %v2961, %v3005
      %v3038 = vadd.f32 %v2962, %v3006
      %v3039 = vadd.f32 %v2963, %v3007
      %v3040 = vadd.f32 %v2964, %v3008
      %v3041 = vadd.f32 %v2965, %v3009
      %v3042 = vadd.f32 %v2966, %v3010
      %v3043 = vadd.f32 %v2967, %v3011
      %v3044 = vadd.f32 %v2968, %v3012
      %v3045 = vadd.f32 %v2969, %v3013
      %v3046 = vadd.f32 %v2970, %v3014
      %v3047 = vadd.f32 %v2971, %v3015
      %v3048 = vadd.f32 %v2972, %v3016
      %3049 = vset.pattern.permute.xlu0 2
      %3050 = vperm.xlu0 %3049, %v2043
      %v3051 = vpop.permute.xlu0 %3050
      %3053 = vset.pattern.permute.xlu0 2
      %3054 = vperm.xlu0 %3053, %v2044
      %v3055 = vpop.permute.xlu0 %3054
      %v3057 = vlaneseq
      %v3058 = vshrl.u32 %v3057, 7
      %v3059 = vsub.s32 2, %v3058
      %v3060 = vrot.slane %v883, %v3059
      %v3061 = vmul.f32 %v2487, %v3060
      %v3062 = vmul.f32 %v2491, %v3060
      %v3063 = vmul.f32 %v2495, %v3060
      %v3064 = vmul.f32 %v2499, %v3060
      %v3065 = vmul.f32 %v2503, %v3060
      %v3066 = vmul.f32 %v2507, %v3060
      %v3067 = vmul.f32 %v2511, %v3060
      %v3068 = vmul.f32 %v2515, %v3060
      %v3069 = vmul.f32 %v2519, %v3060
      %v3070 = vmul.f32 %v2523, %v3060
      %v3071 = vmul.f32 %v2527, %v3060
      %v3072 = vmul.f32 %v2531, %v3060
      %v3073 = vmul.f32 %v2535, %v3060
      %v3074 = vmul.f32 %v2539, %v3060
      %v3075 = vmul.f32 %v2543, %v3060
      %v3076 = vmul.f32 %v2547, %v3060
      %v3077 = vmul.f32 %v2551, %v3060
      %v3078 = vmul.f32 %v2555, %v3060
      %v3079 = vmul.f32 %v2559, %v3060
      %v3080 = vmul.f32 %v2563, %v3060
      %v3081 = vmul.f32 %v2567, %v3060
      %v3082 = vmul.f32 %v2571, %v3060
      %v3083 = vmul.f32 %v2575, %v3060
      %v3084 = vmul.f32 %v2579, %v3060
      %v3085 = vmul.f32 %v2583, %v3060
      %v3086 = vmul.f32 %v2587, %v3060
      %v3087 = vmul.f32 %v2591, %v3060
      %v3088 = vmul.f32 %v2595, %v3060
      %v3089 = vmul.f32 %v2821, %v3060
      %v3090 = vmul.f32 %v2825, %v3060
      %v3091 = vmul.f32 %v3051, %v3060
      %v3092 = vmul.f32 %v3055, %v3060
      %v3093 = vadd.f32 %v3017, %v3061
      %v3094 = vadd.f32 %v3018, %v3062
      %v3095 = vadd.f32 %v3019, %v3063
      %v3096 = vadd.f32 %v3020, %v3064
      %v3097 = vadd.f32 %v3021, %v3065
      %v3098 = vadd.f32 %v3022, %v3066
      %v3099 = vadd.f32 %v3023, %v3067
      %v3100 = vadd.f32 %v3024, %v3068
      %v3101 = vadd.f32 %v3025, %v3069
      %v3102 = vadd.f32 %v3026, %v3070
      %v3103 = vadd.f32 %v3027, %v3071
      %v3104 = vadd.f32 %v3028, %v3072
      %v3105 = vadd.f32 %v3029, %v3073
      %v3106 = vadd.f32 %v3030, %v3074
      %v3107 = vadd.f32 %v3031, %v3075
      %v3108 = vadd.f32 %v3032, %v3076
      %v3109 = vadd.f32 %v3033, %v3077
      %v3110 = vadd.f32 %v3034, %v3078
      %v3111 = vadd.f32 %v3035, %v3079
      %v3112 = vadd.f32 %v3036, %v3080
      %v3113 = vadd.f32 %v3037, %v3081
      %v3114 = vadd.f32 %v3038, %v3082
      %v3115 = vadd.f32 %v3039, %v3083
      %v3116 = vadd.f32 %v3040, %v3084
      %v3117 = vadd.f32 %v3041, %v3085
      %v3118 = vadd.f32 %v3042, %v3086
      %v3119 = vadd.f32 %v3043, %v3087
      %v3120 = vadd.f32 %v3044, %v3088
      %v3121 = vadd.f32 %v3045, %v3089
      %v3122 = vadd.f32 %v3046, %v3090
      %v3123 = vadd.f32 %v3047, %v3091
      %v3124 = vadd.f32 %v3048, %v3092
      %v3125 = vld [vmem:[#allocation2 + $0x2] sm:$0xff]
      %v3126 = vld [vmem:[#allocation2 + $0xa] sm:$0xff]
      %v3127 = vld [vmem:[#allocation2 + $0x1a] sm:$0xff]
      %v3128 = vld [vmem:[#allocation2 + $0x22] sm:$0xff]
      %v3129 = vld [vmem:[#allocation2 + $0x32] sm:$0xff]
      %v3130 = vld [vmem:[#allocation2 + $0x3a] sm:$0xff]
      %v3131 = vld [vmem:[#allocation2 + $0x4a] sm:$0xff]
      %v3132 = vld [vmem:[#allocation2 + $0x52] sm:$0xff]
      %v3133 = vld [vmem:[#allocation2 + $0x62] sm:$0xff]
      %v3134 = vld [vmem:[#allocation2 + $0x6a] sm:$0xff]
      %v3135 = vld [vmem:[#allocation2 + $0x7a] sm:$0xff]
      %v3136 = vld [vmem:[#allocation2 + $0x82] sm:$0xff]
      %v3137 = vld [vmem:[#allocation2 + $0x92] sm:$0xff]
      %v3138 = vld [vmem:[#allocation2 + $0x9a] sm:$0xff]
      %v3139 = vld [vmem:[#allocation2 + $0xaa] sm:$0xff]
      %v3140 = vld [vmem:[#allocation2 + $0xb2] sm:$0xff]
      %v3141 = vld [vmem:[#allocation2 + $0xc2] sm:$0xff]
      %v3142 = vld [vmem:[#allocation2 + $0xca] sm:$0xff]
      %v3143 = vld [vmem:[#allocation2 + $0xda] sm:$0xff]
      %v3144 = vld [vmem:[#allocation2 + $0xe2] sm:$0xff]
      %v3145 = vld [vmem:[#allocation2 + $0xf2] sm:$0xff]
      %v3146 = vld [vmem:[#allocation2 + $0xfa] sm:$0xff]
      %v3147 = vld [vmem:[#allocation2 + $0x10a] sm:$0xff]
      %v3148 = vld [vmem:[#allocation2 + $0x112] sm:$0xff]
      %v3149 = vld [vmem:[#allocation2 + $0x122] sm:$0xff]
      %v3150 = vld [vmem:[#allocation2 + $0x12a] sm:$0xff]
      %v3151 = vld [vmem:[#allocation2 + $0x13a] sm:$0xff]
      %v3152 = vld [vmem:[#allocation2 + $0x142] sm:$0xff]
      %v3153 = vld [vmem:[#allocation2 + $0x152] sm:$0xff]
      %v3154 = vld [vmem:[#allocation2 + $0x15a] sm:$0xff]
      %v3155 = vld [vmem:[#allocation2 + $0x16a] sm:$0xff]
      %v3156 = vld [vmem:[#allocation2 + $0x172] sm:$0xff]
      %v3157 = vld [vmem:[#allocation2 + $0x182] sm:$0xff]
      %v3158 = vld [vmem:[#allocation2 + $0x18a] sm:$0xff]
      %v3159 = vld [vmem:[#allocation2 + $0x19a] sm:$0xff]
      %v3160 = vld [vmem:[#allocation2 + $0x1a2] sm:$0xff]
      %3162 = vset.pattern.permute.xlu0 0
      %3163 = vperm.xlu0 %3162, %v3125
      %v3164 = vpop.permute.xlu0 %3163
      %3167 = vset.pattern.permute.xlu0 0
      %3168 = vperm.xlu0 %3167, %v3126
      %v3169 = vpop.permute.xlu0 %3168
      %3172 = vset.pattern.permute.xlu0 0
      %3173 = vperm.xlu0 %3172, %v3127
      %v3174 = vpop.permute.xlu0 %3173
      %3177 = vset.pattern.permute.xlu0 0
      %3178 = vperm.xlu0 %3177, %v3128
      %v3179 = vpop.permute.xlu0 %3178
      %3182 = vset.pattern.permute.xlu0 0
      %3183 = vperm.xlu0 %3182, %v3129
      %v3184 = vpop.permute.xlu0 %3183
      %3187 = vset.pattern.permute.xlu0 0
      %3188 = vperm.xlu0 %3187, %v3130
      %v3189 = vpop.permute.xlu0 %3188
      %3192 = vset.pattern.permute.xlu0 0
      %3193 = vperm.xlu0 %3192, %v3131
      %v3194 = vpop.permute.xlu0 %3193
      %3197 = vset.pattern.permute.xlu0 0
      %3198 = vperm.xlu0 %3197, %v3132
      %v3199 = vpop.permute.xlu0 %3198
      %3202 = vset.pattern.permute.xlu0 0
      %3203 = vperm.xlu0 %3202, %v3133
      %v3204 = vpop.permute.xlu0 %3203
      %3207 = vset.pattern.permute.xlu0 0
      %3208 = vperm.xlu0 %3207, %v3134
      %v3209 = vpop.permute.xlu0 %3208
      %3212 = vset.pattern.permute.xlu0 0
      %3213 = vperm.xlu0 %3212, %v3135
      %v3214 = vpop.permute.xlu0 %3213
      %3217 = vset.pattern.permute.xlu0 0
      %3218 = vperm.xlu0 %3217, %v3136
      %v3219 = vpop.permute.xlu0 %3218
      %3222 = vset.pattern.permute.xlu0 0
      %3223 = vperm.xlu0 %3222, %v3137
      %v3224 = vpop.permute.xlu0 %3223
      %3227 = vset.pattern.permute.xlu0 0
      %3228 = vperm.xlu0 %3227, %v3138
      %v3229 = vpop.permute.xlu0 %3228
      %3232 = vset.pattern.permute.xlu0 0
      %3233 = vperm.xlu0 %3232, %v3139
      %v3234 = vpop.permute.xlu0 %3233
      %3237 = vset.pattern.permute.xlu0 0
      %3238 = vperm.xlu0 %3237, %v3140
      %v3239 = vpop.permute.xlu0 %3238
      %3242 = vset.pattern.permute.xlu0 0
      %3243 = vperm.xlu0 %3242, %v3141
      %v3244 = vpop.permute.xlu0 %3243
      %3247 = vset.pattern.permute.xlu0 0
      %3248 = vperm.xlu0 %3247, %v3142
      %v3249 = vpop.permute.xlu0 %3248
      %3252 = vset.pattern.permute.xlu0 0
      %3253 = vperm.xlu0 %3252, %v3143
      %v3254 = vpop.permute.xlu0 %3253
      %3257 = vset.pattern.permute.xlu0 0
      %3258 = vperm.xlu0 %3257, %v3144
      %v3259 = vpop.permute.xlu0 %3258
      %3262 = vset.pattern.permute.xlu0 0
      %3263 = vperm.xlu0 %3262, %v3145
      %v3264 = vpop.permute.xlu0 %3263
      %3267 = vset.pattern.permute.xlu0 0
      %3268 = vperm.xlu0 %3267, %v3146
      %v3269 = vpop.permute.xlu0 %3268
      %3272 = vset.pattern.permute.xlu0 0
      %3273 = vperm.xlu0 %3272, %v3147
      %v3274 = vpop.permute.xlu0 %3273
      %3277 = vset.pattern.permute.xlu0 0
      %3278 = vperm.xlu0 %3277, %v3148
      %v3279 = vpop.permute.xlu0 %3278
      %3282 = vset.pattern.permute.xlu0 0
      %3283 = vperm.xlu0 %3282, %v3149
      %v3284 = vpop.permute.xlu0 %3283
      %3287 = vset.pattern.permute.xlu0 0
      %3288 = vperm.xlu0 %3287, %v3150
      %v3289 = vpop.permute.xlu0 %3288
      %3292 = vset.pattern.permute.xlu0 0
      %3293 = vperm.xlu0 %3292, %v3151
      %v3294 = vpop.permute.xlu0 %3293
      %3297 = vset.pattern.permute.xlu0 0
      %3298 = vperm.xlu0 %3297, %v3152
      %v3299 = vpop.permute.xlu0 %3298
      %3302 = vset.pattern.permute.xlu0 0
      %3303 = vperm.xlu0 %3302, %v3153
      %v3304 = vpop.permute.xlu0 %3303
      %3307 = vset.pattern.permute.xlu0 0
      %3308 = vperm.xlu0 %3307, %v3154
      %v3309 = vpop.permute.xlu0 %3308
      %3312 = vset.pattern.permute.xlu0 0
      %3313 = vperm.xlu0 %3312, %v3155
      %v3314 = vpop.permute.xlu0 %3313
      %3317 = vset.pattern.permute.xlu0 0
      %3318 = vperm.xlu0 %3317, %v3156
      %v3319 = vpop.permute.xlu0 %3318
      %v3321 = vlaneseq
      %v3322 = vshrl.u32 %v3321, 7
      %v3323 = vsub.s32 0, %v3322
      %v3324 = vrot.slane %v878, %v3323
      %v3325 = vmul.f32 %v3164, %v3324
      %v3326 = vmul.f32 %v3169, %v3324
      %v3327 = vmul.f32 %v3174, %v3324
      %v3328 = vmul.f32 %v3179, %v3324
      %v3329 = vmul.f32 %v3184, %v3324
      %v3330 = vmul.f32 %v3189, %v3324
      %v3331 = vmul.f32 %v3194, %v3324
      %v3332 = vmul.f32 %v3199, %v3324
      %v3333 = vmul.f32 %v3204, %v3324
      %v3334 = vmul.f32 %v3209, %v3324
      %v3335 = vmul.f32 %v3214, %v3324
      %v3336 = vmul.f32 %v3219, %v3324
      %v3337 = vmul.f32 %v3224, %v3324
      %v3338 = vmul.f32 %v3229, %v3324
      %v3339 = vmul.f32 %v3234, %v3324
      %v3340 = vmul.f32 %v3239, %v3324
      %v3341 = vmul.f32 %v3244, %v3324
      %v3342 = vmul.f32 %v3249, %v3324
      %v3343 = vmul.f32 %v3254, %v3324
      %v3344 = vmul.f32 %v3259, %v3324
      %v3345 = vmul.f32 %v3264, %v3324
      %v3346 = vmul.f32 %v3269, %v3324
      %v3347 = vmul.f32 %v3274, %v3324
      %v3348 = vmul.f32 %v3279, %v3324
      %v3349 = vmul.f32 %v3284, %v3324
      %v3350 = vmul.f32 %v3289, %v3324
      %v3351 = vmul.f32 %v3294, %v3324
      %v3352 = vmul.f32 %v3299, %v3324
      %v3353 = vmul.f32 %v3304, %v3324
      %v3354 = vmul.f32 %v3309, %v3324
      %v3355 = vmul.f32 %v3314, %v3324
      %v3356 = vmul.f32 %v3319, %v3324
      %v3357 = vadd.f32 %v3093, %v3325
      %v3358 = vadd.f32 %v3094, %v3326
      %v3359 = vadd.f32 %v3095, %v3327
      %v3360 = vadd.f32 %v3096, %v3328
      %v3361 = vadd.f32 %v3097, %v3329
      %v3362 = vadd.f32 %v3098, %v3330
      %v3363 = vadd.f32 %v3099, %v3331
      %v3364 = vadd.f32 %v3100, %v3332
      %v3365 = vadd.f32 %v3101, %v3333
      %v3366 = vadd.f32 %v3102, %v3334
      %v3367 = vadd.f32 %v3103, %v3335
      %v3368 = vadd.f32 %v3104, %v3336
      %v3369 = vadd.f32 %v3105, %v3337
      %v3370 = vadd.f32 %v3106, %v3338
      %v3371 = vadd.f32 %v3107, %v3339
      %v3372 = vadd.f32 %v3108, %v3340
      %v3373 = vadd.f32 %v3109, %v3341
      %v3374 = vadd.f32 %v3110, %v3342
      %v3375 = vadd.f32 %v3111, %v3343
      %v3376 = vadd.f32 %v3112, %v3344
      %v3377 = vadd.f32 %v3113, %v3345
      %v3378 = vadd.f32 %v3114, %v3346
      %v3379 = vadd.f32 %v3115, %v3347
      %v3380 = vadd.f32 %v3116, %v3348
      %v3381 = vadd.f32 %v3117, %v3349
      %v3382 = vadd.f32 %v3118, %v3350
      %v3383 = vadd.f32 %v3119, %v3351
      %v3384 = vadd.f32 %v3120, %v3352
      %v3385 = vadd.f32 %v3121, %v3353
      %v3386 = vadd.f32 %v3122, %v3354
      %v3387 = vadd.f32 %v3123, %v3355
      %v3388 = vadd.f32 %v3124, %v3356
      %3389 = vset.pattern.permute.xlu0 1
      %3390 = vperm.xlu0 %3389, %v3125
      %v3391 = vpop.permute.xlu0 %3390
      %3393 = vset.pattern.permute.xlu0 1
      %3394 = vperm.xlu0 %3393, %v3126
      %v3395 = vpop.permute.xlu0 %3394
      %3397 = vset.pattern.permute.xlu0 1
      %3398 = vperm.xlu0 %3397, %v3127
      %v3399 = vpop.permute.xlu0 %3398
      %3401 = vset.pattern.permute.xlu0 1
      %3402 = vperm.xlu0 %3401, %v3128
      %v3403 = vpop.permute.xlu0 %3402
      %3405 = vset.pattern.permute.xlu0 1
      %3406 = vperm.xlu0 %3405, %v3129
      %v3407 = vpop.permute.xlu0 %3406
      %3409 = vset.pattern.permute.xlu0 1
      %3410 = vperm.xlu0 %3409, %v3130
      %v3411 = vpop.permute.xlu0 %3410
      %3413 = vset.pattern.permute.xlu0 1
      %3414 = vperm.xlu0 %3413, %v3131
      %v3415 = vpop.permute.xlu0 %3414
      %3417 = vset.pattern.permute.xlu0 1
      %3418 = vperm.xlu0 %3417, %v3132
      %v3419 = vpop.permute.xlu0 %3418
      %3421 = vset.pattern.permute.xlu0 1
      %3422 = vperm.xlu0 %3421, %v3133
      %v3423 = vpop.permute.xlu0 %3422
      %3425 = vset.pattern.permute.xlu0 1
      %3426 = vperm.xlu0 %3425, %v3134
      %v3427 = vpop.permute.xlu0 %3426
      %3429 = vset.pattern.permute.xlu0 1
      %3430 = vperm.xlu0 %3429, %v3135
      %v3431 = vpop.permute.xlu0 %3430
      %3433 = vset.pattern.permute.xlu0 1
      %3434 = vperm.xlu0 %3433, %v3136
      %v3435 = vpop.permute.xlu0 %3434
      %3437 = vset.pattern.permute.xlu0 1
      %3438 = vperm.xlu0 %3437, %v3137
      %v3439 = vpop.permute.xlu0 %3438
      %3441 = vset.pattern.permute.xlu0 1
      %3442 = vperm.xlu0 %3441, %v3138
      %v3443 = vpop.permute.xlu0 %3442
      %3445 = vset.pattern.permute.xlu0 1
      %3446 = vperm.xlu0 %3445, %v3139
      %v3447 = vpop.permute.xlu0 %3446
      %3449 = vset.pattern.permute.xlu0 1
      %3450 = vperm.xlu0 %3449, %v3140
      %v3451 = vpop.permute.xlu0 %3450
      %3453 = vset.pattern.permute.xlu0 1
      %3454 = vperm.xlu0 %3453, %v3141
      %v3455 = vpop.permute.xlu0 %3454
      %3457 = vset.pattern.permute.xlu0 1
      %3458 = vperm.xlu0 %3457, %v3142
      %v3459 = vpop.permute.xlu0 %3458
      %3461 = vset.pattern.permute.xlu0 1
      %3462 = vperm.xlu0 %3461, %v3143
      %v3463 = vpop.permute.xlu0 %3462
      %3465 = vset.pattern.permute.xlu0 1
      %3466 = vperm.xlu0 %3465, %v3144
      %v3467 = vpop.permute.xlu0 %3466
      %3469 = vset.pattern.permute.xlu0 1
      %3470 = vperm.xlu0 %3469, %v3145
      %v3471 = vpop.permute.xlu0 %3470
      %3473 = vset.pattern.permute.xlu0 1
      %3474 = vperm.xlu0 %3473, %v3146
      %v3475 = vpop.permute.xlu0 %3474
      %3477 = vset.pattern.permute.xlu0 1
      %3478 = vperm.xlu0 %3477, %v3147
      %v3479 = vpop.permute.xlu0 %3478
      %3481 = vset.pattern.permute.xlu0 1
      %3482 = vperm.xlu0 %3481, %v3148
      %v3483 = vpop.permute.xlu0 %3482
      %3485 = vset.pattern.permute.xlu0 1
      %3486 = vperm.xlu0 %3485, %v3149
      %v3487 = vpop.permute.xlu0 %3486
      %3489 = vset.pattern.permute.xlu0 1
      %3490 = vperm.xlu0 %3489, %v3150
      %v3491 = vpop.permute.xlu0 %3490
      %3493 = vset.pattern.permute.xlu0 1
      %3494 = vperm.xlu0 %3493, %v3151
      %v3495 = vpop.permute.xlu0 %3494
      %3497 = vset.pattern.permute.xlu0 1
      %3498 = vperm.xlu0 %3497, %v3152
      %v3499 = vpop.permute.xlu0 %3498
      %3501 = vset.pattern.permute.xlu0 1
      %3502 = vperm.xlu0 %3501, %v3153
      %v3503 = vpop.permute.xlu0 %3502
      %3505 = vset.pattern.permute.xlu0 1
      %3506 = vperm.xlu0 %3505, %v3154
      %v3507 = vpop.permute.xlu0 %3506
      %3509 = vset.pattern.permute.xlu0 1
      %3510 = vperm.xlu0 %3509, %v3155
      %v3511 = vpop.permute.xlu0 %3510
      %3513 = vset.pattern.permute.xlu0 1
      %3514 = vperm.xlu0 %3513, %v3156
      %v3515 = vpop.permute.xlu0 %3514
      %v3517 = vlaneseq
      %v3518 = vshrl.u32 %v3517, 7
      %v3519 = vsub.s32 1, %v3518
      %v3520 = vrot.slane %v878, %v3519
      %v3521 = vmul.f32 %v3391, %v3520
      %v3522 = vmul.f32 %v3395, %v3520
      %v3523 = vmul.f32 %v3399, %v3520
      %v3524 = vmul.f32 %v3403, %v3520
      %v3525 = vmul.f32 %v3407, %v3520
      %v3526 = vmul.f32 %v3411, %v3520
      %v3527 = vmul.f32 %v3415, %v3520
      %v3528 = vmul.f32 %v3419, %v3520
      %v3529 = vmul.f32 %v3423, %v3520
      %v3530 = vmul.f32 %v3427, %v3520
      %v3531 = vmul.f32 %v3431, %v3520
      %v3532 = vmul.f32 %v3435, %v3520
      %v3533 = vmul.f32 %v3439, %v3520
      %v3534 = vmul.f32 %v3443, %v3520
      %v3535 = vmul.f32 %v3447, %v3520
      %v3536 = vmul.f32 %v3451, %v3520
      %v3537 = vmul.f32 %v3455, %v3520
      %v3538 = vmul.f32 %v3459, %v3520
      %v3539 = vmul.f32 %v3463, %v3520
      %v3540 = vmul.f32 %v3467, %v3520
      %v3541 = vmul.f32 %v3471, %v3520
      %v3542 = vmul.f32 %v3475, %v3520
      %v3543 = vmul.f32 %v3479, %v3520
      %v3544 = vmul.f32 %v3483, %v3520
      %v3545 = vmul.f32 %v3487, %v3520
      %v3546 = vmul.f32 %v3491, %v3520
      %v3547 = vmul.f32 %v3495, %v3520
      %v3548 = vmul.f32 %v3499, %v3520
      %v3549 = vmul.f32 %v3503, %v3520
      %v3550 = vmul.f32 %v3507, %v3520
      %v3551 = vmul.f32 %v3511, %v3520
      %v3552 = vmul.f32 %v3515, %v3520
      %v3553 = vadd.f32 %v3357, %v3521
      %v3554 = vadd.f32 %v3358, %v3522
      %v3555 = vadd.f32 %v3359, %v3523
      %v3556 = vadd.f32 %v3360, %v3524
      %v3557 = vadd.f32 %v3361, %v3525
      %v3558 = vadd.f32 %v3362, %v3526
      %v3559 = vadd.f32 %v3363, %v3527
      %v3560 = vadd.f32 %v3364, %v3528
      %v3561 = vadd.f32 %v3365, %v3529
      %v3562 = vadd.f32 %v3366, %v3530
      %v3563 = vadd.f32 %v3367, %v3531
      %v3564 = vadd.f32 %v3368, %v3532
      %v3565 = vadd.f32 %v3369, %v3533
      %v3566 = vadd.f32 %v3370, %v3534
      %v3567 = vadd.f32 %v3371, %v3535
      %v3568 = vadd.f32 %v3372, %v3536
      %v3569 = vadd.f32 %v3373, %v3537
      %v3570 = vadd.f32 %v3374, %v3538
      %v3571 = vadd.f32 %v3375, %v3539
      %v3572 = vadd.f32 %v3376, %v3540
      %v3573 = vadd.f32 %v3377, %v3541
      %v3574 = vadd.f32 %v3378, %v3542
      %v3575 = vadd.f32 %v3379, %v3543
      %v3576 = vadd.f32 %v3380, %v3544
      %v3577 = vadd.f32 %v3381, %v3545
      %v3578 = vadd.f32 %v3382, %v3546
      %v3579 = vadd.f32 %v3383, %v3547
      %v3580 = vadd.f32 %v3384, %v3548
      %v3581 = vadd.f32 %v3385, %v3549
      %v3582 = vadd.f32 %v3386, %v3550
      %v3583 = vadd.f32 %v3387, %v3551
      %v3584 = vadd.f32 %v3388, %v3552
      %3585 = vset.pattern.permute.xlu0 2
      %3586 = vperm.xlu0 %3585, %v3125
      %v3587 = vpop.permute.xlu0 %3586
      %3589 = vset.pattern.permute.xlu0 2
      %3590 = vperm.xlu0 %3589, %v3126
      %v3591 = vpop.permute.xlu0 %3590
      %3593 = vset.pattern.permute.xlu0 2
      %3594 = vperm.xlu0 %3593, %v3127
      %v3595 = vpop.permute.xlu0 %3594
      %3597 = vset.pattern.permute.xlu0 2
      %3598 = vperm.xlu0 %3597, %v3128
      %v3599 = vpop.permute.xlu0 %3598
      %3601 = vset.pattern.permute.xlu0 2
      %3602 = vperm.xlu0 %3601, %v3129
      %v3603 = vpop.permute.xlu0 %3602
      %3605 = vset.pattern.permute.xlu0 2
      %3606 = vperm.xlu0 %3605, %v3130
      %v3607 = vpop.permute.xlu0 %3606
      %3609 = vset.pattern.permute.xlu0 2
      %3610 = vperm.xlu0 %3609, %v3131
      %v3611 = vpop.permute.xlu0 %3610
      %3613 = vset.pattern.permute.xlu0 2
      %3614 = vperm.xlu0 %3613, %v3132
      %v3615 = vpop.permute.xlu0 %3614
      %3617 = vset.pattern.permute.xlu0 2
      %3618 = vperm.xlu0 %3617, %v3133
      %v3619 = vpop.permute.xlu0 %3618
      %3621 = vset.pattern.permute.xlu0 2
      %3622 = vperm.xlu0 %3621, %v3134
      %v3623 = vpop.permute.xlu0 %3622
      %3625 = vset.pattern.permute.xlu0 2
      %3626 = vperm.xlu0 %3625, %v3135
      %v3627 = vpop.permute.xlu0 %3626
      %3629 = vset.pattern.permute.xlu0 2
      %3630 = vperm.xlu0 %3629, %v3136
      %v3631 = vpop.permute.xlu0 %3630
      %3633 = vset.pattern.permute.xlu0 2
      %3634 = vperm.xlu0 %3633, %v3137
      %v3635 = vpop.permute.xlu0 %3634
      %3637 = vset.pattern.permute.xlu0 2
      %3638 = vperm.xlu0 %3637, %v3138
      %v3639 = vpop.permute.xlu0 %3638
      %3641 = vset.pattern.permute.xlu0 2
      %3642 = vperm.xlu0 %3641, %v3139
      %v3643 = vpop.permute.xlu0 %3642
      %3645 = vset.pattern.permute.xlu0 2
      %3646 = vperm.xlu0 %3645, %v3140
      %v3647 = vpop.permute.xlu0 %3646
      %3649 = vset.pattern.permute.xlu0 2
      %3650 = vperm.xlu0 %3649, %v3141
      %v3651 = vpop.permute.xlu0 %3650
      %3653 = vset.pattern.permute.xlu0 2
      %3654 = vperm.xlu0 %3653, %v3142
      %v3655 = vpop.permute.xlu0 %3654
      %3657 = vset.pattern.permute.xlu0 2
      %3658 = vperm.xlu0 %3657, %v3143
      %v3659 = vpop.permute.xlu0 %3658
      %3661 = vset.pattern.permute.xlu0 2
      %3662 = vperm.xlu0 %3661, %v3144
      %v3663 = vpop.permute.xlu0 %3662
      %3665 = vset.pattern.permute.xlu0 2
      %3666 = vperm.xlu0 %3665, %v3145
      %v3667 = vpop.permute.xlu0 %3666
      %3669 = vset.pattern.permute.xlu0 2
      %3670 = vperm.xlu0 %3669, %v3146
      %v3671 = vpop.permute.xlu0 %3670
      %3673 = vset.pattern.permute.xlu0 2
      %3674 = vperm.xlu0 %3673, %v3147
      %v3675 = vpop.permute.xlu0 %3674
      %3677 = vset.pattern.permute.xlu0 2
      %3678 = vperm.xlu0 %3677, %v3148
      %v3679 = vpop.permute.xlu0 %3678
      %3681 = vset.pattern.permute.xlu0 2
      %3682 = vperm.xlu0 %3681, %v3149
      %v3683 = vpop.permute.xlu0 %3682
      %3685 = vset.pattern.permute.xlu0 2
      %3686 = vperm.xlu0 %3685, %v3150
      %v3687 = vpop.permute.xlu0 %3686
      %3689 = vset.pattern.permute.xlu0 2
      %3690 = vperm.xlu0 %3689, %v3151
      %v3691 = vpop.permute.xlu0 %3690
      %3693 = vset.pattern.permute.xlu0 2
      %3694 = vperm.xlu0 %3693, %v3152
      %v3695 = vpop.permute.xlu0 %3694
      %3697 = vset.pattern.permute.xlu0 2
      %3698 = vperm.xlu0 %3697, %v3153
      %v3699 = vpop.permute.xlu0 %3698
      %3701 = vset.pattern.permute.xlu0 2
      %3702 = vperm.xlu0 %3701, %v3154
      %v3703 = vpop.permute.xlu0 %3702
      %3705 = vset.pattern.permute.xlu0 2
      %3706 = vperm.xlu0 %3705, %v3155
      %v3707 = vpop.permute.xlu0 %3706
      %3709 = vset.pattern.permute.xlu0 2
      %3710 = vperm.xlu0 %3709, %v3156
      %v3711 = vpop.permute.xlu0 %3710
      %v3713 = vlaneseq
      %v3714 = vshrl.u32 %v3713, 7
      %v3715 = vsub.s32 2, %v3714
      %v3716 = vrot.slane %v878, %v3715
      %v3717 = vmul.f32 %v3587, %v3716
      %v3718 = vmul.f32 %v3591, %v3716
      %v3719 = vmul.f32 %v3595, %v3716
      %v3720 = vmul.f32 %v3599, %v3716
      %v3721 = vmul.f32 %v3603, %v3716
      %v3722 = vmul.f32 %v3607, %v3716
      %v3723 = vmul.f32 %v3611, %v3716
      %v3724 = vmul.f32 %v3615, %v3716
      %v3725 = vmul.f32 %v3619, %v3716
      %v3726 = vmul.f32 %v3623, %v3716
      %v3727 = vmul.f32 %v3627, %v3716
      %v3728 = vmul.f32 %v3631, %v3716
      %v3729 = vmul.f32 %v3635, %v3716
      %v3730 = vmul.f32 %v3639, %v3716
      %v3731 = vmul.f32 %v3643, %v3716
      %v3732 = vmul.f32 %v3647, %v3716
      %v3733 = vmul.f32 %v3651, %v3716
      %v3734 = vmul.f32 %v3655, %v3716
      %v3735 = vmul.f32 %v3659, %v3716
      %v3736 = vmul.f32 %v3663, %v3716
      %v3737 = vmul.f32 %v3667, %v3716
      %v3738 = vmul.f32 %v3671, %v3716
      %v3739 = vmul.f32 %v3675, %v3716
      %v3740 = vmul.f32 %v3679, %v3716
      %v3741 = vmul.f32 %v3683, %v3716
      %v3742 = vmul.f32 %v3687, %v3716
      %v3743 = vmul.f32 %v3691, %v3716
      %v3744 = vmul.f32 %v3695, %v3716
      %v3745 = vmul.f32 %v3699, %v3716
      %v3746 = vmul.f32 %v3703, %v3716
      %v3747 = vmul.f32 %v3707, %v3716
      %v3748 = vmul.f32 %v3711, %v3716
      %v3749 = vadd.f32 %v3553, %v3717
      %v3750 = vadd.f32 %v3554, %v3718
      %v3751 = vadd.f32 %v3555, %v3719
      %v3752 = vadd.f32 %v3556, %v3720
      %v3753 = vadd.f32 %v3557, %v3721
      %v3754 = vadd.f32 %v3558, %v3722
      %v3755 = vadd.f32 %v3559, %v3723
      %v3756 = vadd.f32 %v3560, %v3724
      %v3757 = vadd.f32 %v3561, %v3725
      %v3758 = vadd.f32 %v3562, %v3726
      %v3759 = vadd.f32 %v3563, %v3727
      %v3760 = vadd.f32 %v3564, %v3728
      %v3761 = vadd.f32 %v3565, %v3729
      %v3762 = vadd.f32 %v3566, %v3730
      %v3763 = vadd.f32 %v3567, %v3731
      %v3764 = vadd.f32 %v3568, %v3732
      %v3765 = vadd.f32 %v3569, %v3733
      %v3766 = vadd.f32 %v3570, %v3734
      %v3767 = vadd.f32 %v3571, %v3735
      %v3768 = vadd.f32 %v3572, %v3736
      %v3769 = vadd.f32 %v3573, %v3737
      %v3770 = vadd.f32 %v3574, %v3738
      %v3771 = vadd.f32 %v3575, %v3739
      %v3772 = vadd.f32 %v3576, %v3740
      %v3773 = vadd.f32 %v3577, %v3741
      %v3774 = vadd.f32 %v3578, %v3742
      %v3775 = vadd.f32 %v3579, %v3743
      %v3776 = vadd.f32 %v3580, %v3744
      %v3777 = vadd.f32 %v3581, %v3745
      %v3778 = vadd.f32 %v3582, %v3746
      %v3779 = vadd.f32 %v3583, %v3747
      %v3780 = vadd.f32 %v3584, %v3748
      %3782 = vset.pattern.permute.xlu0 0
      %3783 = vperm.xlu0 %3782, %v3157
      %v3784 = vpop.permute.xlu0 %3783
      %3787 = vset.pattern.permute.xlu0 0
      %3788 = vperm.xlu0 %3787, %v3158
      %v3789 = vpop.permute.xlu0 %3788
      %v3791 = vlaneseq
      %v3792 = vshrl.u32 %v3791, 7
      %v3793 = vsub.s32 0, %v3792
      %v3794 = vrot.slane %v881, %v3793
      %v3795 = vmul.f32 %v3174, %v3794
      %v3796 = vmul.f32 %v3179, %v3794
      %v3797 = vmul.f32 %v3184, %v3794
      %v3798 = vmul.f32 %v3189, %v3794
      %v3799 = vmul.f32 %v3194, %v3794
      %v3800 = vmul.f32 %v3199, %v3794
      %v3801 = vmul.f32 %v3204, %v3794
      %v3802 = vmul.f32 %v3209, %v3794
      %v3803 = vmul.f32 %v3214, %v3794
      %v3804 = vmul.f32 %v3219, %v3794
      %v3805 = vmul.f32 %v3224, %v3794
      %v3806 = vmul.f32 %v3229, %v3794
      %v3807 = vmul.f32 %v3234, %v3794
      %v3808 = vmul.f32 %v3239, %v3794
      %v3809 = vmul.f32 %v3244, %v3794
      %v3810 = vmul.f32 %v3249, %v3794
      %v3811 = vmul.f32 %v3254, %v3794
      %v3812 = vmul.f32 %v3259, %v3794
      %v3813 = vmul.f32 %v3264, %v3794
      %v3814 = vmul.f32 %v3269, %v3794
      %v3815 = vmul.f32 %v3274, %v3794
      %v3816 = vmul.f32 %v3279, %v3794
      %v3817 = vmul.f32 %v3284, %v3794
      %v3818 = vmul.f32 %v3289, %v3794
      %v3819 = vmul.f32 %v3294, %v3794
      %v3820 = vmul.f32 %v3299, %v3794
      %v3821 = vmul.f32 %v3304, %v3794
      %v3822 = vmul.f32 %v3309, %v3794
      %v3823 = vmul.f32 %v3314, %v3794
      %v3824 = vmul.f32 %v3319, %v3794
      %v3825 = vmul.f32 %v3784, %v3794
      %v3826 = vmul.f32 %v3789, %v3794
      %v3827 = vadd.f32 %v3749, %v3795
      %v3828 = vadd.f32 %v3750, %v3796
      %v3829 = vadd.f32 %v3751, %v3797
      %v3830 = vadd.f32 %v3752, %v3798
      %v3831 = vadd.f32 %v3753, %v3799
      %v3832 = vadd.f32 %v3754, %v3800
      %v3833 = vadd.f32 %v3755, %v3801
      %v3834 = vadd.f32 %v3756, %v3802
      %v3835 = vadd.f32 %v3757, %v3803
      %v3836 = vadd.f32 %v3758, %v3804
      %v3837 = vadd.f32 %v3759, %v3805
      %v3838 = vadd.f32 %v3760, %v3806
      %v3839 = vadd.f32 %v3761, %v3807
      %v3840 = vadd.f32 %v3762, %v3808
      %v3841 = vadd.f32 %v3763, %v3809
      %v3842 = vadd.f32 %v3764, %v3810
      %v3843 = vadd.f32 %v3765, %v3811
      %v3844 = vadd.f32 %v3766, %v3812
      %v3845 = vadd.f32 %v3767, %v3813
      %v3846 = vadd.f32 %v3768, %v3814
      %v3847 = vadd.f32 %v3769, %v3815
      %v3848 = vadd.f32 %v3770, %v3816
      %v3849 = vadd.f32 %v3771, %v3817
      %v3850 = vadd.f32 %v3772, %v3818
      %v3851 = vadd.f32 %v3773, %v3819
      %v3852 = vadd.f32 %v3774, %v3820
      %v3853 = vadd.f32 %v3775, %v3821
      %v3854 = vadd.f32 %v3776, %v3822
      %v3855 = vadd.f32 %v3777, %v3823
      %v3856 = vadd.f32 %v3778, %v3824
      %v3857 = vadd.f32 %v3779, %v3825
      %v3858 = vadd.f32 %v3780, %v3826
      %3859 = vset.pattern.permute.xlu0 1
      %3860 = vperm.xlu0 %3859, %v3157
      %v3861 = vpop.permute.xlu0 %3860
      %3863 = vset.pattern.permute.xlu0 1
      %3864 = vperm.xlu0 %3863, %v3158
      %v3865 = vpop.permute.xlu0 %3864
      %v3867 = vlaneseq
      %v3868 = vshrl.u32 %v3867, 7
      %v3869 = vsub.s32 1, %v3868
      %v3870 = vrot.slane %v881, %v3869
      %v3871 = vmul.f32 %v3399, %v3870
      %v3872 = vmul.f32 %v3403, %v3870
      %v3873 = vmul.f32 %v3407, %v3870
      %v3874 = vmul.f32 %v3411, %v3870
      %v3875 = vmul.f32 %v3415, %v3870
      %v3876 = vmul.f32 %v3419, %v3870
      %v3877 = vmul.f32 %v3423, %v3870
      %v3878 = vmul.f32 %v3427, %v3870
      %v3879 = vmul.f32 %v3431, %v3870
      %v3880 = vmul.f32 %v3435, %v3870
      %v3881 = vmul.f32 %v3439, %v3870
      %v3882 = vmul.f32 %v3443, %v3870
      %v3883 = vmul.f32 %v3447, %v3870
      %v3884 = vmul.f32 %v3451, %v3870
      %v3885 = vmul.f32 %v3455, %v3870
      %v3886 = vmul.f32 %v3459, %v3870
      %v3887 = vmul.f32 %v3463, %v3870
      %v3888 = vmul.f32 %v3467, %v3870
      %v3889 = vmul.f32 %v3471, %v3870
      %v3890 = vmul.f32 %v3475, %v3870
      %v3891 = vmul.f32 %v3479, %v3870
      %v3892 = vmul.f32 %v3483, %v3870
      %v3893 = vmul.f32 %v3487, %v3870
      %v3894 = vmul.f32 %v3491, %v3870
      %v3895 = vmul.f32 %v3495, %v3870
      %v3896 = vmul.f32 %v3499, %v3870
      %v3897 = vmul.f32 %v3503, %v3870
      %v3898 = vmul.f32 %v3507, %v3870
      %v3899 = vmul.f32 %v3511, %v3870
      %v3900 = vmul.f32 %v3515, %v3870
      %v3901 = vmul.f32 %v3861, %v3870
      %v3902 = vmul.f32 %v3865, %v3870
      %v3903 = vadd.f32 %v3827, %v3871
      %v3904 = vadd.f32 %v3828, %v3872
      %v3905 = vadd.f32 %v3829, %v3873
      %v3906 = vadd.f32 %v3830, %v3874
      %v3907 = vadd.f32 %v3831, %v3875
      %v3908 = vadd.f32 %v3832, %v3876
      %v3909 = vadd.f32 %v3833, %v3877
      %v3910 = vadd.f32 %v3834, %v3878
      %v3911 = vadd.f32 %v3835, %v3879
      %v3912 = vadd.f32 %v3836, %v3880
      %v3913 = vadd.f32 %v3837, %v3881
      %v3914 = vadd.f32 %v3838, %v3882
      %v3915 = vadd.f32 %v3839, %v3883
      %v3916 = vadd.f32 %v3840, %v3884
      %v3917 = vadd.f32 %v3841, %v3885
      %v3918 = vadd.f32 %v3842, %v3886
      %v3919 = vadd.f32 %v3843, %v3887
      %v3920 = vadd.f32 %v3844, %v3888
      %v3921 = vadd.f32 %v3845, %v3889
      %v3922 = vadd.f32 %v3846, %v3890
      %v3923 = vadd.f32 %v3847, %v3891
      %v3924 = vadd.f32 %v3848, %v3892
      %v3925 = vadd.f32 %v3849, %v3893
      %v3926 = vadd.f32 %v3850, %v3894
      %v3927 = vadd.f32 %v3851, %v3895
      %v3928 = vadd.f32 %v3852, %v3896
      %v3929 = vadd.f32 %v3853, %v3897
      %v3930 = vadd.f32 %v3854, %v3898
      %v3931 = vadd.f32 %v3855, %v3899
      %v3932 = vadd.f32 %v3856, %v3900
      %v3933 = vadd.f32 %v3857, %v3901
      %v3934 = vadd.f32 %v3858, %v3902
      %3935 = vset.pattern.permute.xlu0 2
      %3936 = vperm.xlu0 %3935, %v3157
      %v3937 = vpop.permute.xlu0 %3936
      %3939 = vset.pattern.permute.xlu0 2
      %3940 = vperm.xlu0 %3939, %v3158
      %v3941 = vpop.permute.xlu0 %3940
      %v3943 = vlaneseq
      %v3944 = vshrl.u32 %v3943, 7
      %v3945 = vsub.s32 2, %v3944
      %v3946 = vrot.slane %v881, %v3945
      %v3947 = vmul.f32 %v3595, %v3946
      %v3948 = vmul.f32 %v3599, %v3946
      %v3949 = vmul.f32 %v3603, %v3946
      %v3950 = vmul.f32 %v3607, %v3946
      %v3951 = vmul.f32 %v3611, %v3946
      %v3952 = vmul.f32 %v3615, %v3946
      %v3953 = vmul.f32 %v3619, %v3946
      %v3954 = vmul.f32 %v3623, %v3946
      %v3955 = vmul.f32 %v3627, %v3946
      %v3956 = vmul.f32 %v3631, %v3946
      %v3957 = vmul.f32 %v3635, %v3946
      %v3958 = vmul.f32 %v3639, %v3946
      %v3959 = vmul.f32 %v3643, %v3946
      %v3960 = vmul.f32 %v3647, %v3946
      %v3961 = vmul.f32 %v3651, %v3946
      %v3962 = vmul.f32 %v3655, %v3946
      %v3963 = vmul.f32 %v3659, %v3946
      %v3964 = vmul.f32 %v3663, %v3946
      %v3965 = vmul.f32 %v3667, %v3946
      %v3966 = vmul.f32 %v3671, %v3946
      %v3967 = vmul.f32 %v3675, %v3946
      %v3968 = vmul.f32 %v3679, %v3946
      %v3969 = vmul.f32 %v3683, %v3946
      %v3970 = vmul.f32 %v3687, %v3946
      %v3971 = vmul.f32 %v3691, %v3946
      %v3972 = vmul.f32 %v3695, %v3946
      %v3973 = vmul.f32 %v3699, %v3946
      %v3974 = vmul.f32 %v3703, %v3946
      %v3975 = vmul.f32 %v3707, %v3946
      %v3976 = vmul.f32 %v3711, %v3946
      %v3977 = vmul.f32 %v3937, %v3946
      %v3978 = vmul.f32 %v3941, %v3946
      %v3979 = vadd.f32 %v3903, %v3947
      %v3980 = vadd.f32 %v3904, %v3948
      %v3981 = vadd.f32 %v3905, %v3949
      %v3982 = vadd.f32 %v3906, %v3950
      %v3983 = vadd.f32 %v3907, %v3951
      %v3984 = vadd.f32 %v3908, %v3952
      %v3985 = vadd.f32 %v3909, %v3953
      %v3986 = vadd.f32 %v3910, %v3954
      %v3987 = vadd.f32 %v3911, %v3955
      %v3988 = vadd.f32 %v3912, %v3956
      %v3989 = vadd.f32 %v3913, %v3957
      %v3990 = vadd.f32 %v3914, %v3958
      %v3991 = vadd.f32 %v3915, %v3959
      %v3992 = vadd.f32 %v3916, %v3960
      %v3993 = vadd.f32 %v3917, %v3961
      %v3994 = vadd.f32 %v3918, %v3962
      %v3995 = vadd.f32 %v3919, %v3963
      %v3996 = vadd.f32 %v3920, %v3964
      %v3997 = vadd.f32 %v3921, %v3965
      %v3998 = vadd.f32 %v3922, %v3966
      %v3999 = vadd.f32 %v3923, %v3967
      %v4000 = vadd.f32 %v3924, %v3968
      %v4001 = vadd.f32 %v3925, %v3969
      %v4002 = vadd.f32 %v3926, %v3970
      %v4003 = vadd.f32 %v3927, %v3971
      %v4004 = vadd.f32 %v3928, %v3972
      %v4005 = vadd.f32 %v3929, %v3973
      %v4006 = vadd.f32 %v3930, %v3974
      %v4007 = vadd.f32 %v3931, %v3975
      %v4008 = vadd.f32 %v3932, %v3976
      %v4009 = vadd.f32 %v3933, %v3977
      %v4010 = vadd.f32 %v3934, %v3978
      %4012 = vset.pattern.permute.xlu0 0
      %4013 = vperm.xlu0 %4012, %v3159
      %v4014 = vpop.permute.xlu0 %4013
      %4017 = vset.pattern.permute.xlu0 0
      %4018 = vperm.xlu0 %4017, %v3160
      %v4019 = vpop.permute.xlu0 %4018
      %v4021 = vlaneseq
      %v4022 = vshrl.u32 %v4021, 7
      %v4023 = vsub.s32 0, %v4022
      %v4024 = vrot.slane %v884, %v4023
      %v4025 = vmul.f32 %v3184, %v4024
      %v4026 = vmul.f32 %v3189, %v4024
      %v4027 = vmul.f32 %v3194, %v4024
      %v4028 = vmul.f32 %v3199, %v4024
      %v4029 = vmul.f32 %v3204, %v4024
      %v4030 = vmul.f32 %v3209, %v4024
      %v4031 = vmul.f32 %v3214, %v4024
      %v4032 = vmul.f32 %v3219, %v4024
      %v4033 = vmul.f32 %v3224, %v4024
      %v4034 = vmul.f32 %v3229, %v4024
      %v4035 = vmul.f32 %v3234, %v4024
      %v4036 = vmul.f32 %v3239, %v4024
      %v4037 = vmul.f32 %v3244, %v4024
      %v4038 = vmul.f32 %v3249, %v4024
      %v4039 = vmul.f32 %v3254, %v4024
      %v4040 = vmul.f32 %v3259, %v4024
      %v4041 = vmul.f32 %v3264, %v4024
      %v4042 = vmul.f32 %v3269, %v4024
      %v4043 = vmul.f32 %v3274, %v4024
      %v4044 = vmul.f32 %v3279, %v4024
      %v4045 = vmul.f32 %v3284, %v4024
      %v4046 = vmul.f32 %v3289, %v4024
      %v4047 = vmul.f32 %v3294, %v4024
      %v4048 = vmul.f32 %v3299, %v4024
      %v4049 = vmul.f32 %v3304, %v4024
      %v4050 = vmul.f32 %v3309, %v4024
      %v4051 = vmul.f32 %v3314, %v4024
      %v4052 = vmul.f32 %v3319, %v4024
      %v4053 = vmul.f32 %v3784, %v4024
      %v4054 = vmul.f32 %v3789, %v4024
      %v4055 = vmul.f32 %v4014, %v4024
      %v4056 = vmul.f32 %v4019, %v4024
      %v4057 = vadd.f32 %v3979, %v4025
      %v4058 = vadd.f32 %v3980, %v4026
      %v4059 = vadd.f32 %v3981, %v4027
      %v4060 = vadd.f32 %v3982, %v4028
      %v4061 = vadd.f32 %v3983, %v4029
      %v4062 = vadd.f32 %v3984, %v4030
      %v4063 = vadd.f32 %v3985, %v4031
      %v4064 = vadd.f32 %v3986, %v4032
      %v4065 = vadd.f32 %v3987, %v4033
      %v4066 = vadd.f32 %v3988, %v4034
      %v4067 = vadd.f32 %v3989, %v4035
      %v4068 = vadd.f32 %v3990, %v4036
      %v4069 = vadd.f32 %v3991, %v4037
      %v4070 = vadd.f32 %v3992, %v4038
      %v4071 = vadd.f32 %v3993, %v4039
      %v4072 = vadd.f32 %v3994, %v4040
      %v4073 = vadd.f32 %v3995, %v4041
      %v4074 = vadd.f32 %v3996, %v4042
      %v4075 = vadd.f32 %v3997, %v4043
      %v4076 = vadd.f32 %v3998, %v4044
      %v4077 = vadd.f32 %v3999, %v4045
      %v4078 = vadd.f32 %v4000, %v4046
      %v4079 = vadd.f32 %v4001, %v4047
      %v4080 = vadd.f32 %v4002, %v4048
      %v4081 = vadd.f32 %v4003, %v4049
      %v4082 = vadd.f32 %v4004, %v4050
      %v4083 = vadd.f32 %v4005, %v4051
      %v4084 = vadd.f32 %v4006, %v4052
      %v4085 = vadd.f32 %v4007, %v4053
      %v4086 = vadd.f32 %v4008, %v4054
      %v4087 = vadd.f32 %v4009, %v4055
      %v4088 = vadd.f32 %v4010, %v4056
      %4089 = vset.pattern.permute.xlu0 1
      %4090 = vperm.xlu0 %4089, %v3159
      %v4091 = vpop.permute.xlu0 %4090
      %4093 = vset.pattern.permute.xlu0 1
      %4094 = vperm.xlu0 %4093, %v3160
      %v4095 = vpop.permute.xlu0 %4094
      %v4097 = vlaneseq
      %v4098 = vshrl.u32 %v4097, 7
      %v4099 = vsub.s32 1, %v4098
      %v4100 = vrot.slane %v884, %v4099
      %v4101 = vmul.f32 %v3407, %v4100
      %v4102 = vmul.f32 %v3411, %v4100
      %v4103 = vmul.f32 %v3415, %v4100
      %v4104 = vmul.f32 %v3419, %v4100
      %v4105 = vmul.f32 %v3423, %v4100
      %v4106 = vmul.f32 %v3427, %v4100
      %v4107 = vmul.f32 %v3431, %v4100
      %v4108 = vmul.f32 %v3435, %v4100
      %v4109 = vmul.f32 %v3439, %v4100
      %v4110 = vmul.f32 %v3443, %v4100
      %v4111 = vmul.f32 %v3447, %v4100
      %v4112 = vmul.f32 %v3451, %v4100
      %v4113 = vmul.f32 %v3455, %v4100
      %v4114 = vmul.f32 %v3459, %v4100
      %v4115 = vmul.f32 %v3463, %v4100
      %v4116 = vmul.f32 %v3467, %v4100
      %v4117 = vmul.f32 %v3471, %v4100
      %v4118 = vmul.f32 %v3475, %v4100
      %v4119 = vmul.f32 %v3479, %v4100
      %v4120 = vmul.f32 %v3483, %v4100
      %v4121 = vmul.f32 %v3487, %v4100
      %v4122 = vmul.f32 %v3491, %v4100
      %v4123 = vmul.f32 %v3495, %v4100
      %v4124 = vmul.f32 %v3499, %v4100
      %v4125 = vmul.f32 %v3503, %v4100
      %v4126 = vmul.f32 %v3507, %v4100
      %v4127 = vmul.f32 %v3511, %v4100
      %v4128 = vmul.f32 %v3515, %v4100
      %v4129 = vmul.f32 %v3861, %v4100
      %v4130 = vmul.f32 %v3865, %v4100
      %v4131 = vmul.f32 %v4091, %v4100
      %v4132 = vmul.f32 %v4095, %v4100
      %v4133 = vadd.f32 %v4057, %v4101
      %v4134 = vadd.f32 %v4058, %v4102
      %v4135 = vadd.f32 %v4059, %v4103
      %v4136 = vadd.f32 %v4060, %v4104
      %v4137 = vadd.f32 %v4061, %v4105
      %v4138 = vadd.f32 %v4062, %v4106
      %v4139 = vadd.f32 %v4063, %v4107
      %v4140 = vadd.f32 %v4064, %v4108
      %v4141 = vadd.f32 %v4065, %v4109
      %v4142 = vadd.f32 %v4066, %v4110
      %v4143 = vadd.f32 %v4067, %v4111
      %v4144 = vadd.f32 %v4068, %v4112
      %v4145 = vadd.f32 %v4069, %v4113
      %v4146 = vadd.f32 %v4070, %v4114
      %v4147 = vadd.f32 %v4071, %v4115
      %v4148 = vadd.f32 %v4072, %v4116
      %v4149 = vadd.f32 %v4073, %v4117
      %v4150 = vadd.f32 %v4074, %v4118
      %v4151 = vadd.f32 %v4075, %v4119
      %v4152 = vadd.f32 %v4076, %v4120
      %v4153 = vadd.f32 %v4077, %v4121
      %v4154 = vadd.f32 %v4078, %v4122
      %v4155 = vadd.f32 %v4079, %v4123
      %v4156 = vadd.f32 %v4080, %v4124
      %v4157 = vadd.f32 %v4081, %v4125
      %v4158 = vadd.f32 %v4082, %v4126
      %v4159 = vadd.f32 %v4083, %v4127
      %v4160 = vadd.f32 %v4084, %v4128
      %v4161 = vadd.f32 %v4085, %v4129
      %v4162 = vadd.f32 %v4086, %v4130
      %v4163 = vadd.f32 %v4087, %v4131
      %v4164 = vadd.f32 %v4088, %v4132
      %4165 = vset.pattern.permute.xlu0 2
      %4166 = vperm.xlu0 %4165, %v3159
      %v4167 = vpop.permute.xlu0 %4166
      %4169 = vset.pattern.permute.xlu0 2
      %4170 = vperm.xlu0 %4169, %v3160
      %v4171 = vpop.permute.xlu0 %4170
      %v4173 = vlaneseq
      %v4174 = vshrl.u32 %v4173, 7
      %v4175 = vsub.s32 2, %v4174
      %v4176 = vrot.slane %v884, %v4175
      %v4177 = vmul.f32 %v3603, %v4176
      %v4178 = vmul.f32 %v3607, %v4176
      %v4179 = vmul.f32 %v3611, %v4176
      %v4180 = vmul.f32 %v3615, %v4176
      %v4181 = vmul.f32 %v3619, %v4176
      %v4182 = vmul.f32 %v3623, %v4176
      %v4183 = vmul.f32 %v3627, %v4176
      %v4184 = vmul.f32 %v3631, %v4176
      %v4185 = vmul.f32 %v3635, %v4176
      %v4186 = vmul.f32 %v3639, %v4176
      %v4187 = vmul.f32 %v3643, %v4176
      %v4188 = vmul.f32 %v3647, %v4176
      %v4189 = vmul.f32 %v3651, %v4176
      %v4190 = vmul.f32 %v3655, %v4176
      %v4191 = vmul.f32 %v3659, %v4176
      %v4192 = vmul.f32 %v3663, %v4176
      %v4193 = vmul.f32 %v3667, %v4176
      %v4194 = vmul.f32 %v3671, %v4176
      %v4195 = vmul.f32 %v3675, %v4176
      %v4196 = vmul.f32 %v3679, %v4176
      %v4197 = vmul.f32 %v3683, %v4176
      %v4198 = vmul.f32 %v3687, %v4176
      %v4199 = vmul.f32 %v3691, %v4176
      %v4200 = vmul.f32 %v3695, %v4176
      %v4201 = vmul.f32 %v3699, %v4176
      %v4202 = vmul.f32 %v3703, %v4176
      %v4203 = vmul.f32 %v3707, %v4176
      %v4204 = vmul.f32 %v3711, %v4176
      %v4205 = vmul.f32 %v3937, %v4176
      %v4206 = vmul.f32 %v3941, %v4176
      %v4207 = vmul.f32 %v4167, %v4176
      %v4208 = vmul.f32 %v4171, %v4176
      %v4209 = vadd.f32 %v4133, %v4177
      %v4210 = vadd.f32 %v4134, %v4178
      %v4211 = vadd.f32 %v4135, %v4179
      %v4212 = vadd.f32 %v4136, %v4180
      %v4213 = vadd.f32 %v4137, %v4181
      %v4214 = vadd.f32 %v4138, %v4182
      %v4215 = vadd.f32 %v4139, %v4183
      %v4216 = vadd.f32 %v4140, %v4184
      %v4217 = vadd.f32 %v4141, %v4185
      %v4218 = vadd.f32 %v4142, %v4186
      %v4219 = vadd.f32 %v4143, %v4187
      %v4220 = vadd.f32 %v4144, %v4188
      %v4221 = vadd.f32 %v4145, %v4189
      %v4222 = vadd.f32 %v4146, %v4190
      %v4223 = vadd.f32 %v4147, %v4191
      %v4224 = vadd.f32 %v4148, %v4192
      %v4225 = vadd.f32 %v4149, %v4193
      %v4226 = vadd.f32 %v4150, %v4194
      %v4227 = vadd.f32 %v4151, %v4195
      %v4228 = vadd.f32 %v4152, %v4196
      %v4229 = vadd.f32 %v4153, %v4197
      %v4230 = vadd.f32 %v4154, %v4198
      %v4231 = vadd.f32 %v4155, %v4199
      %v4232 = vadd.f32 %v4156, %v4200
      %v4233 = vadd.f32 %v4157, %v4201
      %v4234 = vadd.f32 %v4158, %v4202
      %v4235 = vadd.f32 %v4159, %v4203
      %v4236 = vadd.f32 %v4160, %v4204
      %v4237 = vadd.f32 %v4161, %v4205
      %v4238 = vadd.f32 %v4162, %v4206
      %v4239 = vadd.f32 %v4163, %v4207
      %v4240 = vadd.f32 %v4164, %v4208
      %v4241 = vmax.f32 %v4209, 0.0
      %v4242 = vmax.f32 %v4210, 0.0
      %v4243 = vmax.f32 %v4211, 0.0
      %v4244 = vmax.f32 %v4212, 0.0
      %v4245 = vmax.f32 %v4213, 0.0
      %v4246 = vmax.f32 %v4214, 0.0
      %v4247 = vmax.f32 %v4215, 0.0
      %v4248 = vmax.f32 %v4216, 0.0
      %v4249 = vmax.f32 %v4217, 0.0
      %v4250 = vmax.f32 %v4218, 0.0
      %v4251 = vmax.f32 %v4219, 0.0
      %v4252 = vmax.f32 %v4220, 0.0
      %v4253 = vmax.f32 %v4221, 0.0
      %v4254 = vmax.f32 %v4222, 0.0
      %v4255 = vmax.f32 %v4223, 0.0
      %v4256 = vmax.f32 %v4224, 0.0
      %v4257 = vmax.f32 %v4225, 0.0
      %v4258 = vmax.f32 %v4226, 0.0
      %v4259 = vmax.f32 %v4227, 0.0
      %v4260 = vmax.f32 %v4228, 0.0
      %v4261 = vmax.f32 %v4229, 0.0
      %v4262 = vmax.f32 %v4230, 0.0
      %v4263 = vmax.f32 %v4231, 0.0
      %v4264 = vmax.f32 %v4232, 0.0
      %v4265 = vmax.f32 %v4233, 0.0
      %v4266 = vmax.f32 %v4234, 0.0
      %v4267 = vmax.f32 %v4235, 0.0
      %v4268 = vmax.f32 %v4236, 0.0
      %v4269 = vmax.f32 %v4237, 0.0
      %v4270 = vmax.f32 %v4238, 0.0
      %v4271 = vmax.f32 %v4239, 0.0
      %v4272 = vmax.f32 %v4240, 0.0
      %vm4273 = vcmask 261120
      %4274 = vst.msk [vmem:[%s338] sm:$0xff] %vm4273, %v4241
      %4275 = vst.msk [vmem:[%s338 + $0x8] sm:$0xff] %vm4273, %v4242
      %4276 = vst.msk [vmem:[%s338 + $0x10] sm:$0xff] %vm4273, %v4243
      %4277 = vst.msk [vmem:[%s338 + $0x18] sm:$0xff] %vm4273, %v4244
      %4278 = vst.msk [vmem:[%s338 + $0x20] sm:$0xff] %vm4273, %v4245
      %4279 = vst.msk [vmem:[%s338 + $0x28] sm:$0xff] %vm4273, %v4246
      %4280 = vst.msk [vmem:[%s338 + $0x30] sm:$0xff] %vm4273, %v4247
      %4281 = vst.msk [vmem:[%s338 + $0x38] sm:$0xff] %vm4273, %v4248
      %4282 = vst.msk [vmem:[%s338 + $0x40] sm:$0xff] %vm4273, %v4249
      %4283 = vst.msk [vmem:[%s338 + $0x48] sm:$0xff] %vm4273, %v4250
      %4284 = vst.msk [vmem:[%s338 + $0x50] sm:$0xff] %vm4273, %v4251
      %4285 = vst.msk [vmem:[%s338 + $0x58] sm:$0xff] %vm4273, %v4252
      %4286 = vst.msk [vmem:[%s338 + $0x60] sm:$0xff] %vm4273, %v4253
      %4287 = vst.msk [vmem:[%s338 + $0x68] sm:$0xff] %vm4273, %v4254
      %4288 = vst.msk [vmem:[%s338 + $0x70] sm:$0xff] %vm4273, %v4255
      %4289 = vst.msk [vmem:[%s338 + $0x78] sm:$0xff] %vm4273, %v4256
      %4290 = vst.msk [vmem:[%s338 + $0x80] sm:$0xff] %vm4273, %v4257
      %4291 = vst.msk [vmem:[%s338 + $0x88] sm:$0xff] %vm4273, %v4258
      %4292 = vst.msk [vmem:[%s338 + $0x90] sm:$0xff] %vm4273, %v4259
      %4293 = vst.msk [vmem:[%s338 + $0x98] sm:$0xff] %vm4273, %v4260
      %4294 = vst.msk [vmem:[%s338 + $0xa0] sm:$0xff] %vm4273, %v4261
      %4295 = vst.msk [vmem:[%s338 + $0xa8] sm:$0xff] %vm4273, %v4262
      %4296 = vst.msk [vmem:[%s338 + $0xb0] sm:$0xff] %vm4273, %v4263
      %4297 = vst.msk [vmem:[%s338 + $0xb8] sm:$0xff] %vm4273, %v4264
      %4298 = vst.msk [vmem:[%s338 + $0xc0] sm:$0xff] %vm4273, %v4265
      %4299 = vst.msk [vmem:[%s338 + $0xc8] sm:$0xff] %vm4273, %v4266
      %4300 = vst.msk [vmem:[%s338 + $0xd0] sm:$0xff] %vm4273, %v4267
      %4301 = vst.msk [vmem:[%s338 + $0xd8] sm:$0xff] %vm4273, %v4268
      %4302 = vst.msk [vmem:[%s338 + $0xe0] sm:$0xff] %vm4273, %v4269
      %4303 = vst.msk [vmem:[%s338 + $0xe8] sm:$0xff] %vm4273, %v4270
      %4304 = vst.msk [vmem:[%s338 + $0xf0] sm:$0xff] %vm4273, %v4271
      %4305 = vst.msk [vmem:[%s338 + $0xf8] sm:$0xff] %vm4273, %v4272
      %p4306 = scmp.lt.s32.totalorder %s18, 1
      %s4307 = scalar_select %p4306, %s18, 1
      %s4308 = smul.addr %s4307, 32
      %s4309 = smul.addr %s4308, 8
      %s4310 = scalar_lea.vmem %s7, %s4309
      // Predicated region
      $region49: #{_lambda_.11} parent=47 // pred_check
        %p4311 = pneg %p203
      $region50: #{_lambda_.11} parent=47 // pred_check_branch
        %4313 = sbr.rel (%p4311) target = $region52
      $region51: #{_lambda_.11} parent=47 // pred_region
        _
      $region52: #{_lambda_.11} parent=47 // pred_fallthru
        _
    $region48: #{_lambda_.11} parent=5 // pred_fallthru
      _
    %p4314 = scmp.le.s32.totalorder 2, %s13
    // Predicated region
    $region53: #{_lambda_.11} parent=5 // pred_check
      %p4315 = pneg %p4314
    $region54: #{_lambda_.11} parent=5 // pred_check_branch
      %4317 = sbr.rel (%p4315) target = $region56
    $region55: #{_lambda_.11} parent=5 // pred_region
      %s4318 = ssub.s32 %s13, 2
      // Predicated region
      $region57: #{_lambda_.11} parent=55 // pred_check
        %p4319 = pneg %p209
      $region58: #{_lambda_.11} parent=55 // pred_check_branch
        %4321 = sbr.rel (%p4319) target = $region60
      $region59: #{_lambda_.11} parent=55 // pred_region
        %p4322 = scmp.lt.s32.totalorder %s19, 1
        %s4323 = scalar_select %p4322, %s19, 1
        %s4324 = smul.addr %s4323, 32
        %s4325 = smul.addr %s4324, 8
        %s4326 = scalar_lea.vmem %s7, %s4325
      $region60: #{_lambda_.11} parent=55 // pred_fallthru
        _
    $region56: #{_lambda_.11} parent=5 // pred_fallthru
      _
  $region6: #{_lambda_.11} parent=0 // loop_footer
    %s17 = sadd.s32 1, %s13
  $region7: #{_lambda_.11} parent=0 // loop_footer_branch
    %12 = sbr.rel target = $region3
  $region8: #{_lambda_.11} parent=0 // loop_exit
    _

// kernel: _lambda_.21
$region0: #{_lambda_.21}
  #allocation0 [shape = 'u32[]', space=smem, size = 0x4, offset = 0x4, fixed_abs, tag = 'smem constant byte address 0x4 - core index']
  #allocation1 [shape = 'u32[144,128]{1,0:T(1,128)}', space=vmem, size = 0x12000, scoped, tag = 'internal scratch']
  #allocation2 [shape = 'f32[1,1,256]{2,1,0:T(1,128)}', space=vmem, size = 0x400, scoped, tag = 'scratch operand']
  %s0 = inlined_call_operand.vmem [shape: f32[2,1,1,256], index: 0, kind: input, shape index: {}]
  %s1 = inlined_call_operand.vmem [shape: bf16[256,256], index: 1, kind: input, shape index: {}]
  %s2 = inlined_call_operand.vmem [shape: f32[1,256], index: 2, kind: input, shape index: {}]
  %s3 = inlined_call_operand.vmem [shape: f32[9,256], index: 3, kind: input, shape index: {}]
  %s4 = inlined_call_operand.vmem [shape: f32[1,256], index: 4, kind: input, shape index: {}]
  %s5 = inlined_call_operand.hbm [shape: f32[2,1,1,256], index: 5, kind: output, shape index: {}]
  %s6 = sld [smem:[#allocation0]]
  $region53: #{_lambda_.21} parent=0
    _
  %s8 = ssub.s32 1, %s6
  %s9 = scalar_select 0, %s8, %s6
  $region1: #{_lambda_.21} parent=0
    #allocation3 [shape = 'u8[2048]{0}', space=vmem, size = 0x800, scoped, tag = 'output window, operand 0']
    #allocation4 [shape = 's32[2]{0}', space=sflag, size = 0x8, scoped, tag = 'scoped memory for _lambda_.21']
    %10 = vsyncpa [#allocation4], 0
    %s11 = scalar_lea.sflag [#allocation4], 1
    %12 = vsyncpa %s11, 0
    loop: start=0, step=1, limit=4
    $region2: #{_lambda_.21} parent=1 // loop_pre_header
      _
    $region3: #{_lambda_.21} parent=1 // loop_header
      %s14 = sphi 0, %s18
      %p15 = scmp.ge.s32.totalorder %s14, 4
      %s24 = sphi 0, %s26
      %s27 = sphi 0, %s24
      %s28 = sphi 0, %s27
      %s44 = sphi 0, %s28
      %s48 = sphi 0, %s48
      %s50 = sphi 0, %s48
      %s51 = sphi 0, %s50
      %s65 = sphi 0, %s51
      %s69 = sphi 0, %s69
      %s71 = sphi 0, %s69
      %s72 = sphi 0, %s71
      %s86 = sphi 0, %s72
      %s90 = sphi 0, %s90
      %s92 = sphi 0, %s90
      %s93 = sphi 0, %s92
      %s107 = sphi 0, %s93
      %s111 = sphi 0, %s111
      %s113 = sphi 0, %s111
      %s114 = sphi 0, %s113
      %s128 = sphi 0, %s114
      %s134 = sphi 0, %s136
      %s137 = sphi 0, %s134
      %s138 = sphi 0, %s137
      %s154 = sphi 0, %s138
    $region4: #{_lambda_.21} parent=1 // loop_header_branch
      %17 = sbr.rel (%p15) target = $region8
    $region5: #{_lambda_.21} parent=1 // loop_body
      %s19 = ssub.s32 %s14, 1
      %s20 = ssub.s32 %s14, 2
      %s21 = sadd.s32 %s14, 1
      %s22 = ssub.s32 %s14, %s21
      %p23 = scmp.eq.s32.totalorder %s22, 0
      %s25 = sadd.s32 %s24, 1
      %s26 = scalar_select %p23, %s24, %s25
      %p29 = pneg %p23
      %p30 = scmp.eq.s32.totalorder %s14, 1
      %p31 = por %p29, %p30
      %p32 = scmp.ne.s32.totalorder %s24, %s27
      %p33 = scmp.eq.s32.totalorder %s14, 0
      %p34 = por %p32, %p33
      %p35 = scmp.ne.s32.totalorder %s24, %s27
      %p36 = scmp.eq.s32.totalorder %s19, 1
      %p37 = por %p35, %p36
      %p38 = scmp.ne.s32.totalorder %s27, %s28
      %p39 = scmp.eq.s32.totalorder %s19, 0
      %p40 = por %p38, %p39
      %p41 = scmp.ne.s32.totalorder %s27, %s28
      %p42 = scmp.eq.s32.totalorder %s20, 1
      %p43 = por %p41, %p42
      %p45 = scmp.ne.s32.totalorder %s28, %s44
      %p46 = scmp.eq.s32.totalorder %s20, 0
      %p47 = por %p45, %p46
      %s49 = sadd.s32 %s48, 1
      %p52 = scmp.eq.s32.totalorder %s14, 1
      %p53 = scmp.ne.s32.totalorder %s48, %s50
      %p54 = scmp.eq.s32.totalorder %s14, 0
      %p55 = por %p53, %p54
      %p56 = scmp.ne.s32.totalorder %s48, %s50
      %p57 = scmp.eq.s32.totalorder %s19, 1
      %p58 = por %p56, %p57
      %p59 = scmp.ne.s32.totalorder %s50, %s51
      %p60 = scmp.eq.s32.totalorder %s19, 0
      %p61 = por %p59, %p60
      %p62 = scmp.ne.s32.totalorder %s50, %s51
      %p63 = scmp.eq.s32.totalorder %s20, 1
      %p64 = por %p62, %p63
      %p66 = scmp.ne.s32.totalorder %s51, %s65
      %p67 = scmp.eq.s32.totalorder %s20, 0
      %p68 = por %p66, %p67
      %s70 = sadd.s32 %s69, 1
      %p73 = scmp.eq.s32.totalorder %s14, 1
      %p74 = scmp.ne.s32.totalorder %s69, %s71
      %p75 = scmp.eq.s32.totalorder %s14, 0
      %p76 = por %p74, %p75
      %p77 = scmp.ne.s32.totalorder %s69, %s71
      %p78 = scmp.eq.s32.totalorder %s19, 1
      %p79 = por %p77, %p78
      %p80 = scmp.ne.s32.totalorder %s71, %s72
      %p81 = scmp.eq.s32.totalorder %s19, 0
      %p82 = por %p80, %p81
      %p83 = scmp.ne.s32.totalorder %s71, %s72
      %p84 = scmp.eq.s32.totalorder %s20, 1
      %p85 = por %p83, %p84
      %p87 = scmp.ne.s32.totalorder %s72, %s86
      %p88 = scmp.eq.s32.totalorder %s20, 0
      %p89 = por %p87, %p88
      %s91 = sadd.s32 %s90, 1
      %p94 = scmp.eq.s32.totalorder %s14, 1
      %p95 = scmp.ne.s32.totalorder %s90, %s92
      %p96 = scmp.eq.s32.totalorder %s14, 0
      %p97 = por %p95, %p96
      %p98 = scmp.ne.s32.totalorder %s90, %s92
      %p99 = scmp.eq.s32.totalorder %s19, 1
      %p100 = por %p98, %p99
      %p101 = scmp.ne.s32.totalorder %s92, %s93
      %p102 = scmp.eq.s32.totalorder %s19, 0
      %p103 = por %p101, %p102
      %p104 = scmp.ne.s32.totalorder %s92, %s93
      %p105 = scmp.eq.s32.totalorder %s20, 1
      %p106 = por %p104, %p105
      %p108 = scmp.ne.s32.totalorder %s93, %s107
      %p109 = scmp.eq.s32.totalorder %s20, 0
      %p110 = por %p108, %p109
      %s112 = sadd.s32 %s111, 1
      %p115 = scmp.eq.s32.totalorder %s14, 1
      %p116 = scmp.ne.s32.totalorder %s111, %s113
      %p117 = scmp.eq.s32.totalorder %s14, 0
      %p118 = por %p116, %p117
      %p119 = scmp.ne.s32.totalorder %s111, %s113
      %p120 = scmp.eq.s32.totalorder %s19, 1
      %p121 = por %p119, %p120
      %p122 = scmp.ne.s32.totalorder %s113, %s114
      %p123 = scmp.eq.s32.totalorder %s19, 0
      %p124 = por %p122, %p123
      %p125 = scmp.ne.s32.totalorder %s113, %s114
      %p126 = scmp.eq.s32.totalorder %s20, 1
      %p127 = por %p125, %p126
      %p129 = scmp.ne.s32.totalorder %s114, %s128
      %p130 = scmp.eq.s32.totalorder %s20, 0
      %p131 = por %p129, %p130
      %s132 = ssub.s32 %s14, %s21
      %p133 = scmp.eq.s32.totalorder %s132, 0
      %s135 = sadd.s32 %s134, 1
      %s136 = scalar_select %p133, %s134, %s135
      %p139 = pneg %p133
      %p140 = scmp.eq.s32.totalorder %s14, 1
      %p141 = por %p139, %p140
      %p142 = scmp.ne.s32.totalorder %s134, %s137
      %p143 = scmp.eq.s32.totalorder %s14, 0
      %p144 = por %p142, %p143
      %p145 = scmp.ne.s32.totalorder %s134, %s137
      %p146 = scmp.eq.s32.totalorder %s19, 1
      %p147 = por %p145, %p146
      %p148 = scmp.ne.s32.totalorder %s137, %s138
      %p149 = scmp.eq.s32.totalorder %s19, 0
      %p150 = por %p148, %p149
      %p151 = scmp.ne.s32.totalorder %s137, %s138
      %p152 = scmp.eq.s32.totalorder %s20, 1
      %p153 = por %p151, %p152
      %p155 = scmp.ne.s32.totalorder %s138, %s154
      %p156 = scmp.eq.s32.totalorder %s20, 0
      %p157 = por %p155, %p156
      %p158 = scmp.le.s32.totalorder 1, %s14
      %p159 = scmp.lt.s32.totalorder %s14, 3
      %p160 = pnand %p158, %p159
      %p161 = pneg %p160
      // Predicated region
      $region9: #{_lambda_.21} parent=5 // pred_check
        _
      $region10: #{_lambda_.21} parent=5 // pred_check_branch
        %163 = sbr.rel (%p160) target = $region12
      $region11: #{_lambda_.21} parent=5 // pred_region
        %s164 = ssub.s32 %s14, 1
        // Predicated region
        $region13: #{_lambda_.21} parent=11 // pred_check
          %p165 = pneg %p61
        $region14: #{_lambda_.21} parent=11 // pred_check_branch
          %167 = sbr.rel (%p165) target = $region16
        $region15: #{_lambda_.21} parent=11 // pred_region
          _
        $region16: #{_lambda_.21} parent=11 // pred_fallthru
          _
        // Predicated region
        $region17: #{_lambda_.21} parent=11 // pred_check
          %p168 = pneg %p82
        $region18: #{_lambda_.21} parent=11 // pred_check_branch
          %170 = sbr.rel (%p168) target = $region20
        $region19: #{_lambda_.21} parent=11 // pred_region
          _
        $region20: #{_lambda_.21} parent=11 // pred_fallthru
          _
        // Predicated region
        $region21: #{_lambda_.21} parent=11 // pred_check
          %p171 = pneg %p103
        $region22: #{_lambda_.21} parent=11 // pred_check_branch
          %173 = sbr.rel (%p171) target = $region24
        $region23: #{_lambda_.21} parent=11 // pred_region
          _
        $region24: #{_lambda_.21} parent=11 // pred_fallthru
          _
        // Predicated region
        $region25: #{_lambda_.21} parent=11 // pred_check
          %p174 = pneg %p124
        $region26: #{_lambda_.21} parent=11 // pred_check_branch
          %176 = sbr.rel (%p174) target = $region28
        $region27: #{_lambda_.21} parent=11 // pred_region
          _
        $region28: #{_lambda_.21} parent=11 // pred_fallthru
          _
      $region12: #{_lambda_.21} parent=5 // pred_fallthru
        _
      %p177 = scmp.lt.s32.totalorder %s14, 2
      // Predicated region
      $region29: #{_lambda_.21} parent=5 // pred_check
        %p178 = pneg %p177
      $region30: #{_lambda_.21} parent=5 // pred_check_branch
        %180 = sbr.rel (%p178) target = $region32
      $region31: #{_lambda_.21} parent=5 // pred_region
        // Predicated region
        $region33: #{_lambda_.21} parent=31 // pred_check
          %p181 = pneg %p34
        $region34: #{_lambda_.21} parent=31 // pred_check_branch
          %183 = sbr.rel (%p181) target = $region36
        $region35: #{_lambda_.21} parent=31 // pred_region
          %p184 = scmp.lt.s32.totalorder %s14, 1
          %s185 = scalar_select %p184, %s14, 1
          %s186 = smul.addr %s185, 2
          %s187 = scalar_lea.vmem %s0, %s186
        $region36: #{_lambda_.21} parent=31 // pred_fallthru
          _
      $region32: #{_lambda_.21} parent=5 // pred_fallthru
        _
      %p188 = scmp.le.s32.totalorder 1, %s14
      %p189 = scmp.lt.s32.totalorder %s14, 3
      %p190 = pnand %p188, %p189
      %p191 = pneg %p190
      // Predicated region
      $region37: #{_lambda_.21} parent=5 // pred_check
        _
      $region38: #{_lambda_.21} parent=5 // pred_check_branch
        %193 = sbr.rel (%p190) target = $region40
      $region39: #{_lambda_.21} parent=5 // pred_region
        %s194 = ssub.s32 %s14, 1
        %p195 = scmp.lt.s32.totalorder %s19, 1
        %s196 = scalar_select %p195, %s19, 1
        %s197 = smul.addr %s196, 2
        %s198 = scalar_lea.vmem %s0, %s197
        %p199 = pneg %p40
        %p200 = pneg %p37
        %p201 = pneg %p61
        %p202 = pneg %p58
        %p203 = pneg %p82
        %p204 = pneg %p79
        %p205 = pneg %p103
        %p206 = pneg %p100
        %p207 = pneg %p124
        %p208 = pneg %p121
        %p209 = pneg %p150
        %p210 = pneg %p147
        %s211 = sand.u32 %s137, 1
        %s212 = scalar_lea.sflag [#allocation4], %s211
        %s213 = sand.u32 %s137, 1
        %s214 = smul.addr %s213, 2
        %s215 = scalar_lea.vmem [#allocation3], %s214
        %p216 = scmp.lt.s32.totalorder %s19, 1
        %s217 = scalar_select %p216, %s19, 1
        %s218 = smul.addr %s217, 2
        %s219 = scalar_lea.vmem %s0, %s218
        %v220 = vld [vmem:[%s219] sm:$0x3]
        %v221 = vld [vmem:[%s1] sm:$0xff]
        %v222 = vld [vmem:[%s1 + $0x8] sm:$0xff]
        %v223 = vld [vmem:[%s1 + $0x10] sm:$0xff]
        %v224 = vld [vmem:[%s1 + $0x18] sm:$0xff]
        %v225 = vld [vmem:[%s1 + $0x20] sm:$0xff]
        %v226 = vld [vmem:[%s1 + $0x28] sm:$0xff]
        %v227 = vld [vmem:[%s1 + $0x30] sm:$0xff]
        %v228 = vld [vmem:[%s1 + $0x38] sm:$0xff]
        %v229 = vld [vmem:[%s1 + $0x40] sm:$0xff]
        %v230 = vld [vmem:[%s1 + $0x48] sm:$0xff]
        %v231 = vld [vmem:[%s1 + $0x50] sm:$0xff]
        %v232 = vld [vmem:[%s1 + $0x58] sm:$0xff]
        %v233 = vld [vmem:[%s1 + $0x60] sm:$0xff]
        %v234 = vld [vmem:[%s1 + $0x68] sm:$0xff]
        %v235 = vld [vmem:[%s1 + $0x70] sm:$0xff]
        %v236 = vld [vmem:[%s1 + $0x78] sm:$0xff]
        %v237 = vld [vmem:[%s1 + $0x80] sm:$0xff]
        %v238 = vld [vmem:[%s1 + $0x88] sm:$0xff]
        %v239 = vld [vmem:[%s1 + $0x90] sm:$0xff]
        %v240 = vld [vmem:[%s1 + $0x98] sm:$0xff]
        %v241 = vld [vmem:[%s1 + $0xa0] sm:$0xff]
        %v242 = vld [vmem:[%s1 + $0xa8] sm:$0xff]
        %v243 = vld [vmem:[%s1 + $0xb0] sm:$0xff]
        %v244 = vld [vmem:[%s1 + $0xb8] sm:$0xff]
        %v245 = vld [vmem:[%s1 + $0xc0] sm:$0xff]
        %v246 = vld [vmem:[%s1 + $0xc8] sm:$0xff]
        %v247 = vld [vmem:[%s1 + $0xd0] sm:$0xff]
        %v248 = vld [vmem:[%s1 + $0xd8] sm:$0xff]
        %v249 = vld [vmem:[%s1 + $0xe0] sm:$0xff]
        %v250 = vld [vmem:[%s1 + $0xe8] sm:$0xff]
        %v251 = vld [vmem:[%s1 + $0xf0] sm:$0xff]
        %v252 = vld [vmem:[%s1 + $0xf8] sm:$0xff]
        %v253 = vld [vmem:[%s2] sm:$0x3]
        %v255 = vlaneseq
        %v256 = vshrl.u32 %v255, 7
        %v257 = vsub.s32 0, %v256
        %v258 = vrot.slane %v220, %v257
        %v259 = vlaneseq
        %v260 = vshrl.u32 %v259, 7
        %v261 = vsub.s32 1, %v260
        %v262 = vrot.slane %v220, %v261
        %v265 = vpack.c.bf16 %v258, %v258
        %v266 = vpack.c.bf16 %v262, %v262
        %v299 = vunpack.c.l.b16 %v221
        %v300 = vunpack.c.h.b16 %v221
        %v301 = vunpack.c.l.b16 %v222
        %v302 = vunpack.c.h.b16 %v222
        %v303 = vunpack.c.l.b16 %v223
        %v304 = vunpack.c.h.b16 %v223
        %v305 = vunpack.c.l.b16 %v224
        %v306 = vunpack.c.h.b16 %v224
        %v307 = vunpack.c.l.b16 %v225
        %v308 = vunpack.c.h.b16 %v225
        %v309 = vunpack.c.l.b16 %v226
        %v310 = vunpack.c.h.b16 %v226
        %v311 = vunpack.c.l.b16 %v227
        %v312 = vunpack.c.h.b16 %v227
        %v313 = vunpack.c.l.b16 %v228
        %v314 = vunpack.c.h.b16 %v228
        %v315 = vunpack.c.l.b16 %v229
        %v316 = vunpack.c.h.b16 %v229
        %v317 = vunpack.c.l.b16 %v230
        %v318 = vunpack.c.h.b16 %v230
        %v319 = vunpack.c.l.b16 %v231
        %v320 = vunpack.c.h.b16 %v231
        %v321 = vunpack.c.l.b16 %v232
        %v322 = vunpack.c.h.b16 %v232
        %v323 = vunpack.c.l.b16 %v233
        %v324 = vunpack.c.h.b16 %v233
        %v325 = vunpack.c.l.b16 %v234
        %v326 = vunpack.c.h.b16 %v234
        %v327 = vunpack.c.l.b16 %v235
        %v328 = vunpack.c.h.b16 %v235
        %v329 = vunpack.c.l.b16 %v236
        %v330 = vunpack.c.h.b16 %v236
        %v331 = vunpack.c.l.b16 %v237
        %v332 = vunpack.c.h.b16 %v237
        %v333 = vunpack.c.l.b16 %v238
        %v334 = vunpack.c.h.b16 %v238
        %v335 = vunpack.c.l.b16 %v239
        %v336 = vunpack.c.h.b16 %v239
        %v337 = vunpack.c.l.b16 %v240
        %v338 = vunpack.c.h.b16 %v240
        %v339 = vunpack.c.l.b16 %v241
        %v340 = vunpack.c.h.b16 %v241
        %v341 = vunpack.c.l.b16 %v242
        %v342 = vunpack.c.h.b16 %v242
        %v343 = vunpack.c.l.b16 %v243
        %v344 = vunpack.c.h.b16 %v243
        %v345 = vunpack.c.l.b16 %v244
        %v346 = vunpack.c.h.b16 %v244
        %v347 = vunpack.c.l.b16 %v245
        %v348 = vunpack.c.h.b16 %v245
        %v349 = vunpack.c.l.b16 %v246
        %v350 = vunpack.c.h.b16 %v246
        %v351 = vunpack.c.l.b16 %v247
        %v352 = vunpack.c.h.b16 %v247
        %v353 = vunpack.c.l.b16 %v248
        %v354 = vunpack.c.h.b16 %v248
        %v355 = vunpack.c.l.b16 %v249
        %v356 = vunpack.c.h.b16 %v249
        %v357 = vunpack.c.l.b16 %v250
        %v358 = vunpack.c.h.b16 %v250
        %v359 = vunpack.c.l.b16 %v251
        %v360 = vunpack.c.h.b16 %v251
        %v361 = vunpack.c.l.b16 %v252
        %v362 = vunpack.c.h.b16 %v252
        %v363 = vpack.c.b16 %v301, %v299
        %v364 = vpack.c.b16 %v302, %v300
        %v365 = vpack.c.b16 %v305, %v303
        %v366 = vpack.c.b16 %v306, %v304
        %v367 = vpack.c.b16 %v309, %v307
        %v368 = vpack.c.b16 %v310, %v308
        %v369 = vpack.c.b16 %v313, %v311
        %v370 = vpack.c.b16 %v314, %v312
        %v371 = vpack.c.b16 %v317, %v315
        %v372 = vpack.c.b16 %v318, %v316
        %v373 = vpack.c.b16 %v321, %v319
        %v374 = vpack.c.b16 %v322, %v320
        %v375 = vpack.c.b16 %v325, %v323
        %v376 = vpack.c.b16 %v326, %v324
        %v377 = vpack.c.b16 %v329, %v327
        %v378 = vpack.c.b16 %v330, %v328
        %v379 = vpack.c.b16 %v333, %v331
        %v380 = vpack.c.b16 %v334, %v332
        %v381 = vpack.c.b16 %v337, %v335
        %v382 = vpack.c.b16 %v338, %v336
        %v383 = vpack.c.b16 %v341, %v339
        %v384 = vpack.c.b16 %v342, %v340
        %v385 = vpack.c.b16 %v345, %v343
        %v386 = vpack.c.b16 %v346, %v344
        %v387 = vpack.c.b16 %v349, %v347
        %v388 = vpack.c.b16 %v350, %v348
        %v389 = vpack.c.b16 %v353, %v351
        %v390 = vpack.c.b16 %v354, %v352
        %v391 = vpack.c.b16 %v357, %v355
        %v392 = vpack.c.b16 %v358, %v356
        %v393 = vpack.c.b16 %v361, %v359
        %v394 = vpack.c.b16 %v362, %v360
        %v428 = vlaneseq
        %v429 = vshrl.u32 %v428, 7
        %v430 = vsub.s32 0, %v429
        %v431 = vrot.slane %v253, %v430
        %v432 = vlaneseq
        %v433 = vshrl.u32 %v432, 7
        %v434 = vsub.s32 1, %v433
        %v435 = vrot.slane %v253, %v434
        %438 = vmatprep.subr.bf16.mxu0 %v364
        %439 = vmatpush1.bf16.msra.mxu0 %v363
        %440 = vmatprep.subr.bf16.mxu0 %v366
        %441 = vmatpush1.bf16.msra.mxu0 %v365
        %442 = vmatprep.subr.bf16.mxu0 %v368
        %443 = vmatpush1.bf16.msra.mxu0 %v367
        %444 = vmatprep.subr.bf16.mxu0 %v370
        %445 = vmatpush1.bf16.msra.mxu0 %v369
        %446 = vmatprep.subr.bf16.mxu0 %v372
        %447 = vmatpush1.bf16.msra.mxu0 %v371
        %448 = vmatprep.subr.bf16.mxu0 %v374
        %449 = vmatpush1.bf16.msra.mxu0 %v373
        %450 = vmatprep.subr.bf16.mxu0 %v376
        %451 = vmatpush1.bf16.msra.mxu0 %v375
        %452 = vmatprep.subr.bf16.mxu0 %v378
        %453 = vmatpush1.bf16.msra.mxu0 %v377
        %454 = vmatprep.subr.bf16.mxu0 %v380
        %455 = vmatpush1.bf16.msra.mxu0 %v379
        %456 = vmatprep.subr.bf16.mxu0 %v382
        %457 = vmatpush1.bf16.msra.mxu0 %v381
        %458 = vmatprep.subr.bf16.mxu0 %v384
        %459 = vmatpush1.bf16.msra.mxu0 %v383
        %460 = vmatprep.subr.bf16.mxu0 %v386
        %461 = vmatpush1.bf16.msra.mxu0 %v385
        %462 = vmatprep.subr.bf16.mxu0 %v388
        %463 = vmatpush1.bf16.msra.mxu0 %v387
        %464 = vmatprep.subr.bf16.mxu0 %v390
        %465 = vmatpush1.bf16.msra.mxu0 %v389
        %466 = vmatprep.subr.bf16.mxu0 %v392
        %467 = vmatpush1.bf16.msra.mxu0 %v391
        %468 = vmatprep.subr.bf16.mxu0 %v394
        %469 = vmatpush1.bf16.msra.mxu0 %v393
        %470 = vmatprep.mubr.bf16.mxu0 %v266
        %471 = vmatmul.mubr.bf16.gmra.mrb[0].mxu0 %v265
        %v472 = vpop.f32.mrb[0].mxu0
        %v473 = vadd.f32 %v431, %v472
        %v474 = vpop.f32.mrb[0].mxu0
        %v475 = vadd.f32 %v435, %v474
        %v476 = vpop.f32.mrb[0].mxu0
        %v477 = vpop.f32.mrb[0].mxu0
        %478 = vdwg.mxu0
        %v479 = vmax.f32 %v473, 0.0
        %v480 = vmax.f32 %v475, 0.0
        %v483 = vcombine.low %v479, %v480
        %v485 = vunpack.c.l.s4 1966171168
        %v486 = vunpack.c.0.s8 %v485
        %v487 = vlaneseq
        %v488 = vshrl.u32 %v487, 7
        %v489 = vsub.s32 %v486, %v488
        %v490 = vrot.slane %v483, %v489
        %v492 = vunpack.c.l.s4 1966171168
        %v493 = vunpack.c.0.s8 %v492
        %v494 = vlaneseq
        %v495 = vshrl.u32 %v494, 7
        %v496 = vsub.s32 %v493, %v495
        %v497 = vrot.slane %v490, %v496
        %v499 = vlaneseq
        %vm500 = vcmp.ge.s32.totalorder %v499, 0
        %vm501 = vcmp.lt.s32.totalorder %v499, 256
        %vm502 = vmand %vm500, %vm501
        %503 = vst.msk [vmem:[#allocation2] sm:$0x3] %vm502, %v497
        %v504 = vld [vmem:[%s3] sm:$0xff]
        %v505 = vld [vmem:[%s3 + $0x8] sm:$0xff]
        %v506 = vld [vmem:[%s4] sm:$0x3]
        %v507 = vadd.f32 %v506, 0.0
        %v508 = vld [vmem:[#allocation2] sm:$0x3]
        %v511 = vcombine.high %v504, %v505
        %v513 = vunpack.c.l.s4 1966171168
        %v514 = vunpack.c.0.s8 %v513
        %v515 = vlaneseq
        %v516 = vshrl.u32 %v515, 7
        %v517 = vsub.s32 %v514, %v516
        %v518 = vrot.slane %v511, %v517
        %v520 = vunpack.c.l.s4 1966171168
        %v521 = vunpack.c.0.s8 %v520
        %v522 = vlaneseq
        %v523 = vshrl.u32 %v522, 7
        %v524 = vsub.s32 %v521, %v523
        %v525 = vrot.slane %v518, %v524
        %v527 = vmul.f32 %v508, %v525
        %v528 = vadd.f32 %v507, %v527
        %v529 = vmax.f32 %v528, 0.0
        %530 = vst.msk [vmem:[%s215] sm:$0x3] %vm502, %v529
        %s531 = sand.u32 %s137, 1
        %s532 = scalar_lea.sflag [#allocation4], %s531
        %s533 = sand.u32 %s137, 1
        %s534 = smul.addr %s533, 2
        %s535 = scalar_lea.vmem [#allocation3], %s534
        // Predicated region
        $region41: #{_lambda_.21} parent=39 // pred_check
          %p536 = pneg %p147
        $region42: #{_lambda_.21} parent=39 // pred_check_branch
          %538 = sbr.rel (%p536) target = $region44
        $region43: #{_lambda_.21} parent=39 // pred_region
          %s540 = ssub.s32 32, 32
          %541 = vsyncadd %s532, %s540
          %s542 = smul.addr %s19, 2
          %s543 = smul.addr %s542, 16
          %s544 = scalar_lea.hbm %s5, %s543
          %s546 = sshll.u32 %s535, 4
          %s547 = int_to_ptr.vmem [resolvable:$true] %s546
          %549 = dma.vmem_to_hbm [thread:$0]  %s547, 32, %s544, %s532
        $region44: #{_lambda_.21} parent=39 // pred_fallthru
          _
      $region40: #{_lambda_.21} parent=5 // pred_fallthru
        _
      %p550 = scmp.le.s32.totalorder 2, %s14
      // Predicated region
      $region45: #{_lambda_.21} parent=5 // pred_check
        %p551 = pneg %p550
      $region46: #{_lambda_.21} parent=5 // pred_check_branch
        %553 = sbr.rel (%p551) target = $region48
      $region47: #{_lambda_.21} parent=5 // pred_region
        %s554 = ssub.s32 %s14, 2
        // Predicated region
        $region49: #{_lambda_.21} parent=47 // pred_check
          %p555 = pneg %p153
        $region50: #{_lambda_.21} parent=47 // pred_check_branch
          %557 = sbr.rel (%p555) target = $region52
        $region51: #{_lambda_.21} parent=47 // pred_region
          %s558 = sand.u32 %s138, 1
          %s559 = scalar_lea.sflag [#allocation4], %s558
          %s560 = sand.u32 %s138, 1
          %s561 = smul.addr %s560, 2
          %s562 = scalar_lea.vmem [#allocation3], %s561
          %563 = dma.done %s559, 32
        $region52: #{_lambda_.21} parent=47 // pred_fallthru
          _
      $region48: #{_lambda_.21} parent=5 // pred_fallthru
        _
    $region6: #{_lambda_.21} parent=1 // loop_footer
      %s18 = sadd.s32 1, %s14
    $region7: #{_lambda_.21} parent=1 // loop_footer_branch
      %13 = sbr.rel target = $region3
    $region8: #{_lambda_.21} parent=1 // loop_exit
      _
    %564 = vsyncpa [#allocation4], 1
    %s565 = scalar_lea.sflag [#allocation4], 1
    %566 = vsyncpa %s565, 1

</llo_original>
